<compile_context>
chip_gen: v7x
topology: tpu7x:2x2x1
jax: 0.10.0
libtpu: 0.0.40
codegen_flags: <defaults>
</compile_context>

<pallas_src>
import jax
import jax.numpy as jnp
import numpy as np
from jax.experimental import pallas as pl
from jax.experimental.pallas import tpu as pltpu


# ----------------------- fused kernel -----------------------

def cnn_fused_kernel(x_ref, w1_ref, b1_ref, w2a_ref, w2b_ref, b2_ref,
                     wf1_ref, bf1_ref, wf2_ref, bf2_ref, o_ref, hfc_ref):
    Bt = x_ref.shape[0]

    w1 = w1_ref[...]        # [84, 112]  f32 block-diagonal conv1
    b1 = b1_ref[...]        # [1, 112]
    w2a = w2a_ref[...]      # [112, 416] f32 block-Toeplitz conv2, kh = 0
    w2b = w2b_ref[...]      # [112, 416] f32 block-Toeplitz conv2, kh = 1
    b2 = b2_ref[...]        # [1, 416]
    bf1 = bf1_ref[...]      # [1, 128]

    for b in range(Bt):     # static unroll over the batch tile
        xb = x_ref[b]       # [14, 84]  == x[b] in (h, w*6+ic) layout

        # conv1 (1x1) + bias + relu : one MXU matmul (max_pool2d with k=1 is identity).
        y1 = jnp.dot(xb, w1, preferred_element_type=jnp.float32) + b1
        y1 = jnp.maximum(y1, 0.0)                                   # [14, 112] = (h, w*8+c)

        # conv2 (2x2 valid) + bias + relu : kh as sublane shift, kw folded into w2a/w2b.
        y2 = (jnp.dot(y1[0:13, :], w2a, preferred_element_type=jnp.float32)
              + jnp.dot(y1[1:14, :], w2b, preferred_element_type=jnp.float32) + b2)
        # TODO(synk): training-mode Dropout2d (whole-channel dropout) not implemented; inference identity.
        y2 = jnp.maximum(y2, 0.0)                                   # [13, 416] = (h, w*32+c)

        # fc1 : contract y2 in its resident layout, bf16 into the MXU, f32 accumulation,
        # two independent partial accumulators to break the add chain.
        acc0 = jnp.zeros((1, 128), jnp.float32)
        acc1 = jnp.zeros((1, 128), jnp.float32)
        for h in range(13):
            row = y2[h:h + 1, :].astype(jnp.bfloat16)               # [1, 416]
            t = jnp.dot(row, wf1_ref[h], preferred_element_type=jnp.float32)
            if h % 2 == 0:
                acc0 = acc0 + t
            else:
                acc1 = acc1 + t
        hfc_ref[pl.ds(b, 1), :] = jnp.maximum(acc0 + acc1 + bf1, 0.0)   # [1, 128]

    # fc2 + relu + log_softmax for the whole batch tile (bf16 MXU, f32 accum).
    h_all = hfc_ref[...].astype(jnp.bfloat16)                       # [Bt, 128]
    z = jnp.dot(h_all, wf2_ref[...], preferred_element_type=jnp.float32) + bf2_ref[...]
    z = jnp.maximum(z, 0.0)                                         # [Bt, 14]
    m = jnp.max(z, axis=-1, keepdims=True)
    lse = m + jnp.log(jnp.sum(jnp.exp(z - m), axis=-1, keepdims=True))
    o_ref[...] = z - lse


# ----------------------- wrapper -----------------------

def cnn_net1_forward(x_nchw, prep):
    B = x_nchw.shape[0]
    Bt = min(B, 8)
    # Single XLA layout fixup (module contract is NCHW): -> (B, h=14, w*6+ic=84).
    xk = jnp.transpose(x_nchw, (0, 2, 3, 1)).reshape(B, 14, 84)
    pad = (-B) % Bt
    if pad:
        xk = jnp.pad(xk, ((0, pad), (0, 0), (0, 0)))
    Bp = B + pad

    out = pl.pallas_call(
        cnn_fused_kernel,
        out_shape=jax.ShapeDtypeStruct((Bp, 14), jnp.float32),
        grid=(Bp // Bt,),
        in_specs=[
            pl.BlockSpec((Bt, 14, 84), lambda i: (i, 0, 0)),
            pl.BlockSpec((84, 112), lambda i: (0, 0)),
            pl.BlockSpec((1, 112), lambda i: (0, 0)),
            pl.BlockSpec((112, 416), lambda i: (0, 0)),
            pl.BlockSpec((112, 416), lambda i: (0, 0)),
            pl.BlockSpec((1, 416), lambda i: (0, 0)),
            pl.BlockSpec((13, 416, 128), lambda i: (0, 0, 0)),
            pl.BlockSpec((1, 128), lambda i: (0, 0)),
            pl.BlockSpec((128, 14), lambda i: (0, 0)),
            pl.BlockSpec((1, 14), lambda i: (0, 0)),
        ],
        out_specs=pl.BlockSpec((Bt, 14), lambda i: (i, 0)),
        scratch_shapes=[pltpu.VMEM((Bt, 128), jnp.float32)],
        compiler_params=pltpu.CompilerParams(dimension_semantics=("parallel",)),
    )(xk, prep["w1"], prep["b1"], prep["w2a"], prep["w2b"], prep["b2"],
      prep["wf1"], prep["bf1"], prep["wf2"], prep["bf2"])
    return out[:B] if pad else out


# ----------------------- parameters (deterministic, torch-like uniform init) -----------------------

def init_params(key):
    ks = jax.random.split(key, 8)

    def u(k, shape, fan_in):
        bound = 1.0 / jnp.sqrt(jnp.float32(fan_in))
        return jax.random.uniform(k, shape, jnp.float32, -bound, bound)

    return {
        "conv1_w": u(ks[0], (8, 6, 1, 1), 6 * 1 * 1),
        "conv1_b": u(ks[1], (8,), 6 * 1 * 1),
        "conv2_w": u(ks[2], (32, 8, 2, 2), 8 * 2 * 2),
        "conv2_b": u(ks[3], (32,), 8 * 2 * 2),
        "fc1_w": u(ks[4], (100, 5408), 5408),
        "fc1_b": u(ks[5], (100,), 5408),
        "fc2_w": u(ks[6], (14, 100), 100),
        "fc2_b": u(ks[7], (14,), 100),
    }


def prepare_params(p):
    """One-time weight re-layout into MXU-friendly structured matrices (outside the hot path)."""
    w1 = np.asarray(p["conv1_w"], np.float32).reshape(8, 6).T          # [ic=6, oc=8]
    b1 = np.asarray(p["conv1_b"], np.float32)
    w2 = np.asarray(p["conv2_w"], np.float32)                           # [oc=32, ic=8, kh, kw]
    b2 = np.asarray(p["conv2_b"], np.float32)
    f1w = np.asarray(p["fc1_w"], np.float32)                            # [100, 5408]
    f1b = np.asarray(p["fc1_b"], np.float32)
    f2w = np.asarray(p["fc2_w"], np.float32)                            # [14, 100]
    f2b = np.asarray(p["fc2_b"], np.float32)

    # conv1 as block-diagonal: (w*6+ic) -> (w*8+oc)
    W1 = np.kron(np.eye(14, dtype=np.float32), w1)                      # [84, 112]
    B1 = np.tile(b1, 14)[None, :]                                        # [1, 112]

    # conv2 as two block-Toeplitz matrices (one per kh): (wp*8+ic) -> (w*32+oc), kw folded in.
    W2 = np.zeros((2, 14, 8, 13, 32), np.float32)
    for kh in range(2):
        for kw in range(2):
            for w in range(13):
                W2[kh, w + kw, :, w, :] += w2[:, :, kh, kw].T            # [ic, oc]
    W2a = W2[0].reshape(112, 416)
    W2b = W2[1].reshape(112, 416)
    B2 = np.tile(b2, 13)[None, :]                                        # [1, 416]

    # fc1: torch NCHW flatten index is oc*169 + h*13 + w ; kernel y2 layout is (h, w*32+oc).
    Wf1 = f1w.reshape(100, 32, 13, 13).transpose(2, 3, 1, 0).reshape(13, 416, 100)
    Wf1 = np.pad(Wf1, ((0, 0), (0, 0), (0, 28)))                         # [13, 416, 128]
    Bf1 = np.pad(f1b, (0, 28))[None, :]                                   # [1, 128]

    # fc2: [128, 14]  (zero rows for the padded fc1 lanes)
    Wf2 = np.pad(f2w.T, ((0, 28), (0, 0)))                                # [128, 14]
    Bf2 = f2b[None, :]                                                    # [1, 14]

    return {
        "w1": jnp.asarray(W1), "b1": jnp.asarray(B1),
        "w2a": jnp.asarray(W2a), "w2b": jnp.asarray(W2b), "b2": jnp.asarray(B2),
        "wf1": jnp.asarray(Wf1, dtype=jnp.bfloat16), "bf1": jnp.asarray(Bf1),
        "wf2": jnp.asarray(Wf2, dtype=jnp.bfloat16), "bf2": jnp.asarray(Bf2),
    }


# ----------------------- pure-JAX reference (f32) -----------------------

def reference_forward(x, p):
    y1 = jnp.einsum('bihw,oi->bohw', x, p["conv1_w"].reshape(8, 6)) \
        + p["conv1_b"][None, :, None, None]
    y1 = jnp.maximum(y1, 0.0)
    y2 = jax.lax.conv_general_dilated(y1, p["conv2_w"], (1, 1), 'VALID',
                                      dimension_numbers=('NCHW', 'OIHW', 'NCHW'))
    y2 = jnp.maximum(y2 + p["conv2_b"][None, :, None, None], 0.0)
    flat = y2.reshape(x.shape[0], -1)
    h = jnp.maximum(flat @ p["fc1_w"].T + p["fc1_b"], 0.0)
    z = jnp.maximum(h @ p["fc2_w"].T + p["fc2_b"], 0.0)
    return jax.nn.log_softmax(z, axis=-1)


if __name__ == "__main__":
    key = jax.random.PRNGKey(0)
    kx, kp = jax.random.split(key)
    x = jax.random.normal(kx, (2, 6, 14, 14), jnp.float32)   # 14x14 input -> 32*13*13 = 5408
    params = init_params(kp)
    prep = prepare_params(params)

    out = jax.jit(cnn_net1_forward)(x, prep)
    out = jax.block_until_ready(out)

    assert out.shape == (2, 14)
    assert bool(jnp.all(jnp.isfinite(out)))
    # rows of log_softmax must exponentiate-sum to 1
    assert bool(jnp.allclose(jnp.sum(jnp.exp(out), axis=1), 1.0, atol=1e-4))
    # kernel (bf16 fc weights) vs f32 reference
    ref = reference_forward(x, params)
    assert bool(jnp.allclose(out, ref, atol=5e-2)), float(jnp.max(jnp.abs(out - ref)))
    print("KERNEL_OK")
</pallas_src>

<mosaic_0001>
module attributes {stable_mosaic.version = 11 : i64} {
  func.func @cnn_fused_kernel(%arg0: i32, %arg1: memref<2x14x84xf32, #tpu.memory_space<vmem>>, %arg2: memref<84x112xf32, #tpu.memory_space<vmem>>, %arg3: memref<1x112xf32, #tpu.memory_space<vmem>>, %arg4: memref<112x416xf32, #tpu.memory_space<vmem>>, %arg5: memref<112x416xf32, #tpu.memory_space<vmem>>, %arg6: memref<1x416xf32, #tpu.memory_space<vmem>>, %arg7: memref<13x416x128xbf16, #tpu.memory_space<vmem>>, %arg8: memref<1x128xf32, #tpu.memory_space<vmem>>, %arg9: memref<128x14xbf16, #tpu.memory_space<vmem>>, %arg10: memref<1x14xf32, #tpu.memory_space<vmem>>, %arg11: memref<2x14xf32, #tpu.memory_space<vmem>>, %arg12: memref<2x128xf32, #tpu.memory_space<vmem>>) attributes {dimension_semantics = [#tpu.dimension_semantics<parallel>], iteration_bounds = array<i64: 1>, scalar_prefetch = 0 : i64, scratch_operands = 1 : i64, tpu.core_type = #tpu.core_type<tc>, window_params = [{transform_indices = @transform_0, window_bounds = array<i64: 2, 14, 84>}, {pipeline_mode = #tpu.pipeline_mode<synchronous>, transform_indices = @transform_1, window_bounds = array<i64: 84, 112>}, {pipeline_mode = #tpu.pipeline_mode<synchronous>, transform_indices = @transform_2, window_bounds = array<i64: 1, 112>}, {pipeline_mode = #tpu.pipeline_mode<synchronous>, transform_indices = @transform_3, window_bounds = array<i64: 112, 416>}, {pipeline_mode = #tpu.pipeline_mode<synchronous>, transform_indices = @transform_4, window_bounds = array<i64: 112, 416>}, {pipeline_mode = #tpu.pipeline_mode<synchronous>, transform_indices = @transform_5, window_bounds = array<i64: 1, 416>}, {pipeline_mode = #tpu.pipeline_mode<synchronous>, transform_indices = @transform_6, window_bounds = array<i64: 13, 416, 128>}, {pipeline_mode = #tpu.pipeline_mode<synchronous>, transform_indices = @transform_7, window_bounds = array<i64: 1, 128>}, {pipeline_mode = #tpu.pipeline_mode<synchronous>, transform_indices = @transform_8, window_bounds = array<i64: 128, 14>}, {pipeline_mode = #tpu.pipeline_mode<synchronous>, transform_indices = @transform_9, window_bounds = array<i64: 1, 14>}, {transform_indices = @transform_10, window_bounds = array<i64: 2, 14>}]} {
    %c0 = arith.constant 0 : index
    %c0_0 = arith.constant 0 : index
    %0 = vector.load %arg2[%c0, %c0_0] : memref<84x112xf32, #tpu.memory_space<vmem>>, vector<84x112xf32>
    %c0_1 = arith.constant 0 : index
    %c0_2 = arith.constant 0 : index
    %1 = vector.load %arg3[%c0_1, %c0_2] : memref<1x112xf32, #tpu.memory_space<vmem>>, vector<1x112xf32>
    %c0_3 = arith.constant 0 : index
    %c0_4 = arith.constant 0 : index
    %2 = vector.load %arg4[%c0_3, %c0_4] : memref<112x416xf32, #tpu.memory_space<vmem>>, vector<112x416xf32>
    %c0_5 = arith.constant 0 : index
    %c0_6 = arith.constant 0 : index
    %3 = vector.load %arg5[%c0_5, %c0_6] : memref<112x416xf32, #tpu.memory_space<vmem>>, vector<112x416xf32>
    %c0_7 = arith.constant 0 : index
    %c0_8 = arith.constant 0 : index
    %4 = vector.load %arg6[%c0_7, %c0_8] : memref<1x416xf32, #tpu.memory_space<vmem>>, vector<1x416xf32>
    %c0_9 = arith.constant 0 : index
    %c0_10 = arith.constant 0 : index
    %5 = vector.load %arg8[%c0_9, %c0_10] : memref<1x128xf32, #tpu.memory_space<vmem>>, vector<1x128xf32>
    %c0_11 = arith.constant 0 : index
    %c0_12 = arith.constant 0 : index
    %c0_13 = arith.constant 0 : index
    %6 = vector.load %arg1[%c0_11, %c0_12, %c0_13] : memref<2x14x84xf32, #tpu.memory_space<vmem>>, vector<1x14x84xf32>
    %7 = vector.shape_cast %6 : vector<1x14x84xf32> to vector<14x84xf32>
    %cst = arith.constant dense<0.000000e+00> : vector<14x112xf32>
    %8 = tpu.matmul %7, %0, %cst {dimension_numbers = #tpu.dot_dimension_numbers<[1], [0], [0], [1], [0, 0, 1, 1], [], []>} : vector<14x84xf32>, vector<84x112xf32>, vector<14x112xf32> -> vector<14x112xf32>
    %9 = vector.broadcast %1 : vector<1x112xf32> to vector<14x112xf32>
    %10 = arith.addf %8, %9 : vector<14x112xf32>
    %cst_14 = arith.constant 0.000000e+00 : f32
    %11 = vector.broadcast %cst_14 : f32 to vector<14x112xf32>
    %12 = arith.maximumf %10, %11 : vector<14x112xf32>
    %13 = vector.extract_strided_slice %12 {offsets = [0, 0], sizes = [13, 112], strides = [1, 1]} : vector<14x112xf32> to vector<13x112xf32>
    %cst_15 = arith.constant dense<0.000000e+00> : vector<13x416xf32>
    %14 = tpu.matmul %13, %2, %cst_15 {dimension_numbers = #tpu.dot_dimension_numbers<[1], [0], [0], [1], [0, 0, 1, 1], [], []>} : vector<13x112xf32>, vector<112x416xf32>, vector<13x416xf32> -> vector<13x416xf32>
    %15 = vector.extract_strided_slice %12 {offsets = [1, 0], sizes = [13, 112], strides = [1, 1]} : vector<14x112xf32> to vector<13x112xf32>
    %cst_16 = arith.constant dense<0.000000e+00> : vector<13x416xf32>
    %16 = tpu.matmul %15, %3, %cst_16 {dimension_numbers = #tpu.dot_dimension_numbers<[1], [0], [0], [1], [0, 0, 1, 1], [], []>} : vector<13x112xf32>, vector<112x416xf32>, vector<13x416xf32> -> vector<13x416xf32>
    %17 = arith.addf %14, %16 : vector<13x416xf32>
    %18 = vector.broadcast %4 : vector<1x416xf32> to vector<13x416xf32>
    %19 = arith.addf %17, %18 : vector<13x416xf32>
    %cst_17 = arith.constant 0.000000e+00 : f32
    %20 = vector.broadcast %cst_17 : f32 to vector<13x416xf32>
    %21 = arith.maximumf %19, %20 : vector<13x416xf32>
    %cst_18 = arith.constant 0.000000e+00 : f32
    %22 = vector.broadcast %cst_18 : f32 to vector<1x128xf32>
    %cst_19 = arith.constant 0.000000e+00 : f32
    %23 = vector.broadcast %cst_19 : f32 to vector<1x128xf32>
    %24 = vector.extract_strided_slice %21 {offsets = [0, 0], sizes = [1, 416], strides = [1, 1]} : vector<13x416xf32> to vector<1x416xf32>
    %25 = arith.truncf %24 : vector<1x416xf32> to vector<1x416xbf16>
    %c0_20 = arith.constant 0 : index
    %c0_21 = arith.constant 0 : index
    %c0_22 = arith.constant 0 : index
    %26 = vector.load %arg7[%c0_20, %c0_21, %c0_22] : memref<13x416x128xbf16, #tpu.memory_space<vmem>>, vector<1x416x128xbf16>
    %27 = vector.shape_cast %26 : vector<1x416x128xbf16> to vector<416x128xbf16>
    %cst_23 = arith.constant dense<0.000000e+00> : vector<1x128xf32>
    %28 = tpu.matmul %25, %27, %cst_23 {dimension_numbers = #tpu.dot_dimension_numbers<[1], [0], [0], [1], [0, 0, 1, 1], [], []>} : vector<1x416xbf16>, vector<416x128xbf16>, vector<1x128xf32> -> vector<1x128xf32>
    %29 = arith.addf %22, %28 : vector<1x128xf32>
    %30 = vector.extract_strided_slice %21 {offsets = [1, 0], sizes = [1, 416], strides = [1, 1]} : vector<13x416xf32> to vector<1x416xf32>
    %31 = arith.truncf %30 : vector<1x416xf32> to vector<1x416xbf16>
    %c1 = arith.constant 1 : index
    %c0_24 = arith.constant 0 : index
    %c0_25 = arith.constant 0 : index
    %32 = vector.load %arg7[%c1, %c0_24, %c0_25] : memref<13x416x128xbf16, #tpu.memory_space<vmem>>, vector<1x416x128xbf16>
    %33 = vector.shape_cast %32 : vector<1x416x128xbf16> to vector<416x128xbf16>
    %cst_26 = arith.constant dense<0.000000e+00> : vector<1x128xf32>
    %34 = tpu.matmul %31, %33, %cst_26 {dimension_numbers = #tpu.dot_dimension_numbers<[1], [0], [0], [1], [0, 0, 1, 1], [], []>} : vector<1x416xbf16>, vector<416x128xbf16>, vector<1x128xf32> -> vector<1x128xf32>
    %35 = arith.addf %23, %34 : vector<1x128xf32>
    %36 = vector.extract_strided_slice %21 {offsets = [2, 0], sizes = [1, 416], strides = [1, 1]} : vector<13x416xf32> to vector<1x416xf32>
    %37 = arith.truncf %36 : vector<1x416xf32> to vector<1x416xbf16>
    %c2 = arith.constant 2 : index
    %c0_27 = arith.constant 0 : index
    %c0_28 = arith.constant 0 : index
    %38 = vector.load %arg7[%c2, %c0_27, %c0_28] : memref<13x416x128xbf16, #tpu.memory_space<vmem>>, vector<1x416x128xbf16>
    %39 = vector.shape_cast %38 : vector<1x416x128xbf16> to vector<416x128xbf16>
    %cst_29 = arith.constant dense<0.000000e+00> : vector<1x128xf32>
    %40 = tpu.matmul %37, %39, %cst_29 {dimension_numbers = #tpu.dot_dimension_numbers<[1], [0], [0], [1], [0, 0, 1, 1], [], []>} : vector<1x416xbf16>, vector<416x128xbf16>, vector<1x128xf32> -> vector<1x128xf32>
    %41 = arith.addf %29, %40 : vector<1x128xf32>
    %42 = vector.extract_strided_slice %21 {offsets = [3, 0], sizes = [1, 416], strides = [1, 1]} : vector<13x416xf32> to vector<1x416xf32>
    %43 = arith.truncf %42 : vector<1x416xf32> to vector<1x416xbf16>
    %c3 = arith.constant 3 : index
    %c0_30 = arith.constant 0 : index
    %c0_31 = arith.constant 0 : index
    %44 = vector.load %arg7[%c3, %c0_30, %c0_31] : memref<13x416x128xbf16, #tpu.memory_space<vmem>>, vector<1x416x128xbf16>
    %45 = vector.shape_cast %44 : vector<1x416x128xbf16> to vector<416x128xbf16>
    %cst_32 = arith.constant dense<0.000000e+00> : vector<1x128xf32>
    %46 = tpu.matmul %43, %45, %cst_32 {dimension_numbers = #tpu.dot_dimension_numbers<[1], [0], [0], [1], [0, 0, 1, 1], [], []>} : vector<1x416xbf16>, vector<416x128xbf16>, vector<1x128xf32> -> vector<1x128xf32>
    %47 = arith.addf %35, %46 : vector<1x128xf32>
    %48 = vector.extract_strided_slice %21 {offsets = [4, 0], sizes = [1, 416], strides = [1, 1]} : vector<13x416xf32> to vector<1x416xf32>
    %49 = arith.truncf %48 : vector<1x416xf32> to vector<1x416xbf16>
    %c4 = arith.constant 4 : index
    %c0_33 = arith.constant 0 : index
    %c0_34 = arith.constant 0 : index
    %50 = vector.load %arg7[%c4, %c0_33, %c0_34] : memref<13x416x128xbf16, #tpu.memory_space<vmem>>, vector<1x416x128xbf16>
    %51 = vector.shape_cast %50 : vector<1x416x128xbf16> to vector<416x128xbf16>
    %cst_35 = arith.constant dense<0.000000e+00> : vector<1x128xf32>
    %52 = tpu.matmul %49, %51, %cst_35 {dimension_numbers = #tpu.dot_dimension_numbers<[1], [0], [0], [1], [0, 0, 1, 1], [], []>} : vector<1x416xbf16>, vector<416x128xbf16>, vector<1x128xf32> -> vector<1x128xf32>
    %53 = arith.addf %41, %52 : vector<1x128xf32>
    %54 = vector.extract_strided_slice %21 {offsets = [5, 0], sizes = [1, 416], strides = [1, 1]} : vector<13x416xf32> to vector<1x416xf32>
    %55 = arith.truncf %54 : vector<1x416xf32> to vector<1x416xbf16>
    %c5 = arith.constant 5 : index
    %c0_36 = arith.constant 0 : index
    %c0_37 = arith.constant 0 : index
    %56 = vector.load %arg7[%c5, %c0_36, %c0_37] : memref<13x416x128xbf16, #tpu.memory_space<vmem>>, vector<1x416x128xbf16>
    %57 = vector.shape_cast %56 : vector<1x416x128xbf16> to vector<416x128xbf16>
    %cst_38 = arith.constant dense<0.000000e+00> : vector<1x128xf32>
    %58 = tpu.matmul %55, %57, %cst_38 {dimension_numbers = #tpu.dot_dimension_numbers<[1], [0], [0], [1], [0, 0, 1, 1], [], []>} : vector<1x416xbf16>, vector<416x128xbf16>, vector<1x128xf32> -> vector<1x128xf32>
    %59 = arith.addf %47, %58 : vector<1x128xf32>
    %60 = vector.extract_strided_slice %21 {offsets = [6, 0], sizes = [1, 416], strides = [1, 1]} : vector<13x416xf32> to vector<1x416xf32>
    %61 = arith.truncf %60 : vector<1x416xf32> to vector<1x416xbf16>
    %c6 = arith.constant 6 : index
    %c0_39 = arith.constant 0 : index
    %c0_40 = arith.constant 0 : index
    %62 = vector.load %arg7[%c6, %c0_39, %c0_40] : memref<13x416x128xbf16, #tpu.memory_space<vmem>>, vector<1x416x128xbf16>
    %63 = vector.shape_cast %62 : vector<1x416x128xbf16> to vector<416x128xbf16>
    %cst_41 = arith.constant dense<0.000000e+00> : vector<1x128xf32>
    %64 = tpu.matmul %61, %63, %cst_41 {dimension_numbers = #tpu.dot_dimension_numbers<[1], [0], [0], [1], [0, 0, 1, 1], [], []>} : vector<1x416xbf16>, vector<416x128xbf16>, vector<1x128xf32> -> vector<1x128xf32>
    %65 = arith.addf %53, %64 : vector<1x128xf32>
    %66 = vector.extract_strided_slice %21 {offsets = [7, 0], sizes = [1, 416], strides = [1, 1]} : vector<13x416xf32> to vector<1x416xf32>
    %67 = arith.truncf %66 : vector<1x416xf32> to vector<1x416xbf16>
    %c7 = arith.constant 7 : index
    %c0_42 = arith.constant 0 : index
    %c0_43 = arith.constant 0 : index
    %68 = vector.load %arg7[%c7, %c0_42, %c0_43] : memref<13x416x128xbf16, #tpu.memory_space<vmem>>, vector<1x416x128xbf16>
    %69 = vector.shape_cast %68 : vector<1x416x128xbf16> to vector<416x128xbf16>
    %cst_44 = arith.constant dense<0.000000e+00> : vector<1x128xf32>
    %70 = tpu.matmul %67, %69, %cst_44 {dimension_numbers = #tpu.dot_dimension_numbers<[1], [0], [0], [1], [0, 0, 1, 1], [], []>} : vector<1x416xbf16>, vector<416x128xbf16>, vector<1x128xf32> -> vector<1x128xf32>
    %71 = arith.addf %59, %70 : vector<1x128xf32>
    %72 = vector.extract_strided_slice %21 {offsets = [8, 0], sizes = [1, 416], strides = [1, 1]} : vector<13x416xf32> to vector<1x416xf32>
    %73 = arith.truncf %72 : vector<1x416xf32> to vector<1x416xbf16>
    %c8 = arith.constant 8 : index
    %c0_45 = arith.constant 0 : index
    %c0_46 = arith.constant 0 : index
    %74 = vector.load %arg7[%c8, %c0_45, %c0_46] : memref<13x416x128xbf16, #tpu.memory_space<vmem>>, vector<1x416x128xbf16>
    %75 = vector.shape_cast %74 : vector<1x416x128xbf16> to vector<416x128xbf16>
    %cst_47 = arith.constant dense<0.000000e+00> : vector<1x128xf32>
    %76 = tpu.matmul %73, %75, %cst_47 {dimension_numbers = #tpu.dot_dimension_numbers<[1], [0], [0], [1], [0, 0, 1, 1], [], []>} : vector<1x416xbf16>, vector<416x128xbf16>, vector<1x128xf32> -> vector<1x128xf32>
    %77 = arith.addf %65, %76 : vector<1x128xf32>
    %78 = vector.extract_strided_slice %21 {offsets = [9, 0], sizes = [1, 416], strides = [1, 1]} : vector<13x416xf32> to vector<1x416xf32>
    %79 = arith.truncf %78 : vector<1x416xf32> to vector<1x416xbf16>
    %c9 = arith.constant 9 : index
    %c0_48 = arith.constant 0 : index
    %c0_49 = arith.constant 0 : index
    %80 = vector.load %arg7[%c9, %c0_48, %c0_49] : memref<13x416x128xbf16, #tpu.memory_space<vmem>>, vector<1x416x128xbf16>
    %81 = vector.shape_cast %80 : vector<1x416x128xbf16> to vector<416x128xbf16>
    %cst_50 = arith.constant dense<0.000000e+00> : vector<1x128xf32>
    %82 = tpu.matmul %79, %81, %cst_50 {dimension_numbers = #tpu.dot_dimension_numbers<[1], [0], [0], [1], [0, 0, 1, 1], [], []>} : vector<1x416xbf16>, vector<416x128xbf16>, vector<1x128xf32> -> vector<1x128xf32>
    %83 = arith.addf %71, %82 : vector<1x128xf32>
    %84 = vector.extract_strided_slice %21 {offsets = [10, 0], sizes = [1, 416], strides = [1, 1]} : vector<13x416xf32> to vector<1x416xf32>
    %85 = arith.truncf %84 : vector<1x416xf32> to vector<1x416xbf16>
    %c10 = arith.constant 10 : index
    %c0_51 = arith.constant 0 : index
    %c0_52 = arith.constant 0 : index
    %86 = vector.load %arg7[%c10, %c0_51, %c0_52] : memref<13x416x128xbf16, #tpu.memory_space<vmem>>, vector<1x416x128xbf16>
    %87 = vector.shape_cast %86 : vector<1x416x128xbf16> to vector<416x128xbf16>
    %cst_53 = arith.constant dense<0.000000e+00> : vector<1x128xf32>
    %88 = tpu.matmul %85, %87, %cst_53 {dimension_numbers = #tpu.dot_dimension_numbers<[1], [0], [0], [1], [0, 0, 1, 1], [], []>} : vector<1x416xbf16>, vector<416x128xbf16>, vector<1x128xf32> -> vector<1x128xf32>
    %89 = arith.addf %77, %88 : vector<1x128xf32>
    %90 = vector.extract_strided_slice %21 {offsets = [11, 0], sizes = [1, 416], strides = [1, 1]} : vector<13x416xf32> to vector<1x416xf32>
    %91 = arith.truncf %90 : vector<1x416xf32> to vector<1x416xbf16>
    %c11 = arith.constant 11 : index
    %c0_54 = arith.constant 0 : index
    %c0_55 = arith.constant 0 : index
    %92 = vector.load %arg7[%c11, %c0_54, %c0_55] : memref<13x416x128xbf16, #tpu.memory_space<vmem>>, vector<1x416x128xbf16>
    %93 = vector.shape_cast %92 : vector<1x416x128xbf16> to vector<416x128xbf16>
    %cst_56 = arith.constant dense<0.000000e+00> : vector<1x128xf32>
    %94 = tpu.matmul %91, %93, %cst_56 {dimension_numbers = #tpu.dot_dimension_numbers<[1], [0], [0], [1], [0, 0, 1, 1], [], []>} : vector<1x416xbf16>, vector<416x128xbf16>, vector<1x128xf32> -> vector<1x128xf32>
    %95 = arith.addf %83, %94 : vector<1x128xf32>
    %96 = vector.extract_strided_slice %21 {offsets = [12, 0], sizes = [1, 416], strides = [1, 1]} : vector<13x416xf32> to vector<1x416xf32>
    %97 = arith.truncf %96 : vector<1x416xf32> to vector<1x416xbf16>
    %c12 = arith.constant 12 : index
    %c0_57 = arith.constant 0 : index
    %c0_58 = arith.constant 0 : index
    %98 = vector.load %arg7[%c12, %c0_57, %c0_58] : memref<13x416x128xbf16, #tpu.memory_space<vmem>>, vector<1x416x128xbf16>
    %99 = vector.shape_cast %98 : vector<1x416x128xbf16> to vector<416x128xbf16>
    %cst_59 = arith.constant dense<0.000000e+00> : vector<1x128xf32>
    %100 = tpu.matmul %97, %99, %cst_59 {dimension_numbers = #tpu.dot_dimension_numbers<[1], [0], [0], [1], [0, 0, 1, 1], [], []>} : vector<1x416xbf16>, vector<416x128xbf16>, vector<1x128xf32> -> vector<1x128xf32>
    %101 = arith.addf %89, %100 : vector<1x128xf32>
    %102 = arith.addf %101, %95 : vector<1x128xf32>
    %103 = arith.addf %102, %5 : vector<1x128xf32>
    %cst_60 = arith.constant 0.000000e+00 : f32
    %104 = vector.broadcast %cst_60 : f32 to vector<1x128xf32>
    %105 = arith.maximumf %103, %104 : vector<1x128xf32>
    %c0_61 = arith.constant 0 : index
    %c0_62 = arith.constant 0 : index
    %106 = vector.load %arg12[%c0_61, %c0_62] : memref<2x128xf32, #tpu.memory_space<vmem>>, vector<1x128xf32>
    tpu.vector_store %arg12[%c0_61, %c0_62], %105 {strides = array<i32>} : memref<2x128xf32, #tpu.memory_space<vmem>>, vector<1x128xf32>,
    %c1_63 = arith.constant 1 : index
    %c0_64 = arith.constant 0 : index
    %c0_65 = arith.constant 0 : index
    %107 = vector.load %arg1[%c1_63, %c0_64, %c0_65] : memref<2x14x84xf32, #tpu.memory_space<vmem>>, vector<1x14x84xf32>
    %108 = vector.shape_cast %107 : vector<1x14x84xf32> to vector<14x84xf32>
    %cst_66 = arith.constant dense<0.000000e+00> : vector<14x112xf32>
    %109 = tpu.matmul %108, %0, %cst_66 {dimension_numbers = #tpu.dot_dimension_numbers<[1], [0], [0], [1], [0, 0, 1, 1], [], []>} : vector<14x84xf32>, vector<84x112xf32>, vector<14x112xf32> -> vector<14x112xf32>
    %110 = vector.broadcast %1 : vector<1x112xf32> to vector<14x112xf32>
    %111 = arith.addf %109, %110 : vector<14x112xf32>
    %cst_67 = arith.constant 0.000000e+00 : f32
    %112 = vector.broadcast %cst_67 : f32 to vector<14x112xf32>
    %113 = arith.maximumf %111, %112 : vector<14x112xf32>
    %114 = vector.extract_strided_slice %113 {offsets = [0, 0], sizes = [13, 112], strides = [1, 1]} : vector<14x112xf32> to vector<13x112xf32>
    %cst_68 = arith.constant dense<0.000000e+00> : vector<13x416xf32>
    %115 = tpu.matmul %114, %2, %cst_68 {dimension_numbers = #tpu.dot_dimension_numbers<[1], [0], [0], [1], [0, 0, 1, 1], [], []>} : vector<13x112xf32>, vector<112x416xf32>, vector<13x416xf32> -> vector<13x416xf32>
    %116 = vector.extract_strided_slice %113 {offsets = [1, 0], sizes = [13, 112], strides = [1, 1]} : vector<14x112xf32> to vector<13x112xf32>
    %cst_69 = arith.constant dense<0.000000e+00> : vector<13x416xf32>
    %117 = tpu.matmul %116, %3, %cst_69 {dimension_numbers = #tpu.dot_dimension_numbers<[1], [0], [0], [1], [0, 0, 1, 1], [], []>} : vector<13x112xf32>, vector<112x416xf32>, vector<13x416xf32> -> vector<13x416xf32>
    %118 = arith.addf %115, %117 : vector<13x416xf32>
    %119 = vector.broadcast %4 : vector<1x416xf32> to vector<13x416xf32>
    %120 = arith.addf %118, %119 : vector<13x416xf32>
    %cst_70 = arith.constant 0.000000e+00 : f32
    %121 = vector.broadcast %cst_70 : f32 to vector<13x416xf32>
    %122 = arith.maximumf %120, %121 : vector<13x416xf32>
    %cst_71 = arith.constant 0.000000e+00 : f32
    %123 = vector.broadcast %cst_71 : f32 to vector<1x128xf32>
    %cst_72 = arith.constant 0.000000e+00 : f32
    %124 = vector.broadcast %cst_72 : f32 to vector<1x128xf32>
    %125 = vector.extract_strided_slice %122 {offsets = [0, 0], sizes = [1, 416], strides = [1, 1]} : vector<13x416xf32> to vector<1x416xf32>
    %126 = arith.truncf %125 : vector<1x416xf32> to vector<1x416xbf16>
    %c0_73 = arith.constant 0 : index
    %c0_74 = arith.constant 0 : index
    %c0_75 = arith.constant 0 : index
    %127 = vector.load %arg7[%c0_73, %c0_74, %c0_75] : memref<13x416x128xbf16, #tpu.memory_space<vmem>>, vector<1x416x128xbf16>
    %128 = vector.shape_cast %127 : vector<1x416x128xbf16> to vector<416x128xbf16>
    %cst_76 = arith.constant dense<0.000000e+00> : vector<1x128xf32>
    %129 = tpu.matmul %126, %128, %cst_76 {dimension_numbers = #tpu.dot_dimension_numbers<[1], [0], [0], [1], [0, 0, 1, 1], [], []>} : vector<1x416xbf16>, vector<416x128xbf16>, vector<1x128xf32> -> vector<1x128xf32>
    %130 = arith.addf %123, %129 : vector<1x128xf32>
    %131 = vector.extract_strided_slice %122 {offsets = [1, 0], sizes = [1, 416], strides = [1, 1]} : vector<13x416xf32> to vector<1x416xf32>
    %132 = arith.truncf %131 : vector<1x416xf32> to vector<1x416xbf16>
    %c1_77 = arith.constant 1 : index
    %c0_78 = arith.constant 0 : index
    %c0_79 = arith.constant 0 : index
    %133 = vector.load %arg7[%c1_77, %c0_78, %c0_79] : memref<13x416x128xbf16, #tpu.memory_space<vmem>>, vector<1x416x128xbf16>
    %134 = vector.shape_cast %133 : vector<1x416x128xbf16> to vector<416x128xbf16>
    %cst_80 = arith.constant dense<0.000000e+00> : vector<1x128xf32>
    %135 = tpu.matmul %132, %134, %cst_80 {dimension_numbers = #tpu.dot_dimension_numbers<[1], [0], [0], [1], [0, 0, 1, 1], [], []>} : vector<1x416xbf16>, vector<416x128xbf16>, vector<1x128xf32> -> vector<1x128xf32>
    %136 = arith.addf %124, %135 : vector<1x128xf32>
    %137 = vector.extract_strided_slice %122 {offsets = [2, 0], sizes = [1, 416], strides = [1, 1]} : vector<13x416xf32> to vector<1x416xf32>
    %138 = arith.truncf %137 : vector<1x416xf32> to vector<1x416xbf16>
    %c2_81 = arith.constant 2 : index
    %c0_82 = arith.constant 0 : index
    %c0_83 = arith.constant 0 : index
    %139 = vector.load %arg7[%c2_81, %c0_82, %c0_83] : memref<13x416x128xbf16, #tpu.memory_space<vmem>>, vector<1x416x128xbf16>
    %140 = vector.shape_cast %139 : vector<1x416x128xbf16> to vector<416x128xbf16>
    %cst_84 = arith.constant dense<0.000000e+00> : vector<1x128xf32>
    %141 = tpu.matmul %138, %140, %cst_84 {dimension_numbers = #tpu.dot_dimension_numbers<[1], [0], [0], [1], [0, 0, 1, 1], [], []>} : vector<1x416xbf16>, vector<416x128xbf16>, vector<1x128xf32> -> vector<1x128xf32>
    %142 = arith.addf %130, %141 : vector<1x128xf32>
    %143 = vector.extract_strided_slice %122 {offsets = [3, 0], sizes = [1, 416], strides = [1, 1]} : vector<13x416xf32> to vector<1x416xf32>
    %144 = arith.truncf %143 : vector<1x416xf32> to vector<1x416xbf16>
    %c3_85 = arith.constant 3 : index
    %c0_86 = arith.constant 0 : index
    %c0_87 = arith.constant 0 : index
    %145 = vector.load %arg7[%c3_85, %c0_86, %c0_87] : memref<13x416x128xbf16, #tpu.memory_space<vmem>>, vector<1x416x128xbf16>
    %146 = vector.shape_cast %145 : vector<1x416x128xbf16> to vector<416x128xbf16>
    %cst_88 = arith.constant dense<0.000000e+00> : vector<1x128xf32>
    %147 = tpu.matmul %144, %146, %cst_88 {dimension_numbers = #tpu.dot_dimension_numbers<[1], [0], [0], [1], [0, 0, 1, 1], [], []>} : vector<1x416xbf16>, vector<416x128xbf16>, vector<1x128xf32> -> vector<1x128xf32>
    %148 = arith.addf %136, %147 : vector<1x128xf32>
    %149 = vector.extract_strided_slice %122 {offsets = [4, 0], sizes = [1, 416], strides = [1, 1]} : vector<13x416xf32> to vector<1x416xf32>
    %150 = arith.truncf %149 : vector<1x416xf32> to vector<1x416xbf16>
    %c4_89 = arith.constant 4 : index
    %c0_90 = arith.constant 0 : index
    %c0_91 = arith.constant 0 : index
    %151 = vector.load %arg7[%c4_89, %c0_90, %c0_91] : memref<13x416x128xbf16, #tpu.memory_space<vmem>>, vector<1x416x128xbf16>
    %152 = vector.shape_cast %151 : vector<1x416x128xbf16> to vector<416x128xbf16>
    %cst_92 = arith.constant dense<0.000000e+00> : vector<1x128xf32>
    %153 = tpu.matmul %150, %152, %cst_92 {dimension_numbers = #tpu.dot_dimension_numbers<[1], [0], [0], [1], [0, 0, 1, 1], [], []>} : vector<1x416xbf16>, vector<416x128xbf16>, vector<1x128xf32> -> vector<1x128xf32>
    %154 = arith.addf %142, %153 : vector<1x128xf32>
    %155 = vector.extract_strided_slice %122 {offsets = [5, 0], sizes = [1, 416], strides = [1, 1]} : vector<13x416xf32> to vector<1x416xf32>
    %156 = arith.truncf %155 : vector<1x416xf32> to vector<1x416xbf16>
    %c5_93 = arith.constant 5 : index
    %c0_94 = arith.constant 0 : index
    %c0_95 = arith.constant 0 : index
    %157 = vector.load %arg7[%c5_93, %c0_94, %c0_95] : memref<13x416x128xbf16, #tpu.memory_space<vmem>>, vector<1x416x128xbf16>
    %158 = vector.shape_cast %157 : vector<1x416x128xbf16> to vector<416x128xbf16>
    %cst_96 = arith.constant dense<0.000000e+00> : vector<1x128xf32>
    %159 = tpu.matmul %156, %158, %cst_96 {dimension_numbers = #tpu.dot_dimension_numbers<[1], [0], [0], [1], [0, 0, 1, 1], [], []>} : vector<1x416xbf16>, vector<416x128xbf16>, vector<1x128xf32> -> vector<1x128xf32>
    %160 = arith.addf %148, %159 : vector<1x128xf32>
    %161 = vector.extract_strided_slice %122 {offsets = [6, 0], sizes = [1, 416], strides = [1, 1]} : vector<13x416xf32> to vector<1x416xf32>
    %162 = arith.truncf %161 : vector<1x416xf32> to vector<1x416xbf16>
    %c6_97 = arith.constant 6 : index
    %c0_98 = arith.constant 0 : index
    %c0_99 = arith.constant 0 : index
    %163 = vector.load %arg7[%c6_97, %c0_98, %c0_99] : memref<13x416x128xbf16, #tpu.memory_space<vmem>>, vector<1x416x128xbf16>
    %164 = vector.shape_cast %163 : vector<1x416x128xbf16> to vector<416x128xbf16>
    %cst_100 = arith.constant dense<0.000000e+00> : vector<1x128xf32>
    %165 = tpu.matmul %162, %164, %cst_100 {dimension_numbers = #tpu.dot_dimension_numbers<[1], [0], [0], [1], [0, 0, 1, 1], [], []>} : vector<1x416xbf16>, vector<416x128xbf16>, vector<1x128xf32> -> vector<1x128xf32>
    %166 = arith.addf %154, %165 : vector<1x128xf32>
    %167 = vector.extract_strided_slice %122 {offsets = [7, 0], sizes = [1, 416], strides = [1, 1]} : vector<13x416xf32> to vector<1x416xf32>
    %168 = arith.truncf %167 : vector<1x416xf32> to vector<1x416xbf16>
    %c7_101 = arith.constant 7 : index
    %c0_102 = arith.constant 0 : index
    %c0_103 = arith.constant 0 : index
    %169 = vector.load %arg7[%c7_101, %c0_102, %c0_103] : memref<13x416x128xbf16, #tpu.memory_space<vmem>>, vector<1x416x128xbf16>
    %170 = vector.shape_cast %169 : vector<1x416x128xbf16> to vector<416x128xbf16>
    %cst_104 = arith.constant dense<0.000000e+00> : vector<1x128xf32>
    %171 = tpu.matmul %168, %170, %cst_104 {dimension_numbers = #tpu.dot_dimension_numbers<[1], [0], [0], [1], [0, 0, 1, 1], [], []>} : vector<1x416xbf16>, vector<416x128xbf16>, vector<1x128xf32> -> vector<1x128xf32>
    %172 = arith.addf %160, %171 : vector<1x128xf32>
    %173 = vector.extract_strided_slice %122 {offsets = [8, 0], sizes = [1, 416], strides = [1, 1]} : vector<13x416xf32> to vector<1x416xf32>
    %174 = arith.truncf %173 : vector<1x416xf32> to vector<1x416xbf16>
    %c8_105 = arith.constant 8 : index
    %c0_106 = arith.constant 0 : index
    %c0_107 = arith.constant 0 : index
    %175 = vector.load %arg7[%c8_105, %c0_106, %c0_107] : memref<13x416x128xbf16, #tpu.memory_space<vmem>>, vector<1x416x128xbf16>
    %176 = vector.shape_cast %175 : vector<1x416x128xbf16> to vector<416x128xbf16>
    %cst_108 = arith.constant dense<0.000000e+00> : vector<1x128xf32>
    %177 = tpu.matmul %174, %176, %cst_108 {dimension_numbers = #tpu.dot_dimension_numbers<[1], [0], [0], [1], [0, 0, 1, 1], [], []>} : vector<1x416xbf16>, vector<416x128xbf16>, vector<1x128xf32> -> vector<1x128xf32>
    %178 = arith.addf %166, %177 : vector<1x128xf32>
    %179 = vector.extract_strided_slice %122 {offsets = [9, 0], sizes = [1, 416], strides = [1, 1]} : vector<13x416xf32> to vector<1x416xf32>
    %180 = arith.truncf %179 : vector<1x416xf32> to vector<1x416xbf16>
    %c9_109 = arith.constant 9 : index
    %c0_110 = arith.constant 0 : index
    %c0_111 = arith.constant 0 : index
    %181 = vector.load %arg7[%c9_109, %c0_110, %c0_111] : memref<13x416x128xbf16, #tpu.memory_space<vmem>>, vector<1x416x128xbf16>
    %182 = vector.shape_cast %181 : vector<1x416x128xbf16> to vector<416x128xbf16>
    %cst_112 = arith.constant dense<0.000000e+00> : vector<1x128xf32>
    %183 = tpu.matmul %180, %182, %cst_112 {dimension_numbers = #tpu.dot_dimension_numbers<[1], [0], [0], [1], [0, 0, 1, 1], [], []>} : vector<1x416xbf16>, vector<416x128xbf16>, vector<1x128xf32> -> vector<1x128xf32>
    %184 = arith.addf %172, %183 : vector<1x128xf32>
    %185 = vector.extract_strided_slice %122 {offsets = [10, 0], sizes = [1, 416], strides = [1, 1]} : vector<13x416xf32> to vector<1x416xf32>
    %186 = arith.truncf %185 : vector<1x416xf32> to vector<1x416xbf16>
    %c10_113 = arith.constant 10 : index
    %c0_114 = arith.constant 0 : index
    %c0_115 = arith.constant 0 : index
    %187 = vector.load %arg7[%c10_113, %c0_114, %c0_115] : memref<13x416x128xbf16, #tpu.memory_space<vmem>>, vector<1x416x128xbf16>
    %188 = vector.shape_cast %187 : vector<1x416x128xbf16> to vector<416x128xbf16>
    %cst_116 = arith.constant dense<0.000000e+00> : vector<1x128xf32>
    %189 = tpu.matmul %186, %188, %cst_116 {dimension_numbers = #tpu.dot_dimension_numbers<[1], [0], [0], [1], [0, 0, 1, 1], [], []>} : vector<1x416xbf16>, vector<416x128xbf16>, vector<1x128xf32> -> vector<1x128xf32>
    %190 = arith.addf %178, %189 : vector<1x128xf32>
    %191 = vector.extract_strided_slice %122 {offsets = [11, 0], sizes = [1, 416], strides = [1, 1]} : vector<13x416xf32> to vector<1x416xf32>
    %192 = arith.truncf %191 : vector<1x416xf32> to vector<1x416xbf16>
    %c11_117 = arith.constant 11 : index
    %c0_118 = arith.constant 0 : index
    %c0_119 = arith.constant 0 : index
    %193 = vector.load %arg7[%c11_117, %c0_118, %c0_119] : memref<13x416x128xbf16, #tpu.memory_space<vmem>>, vector<1x416x128xbf16>
    %194 = vector.shape_cast %193 : vector<1x416x128xbf16> to vector<416x128xbf16>
    %cst_120 = arith.constant dense<0.000000e+00> : vector<1x128xf32>
    %195 = tpu.matmul %192, %194, %cst_120 {dimension_numbers = #tpu.dot_dimension_numbers<[1], [0], [0], [1], [0, 0, 1, 1], [], []>} : vector<1x416xbf16>, vector<416x128xbf16>, vector<1x128xf32> -> vector<1x128xf32>
    %196 = arith.addf %184, %195 : vector<1x128xf32>
    %197 = vector.extract_strided_slice %122 {offsets = [12, 0], sizes = [1, 416], strides = [1, 1]} : vector<13x416xf32> to vector<1x416xf32>
    %198 = arith.truncf %197 : vector<1x416xf32> to vector<1x416xbf16>
    %c12_121 = arith.constant 12 : index
    %c0_122 = arith.constant 0 : index
    %c0_123 = arith.constant 0 : index
    %199 = vector.load %arg7[%c12_121, %c0_122, %c0_123] : memref<13x416x128xbf16, #tpu.memory_space<vmem>>, vector<1x416x128xbf16>
    %200 = vector.shape_cast %199 : vector<1x416x128xbf16> to vector<416x128xbf16>
    %cst_124 = arith.constant dense<0.000000e+00> : vector<1x128xf32>
    %201 = tpu.matmul %198, %200, %cst_124 {dimension_numbers = #tpu.dot_dimension_numbers<[1], [0], [0], [1], [0, 0, 1, 1], [], []>} : vector<1x416xbf16>, vector<416x128xbf16>, vector<1x128xf32> -> vector<1x128xf32>
    %202 = arith.addf %190, %201 : vector<1x128xf32>
    %203 = arith.addf %202, %196 : vector<1x128xf32>
    %204 = arith.addf %203, %5 : vector<1x128xf32>
    %cst_125 = arith.constant 0.000000e+00 : f32
    %205 = vector.broadcast %cst_125 : f32 to vector<1x128xf32>
    %206 = arith.maximumf %204, %205 : vector<1x128xf32>
    %c1_126 = arith.constant 1 : index
    %c0_127 = arith.constant 0 : index
    %207 = vector.load %arg12[%c1_126, %c0_127] : memref<2x128xf32, #tpu.memory_space<vmem>>, vector<1x128xf32>
    tpu.vector_store %arg12[%c1_126, %c0_127], %206 {strides = array<i32>} : memref<2x128xf32, #tpu.memory_space<vmem>>, vector<1x128xf32>,
    %c0_128 = arith.constant 0 : index
    %c0_129 = arith.constant 0 : index
    %208 = vector.load %arg12[%c0_128, %c0_129] : memref<2x128xf32, #tpu.memory_space<vmem>>, vector<2x128xf32>
    %209 = arith.truncf %208 : vector<2x128xf32> to vector<2x128xbf16>
    %c0_130 = arith.constant 0 : index
    %c0_131 = arith.constant 0 : index
    %210 = vector.load %arg9[%c0_130, %c0_131] : memref<128x14xbf16, #tpu.memory_space<vmem>>, vector<128x14xbf16>
    %cst_132 = arith.constant dense<0.000000e+00> : vector<2x14xf32>
    %211 = tpu.matmul %209, %210, %cst_132 {dimension_numbers = #tpu.dot_dimension_numbers<[1], [0], [0], [1], [0, 0, 1, 1], [], []>} : vector<2x128xbf16>, vector<128x14xbf16>, vector<2x14xf32> -> vector<2x14xf32>
    %c0_133 = arith.constant 0 : index
    %c0_134 = arith.constant 0 : index
    %212 = vector.load %arg10[%c0_133, %c0_134] : memref<1x14xf32, #tpu.memory_space<vmem>>, vector<1x14xf32>
    %213 = vector.broadcast %212 : vector<1x14xf32> to vector<2x14xf32>
    %214 = arith.addf %211, %213 : vector<2x14xf32>
    %cst_135 = arith.constant 0.000000e+00 : f32
    %215 = vector.broadcast %cst_135 : f32 to vector<2x14xf32>
    %216 = arith.maximumf %214, %215 : vector<2x14xf32>
    %cst_136 = arith.constant dense<0xFF800000> : vector<2xf32>
    %217 = vector.multi_reduction <maximumf>, %216, %cst_136 [1] : vector<2x14xf32> to vector<2xf32>
    %218 = vector.shape_cast %217 : vector<2xf32> to vector<2x1xf32>
    %219 = vector.broadcast %218 : vector<2x1xf32> to vector<2x14xf32>
    %220 = arith.subf %216, %219 : vector<2x14xf32>
    %221 = math.exp %220 : vector<2x14xf32>
    %cst_137 = arith.constant dense<0.000000e+00> : vector<2xf32>
    %222 = vector.multi_reduction <add>, %221, %cst_137 [1] : vector<2x14xf32> to vector<2xf32>
    %223 = vector.shape_cast %222 : vector<2xf32> to vector<2x1xf32>
    %224 = math.log %223 : vector<2x1xf32>
    %225 = arith.addf %218, %224 : vector<2x1xf32>
    %226 = vector.broadcast %225 : vector<2x1xf32> to vector<2x14xf32>
    %227 = arith.subf %216, %226 : vector<2x14xf32>
    %c0_138 = arith.constant 0 : index
    %c0_139 = arith.constant 0 : index
    %228 = vector.load %arg11[%c0_138, %c0_139] : memref<2x14xf32, #tpu.memory_space<vmem>>, vector<2x14xf32>
    tpu.vector_store %arg11[%c0_138, %c0_139], %227 {strides = array<i32>} : memref<2x14xf32, #tpu.memory_space<vmem>>, vector<2x14xf32>,
    return
  }
  func.func @transform_0(%arg0: i32) -> (i32, i32, i32) {
    %c0_i32 = arith.constant 0 : i32
    %c0_i32_0 = arith.constant 0 : i32
    %c0_i32_1 = arith.constant 0 : i32
    return %arg0, %c0_i32, %c0_i32_0 : i32, i32, i32
  }
  func.func @transform_1(%arg0: i32) -> (i32, i32) {
    %c0_i32 = arith.constant 0 : i32
    %c0_i32_0 = arith.constant 0 : i32
    %c0_i32_1 = arith.constant 0 : i32
    return %c0_i32, %c0_i32_0 : i32, i32
  }
  func.func @transform_2(%arg0: i32) -> (i32, i32) {
    %c0_i32 = arith.constant 0 : i32
    %c0_i32_0 = arith.constant 0 : i32
    %c0_i32_1 = arith.constant 0 : i32
    return %c0_i32, %c0_i32_0 : i32, i32
  }
  func.func @transform_3(%arg0: i32) -> (i32, i32) {
    %c0_i32 = arith.constant 0 : i32
    %c0_i32_0 = arith.constant 0 : i32
    %c0_i32_1 = arith.constant 0 : i32
    return %c0_i32, %c0_i32_0 : i32, i32
  }
  func.func @transform_4(%arg0: i32) -> (i32, i32) {
    %c0_i32 = arith.constant 0 : i32
    %c0_i32_0 = arith.constant 0 : i32
    %c0_i32_1 = arith.constant 0 : i32
    return %c0_i32, %c0_i32_0 : i32, i32
  }
  func.func @transform_5(%arg0: i32) -> (i32, i32) {
    %c0_i32 = arith.constant 0 : i32
    %c0_i32_0 = arith.constant 0 : i32
    %c0_i32_1 = arith.constant 0 : i32
    return %c0_i32, %c0_i32_0 : i32, i32
  }
  func.func @transform_6(%arg0: i32) -> (i32, i32, i32) {
    %c0_i32 = arith.constant 0 : i32
    %c0_i32_0 = arith.constant 0 : i32
    %c0_i32_1 = arith.constant 0 : i32
    %c0_i32_2 = arith.constant 0 : i32
    return %c0_i32, %c0_i32_0, %c0_i32_1 : i32, i32, i32
  }
  func.func @transform_7(%arg0: i32) -> (i32, i32) {
    %c0_i32 = arith.constant 0 : i32
    %c0_i32_0 = arith.constant 0 : i32
    %c0_i32_1 = arith.constant 0 : i32
    return %c0_i32, %c0_i32_0 : i32, i32
  }
  func.func @transform_8(%arg0: i32) -> (i32, i32) {
    %c0_i32 = arith.constant 0 : i32
    %c0_i32_0 = arith.constant 0 : i32
    %c0_i32_1 = arith.constant 0 : i32
    return %c0_i32, %c0_i32_0 : i32, i32
  }
  func.func @transform_9(%arg0: i32) -> (i32, i32) {
    %c0_i32 = arith.constant 0 : i32
    %c0_i32_0 = arith.constant 0 : i32
    %c0_i32_1 = arith.constant 0 : i32
    return %c0_i32, %c0_i32_0 : i32, i32
  }
  func.func @transform_10(%arg0: i32) -> (i32, i32) {
    %c0_i32 = arith.constant 0 : i32
    %c0_i32_0 = arith.constant 0 : i32
    return %arg0, %c0_i32 : i32, i32
  }
}

</mosaic_0001>

<llo_original>
// kernel: cnn_net1_forward.1
$region0: #{cnn_net1_forward.1}
  #allocation0 [shape = 'u32[]', space=smem, size = 0x4, offset = 0x4, fixed_abs, tag = 'smem constant byte address 0x4 - core index']
  #allocation1 [shape = 'u32[144,128]{1,0:T(1,128)}', space=vmem, size = 0x12000, scoped, tag = 'internal scratch']
  #allocation2 [shape = 'f32[2,128]{1,0:T(2,128)}', space=vmem, size = 0x400, scoped, tag = 'scratch operand']
  %s0 = inlined_call_operand.vmem [shape: f32[2,14,84], index: 0, kind: input, shape index: {}]
  %s1 = inlined_call_operand.hbm [shape: f32[84,112], index: 1, kind: input, shape index: {}]
  %s2 = inlined_call_operand.hbm [shape: f32[1,112], index: 2, kind: input, shape index: {}]
  %s3 = inlined_call_operand.vmem [shape: f32[112,416], index: 3, kind: input, shape index: {}]
  %s4 = inlined_call_operand.vmem [shape: f32[112,416], index: 4, kind: input, shape index: {}]
  %s5 = inlined_call_operand.hbm [shape: f32[1,416], index: 5, kind: input, shape index: {}]
  %s6 = inlined_call_operand.hbm [shape: bf16[13,416,128], index: 6, kind: input, shape index: {}]
  %s7 = inlined_call_operand.hbm [shape: f32[1,128], index: 7, kind: input, shape index: {}]
  %s8 = inlined_call_operand.vmem [shape: bf16[128,14], index: 8, kind: input, shape index: {}]
  %s9 = inlined_call_operand.hbm [shape: f32[1,14], index: 9, kind: input, shape index: {}]
  %s10 = inlined_call_operand.hbm [shape: f32[2,14], index: 10, kind: output, shape index: {}]
  %s11 = sld [smem:[#allocation0]]
  $region74: #{cnn_net1_forward.1} parent=0
    _
  %s13 = ssub.s32 1, %s11
  %s14 = scalar_select 0, %s13, %s11
  $region1: #{cnn_net1_forward.1} parent=0
    #allocation3 [shape = 'u8[45056]{0}', space=vmem, size = 0xb000, scoped, tag = 'input window, operand 1, single buffered']
    #allocation4 [shape = 's32[1]{0}', space=sflag, size = 0x4, scoped, tag = 'scoped memory for cnn_net1_forward.1']
    #allocation5 [shape = 's32[1]{0}', space=sflag, size = 0x4, scoped, tag = 'scoped memory for cnn_net1_forward.1']
    #allocation6 [shape = 'u8[512]{0}', space=vmem, size = 0x400, scoped, tag = 'input window, operand 2, single buffered']
    #allocation7 [shape = 's32[1]{0}', space=sflag, size = 0x4, scoped, tag = 'scoped memory for cnn_net1_forward.1']
    #allocation8 [shape = 'u8[2048]{0}', space=vmem, size = 0x800, scoped, tag = 'input window, operand 5, single buffered']
    #allocation9 [shape = 'u8[1384448]{0}', space=vmem, size = 0x152000, scoped, tag = 'input window, operand 6, single buffered']
    #allocation10 [shape = 's32[1]{0}', space=sflag, size = 0x4, scoped, tag = 'scoped memory for cnn_net1_forward.1']
    #allocation11 [shape = 'u8[512]{0}', space=vmem, size = 0x400, scoped, tag = 'input window, operand 7, single buffered']
    #allocation12 [shape = 'u8[512]{0}', space=vmem, size = 0x400, scoped, tag = 'input window, operand 9, single buffered']
    #allocation13 [shape = 's32[1]{0}', space=sflag, size = 0x4, scoped, tag = 'scoped memory for cnn_net1_forward.1']
    #allocation14 [shape = 'u8[1024]{0}', space=vmem, size = 0x400, scoped, tag = 'output window, operand 0, single buffered']
    %15 = vsyncpa [#allocation4], 0
    %16 = vsyncpa [#allocation7], 0
    %17 = vsyncpa [#allocation10], 0
    %18 = vsyncpa [#allocation13], 0
    %19 = vsyncpa [#allocation5], 0
    // Predicated region
    $region2: #{cnn_net1_forward.1} parent=1 // pred_check
      _
    $region3: #{cnn_net1_forward.1} parent=1 // pred_check_branch
      %21 = sbr.rel (0) target = $region5
    $region4: #{cnn_net1_forward.1} parent=1 // pred_region
      _
    $region5: #{cnn_net1_forward.1} parent=1 // pred_fallthru
      _
    // Predicated region
    $region6: #{cnn_net1_forward.1} parent=1 // pred_check
      _
    $region7: #{cnn_net1_forward.1} parent=1 // pred_check_branch
      %23 = sbr.rel (0) target = $region9
    $region8: #{cnn_net1_forward.1} parent=1 // pred_region
      %s25 = ssub.s32 1408, 1408
      %26 = vsyncadd [#allocation4], %s25
      %s27 = sshll.u32 [#allocation3], 4
      %s28 = int_to_ptr.vmem [resolvable:$true] %s27
      %33 = dma.hbm_to_vmem [thread:$0]  %s1, 1408, %s28, [#allocation4], 128, 128, 8
    $region9: #{cnn_net1_forward.1} parent=1 // pred_fallthru
      _
    // Predicated region
    $region10: #{cnn_net1_forward.1} parent=1 // pred_check
      _
    $region11: #{cnn_net1_forward.1} parent=1 // pred_check_branch
      %35 = sbr.rel (0) target = $region13
    $region12: #{cnn_net1_forward.1} parent=1 // pred_region
      %s37 = ssub.s32 16, 16
      %38 = vsyncadd [#allocation7], %s37
      %s40 = sshll.u32 [#allocation6], 4
      %s41 = int_to_ptr.vmem [resolvable:$true] %s40
      %43 = dma.hbm_to_vmem [thread:$0]  %s2, 16, %s41, [#allocation7]
    $region13: #{cnn_net1_forward.1} parent=1 // pred_fallthru
      _
    // Predicated region
    $region14: #{cnn_net1_forward.1} parent=1 // pred_check
      _
    $region15: #{cnn_net1_forward.1} parent=1 // pred_check_branch
      %45 = sbr.rel (0) target = $region17
    $region16: #{cnn_net1_forward.1} parent=1 // pred_region
      _
    $region17: #{cnn_net1_forward.1} parent=1 // pred_fallthru
      _
    // Predicated region
    $region18: #{cnn_net1_forward.1} parent=1 // pred_check
      _
    $region19: #{cnn_net1_forward.1} parent=1 // pred_check_branch
      %47 = sbr.rel (0) target = $region21
    $region20: #{cnn_net1_forward.1} parent=1 // pred_region
      _
    $region21: #{cnn_net1_forward.1} parent=1 // pred_fallthru
      _
    // Predicated region
    $region22: #{cnn_net1_forward.1} parent=1 // pred_check
      _
    $region23: #{cnn_net1_forward.1} parent=1 // pred_check_branch
      %49 = sbr.rel (0) target = $region25
    $region24: #{cnn_net1_forward.1} parent=1 // pred_region
      %s51 = ssub.s32 64, 64
      %52 = vsyncadd [#allocation7], %s51
      %s54 = sshll.u32 [#allocation8], 4
      %s55 = int_to_ptr.vmem [resolvable:$true] %s54
      %57 = dma.hbm_to_vmem [thread:$0]  %s5, 64, %s55, [#allocation7]
    $region25: #{cnn_net1_forward.1} parent=1 // pred_fallthru
      _
    // Predicated region
    $region26: #{cnn_net1_forward.1} parent=1 // pred_check
      _
    $region27: #{cnn_net1_forward.1} parent=1 // pred_check_branch
      %59 = sbr.rel (0) target = $region29
    $region28: #{cnn_net1_forward.1} parent=1 // pred_region
      %s61 = ssub.s32 43264, 43264
      %62 = vsyncadd [#allocation10], %s61
      %s63 = sshll.u32 [#allocation9], 4
      %s64 = int_to_ptr.vmem [resolvable:$true] %s63
      %69 = dma.hbm_to_vmem [thread:$0]  %s6, 43264, %s64, [#allocation10], 64, 64, 4
    $region29: #{cnn_net1_forward.1} parent=1 // pred_fallthru
      _
    // Predicated region
    $region30: #{cnn_net1_forward.1} parent=1 // pred_check
      _
    $region31: #{cnn_net1_forward.1} parent=1 // pred_check_branch
      %71 = sbr.rel (0) target = $region33
    $region32: #{cnn_net1_forward.1} parent=1 // pred_region
      %s73 = ssub.s32 16, 16
      %74 = vsyncadd [#allocation10], %s73
      %s76 = sshll.u32 [#allocation11], 4
      %s77 = int_to_ptr.vmem [resolvable:$true] %s76
      %79 = dma.hbm_to_vmem [thread:$0]  %s7, 16, %s77, [#allocation10]
    $region33: #{cnn_net1_forward.1} parent=1 // pred_fallthru
      _
    // Predicated region
    $region34: #{cnn_net1_forward.1} parent=1 // pred_check
      _
    $region35: #{cnn_net1_forward.1} parent=1 // pred_check_branch
      %81 = sbr.rel (0) target = $region37
    $region36: #{cnn_net1_forward.1} parent=1 // pred_region
      _
    $region37: #{cnn_net1_forward.1} parent=1 // pred_fallthru
      _
    // Predicated region
    $region38: #{cnn_net1_forward.1} parent=1 // pred_check
      _
    $region39: #{cnn_net1_forward.1} parent=1 // pred_check_branch
      %83 = sbr.rel (0) target = $region41
    $region40: #{cnn_net1_forward.1} parent=1 // pred_region
      %s85 = ssub.s32 16, 16
      %86 = vsyncadd [#allocation13], %s85
      %s88 = sshll.u32 [#allocation12], 4
      %s89 = int_to_ptr.vmem [resolvable:$true] %s88
      %91 = dma.hbm_to_vmem [thread:$0]  %s9, 16, %s89, [#allocation13]
    $region41: #{cnn_net1_forward.1} parent=1 // pred_fallthru
      _
    // Predicated region
    $region42: #{cnn_net1_forward.1} parent=1 // pred_check
      _
    $region43: #{cnn_net1_forward.1} parent=1 // pred_check_branch
      %93 = sbr.rel (0) target = $region45
    $region44: #{cnn_net1_forward.1} parent=1 // pred_region
      %94 = dma.done [#allocation4], 1408
    $region45: #{cnn_net1_forward.1} parent=1 // pred_fallthru
      _
    // Predicated region
    $region46: #{cnn_net1_forward.1} parent=1 // pred_check
      _
    $region47: #{cnn_net1_forward.1} parent=1 // pred_check_branch
      %96 = sbr.rel (0) target = $region49
    $region48: #{cnn_net1_forward.1} parent=1 // pred_region
      %97 = dma.done [#allocation7], 16
    $region49: #{cnn_net1_forward.1} parent=1 // pred_fallthru
      _
    // Predicated region
    $region50: #{cnn_net1_forward.1} parent=1 // pred_check
      _
    $region51: #{cnn_net1_forward.1} parent=1 // pred_check_branch
      %99 = sbr.rel (0) target = $region53
    $region52: #{cnn_net1_forward.1} parent=1 // pred_region
      %100 = dma.done [#allocation7], 64
    $region53: #{cnn_net1_forward.1} parent=1 // pred_fallthru
      _
    // Predicated region
    $region54: #{cnn_net1_forward.1} parent=1 // pred_check
      _
    $region55: #{cnn_net1_forward.1} parent=1 // pred_check_branch
      %102 = sbr.rel (0) target = $region57
    $region56: #{cnn_net1_forward.1} parent=1 // pred_region
      %103 = dma.done [#allocation10], 43264
    $region57: #{cnn_net1_forward.1} parent=1 // pred_fallthru
      _
    // Predicated region
    $region58: #{cnn_net1_forward.1} parent=1 // pred_check
      _
    $region59: #{cnn_net1_forward.1} parent=1 // pred_check_branch
      %105 = sbr.rel (0) target = $region61
    $region60: #{cnn_net1_forward.1} parent=1 // pred_region
      %106 = dma.done [#allocation10], 16
    $region61: #{cnn_net1_forward.1} parent=1 // pred_fallthru
      _
    // Predicated region
    $region62: #{cnn_net1_forward.1} parent=1 // pred_check
      _
    $region63: #{cnn_net1_forward.1} parent=1 // pred_check_branch
      %108 = sbr.rel (0) target = $region65
    $region64: #{cnn_net1_forward.1} parent=1 // pred_region
      %109 = dma.done [#allocation13], 16
    $region65: #{cnn_net1_forward.1} parent=1 // pred_fallthru
      _
    %v111 = vld [vmem:[#allocation3] sm:$0xff]
    %v112 = vld [vmem:[#allocation3 + $0x8] sm:$0xff]
    %v113 = vld [vmem:[#allocation3 + $0x10] sm:$0xff]
    %v114 = vld [vmem:[#allocation3 + $0x18] sm:$0xff]
    %v115 = vld [vmem:[#allocation3 + $0x20] sm:$0xff]
    %v116 = vld [vmem:[#allocation3 + $0x28] sm:$0xff]
    %v117 = vld [vmem:[#allocation3 + $0x30] sm:$0xff]
    %v118 = vld [vmem:[#allocation3 + $0x38] sm:$0xff]
    %v119 = vld [vmem:[#allocation3 + $0x40] sm:$0xff]
    %v120 = vld [vmem:[#allocation3 + $0x48] sm:$0xff]
    %v121 = vld [vmem:[#allocation3 + $0x50] sm:$0xf]
    %v122 = vld [vmem:[#allocation6] sm:$0x1]
    %v123 = vld [vmem:[%s3] sm:$0xff]
    %v124 = vld [vmem:[%s3 + $0x8] sm:$0xff]
    %v125 = vld [vmem:[%s3 + $0x10] sm:$0xff]
    %v126 = vld [vmem:[%s3 + $0x18] sm:$0xff]
    %v127 = vld [vmem:[%s3 + $0x20] sm:$0xff]
    %v128 = vld [vmem:[%s3 + $0x28] sm:$0xff]
    %v129 = vld [vmem:[%s3 + $0x30] sm:$0xff]
    %v130 = vld [vmem:[%s3 + $0x38] sm:$0xff]
    %v131 = vld [vmem:[%s3 + $0x40] sm:$0xff]
    %v132 = vld [vmem:[%s3 + $0x48] sm:$0xff]
    %v133 = vld [vmem:[%s3 + $0x50] sm:$0xff]
    %v134 = vld [vmem:[%s3 + $0x58] sm:$0xff]
    %v135 = vld [vmem:[%s3 + $0x60] sm:$0xff]
    %v136 = vld [vmem:[%s3 + $0x68] sm:$0xff]
    %v137 = vld [vmem:[%s3 + $0x70] sm:$0xff]
    %v138 = vld [vmem:[%s3 + $0x78] sm:$0xff]
    %v139 = vld [vmem:[%s3 + $0x80] sm:$0xff]
    %v140 = vld [vmem:[%s3 + $0x88] sm:$0xff]
    %v141 = vld [vmem:[%s3 + $0x90] sm:$0xff]
    %v142 = vld [vmem:[%s3 + $0x98] sm:$0xff]
    %v143 = vld [vmem:[%s3 + $0xa0] sm:$0xff]
    %v144 = vld [vmem:[%s3 + $0xa8] sm:$0xff]
    %v145 = vld [vmem:[%s3 + $0xb0] sm:$0xff]
    %v146 = vld [vmem:[%s3 + $0xb8] sm:$0xff]
    %v147 = vld [vmem:[%s3 + $0xc0] sm:$0xff]
    %v148 = vld [vmem:[%s3 + $0xc8] sm:$0xff]
    %v149 = vld [vmem:[%s3 + $0xd0] sm:$0xff]
    %v150 = vld [vmem:[%s3 + $0xd8] sm:$0xff]
    %v151 = vld [vmem:[%s3 + $0xe0] sm:$0xff]
    %v152 = vld [vmem:[%s3 + $0xe8] sm:$0xff]
    %v153 = vld [vmem:[%s3 + $0xf0] sm:$0xff]
    %v154 = vld [vmem:[%s3 + $0xf8] sm:$0xff]
    %v155 = vld [vmem:[%s3 + $0x100] sm:$0xff]
    %v156 = vld [vmem:[%s3 + $0x108] sm:$0xff]
    %v157 = vld [vmem:[%s3 + $0x110] sm:$0xff]
    %v158 = vld [vmem:[%s3 + $0x118] sm:$0xff]
    %v159 = vld [vmem:[%s3 + $0x120] sm:$0xff]
    %v160 = vld [vmem:[%s3 + $0x128] sm:$0xff]
    %v161 = vld [vmem:[%s3 + $0x130] sm:$0xff]
    %v162 = vld [vmem:[%s3 + $0x138] sm:$0xff]
    %v163 = vld [vmem:[%s3 + $0x140] sm:$0xff]
    %v164 = vld [vmem:[%s3 + $0x148] sm:$0xff]
    %v165 = vld [vmem:[%s3 + $0x150] sm:$0xff]
    %v166 = vld [vmem:[%s3 + $0x158] sm:$0xff]
    %v167 = vld [vmem:[%s3 + $0x160] sm:$0xff]
    %v168 = vld [vmem:[%s3 + $0x168] sm:$0xff]
    %v169 = vld [vmem:[%s3 + $0x170] sm:$0xff]
    %v170 = vld [vmem:[%s3 + $0x178] sm:$0xff]
    %v171 = vld [vmem:[%s3 + $0x180] sm:$0xff]
    %v172 = vld [vmem:[%s3 + $0x188] sm:$0xff]
    %v173 = vld [vmem:[%s3 + $0x190] sm:$0xff]
    %v174 = vld [vmem:[%s3 + $0x198] sm:$0xff]
    %v175 = vld [vmem:[%s3 + $0x1a0] sm:$0xff]
    %v176 = vld [vmem:[%s3 + $0x1a8] sm:$0xff]
    %v177 = vld [vmem:[%s3 + $0x1b0] sm:$0xff]
    %v178 = vld [vmem:[%s3 + $0x1b8] sm:$0xff]
    %v179 = vld [vmem:[%s4] sm:$0xff]
    %v180 = vld [vmem:[%s4 + $0x8] sm:$0xff]
    %v181 = vld [vmem:[%s4 + $0x10] sm:$0xff]
    %v182 = vld [vmem:[%s4 + $0x18] sm:$0xff]
    %v183 = vld [vmem:[%s4 + $0x20] sm:$0xff]
    %v184 = vld [vmem:[%s4 + $0x28] sm:$0xff]
    %v185 = vld [vmem:[%s4 + $0x30] sm:$0xff]
    %v186 = vld [vmem:[%s4 + $0x38] sm:$0xff]
    %v187 = vld [vmem:[%s4 + $0x40] sm:$0xff]
    %v188 = vld [vmem:[%s4 + $0x48] sm:$0xff]
    %v189 = vld [vmem:[%s4 + $0x50] sm:$0xff]
    %v190 = vld [vmem:[%s4 + $0x58] sm:$0xff]
    %v191 = vld [vmem:[%s4 + $0x60] sm:$0xff]
    %v192 = vld [vmem:[%s4 + $0x68] sm:$0xff]
    %v193 = vld [vmem:[%s4 + $0x70] sm:$0xff]
    %v194 = vld [vmem:[%s4 + $0x78] sm:$0xff]
    %v195 = vld [vmem:[%s4 + $0x80] sm:$0xff]
    %v196 = vld [vmem:[%s4 + $0x88] sm:$0xff]
    %v197 = vld [vmem:[%s4 + $0x90] sm:$0xff]
    %v198 = vld [vmem:[%s4 + $0x98] sm:$0xff]
    %v199 = vld [vmem:[%s4 + $0xa0] sm:$0xff]
    %v200 = vld [vmem:[%s4 + $0xa8] sm:$0xff]
    %v201 = vld [vmem:[%s4 + $0xb0] sm:$0xff]
    %v202 = vld [vmem:[%s4 + $0xb8] sm:$0xff]
    %v203 = vld [vmem:[%s4 + $0xc0] sm:$0xff]
    %v204 = vld [vmem:[%s4 + $0xc8] sm:$0xff]
    %v205 = vld [vmem:[%s4 + $0xd0] sm:$0xff]
    %v206 = vld [vmem:[%s4 + $0xd8] sm:$0xff]
    %v207 = vld [vmem:[%s4 + $0xe0] sm:$0xff]
    %v208 = vld [vmem:[%s4 + $0xe8] sm:$0xff]
    %v209 = vld [vmem:[%s4 + $0xf0] sm:$0xff]
    %v210 = vld [vmem:[%s4 + $0xf8] sm:$0xff]
    %v211 = vld [vmem:[%s4 + $0x100] sm:$0xff]
    %v212 = vld [vmem:[%s4 + $0x108] sm:$0xff]
    %v213 = vld [vmem:[%s4 + $0x110] sm:$0xff]
    %v214 = vld [vmem:[%s4 + $0x118] sm:$0xff]
    %v215 = vld [vmem:[%s4 + $0x120] sm:$0xff]
    %v216 = vld [vmem:[%s4 + $0x128] sm:$0xff]
    %v217 = vld [vmem:[%s4 + $0x130] sm:$0xff]
    %v218 = vld [vmem:[%s4 + $0x138] sm:$0xff]
    %v219 = vld [vmem:[%s4 + $0x140] sm:$0xff]
    %v220 = vld [vmem:[%s4 + $0x148] sm:$0xff]
    %v221 = vld [vmem:[%s4 + $0x150] sm:$0xff]
    %v222 = vld [vmem:[%s4 + $0x158] sm:$0xff]
    %v223 = vld [vmem:[%s4 + $0x160] sm:$0xff]
    %v224 = vld [vmem:[%s4 + $0x168] sm:$0xff]
    %v225 = vld [vmem:[%s4 + $0x170] sm:$0xff]
    %v226 = vld [vmem:[%s4 + $0x178] sm:$0xff]
    %v227 = vld [vmem:[%s4 + $0x180] sm:$0xff]
    %v228 = vld [vmem:[%s4 + $0x188] sm:$0xff]
    %v229 = vld [vmem:[%s4 + $0x190] sm:$0xff]
    %v230 = vld [vmem:[%s4 + $0x198] sm:$0xff]
    %v231 = vld [vmem:[%s4 + $0x1a0] sm:$0xff]
    %v232 = vld [vmem:[%s4 + $0x1a8] sm:$0xff]
    %v233 = vld [vmem:[%s4 + $0x1b0] sm:$0xff]
    %v234 = vld [vmem:[%s4 + $0x1b8] sm:$0xff]
    %v235 = vld [vmem:[#allocation8] sm:$0xf]
    %v236 = vld [vmem:[#allocation11] sm:$0x1]
    %v237 = vld [vmem:[%s0] sm:$0xff]
    %v238 = vld [vmem:[%s0 + $0x8] sm:$0x3f]
    %v240 = vlaneseq
    %v241 = vshrl.u32 %v240, 7
    %v242 = vsub.s32 0, %v241
    %v243 = vrot.slane %v122, %v242
    %vm245 = vcmask 687104
    %v247 = vsel %vm245, %v237, 0
    %v250 = vsel %vm245, %v238, 0
    %vm252 = vcmask 1043456
    %v254 = vsel %vm252, %v121, 0
    %256 = vmatprep.subr.mxu0 0.0
    %257 = vmatpush1.msra.mxu0 %v111
    %258 = vmatprep.subr.mxu0 0.0
    %259 = vmatpush1.msra.mxu0 %v112
    %260 = vmatprep.subr.mxu0 0.0
    %261 = vmatpush1.msra.mxu0 %v113
    %262 = vmatprep.subr.mxu0 0.0
    %263 = vmatpush1.msra.mxu0 %v114
    %264 = vmatprep.subr.mxu0 0.0
    %265 = vmatpush1.msra.mxu0 %v115
    %266 = vmatprep.subr.mxu0 0.0
    %267 = vmatpush1.msra.mxu0 %v116
    %268 = vmatprep.subr.mxu0 0.0
    %269 = vmatpush1.msra.mxu0 %v117
    %270 = vmatprep.subr.mxu0 0.0
    %271 = vmatpush1.msra.mxu0 %v118
    %272 = vmatprep.subr.mxu0 0.0
    %273 = vmatpush1.msra.mxu0 %v119
    %274 = vmatprep.subr.mxu0 0.0
    %275 = vmatpush1.msra.mxu0 %v120
    %276 = vmatprep.subr.mxu0 0.0
    %277 = vmatpush1.msra.mxu0 %v254
    %278 = vmatprep.subr.mxu0 0.0
    %279 = vmatpush1.msra.mxu0 0.0
    %280 = vmatprep.subr.mxu0 0.0
    %281 = vmatpush1.msra.mxu0 0.0
    %282 = vmatprep.subr.mxu0 0.0
    %283 = vmatpush1.msra.mxu0 0.0
    %284 = vmatprep.subr.mxu0 0.0
    %285 = vmatpush1.msra.mxu0 0.0
    %286 = vmatprep.subr.mxu0 0.0
    %287 = vmatpush1.msra.mxu0 0.0
    %288 = vmatprep.subr.mxu0 0.0
    %289 = vmatpush1.msra.mxu0 0.0
    %290 = vmatprep.subr.mxu0 0.0
    %291 = vmatpush1.msra.mxu0 0.0
    %292 = vmatprep.subr.mxu0 0.0
    %293 = vmatpush1.msra.mxu0 0.0
    %294 = vmatprep.subr.mxu0 0.0
    %295 = vmatpush1.msra.mxu0 0.0
    %296 = vmatprep.subr.mxu0 0.0
    %297 = vmatpush1.msra.mxu0 0.0
    %298 = vmatprep.subr.mxu0 0.0
    %299 = vmatpush1.msra.mxu0 0.0
    %300 = vmatprep.subr.mxu0 0.0
    %301 = vmatpush1.msra.mxu0 0.0
    %302 = vmatprep.subr.mxu0 0.0
    %303 = vmatpush1.msra.mxu0 0.0
    %304 = vmatprep.subr.mxu0 0.0
    %305 = vmatpush1.msra.mxu0 0.0
    %306 = vmatprep.subr.mxu0 0.0
    %307 = vmatpush1.msra.mxu0 0.0
    %308 = vmatprep.subr.mxu0 0.0
    %309 = vmatpush1.msra.mxu0 0.0
    %310 = vmatprep.subr.mxu0 0.0
    %311 = vmatpush1.msra.mxu0 0.0
    %312 = vmatprep.subr.mxu0 0.0
    %313 = vmatpush1.msra.mxu0 0.0
    %314 = vmatprep.subr.mxu0 0.0
    %315 = vmatpush1.msra.mxu0 0.0
    %316 = vmatprep.subr.mxu0 0.0
    %317 = vmatpush1.msra.mxu0 0.0
    %318 = vmatprep.subr.mxu0 0.0
    %319 = vmatpush1.msra.mxu0 0.0
    %320 = vmatprep.mubr.f32.mxu0 0.0
    %321 = vmatmul.mubr.f32.gmra.mrb[0].mxu0 %v247
    %v322 = vpop.f32.mrb[0].mxu0
    %v323 = vadd.f32 %v243, %v322
    %v324 = vpop.f32.mrb[0].mxu0
    %325 = vmatprep.mubr.f32.mxu0 0.0
    %326 = vmatmul.mubr.f32.gmra.mrb[0].mxu0 %v250
    %v327 = vpop.f32.mrb[0].mxu0
    %v328 = vadd.f32 %v243, %v327
    %v329 = vpop.f32.mrb[0].mxu0
    %330 = vdwg.mxu0
    %v331 = vmax.f32 %v323, 0.0
    %v332 = vmax.f32 %v328, 0.0
    %vm335 = vcmask 1046528
    %v336 = vrot.slane %v331, 1
    %v337 = vrot.slane %v332, 1
    %v338 = vsel %vm335, %v336, %v337
    %vm339 = vcmask 916480
    %v340 = vsel %vm339, %v338, 0
    %v342 = vsel %vm339, %v337, 0
    %344 = vmatprep.subr.mxu0 %v180
    %345 = vmatpush1.msra.mxu0 %v179
    %346 = vmatprep.subr.mxu0 %v184
    %347 = vmatpush1.msra.mxu0 %v183
    %348 = vmatprep.subr.mxu0 %v188
    %349 = vmatpush1.msra.mxu0 %v187
    %350 = vmatprep.subr.mxu0 %v192
    %351 = vmatpush1.msra.mxu0 %v191
    %352 = vmatprep.subr.mxu0 %v196
    %353 = vmatpush1.msra.mxu0 %v195
    %354 = vmatprep.subr.mxu0 %v200
    %355 = vmatpush1.msra.mxu0 %v199
    %356 = vmatprep.subr.mxu0 %v204
    %357 = vmatpush1.msra.mxu0 %v203
    %358 = vmatprep.subr.mxu0 %v208
    %359 = vmatpush1.msra.mxu0 %v207
    %360 = vmatprep.subr.mxu0 %v212
    %361 = vmatpush1.msra.mxu0 %v211
    %362 = vmatprep.subr.mxu0 %v216
    %363 = vmatpush1.msra.mxu0 %v215
    %364 = vmatprep.subr.mxu0 %v220
    %365 = vmatpush1.msra.mxu0 %v219
    %366 = vmatprep.subr.mxu0 %v224
    %367 = vmatpush1.msra.mxu0 %v223
    %368 = vmatprep.subr.mxu0 %v228
    %369 = vmatpush1.msra.mxu0 %v227
    %370 = vmatprep.subr.mxu0 %v232
    %371 = vmatpush1.msra.mxu0 %v231
    %372 = vmatprep.subr.mxu0 0.0
    %373 = vmatpush1.msra.mxu0 0.0
    %374 = vmatprep.subr.mxu0 0.0
    %375 = vmatpush1.msra.mxu0 0.0
    %376 = vmatprep.subr.mxu0 0.0
    %377 = vmatpush1.msra.mxu0 0.0
    %378 = vmatprep.subr.mxu0 0.0
    %379 = vmatpush1.msra.mxu0 0.0
    %380 = vmatprep.subr.mxu0 0.0
    %381 = vmatpush1.msra.mxu0 0.0
    %382 = vmatprep.subr.mxu0 0.0
    %383 = vmatpush1.msra.mxu0 0.0
    %384 = vmatprep.subr.mxu0 0.0
    %385 = vmatpush1.msra.mxu0 0.0
    %386 = vmatprep.subr.mxu0 0.0
    %387 = vmatpush1.msra.mxu0 0.0
    %388 = vmatprep.subr.mxu0 0.0
    %389 = vmatpush1.msra.mxu0 0.0
    %390 = vmatprep.subr.mxu0 0.0
    %391 = vmatpush1.msra.mxu0 0.0
    %392 = vmatprep.subr.mxu0 0.0
    %393 = vmatpush1.msra.mxu0 0.0
    %394 = vmatprep.subr.mxu0 0.0
    %395 = vmatpush1.msra.mxu0 0.0
    %396 = vmatprep.subr.mxu0 0.0
    %397 = vmatpush1.msra.mxu0 0.0
    %398 = vmatprep.subr.mxu0 0.0
    %399 = vmatpush1.msra.mxu0 0.0
    %400 = vmatprep.subr.mxu0 0.0
    %401 = vmatpush1.msra.mxu0 0.0
    %402 = vmatprep.subr.mxu0 0.0
    %403 = vmatpush1.msra.mxu0 0.0
    %404 = vmatprep.subr.mxu0 0.0
    %405 = vmatpush1.msra.mxu0 0.0
    %406 = vmatprep.subr.mxu0 0.0
    %407 = vmatpush1.msra.mxu0 0.0
    %408 = vmatprep.mubr.f32.mxu0 0.0
    %409 = vmatmul.mubr.f32.gmra.mrb[0].mxu0 %v340
    %v410 = vpop.f32.mrb[0].mxu0
    %v411 = vadd.f32 0.0, %v410
    %v412 = vpop.f32.mrb[0].mxu0
    %v413 = vadd.f32 0.0, %v412
    %414 = vmatprep.mubr.f32.mxu0 0.0
    %415 = vmatmul.mubr.f32.gmra.mrb[0].mxu0 %v342
    %v416 = vpop.f32.mrb[0].mxu0
    %v417 = vadd.f32 0.0, %v416
    %v418 = vpop.f32.mrb[0].mxu0
    %v419 = vadd.f32 0.0, %v418
    %420 = vdwg.mxu0
    %421 = vmatprep.subr.mxu0 %v182
    %422 = vmatpush1.msra.mxu0 %v181
    %423 = vmatprep.subr.mxu0 %v186
    %424 = vmatpush1.msra.mxu0 %v185
    %425 = vmatprep.subr.mxu0 %v190
    %426 = vmatpush1.msra.mxu0 %v189
    %427 = vmatprep.subr.mxu0 %v194
    %428 = vmatpush1.msra.mxu0 %v193
    %429 = vmatprep.subr.mxu0 %v198
    %430 = vmatpush1.msra.mxu0 %v197
    %431 = vmatprep.subr.mxu0 %v202
    %432 = vmatpush1.msra.mxu0 %v201
    %433 = vmatprep.subr.mxu0 %v206
    %434 = vmatpush1.msra.mxu0 %v205
    %435 = vmatprep.subr.mxu0 %v210
    %436 = vmatpush1.msra.mxu0 %v209
    %437 = vmatprep.subr.mxu0 %v214
    %438 = vmatpush1.msra.mxu0 %v213
    %439 = vmatprep.subr.mxu0 %v218
    %440 = vmatpush1.msra.mxu0 %v217
    %441 = vmatprep.subr.mxu0 %v222
    %442 = vmatpush1.msra.mxu0 %v221
    %443 = vmatprep.subr.mxu0 %v226
    %444 = vmatpush1.msra.mxu0 %v225
    %445 = vmatprep.subr.mxu0 %v230
    %446 = vmatpush1.msra.mxu0 %v229
    %447 = vmatprep.subr.mxu0 %v234
    %448 = vmatpush1.msra.mxu0 %v233
    %449 = vmatprep.subr.mxu0 0.0
    %450 = vmatpush1.msra.mxu0 0.0
    %451 = vmatprep.subr.mxu0 0.0
    %452 = vmatpush1.msra.mxu0 0.0
    %453 = vmatprep.subr.mxu0 0.0
    %454 = vmatpush1.msra.mxu0 0.0
    %455 = vmatprep.subr.mxu0 0.0
    %456 = vmatpush1.msra.mxu0 0.0
    %457 = vmatprep.subr.mxu0 0.0
    %458 = vmatpush1.msra.mxu0 0.0
    %459 = vmatprep.subr.mxu0 0.0
    %460 = vmatpush1.msra.mxu0 0.0
    %461 = vmatprep.subr.mxu0 0.0
    %462 = vmatpush1.msra.mxu0 0.0
    %463 = vmatprep.subr.mxu0 0.0
    %464 = vmatpush1.msra.mxu0 0.0
    %465 = vmatprep.subr.mxu0 0.0
    %466 = vmatpush1.msra.mxu0 0.0
    %467 = vmatprep.subr.mxu0 0.0
    %468 = vmatpush1.msra.mxu0 0.0
    %469 = vmatprep.subr.mxu0 0.0
    %470 = vmatpush1.msra.mxu0 0.0
    %471 = vmatprep.subr.mxu0 0.0
    %472 = vmatpush1.msra.mxu0 0.0
    %473 = vmatprep.subr.mxu0 0.0
    %474 = vmatpush1.msra.mxu0 0.0
    %475 = vmatprep.subr.mxu0 0.0
    %476 = vmatpush1.msra.mxu0 0.0
    %477 = vmatprep.subr.mxu0 0.0
    %478 = vmatpush1.msra.mxu0 0.0
    %479 = vmatprep.subr.mxu0 0.0
    %480 = vmatpush1.msra.mxu0 0.0
    %481 = vmatprep.subr.mxu0 0.0
    %482 = vmatpush1.msra.mxu0 0.0
    %483 = vmatprep.subr.mxu0 0.0
    %484 = vmatpush1.msra.mxu0 0.0
    %485 = vmatprep.mubr.f32.mxu0 0.0
    %486 = vmatmul.mubr.f32.gmra.mrb[0].mxu0 %v340
    %v487 = vpop.f32.mrb[0].mxu0
    %v488 = vadd.f32 0.0, %v487
    %v489 = vpop.f32.mrb[0].mxu0
    %v490 = vadd.f32 0.0, %v489
    %491 = vmatprep.mubr.f32.mxu0 0.0
    %492 = vmatmul.mubr.f32.gmra.mrb[0].mxu0 %v342
    %v493 = vpop.f32.mrb[0].mxu0
    %v494 = vadd.f32 0.0, %v493
    %v495 = vpop.f32.mrb[0].mxu0
    %v496 = vadd.f32 0.0, %v495
    %497 = vdwg.mxu0
    %v498 = vsel %vm339, %v331, 0
    %v500 = vsel %vm339, %v332, 0
    %502 = vmatprep.subr.mxu0 %v124
    %503 = vmatpush1.msra.mxu0 %v123
    %504 = vmatprep.subr.mxu0 %v128
    %505 = vmatpush1.msra.mxu0 %v127
    %506 = vmatprep.subr.mxu0 %v132
    %507 = vmatpush1.msra.mxu0 %v131
    %508 = vmatprep.subr.mxu0 %v136
    %509 = vmatpush1.msra.mxu0 %v135
    %510 = vmatprep.subr.mxu0 %v140
    %511 = vmatpush1.msra.mxu0 %v139
    %512 = vmatprep.subr.mxu0 %v144
    %513 = vmatpush1.msra.mxu0 %v143
    %514 = vmatprep.subr.mxu0 %v148
    %515 = vmatpush1.msra.mxu0 %v147
    %516 = vmatprep.subr.mxu0 %v152
    %517 = vmatpush1.msra.mxu0 %v151
    %518 = vmatprep.subr.mxu0 %v156
    %519 = vmatpush1.msra.mxu0 %v155
    %520 = vmatprep.subr.mxu0 %v160
    %521 = vmatpush1.msra.mxu0 %v159
    %522 = vmatprep.subr.mxu0 %v164
    %523 = vmatpush1.msra.mxu0 %v163
    %524 = vmatprep.subr.mxu0 %v168
    %525 = vmatpush1.msra.mxu0 %v167
    %526 = vmatprep.subr.mxu0 %v172
    %527 = vmatpush1.msra.mxu0 %v171
    %528 = vmatprep.subr.mxu0 %v176
    %529 = vmatpush1.msra.mxu0 %v175
    %530 = vmatprep.subr.mxu0 0.0
    %531 = vmatpush1.msra.mxu0 0.0
    %532 = vmatprep.subr.mxu0 0.0
    %533 = vmatpush1.msra.mxu0 0.0
    %534 = vmatprep.subr.mxu0 0.0
    %535 = vmatpush1.msra.mxu0 0.0
    %536 = vmatprep.subr.mxu0 0.0
    %537 = vmatpush1.msra.mxu0 0.0
    %538 = vmatprep.subr.mxu0 0.0
    %539 = vmatpush1.msra.mxu0 0.0
    %540 = vmatprep.subr.mxu0 0.0
    %541 = vmatpush1.msra.mxu0 0.0
    %542 = vmatprep.subr.mxu0 0.0
    %543 = vmatpush1.msra.mxu0 0.0
    %544 = vmatprep.subr.mxu0 0.0
    %545 = vmatpush1.msra.mxu0 0.0
    %546 = vmatprep.subr.mxu0 0.0
    %547 = vmatpush1.msra.mxu0 0.0
    %548 = vmatprep.subr.mxu0 0.0
    %549 = vmatpush1.msra.mxu0 0.0
    %550 = vmatprep.subr.mxu0 0.0
    %551 = vmatpush1.msra.mxu0 0.0
    %552 = vmatprep.subr.mxu0 0.0
    %553 = vmatpush1.msra.mxu0 0.0
    %554 = vmatprep.subr.mxu0 0.0
    %555 = vmatpush1.msra.mxu0 0.0
    %556 = vmatprep.subr.mxu0 0.0
    %557 = vmatpush1.msra.mxu0 0.0
    %558 = vmatprep.subr.mxu0 0.0
    %559 = vmatpush1.msra.mxu0 0.0
    %560 = vmatprep.subr.mxu0 0.0
    %561 = vmatpush1.msra.mxu0 0.0
    %562 = vmatprep.subr.mxu0 0.0
    %563 = vmatpush1.msra.mxu0 0.0
    %564 = vmatprep.subr.mxu0 0.0
    %565 = vmatpush1.msra.mxu0 0.0
    %566 = vmatprep.mubr.f32.mxu0 0.0
    %567 = vmatmul.mubr.f32.gmra.mrb[0].mxu0 %v498
    %v568 = vpop.f32.mrb[0].mxu0
    %v569 = vadd.f32 %v411, %v568
    %v570 = vpop.f32.mrb[0].mxu0
    %v571 = vadd.f32 %v413, %v570
    %572 = vmatprep.mubr.f32.mxu0 0.0
    %573 = vmatmul.mubr.f32.gmra.mrb[0].mxu0 %v500
    %v574 = vpop.f32.mrb[0].mxu0
    %v575 = vadd.f32 %v417, %v574
    %v576 = vpop.f32.mrb[0].mxu0
    %v577 = vadd.f32 %v419, %v576
    %578 = vdwg.mxu0
    %579 = vmatprep.subr.mxu0 %v126
    %580 = vmatpush1.msra.mxu0 %v125
    %581 = vmatprep.subr.mxu0 %v130
    %582 = vmatpush1.msra.mxu0 %v129
    %583 = vmatprep.subr.mxu0 %v134
    %584 = vmatpush1.msra.mxu0 %v133
    %585 = vmatprep.subr.mxu0 %v138
    %586 = vmatpush1.msra.mxu0 %v137
    %587 = vmatprep.subr.mxu0 %v142
    %588 = vmatpush1.msra.mxu0 %v141
    %589 = vmatprep.subr.mxu0 %v146
    %590 = vmatpush1.msra.mxu0 %v145
    %591 = vmatprep.subr.mxu0 %v150
    %592 = vmatpush1.msra.mxu0 %v149
    %593 = vmatprep.subr.mxu0 %v154
    %594 = vmatpush1.msra.mxu0 %v153
    %595 = vmatprep.subr.mxu0 %v158
    %596 = vmatpush1.msra.mxu0 %v157
    %597 = vmatprep.subr.mxu0 %v162
    %598 = vmatpush1.msra.mxu0 %v161
    %599 = vmatprep.subr.mxu0 %v166
    %600 = vmatpush1.msra.mxu0 %v165
    %601 = vmatprep.subr.mxu0 %v170
    %602 = vmatpush1.msra.mxu0 %v169
    %603 = vmatprep.subr.mxu0 %v174
    %604 = vmatpush1.msra.mxu0 %v173
    %605 = vmatprep.subr.mxu0 %v178
    %606 = vmatpush1.msra.mxu0 %v177
    %607 = vmatprep.subr.mxu0 0.0
    %608 = vmatpush1.msra.mxu0 0.0
    %609 = vmatprep.subr.mxu0 0.0
    %610 = vmatpush1.msra.mxu0 0.0
    %611 = vmatprep.subr.mxu0 0.0
    %612 = vmatpush1.msra.mxu0 0.0
    %613 = vmatprep.subr.mxu0 0.0
    %614 = vmatpush1.msra.mxu0 0.0
    %615 = vmatprep.subr.mxu0 0.0
    %616 = vmatpush1.msra.mxu0 0.0
    %617 = vmatprep.subr.mxu0 0.0
    %618 = vmatpush1.msra.mxu0 0.0
    %619 = vmatprep.subr.mxu0 0.0
    %620 = vmatpush1.msra.mxu0 0.0
    %621 = vmatprep.subr.mxu0 0.0
    %622 = vmatpush1.msra.mxu0 0.0
    %623 = vmatprep.subr.mxu0 0.0
    %624 = vmatpush1.msra.mxu0 0.0
    %625 = vmatprep.subr.mxu0 0.0
    %626 = vmatpush1.msra.mxu0 0.0
    %627 = vmatprep.subr.mxu0 0.0
    %628 = vmatpush1.msra.mxu0 0.0
    %629 = vmatprep.subr.mxu0 0.0
    %630 = vmatpush1.msra.mxu0 0.0
    %631 = vmatprep.subr.mxu0 0.0
    %632 = vmatpush1.msra.mxu0 0.0
    %633 = vmatprep.subr.mxu0 0.0
    %634 = vmatpush1.msra.mxu0 0.0
    %635 = vmatprep.subr.mxu0 0.0
    %636 = vmatpush1.msra.mxu0 0.0
    %637 = vmatprep.subr.mxu0 0.0
    %638 = vmatpush1.msra.mxu0 0.0
    %639 = vmatprep.subr.mxu0 0.0
    %640 = vmatpush1.msra.mxu0 0.0
    %641 = vmatprep.subr.mxu0 0.0
    %642 = vmatpush1.msra.mxu0 0.0
    %643 = vmatprep.mubr.f32.mxu0 0.0
    %644 = vmatmul.mubr.f32.gmra.mrb[0].mxu0 %v498
    %v645 = vpop.f32.mrb[0].mxu0
    %v646 = vadd.f32 %v488, %v645
    %v647 = vpop.f32.mrb[0].mxu0
    %v648 = vadd.f32 %v490, %v647
    %649 = vmatprep.mubr.f32.mxu0 0.0
    %650 = vmatmul.mubr.f32.gmra.mrb[0].mxu0 %v500
    %v651 = vpop.f32.mrb[0].mxu0
    %v652 = vadd.f32 %v494, %v651
    %v653 = vpop.f32.mrb[0].mxu0
    %v654 = vadd.f32 %v496, %v653
    %655 = vdwg.mxu0
    %v657 = vlaneseq
    %v658 = vshrl.u32 %v657, 7
    %v659 = vsub.s32 0, %v658
    %v660 = vrot.slane %v235, %v659
    %v661 = vlaneseq
    %v662 = vshrl.u32 %v661, 7
    %v663 = vsub.s32 1, %v662
    %v664 = vrot.slane %v235, %v663
    %v665 = vlaneseq
    %v666 = vshrl.u32 %v665, 7
    %v667 = vsub.s32 2, %v666
    %v668 = vrot.slane %v235, %v667
    %v669 = vlaneseq
    %v670 = vshrl.u32 %v669, 7
    %v671 = vsub.s32 3, %v670
    %v672 = vrot.slane %v235, %v671
    %v677 = vadd.f32 %v569, %v660
    %v678 = vadd.f32 %v571, %v664
    %v679 = vadd.f32 %v646, %v668
    %v680 = vadd.f32 %v648, %v672
    %v681 = vadd.f32 %v575, %v660
    %v682 = vadd.f32 %v577, %v664
    %v683 = vadd.f32 %v652, %v668
    %v684 = vadd.f32 %v654, %v672
    %v685 = vmax.f32 %v677, 0.0
    %v686 = vmax.f32 %v678, 0.0
    %v687 = vmax.f32 %v679, 0.0
    %v688 = vmax.f32 %v680, 0.0
    %v689 = vmax.f32 %v681, 0.0
    %v690 = vmax.f32 %v682, 0.0
    %v691 = vmax.f32 %v683, 0.0
    %v692 = vmax.f32 %v684, 0.0
    %v693 = vpack.c.bf16 %v685, %v685
    %v694 = vpack.c.bf16 %v686, %v686
    %v695 = vpack.c.bf16 %v687, %v687
    %v696 = vpack.c.bf16 %v688, %v688
    %v697 = vld [vmem:[#allocation9] sm:$0xf]
    %v698 = vld [vmem:[#allocation9 + $0x4] sm:$0xf]
    %v699 = vld [vmem:[#allocation9 + $0x8] sm:$0xf]
    %v700 = vld [vmem:[#allocation9 + $0xc] sm:$0xf]
    %v701 = vld [vmem:[#allocation9 + $0x10] sm:$0xf]
    %v702 = vld [vmem:[#allocation9 + $0x14] sm:$0xf]
    %v703 = vld [vmem:[#allocation9 + $0x18] sm:$0xf]
    %v704 = vld [vmem:[#allocation9 + $0x1c] sm:$0xf]
    %v705 = vld [vmem:[#allocation9 + $0x20] sm:$0xf]
    %v706 = vld [vmem:[#allocation9 + $0x24] sm:$0xf]
    %v707 = vld [vmem:[#allocation9 + $0x28] sm:$0xf]
    %v708 = vld [vmem:[#allocation9 + $0x2c] sm:$0xf]
    %v709 = vld [vmem:[#allocation9 + $0x30] sm:$0xf]
    %v710 = vld [vmem:[#allocation9 + $0x34] sm:$0xf]
    %v711 = vld [vmem:[#allocation9 + $0x38] sm:$0xf]
    %v712 = vld [vmem:[#allocation9 + $0x3c] sm:$0xf]
    %v713 = vld [vmem:[#allocation9 + $0x40] sm:$0xf]
    %v714 = vld [vmem:[#allocation9 + $0x44] sm:$0xf]
    %v715 = vld [vmem:[#allocation9 + $0x48] sm:$0xf]
    %v716 = vld [vmem:[#allocation9 + $0x4c] sm:$0xf]
    %v717 = vld [vmem:[#allocation9 + $0x50] sm:$0xf]
    %v718 = vld [vmem:[#allocation9 + $0x54] sm:$0xf]
    %v719 = vld [vmem:[#allocation9 + $0x58] sm:$0xf]
    %v720 = vld [vmem:[#allocation9 + $0x5c] sm:$0xf]
    %v721 = vld [vmem:[#allocation9 + $0x60] sm:$0xf]
    %v722 = vld [vmem:[#allocation9 + $0x64] sm:$0xf]
    %v723 = vld [vmem:[#allocation9 + $0x68] sm:$0xf]
    %v724 = vld [vmem:[#allocation9 + $0x6c] sm:$0xf]
    %v725 = vld [vmem:[#allocation9 + $0x70] sm:$0xf]
    %v726 = vld [vmem:[#allocation9 + $0x74] sm:$0xf]
    %v727 = vld [vmem:[#allocation9 + $0x78] sm:$0xf]
    %v728 = vld [vmem:[#allocation9 + $0x7c] sm:$0xf]
    %v729 = vld [vmem:[#allocation9 + $0x80] sm:$0xf]
    %v730 = vld [vmem:[#allocation9 + $0x84] sm:$0xf]
    %v731 = vld [vmem:[#allocation9 + $0x88] sm:$0xf]
    %v732 = vld [vmem:[#allocation9 + $0x8c] sm:$0xf]
    %v733 = vld [vmem:[#allocation9 + $0x90] sm:$0xf]
    %v734 = vld [vmem:[#allocation9 + $0x94] sm:$0xf]
    %v735 = vld [vmem:[#allocation9 + $0x98] sm:$0xf]
    %v736 = vld [vmem:[#allocation9 + $0x9c] sm:$0xf]
    %v737 = vld [vmem:[#allocation9 + $0xa0] sm:$0xf]
    %v738 = vld [vmem:[#allocation9 + $0xa4] sm:$0xf]
    %v739 = vld [vmem:[#allocation9 + $0xa8] sm:$0xf]
    %v740 = vld [vmem:[#allocation9 + $0xac] sm:$0xf]
    %v741 = vld [vmem:[#allocation9 + $0xb0] sm:$0xf]
    %v742 = vld [vmem:[#allocation9 + $0xb4] sm:$0xf]
    %v743 = vld [vmem:[#allocation9 + $0xb8] sm:$0xf]
    %v744 = vld [vmem:[#allocation9 + $0xbc] sm:$0xf]
    %v745 = vld [vmem:[#allocation9 + $0xc0] sm:$0xf]
    %v746 = vld [vmem:[#allocation9 + $0xc4] sm:$0xf]
    %v747 = vld [vmem:[#allocation9 + $0xc8] sm:$0xf]
    %v748 = vld [vmem:[#allocation9 + $0xcc] sm:$0xf]
    %s749 = scalar_lea.vmem [#allocation9], 208
    %v750 = vld [vmem:[%s749] sm:$0xf]
    %v751 = vld [vmem:[%s749 + $0x4] sm:$0xf]
    %v752 = vld [vmem:[%s749 + $0x8] sm:$0xf]
    %v753 = vld [vmem:[%s749 + $0xc] sm:$0xf]
    %v754 = vld [vmem:[%s749 + $0x10] sm:$0xf]
    %v755 = vld [vmem:[%s749 + $0x14] sm:$0xf]
    %v756 = vld [vmem:[%s749 + $0x18] sm:$0xf]
    %v757 = vld [vmem:[%s749 + $0x1c] sm:$0xf]
    %v758 = vld [vmem:[%s749 + $0x20] sm:$0xf]
    %v759 = vld [vmem:[%s749 + $0x24] sm:$0xf]
    %v760 = vld [vmem:[%s749 + $0x28] sm:$0xf]
    %v761 = vld [vmem:[%s749 + $0x2c] sm:$0xf]
    %v762 = vld [vmem:[%s749 + $0x30] sm:$0xf]
    %v763 = vld [vmem:[%s749 + $0x34] sm:$0xf]
    %v764 = vld [vmem:[%s749 + $0x38] sm:$0xf]
    %v765 = vld [vmem:[%s749 + $0x3c] sm:$0xf]
    %v766 = vld [vmem:[%s749 + $0x40] sm:$0xf]
    %v767 = vld [vmem:[%s749 + $0x44] sm:$0xf]
    %v768 = vld [vmem:[%s749 + $0x48] sm:$0xf]
    %v769 = vld [vmem:[%s749 + $0x4c] sm:$0xf]
    %v770 = vld [vmem:[%s749 + $0x50] sm:$0xf]
    %v771 = vld [vmem:[%s749 + $0x54] sm:$0xf]
    %v772 = vld [vmem:[%s749 + $0x58] sm:$0xf]
    %v773 = vld [vmem:[%s749 + $0x5c] sm:$0xf]
    %v774 = vld [vmem:[%s749 + $0x60] sm:$0xf]
    %v775 = vld [vmem:[%s749 + $0x64] sm:$0xf]
    %v776 = vld [vmem:[%s749 + $0x68] sm:$0xf]
    %v777 = vld [vmem:[%s749 + $0x6c] sm:$0xf]
    %v778 = vld [vmem:[%s749 + $0x70] sm:$0xf]
    %v779 = vld [vmem:[%s749 + $0x74] sm:$0xf]
    %v780 = vld [vmem:[%s749 + $0x78] sm:$0xf]
    %v781 = vld [vmem:[%s749 + $0x7c] sm:$0xf]
    %v782 = vld [vmem:[%s749 + $0x80] sm:$0xf]
    %v783 = vld [vmem:[%s749 + $0x84] sm:$0xf]
    %v784 = vld [vmem:[%s749 + $0x88] sm:$0xf]
    %v785 = vld [vmem:[%s749 + $0x8c] sm:$0xf]
    %v786 = vld [vmem:[%s749 + $0x90] sm:$0xf]
    %v787 = vld [vmem:[%s749 + $0x94] sm:$0xf]
    %v788 = vld [vmem:[%s749 + $0x98] sm:$0xf]
    %v789 = vld [vmem:[%s749 + $0x9c] sm:$0xf]
    %v790 = vld [vmem:[%s749 + $0xa0] sm:$0xf]
    %v791 = vld [vmem:[%s749 + $0xa4] sm:$0xf]
    %v792 = vld [vmem:[%s749 + $0xa8] sm:$0xf]
    %v793 = vld [vmem:[%s749 + $0xac] sm:$0xf]
    %v794 = vld [vmem:[%s749 + $0xb0] sm:$0xf]
    %v795 = vld [vmem:[%s749 + $0xb4] sm:$0xf]
    %v796 = vld [vmem:[%s749 + $0xb8] sm:$0xf]
    %v797 = vld [vmem:[%s749 + $0xbc] sm:$0xf]
    %v798 = vld [vmem:[%s749 + $0xc0] sm:$0xf]
    %v799 = vld [vmem:[%s749 + $0xc4] sm:$0xf]
    %v800 = vld [vmem:[%s749 + $0xc8] sm:$0xf]
    %v801 = vld [vmem:[%s749 + $0xcc] sm:$0xf]
    %s802 = scalar_lea.vmem [#allocation9], 416
    %v803 = vld [vmem:[%s802] sm:$0xf]
    %v804 = vld [vmem:[%s802 + $0x4] sm:$0xf]
    %v805 = vld [vmem:[%s802 + $0x8] sm:$0xf]
    %v806 = vld [vmem:[%s802 + $0xc] sm:$0xf]
    %v807 = vld [vmem:[%s802 + $0x10] sm:$0xf]
    %v808 = vld [vmem:[%s802 + $0x14] sm:$0xf]
    %v809 = vld [vmem:[%s802 + $0x18] sm:$0xf]
    %v810 = vld [vmem:[%s802 + $0x1c] sm:$0xf]
    %v811 = vld [vmem:[%s802 + $0x20] sm:$0xf]
    %v812 = vld [vmem:[%s802 + $0x24] sm:$0xf]
    %v813 = vld [vmem:[%s802 + $0x28] sm:$0xf]
    %v814 = vld [vmem:[%s802 + $0x2c] sm:$0xf]
    %v815 = vld [vmem:[%s802 + $0x30] sm:$0xf]
    %v816 = vld [vmem:[%s802 + $0x34] sm:$0xf]
    %v817 = vld [vmem:[%s802 + $0x38] sm:$0xf]
    %v818 = vld [vmem:[%s802 + $0x3c] sm:$0xf]
    %v819 = vld [vmem:[%s802 + $0x40] sm:$0xf]
    %v820 = vld [vmem:[%s802 + $0x44] sm:$0xf]
    %v821 = vld [vmem:[%s802 + $0x48] sm:$0xf]
    %v822 = vld [vmem:[%s802 + $0x4c] sm:$0xf]
    %v823 = vld [vmem:[%s802 + $0x50] sm:$0xf]
    %v824 = vld [vmem:[%s802 + $0x54] sm:$0xf]
    %v825 = vld [vmem:[%s802 + $0x58] sm:$0xf]
    %v826 = vld [vmem:[%s802 + $0x5c] sm:$0xf]
    %v827 = vld [vmem:[%s802 + $0x60] sm:$0xf]
    %v828 = vld [vmem:[%s802 + $0x64] sm:$0xf]
    %v829 = vld [vmem:[%s802 + $0x68] sm:$0xf]
    %v830 = vld [vmem:[%s802 + $0x6c] sm:$0xf]
    %v831 = vld [vmem:[%s802 + $0x70] sm:$0xf]
    %v832 = vld [vmem:[%s802 + $0x74] sm:$0xf]
    %v833 = vld [vmem:[%s802 + $0x78] sm:$0xf]
    %v834 = vld [vmem:[%s802 + $0x7c] sm:$0xf]
    %v835 = vld [vmem:[%s802 + $0x80] sm:$0xf]
    %v836 = vld [vmem:[%s802 + $0x84] sm:$0xf]
    %v837 = vld [vmem:[%s802 + $0x88] sm:$0xf]
    %v838 = vld [vmem:[%s802 + $0x8c] sm:$0xf]
    %v839 = vld [vmem:[%s802 + $0x90] sm:$0xf]
    %v840 = vld [vmem:[%s802 + $0x94] sm:$0xf]
    %v841 = vld [vmem:[%s802 + $0x98] sm:$0xf]
    %v842 = vld [vmem:[%s802 + $0x9c] sm:$0xf]
    %v843 = vld [vmem:[%s802 + $0xa0] sm:$0xf]
    %v844 = vld [vmem:[%s802 + $0xa4] sm:$0xf]
    %v845 = vld [vmem:[%s802 + $0xa8] sm:$0xf]
    %v846 = vld [vmem:[%s802 + $0xac] sm:$0xf]
    %v847 = vld [vmem:[%s802 + $0xb0] sm:$0xf]
    %v848 = vld [vmem:[%s802 + $0xb4] sm:$0xf]
    %v849 = vld [vmem:[%s802 + $0xb8] sm:$0xf]
    %v850 = vld [vmem:[%s802 + $0xbc] sm:$0xf]
    %v851 = vld [vmem:[%s802 + $0xc0] sm:$0xf]
    %v852 = vld [vmem:[%s802 + $0xc4] sm:$0xf]
    %v853 = vld [vmem:[%s802 + $0xc8] sm:$0xf]
    %v854 = vld [vmem:[%s802 + $0xcc] sm:$0xf]
    %v859 = vrot.slane %v693, 1
    %v860 = vrot.slane %v694, 1
    %v861 = vrot.slane %v695, 1
    %v862 = vrot.slane %v696, 1
    %v918 = vunpack.c.l.b16 %v803
    %v919 = vunpack.c.l.b16 %v804
    %v920 = vunpack.c.l.b16 %v805
    %v921 = vunpack.c.l.b16 %v806
    %v922 = vunpack.c.l.b16 %v807
    %v923 = vunpack.c.l.b16 %v808
    %v924 = vunpack.c.l.b16 %v809
    %v925 = vunpack.c.l.b16 %v810
    %v926 = vunpack.c.l.b16 %v811
    %v927 = vunpack.c.l.b16 %v812
    %v928 = vunpack.c.l.b16 %v813
    %v929 = vunpack.c.l.b16 %v814
    %v930 = vunpack.c.l.b16 %v815
    %v931 = vunpack.c.l.b16 %v816
    %v932 = vunpack.c.l.b16 %v817
    %v933 = vunpack.c.l.b16 %v818
    %v934 = vunpack.c.l.b16 %v819
    %v935 = vunpack.c.l.b16 %v820
    %v936 = vunpack.c.l.b16 %v821
    %v937 = vunpack.c.l.b16 %v822
    %v938 = vunpack.c.l.b16 %v823
    %v939 = vunpack.c.l.b16 %v824
    %v940 = vunpack.c.l.b16 %v825
    %v941 = vunpack.c.l.b16 %v826
    %v942 = vunpack.c.l.b16 %v827
    %v943 = vunpack.c.l.b16 %v828
    %v944 = vunpack.c.l.b16 %v829
    %v945 = vunpack.c.l.b16 %v830
    %v946 = vunpack.c.l.b16 %v831
    %v947 = vunpack.c.l.b16 %v832
    %v948 = vunpack.c.l.b16 %v833
    %v949 = vunpack.c.l.b16 %v834
    %v950 = vunpack.c.l.b16 %v835
    %v951 = vunpack.c.l.b16 %v836
    %v952 = vunpack.c.l.b16 %v837
    %v953 = vunpack.c.l.b16 %v838
    %v954 = vunpack.c.l.b16 %v839
    %v955 = vunpack.c.l.b16 %v840
    %v956 = vunpack.c.l.b16 %v841
    %v957 = vunpack.c.l.b16 %v842
    %v958 = vunpack.c.l.b16 %v843
    %v959 = vunpack.c.l.b16 %v844
    %v960 = vunpack.c.l.b16 %v845
    %v961 = vunpack.c.l.b16 %v846
    %v962 = vunpack.c.l.b16 %v847
    %v963 = vunpack.c.l.b16 %v848
    %v964 = vunpack.c.l.b16 %v849
    %v965 = vunpack.c.l.b16 %v850
    %v966 = vunpack.c.l.b16 %v851
    %v967 = vunpack.c.l.b16 %v852
    %v968 = vunpack.c.l.b16 %v853
    %v969 = vunpack.c.l.b16 %v854
    %v970 = vpack.c.b16 %v919, %v918
    %v971 = vpack.c.b16 %v921, %v920
    %v972 = vpack.c.b16 %v923, %v922
    %v973 = vpack.c.b16 %v925, %v924
    %v974 = vpack.c.b16 %v927, %v926
    %v975 = vpack.c.b16 %v929, %v928
    %v976 = vpack.c.b16 %v931, %v930
    %v977 = vpack.c.b16 %v933, %v932
    %v978 = vpack.c.b16 %v935, %v934
    %v979 = vpack.c.b16 %v937, %v936
    %v980 = vpack.c.b16 %v939, %v938
    %v981 = vpack.c.b16 %v941, %v940
    %v982 = vpack.c.b16 %v943, %v942
    %v983 = vpack.c.b16 %v945, %v944
    %v984 = vpack.c.b16 %v947, %v946
    %v985 = vpack.c.b16 %v949, %v948
    %v986 = vpack.c.b16 %v951, %v950
    %v987 = vpack.c.b16 %v953, %v952
    %v988 = vpack.c.b16 %v955, %v954
    %v989 = vpack.c.b16 %v957, %v956
    %v990 = vpack.c.b16 %v959, %v958
    %v991 = vpack.c.b16 %v961, %v960
    %v992 = vpack.c.b16 %v963, %v962
    %v993 = vpack.c.b16 %v965, %v964
    %v994 = vpack.c.b16 %v967, %v966
    %v995 = vpack.c.b16 %v969, %v968
    %vm1022 = vcmask 261120
    %v1024 = vsel %vm1022, %v862, 0
    %1026 = vmatprep.subr.bf16.mxu0 0
    %1027 = vmatpush1.bf16.msra.mxu0 %v970
    %1028 = vmatprep.subr.bf16.mxu0 0
    %1029 = vmatpush1.bf16.msra.mxu0 %v971
    %1030 = vmatprep.subr.bf16.mxu0 0
    %1031 = vmatpush1.bf16.msra.mxu0 %v972
    %1032 = vmatprep.subr.bf16.mxu0 0
    %1033 = vmatpush1.bf16.msra.mxu0 %v973
    %1034 = vmatprep.subr.bf16.mxu0 0
    %1035 = vmatpush1.bf16.msra.mxu0 %v974
    %1036 = vmatprep.subr.bf16.mxu0 0
    %1037 = vmatpush1.bf16.msra.mxu0 %v975
    %1038 = vmatprep.subr.bf16.mxu0 0
    %1039 = vmatpush1.bf16.msra.mxu0 %v976
    %1040 = vmatprep.subr.bf16.mxu0 0
    %1041 = vmatpush1.bf16.msra.mxu0 %v977
    %1042 = vmatprep.subr.bf16.mxu0 0
    %1043 = vmatpush1.bf16.msra.mxu0 %v978
    %1044 = vmatprep.subr.bf16.mxu0 0
    %1045 = vmatpush1.bf16.msra.mxu0 %v979
    %1046 = vmatprep.subr.bf16.mxu0 0
    %1047 = vmatpush1.bf16.msra.mxu0 %v980
    %1048 = vmatprep.subr.bf16.mxu0 0
    %1049 = vmatpush1.bf16.msra.mxu0 %v981
    %1050 = vmatprep.subr.bf16.mxu0 0
    %1051 = vmatpush1.bf16.msra.mxu0 %v982
    %1052 = vmatprep.subr.bf16.mxu0 0
    %1053 = vmatpush1.bf16.msra.mxu0 %v983
    %1054 = vmatprep.subr.bf16.mxu0 0
    %1055 = vmatpush1.bf16.msra.mxu0 %v984
    %1056 = vmatprep.subr.bf16.mxu0 0
    %1057 = vmatpush1.bf16.msra.mxu0 %v985
    %1058 = vmatprep.mubr.bf16.mxu0 %v860
    %1059 = vmatmul.mubr.bf16.gmra.mrb[0].mxu0 %v859
    %v1060 = vpop.f32.mrb[0].mxu0
    %v1061 = vadd.f32 0.0, %v1060
    %v1062 = vpop.f32.mrb[0].mxu0
    %v1063 = vpop.f32.mrb[0].mxu0
    %v1064 = vpop.f32.mrb[0].mxu0
    %1065 = vdwg.mxu0
    %1066 = vmatprep.subr.bf16.mxu0 0
    %1067 = vmatpush1.bf16.msra.mxu0 %v986
    %1068 = vmatprep.subr.bf16.mxu0 0
    %1069 = vmatpush1.bf16.msra.mxu0 %v987
    %1070 = vmatprep.subr.bf16.mxu0 0
    %1071 = vmatpush1.bf16.msra.mxu0 %v988
    %1072 = vmatprep.subr.bf16.mxu0 0
    %1073 = vmatpush1.bf16.msra.mxu0 %v989
    %1074 = vmatprep.subr.bf16.mxu0 0
    %1075 = vmatpush1.bf16.msra.mxu0 %v990
    %1076 = vmatprep.subr.bf16.mxu0 0
    %1077 = vmatpush1.bf16.msra.mxu0 %v991
    %1078 = vmatprep.subr.bf16.mxu0 0
    %1079 = vmatpush1.bf16.msra.mxu0 %v992
    %1080 = vmatprep.subr.bf16.mxu0 0
    %1081 = vmatpush1.bf16.msra.mxu0 %v993
    %1082 = vmatprep.subr.bf16.mxu0 0
    %1083 = vmatpush1.bf16.msra.mxu0 %v994
    %1084 = vmatprep.subr.bf16.mxu0 0
    %1085 = vmatpush1.bf16.msra.mxu0 %v995
    %1086 = vmatprep.subr.bf16.mxu0 0
    %1087 = vmatpush1.bf16.msra.mxu0 0
    %1088 = vmatprep.subr.bf16.mxu0 0
    %1089 = vmatpush1.bf16.msra.mxu0 0
    %1090 = vmatprep.subr.bf16.mxu0 0
    %1091 = vmatpush1.bf16.msra.mxu0 0
    %1092 = vmatprep.subr.bf16.mxu0 0
    %1093 = vmatpush1.bf16.msra.mxu0 0
    %1094 = vmatprep.subr.bf16.mxu0 0
    %1095 = vmatpush1.bf16.msra.mxu0 0
    %1096 = vmatprep.subr.bf16.mxu0 0
    %1097 = vmatpush1.bf16.msra.mxu0 0
    %1098 = vmatprep.mubr.bf16.mxu0 %v1024
    %1099 = vmatmul.mubr.bf16.gmra.mrb[0].mxu0 %v861
    %v1100 = vpop.f32.mrb[0].mxu0
    %v1101 = vadd.f32 %v1061, %v1100
    %v1102 = vpop.f32.mrb[0].mxu0
    %v1103 = vpop.f32.mrb[0].mxu0
    %v1104 = vpop.f32.mrb[0].mxu0
    %1105 = vdwg.mxu0
    %v1158 = vunpack.c.l.b16 %v697
    %v1159 = vunpack.c.l.b16 %v698
    %v1160 = vunpack.c.l.b16 %v699
    %v1161 = vunpack.c.l.b16 %v700
    %v1162 = vunpack.c.l.b16 %v701
    %v1163 = vunpack.c.l.b16 %v702
    %v1164 = vunpack.c.l.b16 %v703
    %v1165 = vunpack.c.l.b16 %v704
    %v1166 = vunpack.c.l.b16 %v705
    %v1167 = vunpack.c.l.b16 %v706
    %v1168 = vunpack.c.l.b16 %v707
    %v1169 = vunpack.c.l.b16 %v708
    %v1170 = vunpack.c.l.b16 %v709
    %v1171 = vunpack.c.l.b16 %v710
    %v1172 = vunpack.c.l.b16 %v711
    %v1173 = vunpack.c.l.b16 %v712
    %v1174 = vunpack.c.l.b16 %v713
    %v1175 = vunpack.c.l.b16 %v714
    %v1176 = vunpack.c.l.b16 %v715
    %v1177 = vunpack.c.l.b16 %v716
    %v1178 = vunpack.c.l.b16 %v717
    %v1179 = vunpack.c.l.b16 %v718
    %v1180 = vunpack.c.l.b16 %v719
    %v1181 = vunpack.c.l.b16 %v720
    %v1182 = vunpack.c.l.b16 %v721
    %v1183 = vunpack.c.l.b16 %v722
    %v1184 = vunpack.c.l.b16 %v723
    %v1185 = vunpack.c.l.b16 %v724
    %v1186 = vunpack.c.l.b16 %v725
    %v1187 = vunpack.c.l.b16 %v726
    %v1188 = vunpack.c.l.b16 %v727
    %v1189 = vunpack.c.l.b16 %v728
    %v1190 = vunpack.c.l.b16 %v729
    %v1191 = vunpack.c.l.b16 %v730
    %v1192 = vunpack.c.l.b16 %v731
    %v1193 = vunpack.c.l.b16 %v732
    %v1194 = vunpack.c.l.b16 %v733
    %v1195 = vunpack.c.l.b16 %v734
    %v1196 = vunpack.c.l.b16 %v735
    %v1197 = vunpack.c.l.b16 %v736
    %v1198 = vunpack.c.l.b16 %v737
    %v1199 = vunpack.c.l.b16 %v738
    %v1200 = vunpack.c.l.b16 %v739
    %v1201 = vunpack.c.l.b16 %v740
    %v1202 = vunpack.c.l.b16 %v741
    %v1203 = vunpack.c.l.b16 %v742
    %v1204 = vunpack.c.l.b16 %v743
    %v1205 = vunpack.c.l.b16 %v744
    %v1206 = vunpack.c.l.b16 %v745
    %v1207 = vunpack.c.l.b16 %v746
    %v1208 = vunpack.c.l.b16 %v747
    %v1209 = vunpack.c.l.b16 %v748
    %v1210 = vpack.c.b16 %v1159, %v1158
    %v1211 = vpack.c.b16 %v1161, %v1160
    %v1212 = vpack.c.b16 %v1163, %v1162
    %v1213 = vpack.c.b16 %v1165, %v1164
    %v1214 = vpack.c.b16 %v1167, %v1166
    %v1215 = vpack.c.b16 %v1169, %v1168
    %v1216 = vpack.c.b16 %v1171, %v1170
    %v1217 = vpack.c.b16 %v1173, %v1172
    %v1218 = vpack.c.b16 %v1175, %v1174
    %v1219 = vpack.c.b16 %v1177, %v1176
    %v1220 = vpack.c.b16 %v1179, %v1178
    %v1221 = vpack.c.b16 %v1181, %v1180
    %v1222 = vpack.c.b16 %v1183, %v1182
    %v1223 = vpack.c.b16 %v1185, %v1184
    %v1224 = vpack.c.b16 %v1187, %v1186
    %v1225 = vpack.c.b16 %v1189, %v1188
    %v1226 = vpack.c.b16 %v1191, %v1190
    %v1227 = vpack.c.b16 %v1193, %v1192
    %v1228 = vpack.c.b16 %v1195, %v1194
    %v1229 = vpack.c.b16 %v1197, %v1196
    %v1230 = vpack.c.b16 %v1199, %v1198
    %v1231 = vpack.c.b16 %v1201, %v1200
    %v1232 = vpack.c.b16 %v1203, %v1202
    %v1233 = vpack.c.b16 %v1205, %v1204
    %v1234 = vpack.c.b16 %v1207, %v1206
    %v1235 = vpack.c.b16 %v1209, %v1208
    %v1263 = vsel %vm1022, %v696, 0
    %1265 = vmatprep.subr.bf16.mxu0 0
    %1266 = vmatpush1.bf16.msra.mxu0 %v1210
    %1267 = vmatprep.subr.bf16.mxu0 0
    %1268 = vmatpush1.bf16.msra.mxu0 %v1211
    %1269 = vmatprep.subr.bf16.mxu0 0
    %1270 = vmatpush1.bf16.msra.mxu0 %v1212
    %1271 = vmatprep.subr.bf16.mxu0 0
    %1272 = vmatpush1.bf16.msra.mxu0 %v1213
    %1273 = vmatprep.subr.bf16.mxu0 0
    %1274 = vmatpush1.bf16.msra.mxu0 %v1214
    %1275 = vmatprep.subr.bf16.mxu0 0
    %1276 = vmatpush1.bf16.msra.mxu0 %v1215
    %1277 = vmatprep.subr.bf16.mxu0 0
    %1278 = vmatpush1.bf16.msra.mxu0 %v1216
    %1279 = vmatprep.subr.bf16.mxu0 0
    %1280 = vmatpush1.bf16.msra.mxu0 %v1217
    %1281 = vmatprep.subr.bf16.mxu0 0
    %1282 = vmatpush1.bf16.msra.mxu0 %v1218
    %1283 = vmatprep.subr.bf16.mxu0 0
    %1284 = vmatpush1.bf16.msra.mxu0 %v1219
    %1285 = vmatprep.subr.bf16.mxu0 0
    %1286 = vmatpush1.bf16.msra.mxu0 %v1220
    %1287 = vmatprep.subr.bf16.mxu0 0
    %1288 = vmatpush1.bf16.msra.mxu0 %v1221
    %1289 = vmatprep.subr.bf16.mxu0 0
    %1290 = vmatpush1.bf16.msra.mxu0 %v1222
    %1291 = vmatprep.subr.bf16.mxu0 0
    %1292 = vmatpush1.bf16.msra.mxu0 %v1223
    %1293 = vmatprep.subr.bf16.mxu0 0
    %1294 = vmatpush1.bf16.msra.mxu0 %v1224
    %1295 = vmatprep.subr.bf16.mxu0 0
    %1296 = vmatpush1.bf16.msra.mxu0 %v1225
    %1297 = vmatprep.mubr.bf16.mxu0 %v694
    %1298 = vmatmul.mubr.bf16.gmra.mrb[0].mxu0 %v693
    %v1299 = vpop.f32.mrb[0].mxu0
    %v1300 = vadd.f32 %v1101, %v1299
    %v1301 = vpop.f32.mrb[0].mxu0
    %v1302 = vpop.f32.mrb[0].mxu0
    %v1303 = vpop.f32.mrb[0].mxu0
    %1304 = vdwg.mxu0
    %1305 = vmatprep.subr.bf16.mxu0 0
    %1306 = vmatpush1.bf16.msra.mxu0 %v1226
    %1307 = vmatprep.subr.bf16.mxu0 0
    %1308 = vmatpush1.bf16.msra.mxu0 %v1227
    %1309 = vmatprep.subr.bf16.mxu0 0
    %1310 = vmatpush1.bf16.msra.mxu0 %v1228
    %1311 = vmatprep.subr.bf16.mxu0 0
    %1312 = vmatpush1.bf16.msra.mxu0 %v1229
    %1313 = vmatprep.subr.bf16.mxu0 0
    %1314 = vmatpush1.bf16.msra.mxu0 %v1230
    %1315 = vmatprep.subr.bf16.mxu0 0
    %1316 = vmatpush1.bf16.msra.mxu0 %v1231
    %1317 = vmatprep.subr.bf16.mxu0 0
    %1318 = vmatpush1.bf16.msra.mxu0 %v1232
    %1319 = vmatprep.subr.bf16.mxu0 0
    %1320 = vmatpush1.bf16.msra.mxu0 %v1233
    %1321 = vmatprep.subr.bf16.mxu0 0
    %1322 = vmatpush1.bf16.msra.mxu0 %v1234
    %1323 = vmatprep.subr.bf16.mxu0 0
    %1324 = vmatpush1.bf16.msra.mxu0 %v1235
    %1325 = vmatprep.subr.bf16.mxu0 0
    %1326 = vmatpush1.bf16.msra.mxu0 0
    %1327 = vmatprep.subr.bf16.mxu0 0
    %1328 = vmatpush1.bf16.msra.mxu0 0
    %1329 = vmatprep.subr.bf16.mxu0 0
    %1330 = vmatpush1.bf16.msra.mxu0 0
    %1331 = vmatprep.subr.bf16.mxu0 0
    %1332 = vmatpush1.bf16.msra.mxu0 0
    %1333 = vmatprep.subr.bf16.mxu0 0
    %1334 = vmatpush1.bf16.msra.mxu0 0
    %1335 = vmatprep.subr.bf16.mxu0 0
    %1336 = vmatpush1.bf16.msra.mxu0 0
    %1337 = vmatprep.mubr.bf16.mxu0 %v1263
    %1338 = vmatmul.mubr.bf16.gmra.mrb[0].mxu0 %v695
    %v1339 = vpop.f32.mrb[0].mxu0
    %v1340 = vadd.f32 %v1300, %v1339
    %v1341 = vpop.f32.mrb[0].mxu0
    %v1342 = vpop.f32.mrb[0].mxu0
    %v1343 = vpop.f32.mrb[0].mxu0
    %1344 = vdwg.mxu0
    %s1345 = scalar_lea.vmem [#allocation9], 624
    %v1346 = vld [vmem:[%s1345] sm:$0xf]
    %v1347 = vld [vmem:[%s1345 + $0x4] sm:$0xf]
    %v1348 = vld [vmem:[%s1345 + $0x8] sm:$0xf]
    %v1349 = vld [vmem:[%s1345 + $0xc] sm:$0xf]
    %v1350 = vld [vmem:[%s1345 + $0x10] sm:$0xf]
    %v1351 = vld [vmem:[%s1345 + $0x14] sm:$0xf]
    %v1352 = vld [vmem:[%s1345 + $0x18] sm:$0xf]
    %v1353 = vld [vmem:[%s1345 + $0x1c] sm:$0xf]
    %v1354 = vld [vmem:[%s1345 + $0x20] sm:$0xf]
    %v1355 = vld [vmem:[%s1345 + $0x24] sm:$0xf]
    %v1356 = vld [vmem:[%s1345 + $0x28] sm:$0xf]
    %v1357 = vld [vmem:[%s1345 + $0x2c] sm:$0xf]
    %v1358 = vld [vmem:[%s1345 + $0x30] sm:$0xf]
    %v1359 = vld [vmem:[%s1345 + $0x34] sm:$0xf]
    %v1360 = vld [vmem:[%s1345 + $0x38] sm:$0xf]
    %v1361 = vld [vmem:[%s1345 + $0x3c] sm:$0xf]
    %v1362 = vld [vmem:[%s1345 + $0x40] sm:$0xf]
    %v1363 = vld [vmem:[%s1345 + $0x44] sm:$0xf]
    %v1364 = vld [vmem:[%s1345 + $0x48] sm:$0xf]
    %v1365 = vld [vmem:[%s1345 + $0x4c] sm:$0xf]
    %v1366 = vld [vmem:[%s1345 + $0x50] sm:$0xf]
    %v1367 = vld [vmem:[%s1345 + $0x54] sm:$0xf]
    %v1368 = vld [vmem:[%s1345 + $0x58] sm:$0xf]
    %v1369 = vld [vmem:[%s1345 + $0x5c] sm:$0xf]
    %v1370 = vld [vmem:[%s1345 + $0x60] sm:$0xf]
    %v1371 = vld [vmem:[%s1345 + $0x64] sm:$0xf]
    %v1372 = vld [vmem:[%s1345 + $0x68] sm:$0xf]
    %v1373 = vld [vmem:[%s1345 + $0x6c] sm:$0xf]
    %v1374 = vld [vmem:[%s1345 + $0x70] sm:$0xf]
    %v1375 = vld [vmem:[%s1345 + $0x74] sm:$0xf]
    %v1376 = vld [vmem:[%s1345 + $0x78] sm:$0xf]
    %v1377 = vld [vmem:[%s1345 + $0x7c] sm:$0xf]
    %v1378 = vld [vmem:[%s1345 + $0x80] sm:$0xf]
    %v1379 = vld [vmem:[%s1345 + $0x84] sm:$0xf]
    %v1380 = vld [vmem:[%s1345 + $0x88] sm:$0xf]
    %v1381 = vld [vmem:[%s1345 + $0x8c] sm:$0xf]
    %v1382 = vld [vmem:[%s1345 + $0x90] sm:$0xf]
    %v1383 = vld [vmem:[%s1345 + $0x94] sm:$0xf]
    %v1384 = vld [vmem:[%s1345 + $0x98] sm:$0xf]
    %v1385 = vld [vmem:[%s1345 + $0x9c] sm:$0xf]
    %v1386 = vld [vmem:[%s1345 + $0xa0] sm:$0xf]
    %v1387 = vld [vmem:[%s1345 + $0xa4] sm:$0xf]
    %v1388 = vld [vmem:[%s1345 + $0xa8] sm:$0xf]
    %v1389 = vld [vmem:[%s1345 + $0xac] sm:$0xf]
    %v1390 = vld [vmem:[%s1345 + $0xb0] sm:$0xf]
    %v1391 = vld [vmem:[%s1345 + $0xb4] sm:$0xf]
    %v1392 = vld [vmem:[%s1345 + $0xb8] sm:$0xf]
    %v1393 = vld [vmem:[%s1345 + $0xbc] sm:$0xf]
    %v1394 = vld [vmem:[%s1345 + $0xc0] sm:$0xf]
    %v1395 = vld [vmem:[%s1345 + $0xc4] sm:$0xf]
    %v1396 = vld [vmem:[%s1345 + $0xc8] sm:$0xf]
    %v1397 = vld [vmem:[%s1345 + $0xcc] sm:$0xf]
    %v1399 = vshrl.u32 %v693, 16
    %v1401 = vrot.slane %v1399, 1
    %v1403 = vshrl.u32 %v694, 16
    %v1405 = vrot.slane %v1403, 1
    %v1407 = vshrl.u32 %v695, 16
    %v1409 = vrot.slane %v1407, 1
    %v1410 = vshrl.u32 %v696, 16
    %v1412 = vrot.slane %v1410, 1
    %v1468 = vunpack.c.l.b16 %v1346
    %v1469 = vunpack.c.l.b16 %v1347
    %v1470 = vunpack.c.l.b16 %v1348
    %v1471 = vunpack.c.l.b16 %v1349
    %v1472 = vunpack.c.l.b16 %v1350
    %v1473 = vunpack.c.l.b16 %v1351
    %v1474 = vunpack.c.l.b16 %v1352
    %v1475 = vunpack.c.l.b16 %v1353
    %v1476 = vunpack.c.l.b16 %v1354
    %v1477 = vunpack.c.l.b16 %v1355
    %v1478 = vunpack.c.l.b16 %v1356
    %v1479 = vunpack.c.l.b16 %v1357
    %v1480 = vunpack.c.l.b16 %v1358
    %v1481 = vunpack.c.l.b16 %v1359
    %v1482 = vunpack.c.l.b16 %v1360
    %v1483 = vunpack.c.l.b16 %v1361
    %v1484 = vunpack.c.l.b16 %v1362
    %v1485 = vunpack.c.l.b16 %v1363
    %v1486 = vunpack.c.l.b16 %v1364
    %v1487 = vunpack.c.l.b16 %v1365
    %v1488 = vunpack.c.l.b16 %v1366
    %v1489 = vunpack.c.l.b16 %v1367
    %v1490 = vunpack.c.l.b16 %v1368
    %v1491 = vunpack.c.l.b16 %v1369
    %v1492 = vunpack.c.l.b16 %v1370
    %v1493 = vunpack.c.l.b16 %v1371
    %v1494 = vunpack.c.l.b16 %v1372
    %v1495 = vunpack.c.l.b16 %v1373
    %v1496 = vunpack.c.l.b16 %v1374
    %v1497 = vunpack.c.l.b16 %v1375
    %v1498 = vunpack.c.l.b16 %v1376
    %v1499 = vunpack.c.l.b16 %v1377
    %v1500 = vunpack.c.l.b16 %v1378
    %v1501 = vunpack.c.l.b16 %v1379
    %v1502 = vunpack.c.l.b16 %v1380
    %v1503 = vunpack.c.l.b16 %v1381
    %v1504 = vunpack.c.l.b16 %v1382
    %v1505 = vunpack.c.l.b16 %v1383
    %v1506 = vunpack.c.l.b16 %v1384
    %v1507 = vunpack.c.l.b16 %v1385
    %v1508 = vunpack.c.l.b16 %v1386
    %v1509 = vunpack.c.l.b16 %v1387
    %v1510 = vunpack.c.l.b16 %v1388
    %v1511 = vunpack.c.l.b16 %v1389
    %v1512 = vunpack.c.l.b16 %v1390
    %v1513 = vunpack.c.l.b16 %v1391
    %v1514 = vunpack.c.l.b16 %v1392
    %v1515 = vunpack.c.l.b16 %v1393
    %v1516 = vunpack.c.l.b16 %v1394
    %v1517 = vunpack.c.l.b16 %v1395
    %v1518 = vunpack.c.l.b16 %v1396
    %v1519 = vunpack.c.l.b16 %v1397
    %v1520 = vpack.c.b16 %v1469, %v1468
    %v1521 = vpack.c.b16 %v1471, %v1470
    %v1522 = vpack.c.b16 %v1473, %v1472
    %v1523 = vpack.c.b16 %v1475, %v1474
    %v1524 = vpack.c.b16 %v1477, %v1476
    %v1525 = vpack.c.b16 %v1479, %v1478
    %v1526 = vpack.c.b16 %v1481, %v1480
    %v1527 = vpack.c.b16 %v1483, %v1482
    %v1528 = vpack.c.b16 %v1485, %v1484
    %v1529 = vpack.c.b16 %v1487, %v1486
    %v1530 = vpack.c.b16 %v1489, %v1488
    %v1531 = vpack.c.b16 %v1491, %v1490
    %v1532 = vpack.c.b16 %v1493, %v1492
    %v1533 = vpack.c.b16 %v1495, %v1494
    %v1534 = vpack.c.b16 %v1497, %v1496
    %v1535 = vpack.c.b16 %v1499, %v1498
    %v1536 = vpack.c.b16 %v1501, %v1500
    %v1537 = vpack.c.b16 %v1503, %v1502
    %v1538 = vpack.c.b16 %v1505, %v1504
    %v1539 = vpack.c.b16 %v1507, %v1506
    %v1540 = vpack.c.b16 %v1509, %v1508
    %v1541 = vpack.c.b16 %v1511, %v1510
    %v1542 = vpack.c.b16 %v1513, %v1512
    %v1543 = vpack.c.b16 %v1515, %v1514
    %v1544 = vpack.c.b16 %v1517, %v1516
    %v1545 = vpack.c.b16 %v1519, %v1518
    %v1573 = vsel %vm1022, %v1412, 0
    %1575 = vmatprep.subr.bf16.mxu0 0
    %1576 = vmatpush1.bf16.msra.mxu0 %v1520
    %1577 = vmatprep.subr.bf16.mxu0 0
    %1578 = vmatpush1.bf16.msra.mxu0 %v1521
    %1579 = vmatprep.subr.bf16.mxu0 0
    %1580 = vmatpush1.bf16.msra.mxu0 %v1522
    %1581 = vmatprep.subr.bf16.mxu0 0
    %1582 = vmatpush1.bf16.msra.mxu0 %v1523
    %1583 = vmatprep.subr.bf16.mxu0 0
    %1584 = vmatpush1.bf16.msra.mxu0 %v1524
    %1585 = vmatprep.subr.bf16.mxu0 0
    %1586 = vmatpush1.bf16.msra.mxu0 %v1525
    %1587 = vmatprep.subr.bf16.mxu0 0
    %1588 = vmatpush1.bf16.msra.mxu0 %v1526
    %1589 = vmatprep.subr.bf16.mxu0 0
    %1590 = vmatpush1.bf16.msra.mxu0 %v1527
    %1591 = vmatprep.subr.bf16.mxu0 0
    %1592 = vmatpush1.bf16.msra.mxu0 %v1528
    %1593 = vmatprep.subr.bf16.mxu0 0
    %1594 = vmatpush1.bf16.msra.mxu0 %v1529
    %1595 = vmatprep.subr.bf16.mxu0 0
    %1596 = vmatpush1.bf16.msra.mxu0 %v1530
    %1597 = vmatprep.subr.bf16.mxu0 0
    %1598 = vmatpush1.bf16.msra.mxu0 %v1531
    %1599 = vmatprep.subr.bf16.mxu0 0
    %1600 = vmatpush1.bf16.msra.mxu0 %v1532
    %1601 = vmatprep.subr.bf16.mxu0 0
    %1602 = vmatpush1.bf16.msra.mxu0 %v1533
    %1603 = vmatprep.subr.bf16.mxu0 0
    %1604 = vmatpush1.bf16.msra.mxu0 %v1534
    %1605 = vmatprep.subr.bf16.mxu0 0
    %1606 = vmatpush1.bf16.msra.mxu0 %v1535
    %1607 = vmatprep.mubr.bf16.mxu0 %v1405
    %1608 = vmatmul.mubr.bf16.gmra.mrb[0].mxu0 %v1401
    %v1609 = vpop.f32.mrb[0].mxu0
    %v1610 = vadd.f32 0.0, %v1609
    %v1611 = vpop.f32.mrb[0].mxu0
    %v1612 = vpop.f32.mrb[0].mxu0
    %v1613 = vpop.f32.mrb[0].mxu0
    %1614 = vdwg.mxu0
    %1615 = vmatprep.subr.bf16.mxu0 0
    %1616 = vmatpush1.bf16.msra.mxu0 %v1536
    %1617 = vmatprep.subr.bf16.mxu0 0
    %1618 = vmatpush1.bf16.msra.mxu0 %v1537
    %1619 = vmatprep.subr.bf16.mxu0 0
    %1620 = vmatpush1.bf16.msra.mxu0 %v1538
    %1621 = vmatprep.subr.bf16.mxu0 0
    %1622 = vmatpush1.bf16.msra.mxu0 %v1539
    %1623 = vmatprep.subr.bf16.mxu0 0
    %1624 = vmatpush1.bf16.msra.mxu0 %v1540
    %1625 = vmatprep.subr.bf16.mxu0 0
    %1626 = vmatpush1.bf16.msra.mxu0 %v1541
    %1627 = vmatprep.subr.bf16.mxu0 0
    %1628 = vmatpush1.bf16.msra.mxu0 %v1542
    %1629 = vmatprep.subr.bf16.mxu0 0
    %1630 = vmatpush1.bf16.msra.mxu0 %v1543
    %1631 = vmatprep.subr.bf16.mxu0 0
    %1632 = vmatpush1.bf16.msra.mxu0 %v1544
    %1633 = vmatprep.subr.bf16.mxu0 0
    %1634 = vmatpush1.bf16.msra.mxu0 %v1545
    %1635 = vmatprep.subr.bf16.mxu0 0
    %1636 = vmatpush1.bf16.msra.mxu0 0
    %1637 = vmatprep.subr.bf16.mxu0 0
    %1638 = vmatpush1.bf16.msra.mxu0 0
    %1639 = vmatprep.subr.bf16.mxu0 0
    %1640 = vmatpush1.bf16.msra.mxu0 0
    %1641 = vmatprep.subr.bf16.mxu0 0
    %1642 = vmatpush1.bf16.msra.mxu0 0
    %1643 = vmatprep.subr.bf16.mxu0 0
    %1644 = vmatpush1.bf16.msra.mxu0 0
    %1645 = vmatprep.subr.bf16.mxu0 0
    %1646 = vmatpush1.bf16.msra.mxu0 0
    %1647 = vmatprep.mubr.bf16.mxu0 %v1573
    %1648 = vmatmul.mubr.bf16.gmra.mrb[0].mxu0 %v1409
    %v1649 = vpop.f32.mrb[0].mxu0
    %v1650 = vadd.f32 %v1610, %v1649
    %v1651 = vpop.f32.mrb[0].mxu0
    %v1652 = vpop.f32.mrb[0].mxu0
    %v1653 = vpop.f32.mrb[0].mxu0
    %1654 = vdwg.mxu0
    %v1710 = vunpack.c.l.b16 %v750
    %v1711 = vunpack.c.l.b16 %v751
    %v1712 = vunpack.c.l.b16 %v752
    %v1713 = vunpack.c.l.b16 %v753
    %v1714 = vunpack.c.l.b16 %v754
    %v1715 = vunpack.c.l.b16 %v755
    %v1716 = vunpack.c.l.b16 %v756
    %v1717 = vunpack.c.l.b16 %v757
    %v1718 = vunpack.c.l.b16 %v758
    %v1719 = vunpack.c.l.b16 %v759
    %v1720 = vunpack.c.l.b16 %v760
    %v1721 = vunpack.c.l.b16 %v761
    %v1722 = vunpack.c.l.b16 %v762
    %v1723 = vunpack.c.l.b16 %v763
    %v1724 = vunpack.c.l.b16 %v764
    %v1725 = vunpack.c.l.b16 %v765
    %v1726 = vunpack.c.l.b16 %v766
    %v1727 = vunpack.c.l.b16 %v767
    %v1728 = vunpack.c.l.b16 %v768
    %v1729 = vunpack.c.l.b16 %v769
    %v1730 = vunpack.c.l.b16 %v770
    %v1731 = vunpack.c.l.b16 %v771
    %v1732 = vunpack.c.l.b16 %v772
    %v1733 = vunpack.c.l.b16 %v773
    %v1734 = vunpack.c.l.b16 %v774
    %v1735 = vunpack.c.l.b16 %v775
    %v1736 = vunpack.c.l.b16 %v776
    %v1737 = vunpack.c.l.b16 %v777
    %v1738 = vunpack.c.l.b16 %v778
    %v1739 = vunpack.c.l.b16 %v779
    %v1740 = vunpack.c.l.b16 %v780
    %v1741 = vunpack.c.l.b16 %v781
    %v1742 = vunpack.c.l.b16 %v782
    %v1743 = vunpack.c.l.b16 %v783
    %v1744 = vunpack.c.l.b16 %v784
    %v1745 = vunpack.c.l.b16 %v785
    %v1746 = vunpack.c.l.b16 %v786
    %v1747 = vunpack.c.l.b16 %v787
    %v1748 = vunpack.c.l.b16 %v788
    %v1749 = vunpack.c.l.b16 %v789
    %v1750 = vunpack.c.l.b16 %v790
    %v1751 = vunpack.c.l.b16 %v791
    %v1752 = vunpack.c.l.b16 %v792
    %v1753 = vunpack.c.l.b16 %v793
    %v1754 = vunpack.c.l.b16 %v794
    %v1755 = vunpack.c.l.b16 %v795
    %v1756 = vunpack.c.l.b16 %v796
    %v1757 = vunpack.c.l.b16 %v797
    %v1758 = vunpack.c.l.b16 %v798
    %v1759 = vunpack.c.l.b16 %v799
    %v1760 = vunpack.c.l.b16 %v800
    %v1761 = vunpack.c.l.b16 %v801
    %v1762 = vpack.c.b16 %v1711, %v1710
    %v1763 = vpack.c.b16 %v1713, %v1712
    %v1764 = vpack.c.b16 %v1715, %v1714
    %v1765 = vpack.c.b16 %v1717, %v1716
    %v1766 = vpack.c.b16 %v1719, %v1718
    %v1767 = vpack.c.b16 %v1721, %v1720
    %v1768 = vpack.c.b16 %v1723, %v1722
    %v1769 = vpack.c.b16 %v1725, %v1724
    %v1770 = vpack.c.b16 %v1727, %v1726
    %v1771 = vpack.c.b16 %v1729, %v1728
    %v1772 = vpack.c.b16 %v1731, %v1730
    %v1773 = vpack.c.b16 %v1733, %v1732
    %v1774 = vpack.c.b16 %v1735, %v1734
    %v1775 = vpack.c.b16 %v1737, %v1736
    %v1776 = vpack.c.b16 %v1739, %v1738
    %v1777 = vpack.c.b16 %v1741, %v1740
    %v1778 = vpack.c.b16 %v1743, %v1742
    %v1779 = vpack.c.b16 %v1745, %v1744
    %v1780 = vpack.c.b16 %v1747, %v1746
    %v1781 = vpack.c.b16 %v1749, %v1748
    %v1782 = vpack.c.b16 %v1751, %v1750
    %v1783 = vpack.c.b16 %v1753, %v1752
    %v1784 = vpack.c.b16 %v1755, %v1754
    %v1785 = vpack.c.b16 %v1757, %v1756
    %v1786 = vpack.c.b16 %v1759, %v1758
    %v1787 = vpack.c.b16 %v1761, %v1760
    %v1815 = vsel %vm1022, %v1410, 0
    %1817 = vmatprep.subr.bf16.mxu0 0
    %1818 = vmatpush1.bf16.msra.mxu0 %v1762
    %1819 = vmatprep.subr.bf16.mxu0 0
    %1820 = vmatpush1.bf16.msra.mxu0 %v1763
    %1821 = vmatprep.subr.bf16.mxu0 0
    %1822 = vmatpush1.bf16.msra.mxu0 %v1764
    %1823 = vmatprep.subr.bf16.mxu0 0
    %1824 = vmatpush1.bf16.msra.mxu0 %v1765
    %1825 = vmatprep.subr.bf16.mxu0 0
    %1826 = vmatpush1.bf16.msra.mxu0 %v1766
    %1827 = vmatprep.subr.bf16.mxu0 0
    %1828 = vmatpush1.bf16.msra.mxu0 %v1767
    %1829 = vmatprep.subr.bf16.mxu0 0
    %1830 = vmatpush1.bf16.msra.mxu0 %v1768
    %1831 = vmatprep.subr.bf16.mxu0 0
    %1832 = vmatpush1.bf16.msra.mxu0 %v1769
    %1833 = vmatprep.subr.bf16.mxu0 0
    %1834 = vmatpush1.bf16.msra.mxu0 %v1770
    %1835 = vmatprep.subr.bf16.mxu0 0
    %1836 = vmatpush1.bf16.msra.mxu0 %v1771
    %1837 = vmatprep.subr.bf16.mxu0 0
    %1838 = vmatpush1.bf16.msra.mxu0 %v1772
    %1839 = vmatprep.subr.bf16.mxu0 0
    %1840 = vmatpush1.bf16.msra.mxu0 %v1773
    %1841 = vmatprep.subr.bf16.mxu0 0
    %1842 = vmatpush1.bf16.msra.mxu0 %v1774
    %1843 = vmatprep.subr.bf16.mxu0 0
    %1844 = vmatpush1.bf16.msra.mxu0 %v1775
    %1845 = vmatprep.subr.bf16.mxu0 0
    %1846 = vmatpush1.bf16.msra.mxu0 %v1776
    %1847 = vmatprep.subr.bf16.mxu0 0
    %1848 = vmatpush1.bf16.msra.mxu0 %v1777
    %1849 = vmatprep.mubr.bf16.mxu0 %v1403
    %1850 = vmatmul.mubr.bf16.gmra.mrb[0].mxu0 %v1399
    %v1851 = vpop.f32.mrb[0].mxu0
    %v1852 = vadd.f32 %v1650, %v1851
    %v1853 = vpop.f32.mrb[0].mxu0
    %v1854 = vpop.f32.mrb[0].mxu0
    %v1855 = vpop.f32.mrb[0].mxu0
    %1856 = vdwg.mxu0
    %1857 = vmatprep.subr.bf16.mxu0 0
    %1858 = vmatpush1.bf16.msra.mxu0 %v1778
    %1859 = vmatprep.subr.bf16.mxu0 0
    %1860 = vmatpush1.bf16.msra.mxu0 %v1779
    %1861 = vmatprep.subr.bf16.mxu0 0
    %1862 = vmatpush1.bf16.msra.mxu0 %v1780
    %1863 = vmatprep.subr.bf16.mxu0 0
    %1864 = vmatpush1.bf16.msra.mxu0 %v1781
    %1865 = vmatprep.subr.bf16.mxu0 0
    %1866 = vmatpush1.bf16.msra.mxu0 %v1782
    %1867 = vmatprep.subr.bf16.mxu0 0
    %1868 = vmatpush1.bf16.msra.mxu0 %v1783
    %1869 = vmatprep.subr.bf16.mxu0 0
    %1870 = vmatpush1.bf16.msra.mxu0 %v1784
    %1871 = vmatprep.subr.bf16.mxu0 0
    %1872 = vmatpush1.bf16.msra.mxu0 %v1785
    %1873 = vmatprep.subr.bf16.mxu0 0
    %1874 = vmatpush1.bf16.msra.mxu0 %v1786
    %1875 = vmatprep.subr.bf16.mxu0 0
    %1876 = vmatpush1.bf16.msra.mxu0 %v1787
    %1877 = vmatprep.subr.bf16.mxu0 0
    %1878 = vmatpush1.bf16.msra.mxu0 0
    %1879 = vmatprep.subr.bf16.mxu0 0
    %1880 = vmatpush1.bf16.msra.mxu0 0
    %1881 = vmatprep.subr.bf16.mxu0 0
    %1882 = vmatpush1.bf16.msra.mxu0 0
    %1883 = vmatprep.subr.bf16.mxu0 0
    %1884 = vmatpush1.bf16.msra.mxu0 0
    %1885 = vmatprep.subr.bf16.mxu0 0
    %1886 = vmatpush1.bf16.msra.mxu0 0
    %1887 = vmatprep.subr.bf16.mxu0 0
    %1888 = vmatpush1.bf16.msra.mxu0 0
    %1889 = vmatprep.mubr.bf16.mxu0 %v1815
    %1890 = vmatmul.mubr.bf16.gmra.mrb[0].mxu0 %v1407
    %v1891 = vpop.f32.mrb[0].mxu0
    %v1892 = vadd.f32 %v1852, %v1891
    %v1893 = vpop.f32.mrb[0].mxu0
    %v1894 = vpop.f32.mrb[0].mxu0
    %v1895 = vpop.f32.mrb[0].mxu0
    %1896 = vdwg.mxu0
    %s1897 = scalar_lea.vmem [#allocation9], 832
    %v1898 = vld [vmem:[%s1897] sm:$0xf]
    %v1899 = vld [vmem:[%s1897 + $0x4] sm:$0xf]
    %v1900 = vld [vmem:[%s1897 + $0x8] sm:$0xf]
    %v1901 = vld [vmem:[%s1897 + $0xc] sm:$0xf]
    %v1902 = vld [vmem:[%s1897 + $0x10] sm:$0xf]
    %v1903 = vld [vmem:[%s1897 + $0x14] sm:$0xf]
    %v1904 = vld [vmem:[%s1897 + $0x18] sm:$0xf]
    %v1905 = vld [vmem:[%s1897 + $0x1c] sm:$0xf]
    %v1906 = vld [vmem:[%s1897 + $0x20] sm:$0xf]
    %v1907 = vld [vmem:[%s1897 + $0x24] sm:$0xf]
    %v1908 = vld [vmem:[%s1897 + $0x28] sm:$0xf]
    %v1909 = vld [vmem:[%s1897 + $0x2c] sm:$0xf]
    %v1910 = vld [vmem:[%s1897 + $0x30] sm:$0xf]
    %v1911 = vld [vmem:[%s1897 + $0x34] sm:$0xf]
    %v1912 = vld [vmem:[%s1897 + $0x38] sm:$0xf]
    %v1913 = vld [vmem:[%s1897 + $0x3c] sm:$0xf]
    %v1914 = vld [vmem:[%s1897 + $0x40] sm:$0xf]
    %v1915 = vld [vmem:[%s1897 + $0x44] sm:$0xf]
    %v1916 = vld [vmem:[%s1897 + $0x48] sm:$0xf]
    %v1917 = vld [vmem:[%s1897 + $0x4c] sm:$0xf]
    %v1918 = vld [vmem:[%s1897 + $0x50] sm:$0xf]
    %v1919 = vld [vmem:[%s1897 + $0x54] sm:$0xf]
    %v1920 = vld [vmem:[%s1897 + $0x58] sm:$0xf]
    %v1921 = vld [vmem:[%s1897 + $0x5c] sm:$0xf]
    %v1922 = vld [vmem:[%s1897 + $0x60] sm:$0xf]
    %v1923 = vld [vmem:[%s1897 + $0x64] sm:$0xf]
    %v1924 = vld [vmem:[%s1897 + $0x68] sm:$0xf]
    %v1925 = vld [vmem:[%s1897 + $0x6c] sm:$0xf]
    %v1926 = vld [vmem:[%s1897 + $0x70] sm:$0xf]
    %v1927 = vld [vmem:[%s1897 + $0x74] sm:$0xf]
    %v1928 = vld [vmem:[%s1897 + $0x78] sm:$0xf]
    %v1929 = vld [vmem:[%s1897 + $0x7c] sm:$0xf]
    %v1930 = vld [vmem:[%s1897 + $0x80] sm:$0xf]
    %v1931 = vld [vmem:[%s1897 + $0x84] sm:$0xf]
    %v1932 = vld [vmem:[%s1897 + $0x88] sm:$0xf]
    %v1933 = vld [vmem:[%s1897 + $0x8c] sm:$0xf]
    %v1934 = vld [vmem:[%s1897 + $0x90] sm:$0xf]
    %v1935 = vld [vmem:[%s1897 + $0x94] sm:$0xf]
    %v1936 = vld [vmem:[%s1897 + $0x98] sm:$0xf]
    %v1937 = vld [vmem:[%s1897 + $0x9c] sm:$0xf]
    %v1938 = vld [vmem:[%s1897 + $0xa0] sm:$0xf]
    %v1939 = vld [vmem:[%s1897 + $0xa4] sm:$0xf]
    %v1940 = vld [vmem:[%s1897 + $0xa8] sm:$0xf]
    %v1941 = vld [vmem:[%s1897 + $0xac] sm:$0xf]
    %v1942 = vld [vmem:[%s1897 + $0xb0] sm:$0xf]
    %v1943 = vld [vmem:[%s1897 + $0xb4] sm:$0xf]
    %v1944 = vld [vmem:[%s1897 + $0xb8] sm:$0xf]
    %v1945 = vld [vmem:[%s1897 + $0xbc] sm:$0xf]
    %v1946 = vld [vmem:[%s1897 + $0xc0] sm:$0xf]
    %v1947 = vld [vmem:[%s1897 + $0xc4] sm:$0xf]
    %v1948 = vld [vmem:[%s1897 + $0xc8] sm:$0xf]
    %v1949 = vld [vmem:[%s1897 + $0xcc] sm:$0xf]
    %v1950 = vrot.slane %v693, 2
    %v1951 = vrot.slane %v694, 2
    %v1952 = vrot.slane %v695, 2
    %v1953 = vrot.slane %v696, 2
    %v2009 = vunpack.c.l.b16 %v1898
    %v2010 = vunpack.c.l.b16 %v1899
    %v2011 = vunpack.c.l.b16 %v1900
    %v2012 = vunpack.c.l.b16 %v1901
    %v2013 = vunpack.c.l.b16 %v1902
    %v2014 = vunpack.c.l.b16 %v1903
    %v2015 = vunpack.c.l.b16 %v1904
    %v2016 = vunpack.c.l.b16 %v1905
    %v2017 = vunpack.c.l.b16 %v1906
    %v2018 = vunpack.c.l.b16 %v1907
    %v2019 = vunpack.c.l.b16 %v1908
    %v2020 = vunpack.c.l.b16 %v1909
    %v2021 = vunpack.c.l.b16 %v1910
    %v2022 = vunpack.c.l.b16 %v1911
    %v2023 = vunpack.c.l.b16 %v1912
    %v2024 = vunpack.c.l.b16 %v1913
    %v2025 = vunpack.c.l.b16 %v1914
    %v2026 = vunpack.c.l.b16 %v1915
    %v2027 = vunpack.c.l.b16 %v1916
    %v2028 = vunpack.c.l.b16 %v1917
    %v2029 = vunpack.c.l.b16 %v1918
    %v2030 = vunpack.c.l.b16 %v1919
    %v2031 = vunpack.c.l.b16 %v1920
    %v2032 = vunpack.c.l.b16 %v1921
    %v2033 = vunpack.c.l.b16 %v1922
    %v2034 = vunpack.c.l.b16 %v1923
    %v2035 = vunpack.c.l.b16 %v1924
    %v2036 = vunpack.c.l.b16 %v1925
    %v2037 = vunpack.c.l.b16 %v1926
    %v2038 = vunpack.c.l.b16 %v1927
    %v2039 = vunpack.c.l.b16 %v1928
    %v2040 = vunpack.c.l.b16 %v1929
    %v2041 = vunpack.c.l.b16 %v1930
    %v2042 = vunpack.c.l.b16 %v1931
    %v2043 = vunpack.c.l.b16 %v1932
    %v2044 = vunpack.c.l.b16 %v1933
    %v2045 = vunpack.c.l.b16 %v1934
    %v2046 = vunpack.c.l.b16 %v1935
    %v2047 = vunpack.c.l.b16 %v1936
    %v2048 = vunpack.c.l.b16 %v1937
    %v2049 = vunpack.c.l.b16 %v1938
    %v2050 = vunpack.c.l.b16 %v1939
    %v2051 = vunpack.c.l.b16 %v1940
    %v2052 = vunpack.c.l.b16 %v1941
    %v2053 = vunpack.c.l.b16 %v1942
    %v2054 = vunpack.c.l.b16 %v1943
    %v2055 = vunpack.c.l.b16 %v1944
    %v2056 = vunpack.c.l.b16 %v1945
    %v2057 = vunpack.c.l.b16 %v1946
    %v2058 = vunpack.c.l.b16 %v1947
    %v2059 = vunpack.c.l.b16 %v1948
    %v2060 = vunpack.c.l.b16 %v1949
    %v2061 = vpack.c.b16 %v2010, %v2009
    %v2062 = vpack.c.b16 %v2012, %v2011
    %v2063 = vpack.c.b16 %v2014, %v2013
    %v2064 = vpack.c.b16 %v2016, %v2015
    %v2065 = vpack.c.b16 %v2018, %v2017
    %v2066 = vpack.c.b16 %v2020, %v2019
    %v2067 = vpack.c.b16 %v2022, %v2021
    %v2068 = vpack.c.b16 %v2024, %v2023
    %v2069 = vpack.c.b16 %v2026, %v2025
    %v2070 = vpack.c.b16 %v2028, %v2027
    %v2071 = vpack.c.b16 %v2030, %v2029
    %v2072 = vpack.c.b16 %v2032, %v2031
    %v2073 = vpack.c.b16 %v2034, %v2033
    %v2074 = vpack.c.b16 %v2036, %v2035
    %v2075 = vpack.c.b16 %v2038, %v2037
    %v2076 = vpack.c.b16 %v2040, %v2039
    %v2077 = vpack.c.b16 %v2042, %v2041
    %v2078 = vpack.c.b16 %v2044, %v2043
    %v2079 = vpack.c.b16 %v2046, %v2045
    %v2080 = vpack.c.b16 %v2048, %v2047
    %v2081 = vpack.c.b16 %v2050, %v2049
    %v2082 = vpack.c.b16 %v2052, %v2051
    %v2083 = vpack.c.b16 %v2054, %v2053
    %v2084 = vpack.c.b16 %v2056, %v2055
    %v2085 = vpack.c.b16 %v2058, %v2057
    %v2086 = vpack.c.b16 %v2060, %v2059
    %v2114 = vsel %vm1022, %v1953, 0
    %2116 = vmatprep.subr.bf16.mxu0 0
    %2117 = vmatpush1.bf16.msra.mxu0 %v2061
    %2118 = vmatprep.subr.bf16.mxu0 0
    %2119 = vmatpush1.bf16.msra.mxu0 %v2062
    %2120 = vmatprep.subr.bf16.mxu0 0
    %2121 = vmatpush1.bf16.msra.mxu0 %v2063
    %2122 = vmatprep.subr.bf16.mxu0 0
    %2123 = vmatpush1.bf16.msra.mxu0 %v2064
    %2124 = vmatprep.subr.bf16.mxu0 0
    %2125 = vmatpush1.bf16.msra.mxu0 %v2065
    %2126 = vmatprep.subr.bf16.mxu0 0
    %2127 = vmatpush1.bf16.msra.mxu0 %v2066
    %2128 = vmatprep.subr.bf16.mxu0 0
    %2129 = vmatpush1.bf16.msra.mxu0 %v2067
    %2130 = vmatprep.subr.bf16.mxu0 0
    %2131 = vmatpush1.bf16.msra.mxu0 %v2068
    %2132 = vmatprep.subr.bf16.mxu0 0
    %2133 = vmatpush1.bf16.msra.mxu0 %v2069
    %2134 = vmatprep.subr.bf16.mxu0 0
    %2135 = vmatpush1.bf16.msra.mxu0 %v2070
    %2136 = vmatprep.subr.bf16.mxu0 0
    %2137 = vmatpush1.bf16.msra.mxu0 %v2071
    %2138 = vmatprep.subr.bf16.mxu0 0
    %2139 = vmatpush1.bf16.msra.mxu0 %v2072
    %2140 = vmatprep.subr.bf16.mxu0 0
    %2141 = vmatpush1.bf16.msra.mxu0 %v2073
    %2142 = vmatprep.subr.bf16.mxu0 0
    %2143 = vmatpush1.bf16.msra.mxu0 %v2074
    %2144 = vmatprep.subr.bf16.mxu0 0
    %2145 = vmatpush1.bf16.msra.mxu0 %v2075
    %2146 = vmatprep.subr.bf16.mxu0 0
    %2147 = vmatpush1.bf16.msra.mxu0 %v2076
    %2148 = vmatprep.mubr.bf16.mxu0 %v1951
    %2149 = vmatmul.mubr.bf16.gmra.mrb[0].mxu0 %v1950
    %v2150 = vpop.f32.mrb[0].mxu0
    %v2151 = vadd.f32 0.0, %v2150
    %v2152 = vpop.f32.mrb[0].mxu0
    %v2153 = vpop.f32.mrb[0].mxu0
    %v2154 = vpop.f32.mrb[0].mxu0
    %2155 = vdwg.mxu0
    %2156 = vmatprep.subr.bf16.mxu0 0
    %2157 = vmatpush1.bf16.msra.mxu0 %v2077
    %2158 = vmatprep.subr.bf16.mxu0 0
    %2159 = vmatpush1.bf16.msra.mxu0 %v2078
    %2160 = vmatprep.subr.bf16.mxu0 0
    %2161 = vmatpush1.bf16.msra.mxu0 %v2079
    %2162 = vmatprep.subr.bf16.mxu0 0
    %2163 = vmatpush1.bf16.msra.mxu0 %v2080
    %2164 = vmatprep.subr.bf16.mxu0 0
    %2165 = vmatpush1.bf16.msra.mxu0 %v2081
    %2166 = vmatprep.subr.bf16.mxu0 0
    %2167 = vmatpush1.bf16.msra.mxu0 %v2082
    %2168 = vmatprep.subr.bf16.mxu0 0
    %2169 = vmatpush1.bf16.msra.mxu0 %v2083
    %2170 = vmatprep.subr.bf16.mxu0 0
    %2171 = vmatpush1.bf16.msra.mxu0 %v2084
    %2172 = vmatprep.subr.bf16.mxu0 0
    %2173 = vmatpush1.bf16.msra.mxu0 %v2085
    %2174 = vmatprep.subr.bf16.mxu0 0
    %2175 = vmatpush1.bf16.msra.mxu0 %v2086
    %2176 = vmatprep.subr.bf16.mxu0 0
    %2177 = vmatpush1.bf16.msra.mxu0 0
    %2178 = vmatprep.subr.bf16.mxu0 0
    %2179 = vmatpush1.bf16.msra.mxu0 0
    %2180 = vmatprep.subr.bf16.mxu0 0
    %2181 = vmatpush1.bf16.msra.mxu0 0
    %2182 = vmatprep.subr.bf16.mxu0 0
    %2183 = vmatpush1.bf16.msra.mxu0 0
    %2184 = vmatprep.subr.bf16.mxu0 0
    %2185 = vmatpush1.bf16.msra.mxu0 0
    %2186 = vmatprep.subr.bf16.mxu0 0
    %2187 = vmatpush1.bf16.msra.mxu0 0
    %2188 = vmatprep.mubr.bf16.mxu0 %v2114
    %2189 = vmatmul.mubr.bf16.gmra.mrb[0].mxu0 %v1952
    %v2190 = vpop.f32.mrb[0].mxu0
    %v2191 = vadd.f32 %v2151, %v2190
    %v2192 = vpop.f32.mrb[0].mxu0
    %v2193 = vpop.f32.mrb[0].mxu0
    %v2194 = vpop.f32.mrb[0].mxu0
    %2195 = vdwg.mxu0
    %v2196 = vadd.f32 %v1340, %v2191
    %s2197 = scalar_lea.vmem [#allocation9], 1040
    %v2198 = vld [vmem:[%s2197] sm:$0xf]
    %v2199 = vld [vmem:[%s2197 + $0x4] sm:$0xf]
    %v2200 = vld [vmem:[%s2197 + $0x8] sm:$0xf]
    %v2201 = vld [vmem:[%s2197 + $0xc] sm:$0xf]
    %v2202 = vld [vmem:[%s2197 + $0x10] sm:$0xf]
    %v2203 = vld [vmem:[%s2197 + $0x14] sm:$0xf]
    %v2204 = vld [vmem:[%s2197 + $0x18] sm:$0xf]
    %v2205 = vld [vmem:[%s2197 + $0x1c] sm:$0xf]
    %v2206 = vld [vmem:[%s2197 + $0x20] sm:$0xf]
    %v2207 = vld [vmem:[%s2197 + $0x24] sm:$0xf]
    %v2208 = vld [vmem:[%s2197 + $0x28] sm:$0xf]
    %v2209 = vld [vmem:[%s2197 + $0x2c] sm:$0xf]
    %v2210 = vld [vmem:[%s2197 + $0x30] sm:$0xf]
    %v2211 = vld [vmem:[%s2197 + $0x34] sm:$0xf]
    %v2212 = vld [vmem:[%s2197 + $0x38] sm:$0xf]
    %v2213 = vld [vmem:[%s2197 + $0x3c] sm:$0xf]
    %v2214 = vld [vmem:[%s2197 + $0x40] sm:$0xf]
    %v2215 = vld [vmem:[%s2197 + $0x44] sm:$0xf]
    %v2216 = vld [vmem:[%s2197 + $0x48] sm:$0xf]
    %v2217 = vld [vmem:[%s2197 + $0x4c] sm:$0xf]
    %v2218 = vld [vmem:[%s2197 + $0x50] sm:$0xf]
    %v2219 = vld [vmem:[%s2197 + $0x54] sm:$0xf]
    %v2220 = vld [vmem:[%s2197 + $0x58] sm:$0xf]
    %v2221 = vld [vmem:[%s2197 + $0x5c] sm:$0xf]
    %v2222 = vld [vmem:[%s2197 + $0x60] sm:$0xf]
    %v2223 = vld [vmem:[%s2197 + $0x64] sm:$0xf]
    %v2224 = vld [vmem:[%s2197 + $0x68] sm:$0xf]
    %v2225 = vld [vmem:[%s2197 + $0x6c] sm:$0xf]
    %v2226 = vld [vmem:[%s2197 + $0x70] sm:$0xf]
    %v2227 = vld [vmem:[%s2197 + $0x74] sm:$0xf]
    %v2228 = vld [vmem:[%s2197 + $0x78] sm:$0xf]
    %v2229 = vld [vmem:[%s2197 + $0x7c] sm:$0xf]
    %v2230 = vld [vmem:[%s2197 + $0x80] sm:$0xf]
    %v2231 = vld [vmem:[%s2197 + $0x84] sm:$0xf]
    %v2232 = vld [vmem:[%s2197 + $0x88] sm:$0xf]
    %v2233 = vld [vmem:[%s2197 + $0x8c] sm:$0xf]
    %v2234 = vld [vmem:[%s2197 + $0x90] sm:$0xf]
    %v2235 = vld [vmem:[%s2197 + $0x94] sm:$0xf]
    %v2236 = vld [vmem:[%s2197 + $0x98] sm:$0xf]
    %v2237 = vld [vmem:[%s2197 + $0x9c] sm:$0xf]
    %v2238 = vld [vmem:[%s2197 + $0xa0] sm:$0xf]
    %v2239 = vld [vmem:[%s2197 + $0xa4] sm:$0xf]
    %v2240 = vld [vmem:[%s2197 + $0xa8] sm:$0xf]
    %v2241 = vld [vmem:[%s2197 + $0xac] sm:$0xf]
    %v2242 = vld [vmem:[%s2197 + $0xb0] sm:$0xf]
    %v2243 = vld [vmem:[%s2197 + $0xb4] sm:$0xf]
    %v2244 = vld [vmem:[%s2197 + $0xb8] sm:$0xf]
    %v2245 = vld [vmem:[%s2197 + $0xbc] sm:$0xf]
    %v2246 = vld [vmem:[%s2197 + $0xc0] sm:$0xf]
    %v2247 = vld [vmem:[%s2197 + $0xc4] sm:$0xf]
    %v2248 = vld [vmem:[%s2197 + $0xc8] sm:$0xf]
    %v2249 = vld [vmem:[%s2197 + $0xcc] sm:$0xf]
    %v2250 = vrot.slane %v1399, 2
    %v2251 = vrot.slane %v1403, 2
    %v2252 = vrot.slane %v1407, 2
    %v2253 = vrot.slane %v1410, 2
    %v2309 = vunpack.c.l.b16 %v2198
    %v2310 = vunpack.c.l.b16 %v2199
    %v2311 = vunpack.c.l.b16 %v2200
    %v2312 = vunpack.c.l.b16 %v2201
    %v2313 = vunpack.c.l.b16 %v2202
    %v2314 = vunpack.c.l.b16 %v2203
    %v2315 = vunpack.c.l.b16 %v2204
    %v2316 = vunpack.c.l.b16 %v2205
    %v2317 = vunpack.c.l.b16 %v2206
    %v2318 = vunpack.c.l.b16 %v2207
    %v2319 = vunpack.c.l.b16 %v2208
    %v2320 = vunpack.c.l.b16 %v2209
    %v2321 = vunpack.c.l.b16 %v2210
    %v2322 = vunpack.c.l.b16 %v2211
    %v2323 = vunpack.c.l.b16 %v2212
    %v2324 = vunpack.c.l.b16 %v2213
    %v2325 = vunpack.c.l.b16 %v2214
    %v2326 = vunpack.c.l.b16 %v2215
    %v2327 = vunpack.c.l.b16 %v2216
    %v2328 = vunpack.c.l.b16 %v2217
    %v2329 = vunpack.c.l.b16 %v2218
    %v2330 = vunpack.c.l.b16 %v2219
    %v2331 = vunpack.c.l.b16 %v2220
    %v2332 = vunpack.c.l.b16 %v2221
    %v2333 = vunpack.c.l.b16 %v2222
    %v2334 = vunpack.c.l.b16 %v2223
    %v2335 = vunpack.c.l.b16 %v2224
    %v2336 = vunpack.c.l.b16 %v2225
    %v2337 = vunpack.c.l.b16 %v2226
    %v2338 = vunpack.c.l.b16 %v2227
    %v2339 = vunpack.c.l.b16 %v2228
    %v2340 = vunpack.c.l.b16 %v2229
    %v2341 = vunpack.c.l.b16 %v2230
    %v2342 = vunpack.c.l.b16 %v2231
    %v2343 = vunpack.c.l.b16 %v2232
    %v2344 = vunpack.c.l.b16 %v2233
    %v2345 = vunpack.c.l.b16 %v2234
    %v2346 = vunpack.c.l.b16 %v2235
    %v2347 = vunpack.c.l.b16 %v2236
    %v2348 = vunpack.c.l.b16 %v2237
    %v2349 = vunpack.c.l.b16 %v2238
    %v2350 = vunpack.c.l.b16 %v2239
    %v2351 = vunpack.c.l.b16 %v2240
    %v2352 = vunpack.c.l.b16 %v2241
    %v2353 = vunpack.c.l.b16 %v2242
    %v2354 = vunpack.c.l.b16 %v2243
    %v2355 = vunpack.c.l.b16 %v2244
    %v2356 = vunpack.c.l.b16 %v2245
    %v2357 = vunpack.c.l.b16 %v2246
    %v2358 = vunpack.c.l.b16 %v2247
    %v2359 = vunpack.c.l.b16 %v2248
    %v2360 = vunpack.c.l.b16 %v2249
    %v2361 = vpack.c.b16 %v2310, %v2309
    %v2362 = vpack.c.b16 %v2312, %v2311
    %v2363 = vpack.c.b16 %v2314, %v2313
    %v2364 = vpack.c.b16 %v2316, %v2315
    %v2365 = vpack.c.b16 %v2318, %v2317
    %v2366 = vpack.c.b16 %v2320, %v2319
    %v2367 = vpack.c.b16 %v2322, %v2321
    %v2368 = vpack.c.b16 %v2324, %v2323
    %v2369 = vpack.c.b16 %v2326, %v2325
    %v2370 = vpack.c.b16 %v2328, %v2327
    %v2371 = vpack.c.b16 %v2330, %v2329
    %v2372 = vpack.c.b16 %v2332, %v2331
    %v2373 = vpack.c.b16 %v2334, %v2333
    %v2374 = vpack.c.b16 %v2336, %v2335
    %v2375 = vpack.c.b16 %v2338, %v2337
    %v2376 = vpack.c.b16 %v2340, %v2339
    %v2377 = vpack.c.b16 %v2342, %v2341
    %v2378 = vpack.c.b16 %v2344, %v2343
    %v2379 = vpack.c.b16 %v2346, %v2345
    %v2380 = vpack.c.b16 %v2348, %v2347
    %v2381 = vpack.c.b16 %v2350, %v2349
    %v2382 = vpack.c.b16 %v2352, %v2351
    %v2383 = vpack.c.b16 %v2354, %v2353
    %v2384 = vpack.c.b16 %v2356, %v2355
    %v2385 = vpack.c.b16 %v2358, %v2357
    %v2386 = vpack.c.b16 %v2360, %v2359
    %v2414 = vsel %vm1022, %v2253, 0
    %2416 = vmatprep.subr.bf16.mxu0 0
    %2417 = vmatpush1.bf16.msra.mxu0 %v2361
    %2418 = vmatprep.subr.bf16.mxu0 0
    %2419 = vmatpush1.bf16.msra.mxu0 %v2362
    %2420 = vmatprep.subr.bf16.mxu0 0
    %2421 = vmatpush1.bf16.msra.mxu0 %v2363
    %2422 = vmatprep.subr.bf16.mxu0 0
    %2423 = vmatpush1.bf16.msra.mxu0 %v2364
    %2424 = vmatprep.subr.bf16.mxu0 0
    %2425 = vmatpush1.bf16.msra.mxu0 %v2365
    %2426 = vmatprep.subr.bf16.mxu0 0
    %2427 = vmatpush1.bf16.msra.mxu0 %v2366
    %2428 = vmatprep.subr.bf16.mxu0 0
    %2429 = vmatpush1.bf16.msra.mxu0 %v2367
    %2430 = vmatprep.subr.bf16.mxu0 0
    %2431 = vmatpush1.bf16.msra.mxu0 %v2368
    %2432 = vmatprep.subr.bf16.mxu0 0
    %2433 = vmatpush1.bf16.msra.mxu0 %v2369
    %2434 = vmatprep.subr.bf16.mxu0 0
    %2435 = vmatpush1.bf16.msra.mxu0 %v2370
    %2436 = vmatprep.subr.bf16.mxu0 0
    %2437 = vmatpush1.bf16.msra.mxu0 %v2371
    %2438 = vmatprep.subr.bf16.mxu0 0
    %2439 = vmatpush1.bf16.msra.mxu0 %v2372
    %2440 = vmatprep.subr.bf16.mxu0 0
    %2441 = vmatpush1.bf16.msra.mxu0 %v2373
    %2442 = vmatprep.subr.bf16.mxu0 0
    %2443 = vmatpush1.bf16.msra.mxu0 %v2374
    %2444 = vmatprep.subr.bf16.mxu0 0
    %2445 = vmatpush1.bf16.msra.mxu0 %v2375
    %2446 = vmatprep.subr.bf16.mxu0 0
    %2447 = vmatpush1.bf16.msra.mxu0 %v2376
    %2448 = vmatprep.mubr.bf16.mxu0 %v2251
    %2449 = vmatmul.mubr.bf16.gmra.mrb[0].mxu0 %v2250
    %v2450 = vpop.f32.mrb[0].mxu0
    %v2451 = vadd.f32 0.0, %v2450
    %v2452 = vpop.f32.mrb[0].mxu0
    %v2453 = vpop.f32.mrb[0].mxu0
    %v2454 = vpop.f32.mrb[0].mxu0
    %2455 = vdwg.mxu0
    %2456 = vmatprep.subr.bf16.mxu0 0
    %2457 = vmatpush1.bf16.msra.mxu0 %v2377
    %2458 = vmatprep.subr.bf16.mxu0 0
    %2459 = vmatpush1.bf16.msra.mxu0 %v2378
    %2460 = vmatprep.subr.bf16.mxu0 0
    %2461 = vmatpush1.bf16.msra.mxu0 %v2379
    %2462 = vmatprep.subr.bf16.mxu0 0
    %2463 = vmatpush1.bf16.msra.mxu0 %v2380
    %2464 = vmatprep.subr.bf16.mxu0 0
    %2465 = vmatpush1.bf16.msra.mxu0 %v2381
    %2466 = vmatprep.subr.bf16.mxu0 0
    %2467 = vmatpush1.bf16.msra.mxu0 %v2382
    %2468 = vmatprep.subr.bf16.mxu0 0
    %2469 = vmatpush1.bf16.msra.mxu0 %v2383
    %2470 = vmatprep.subr.bf16.mxu0 0
    %2471 = vmatpush1.bf16.msra.mxu0 %v2384
    %2472 = vmatprep.subr.bf16.mxu0 0
    %2473 = vmatpush1.bf16.msra.mxu0 %v2385
    %2474 = vmatprep.subr.bf16.mxu0 0
    %2475 = vmatpush1.bf16.msra.mxu0 %v2386
    %2476 = vmatprep.subr.bf16.mxu0 0
    %2477 = vmatpush1.bf16.msra.mxu0 0
    %2478 = vmatprep.subr.bf16.mxu0 0
    %2479 = vmatpush1.bf16.msra.mxu0 0
    %2480 = vmatprep.subr.bf16.mxu0 0
    %2481 = vmatpush1.bf16.msra.mxu0 0
    %2482 = vmatprep.subr.bf16.mxu0 0
    %2483 = vmatpush1.bf16.msra.mxu0 0
    %2484 = vmatprep.subr.bf16.mxu0 0
    %2485 = vmatpush1.bf16.msra.mxu0 0
    %2486 = vmatprep.subr.bf16.mxu0 0
    %2487 = vmatpush1.bf16.msra.mxu0 0
    %2488 = vmatprep.mubr.bf16.mxu0 %v2414
    %2489 = vmatmul.mubr.bf16.gmra.mrb[0].mxu0 %v2252
    %v2490 = vpop.f32.mrb[0].mxu0
    %v2491 = vadd.f32 %v2451, %v2490
    %v2492 = vpop.f32.mrb[0].mxu0
    %v2493 = vpop.f32.mrb[0].mxu0
    %v2494 = vpop.f32.mrb[0].mxu0
    %2495 = vdwg.mxu0
    %v2496 = vadd.f32 %v1892, %v2491
    %s2497 = scalar_lea.vmem [#allocation9], 1248
    %v2498 = vld [vmem:[%s2497] sm:$0xf]
    %v2499 = vld [vmem:[%s2497 + $0x4] sm:$0xf]
    %v2500 = vld [vmem:[%s2497 + $0x8] sm:$0xf]
    %v2501 = vld [vmem:[%s2497 + $0xc] sm:$0xf]
    %v2502 = vld [vmem:[%s2497 + $0x10] sm:$0xf]
    %v2503 = vld [vmem:[%s2497 + $0x14] sm:$0xf]
    %v2504 = vld [vmem:[%s2497 + $0x18] sm:$0xf]
    %v2505 = vld [vmem:[%s2497 + $0x1c] sm:$0xf]
    %v2506 = vld [vmem:[%s2497 + $0x20] sm:$0xf]
    %v2507 = vld [vmem:[%s2497 + $0x24] sm:$0xf]
    %v2508 = vld [vmem:[%s2497 + $0x28] sm:$0xf]
    %v2509 = vld [vmem:[%s2497 + $0x2c] sm:$0xf]
    %v2510 = vld [vmem:[%s2497 + $0x30] sm:$0xf]
    %v2511 = vld [vmem:[%s2497 + $0x34] sm:$0xf]
    %v2512 = vld [vmem:[%s2497 + $0x38] sm:$0xf]
    %v2513 = vld [vmem:[%s2497 + $0x3c] sm:$0xf]
    %v2514 = vld [vmem:[%s2497 + $0x40] sm:$0xf]
    %v2515 = vld [vmem:[%s2497 + $0x44] sm:$0xf]
    %v2516 = vld [vmem:[%s2497 + $0x48] sm:$0xf]
    %v2517 = vld [vmem:[%s2497 + $0x4c] sm:$0xf]
    %v2518 = vld [vmem:[%s2497 + $0x50] sm:$0xf]
    %v2519 = vld [vmem:[%s2497 + $0x54] sm:$0xf]
    %v2520 = vld [vmem:[%s2497 + $0x58] sm:$0xf]
    %v2521 = vld [vmem:[%s2497 + $0x5c] sm:$0xf]
    %v2522 = vld [vmem:[%s2497 + $0x60] sm:$0xf]
    %v2523 = vld [vmem:[%s2497 + $0x64] sm:$0xf]
    %v2524 = vld [vmem:[%s2497 + $0x68] sm:$0xf]
    %v2525 = vld [vmem:[%s2497 + $0x6c] sm:$0xf]
    %v2526 = vld [vmem:[%s2497 + $0x70] sm:$0xf]
    %v2527 = vld [vmem:[%s2497 + $0x74] sm:$0xf]
    %v2528 = vld [vmem:[%s2497 + $0x78] sm:$0xf]
    %v2529 = vld [vmem:[%s2497 + $0x7c] sm:$0xf]
    %v2530 = vld [vmem:[%s2497 + $0x80] sm:$0xf]
    %v2531 = vld [vmem:[%s2497 + $0x84] sm:$0xf]
    %v2532 = vld [vmem:[%s2497 + $0x88] sm:$0xf]
    %v2533 = vld [vmem:[%s2497 + $0x8c] sm:$0xf]
    %v2534 = vld [vmem:[%s2497 + $0x90] sm:$0xf]
    %v2535 = vld [vmem:[%s2497 + $0x94] sm:$0xf]
    %v2536 = vld [vmem:[%s2497 + $0x98] sm:$0xf]
    %v2537 = vld [vmem:[%s2497 + $0x9c] sm:$0xf]
    %v2538 = vld [vmem:[%s2497 + $0xa0] sm:$0xf]
    %v2539 = vld [vmem:[%s2497 + $0xa4] sm:$0xf]
    %v2540 = vld [vmem:[%s2497 + $0xa8] sm:$0xf]
    %v2541 = vld [vmem:[%s2497 + $0xac] sm:$0xf]
    %v2542 = vld [vmem:[%s2497 + $0xb0] sm:$0xf]
    %v2543 = vld [vmem:[%s2497 + $0xb4] sm:$0xf]
    %v2544 = vld [vmem:[%s2497 + $0xb8] sm:$0xf]
    %v2545 = vld [vmem:[%s2497 + $0xbc] sm:$0xf]
    %v2546 = vld [vmem:[%s2497 + $0xc0] sm:$0xf]
    %v2547 = vld [vmem:[%s2497 + $0xc4] sm:$0xf]
    %v2548 = vld [vmem:[%s2497 + $0xc8] sm:$0xf]
    %v2549 = vld [vmem:[%s2497 + $0xcc] sm:$0xf]
    %v2550 = vrot.slane %v693, 3
    %v2551 = vrot.slane %v694, 3
    %v2552 = vrot.slane %v695, 3
    %v2553 = vrot.slane %v696, 3
    %v2609 = vunpack.c.l.b16 %v2498
    %v2610 = vunpack.c.l.b16 %v2499
    %v2611 = vunpack.c.l.b16 %v2500
    %v2612 = vunpack.c.l.b16 %v2501
    %v2613 = vunpack.c.l.b16 %v2502
    %v2614 = vunpack.c.l.b16 %v2503
    %v2615 = vunpack.c.l.b16 %v2504
    %v2616 = vunpack.c.l.b16 %v2505
    %v2617 = vunpack.c.l.b16 %v2506
    %v2618 = vunpack.c.l.b16 %v2507
    %v2619 = vunpack.c.l.b16 %v2508
    %v2620 = vunpack.c.l.b16 %v2509
    %v2621 = vunpack.c.l.b16 %v2510
    %v2622 = vunpack.c.l.b16 %v2511
    %v2623 = vunpack.c.l.b16 %v2512
    %v2624 = vunpack.c.l.b16 %v2513
    %v2625 = vunpack.c.l.b16 %v2514
    %v2626 = vunpack.c.l.b16 %v2515
    %v2627 = vunpack.c.l.b16 %v2516
    %v2628 = vunpack.c.l.b16 %v2517
    %v2629 = vunpack.c.l.b16 %v2518
    %v2630 = vunpack.c.l.b16 %v2519
    %v2631 = vunpack.c.l.b16 %v2520
    %v2632 = vunpack.c.l.b16 %v2521
    %v2633 = vunpack.c.l.b16 %v2522
    %v2634 = vunpack.c.l.b16 %v2523
    %v2635 = vunpack.c.l.b16 %v2524
    %v2636 = vunpack.c.l.b16 %v2525
    %v2637 = vunpack.c.l.b16 %v2526
    %v2638 = vunpack.c.l.b16 %v2527
    %v2639 = vunpack.c.l.b16 %v2528
    %v2640 = vunpack.c.l.b16 %v2529
    %v2641 = vunpack.c.l.b16 %v2530
    %v2642 = vunpack.c.l.b16 %v2531
    %v2643 = vunpack.c.l.b16 %v2532
    %v2644 = vunpack.c.l.b16 %v2533
    %v2645 = vunpack.c.l.b16 %v2534
    %v2646 = vunpack.c.l.b16 %v2535
    %v2647 = vunpack.c.l.b16 %v2536
    %v2648 = vunpack.c.l.b16 %v2537
    %v2649 = vunpack.c.l.b16 %v2538
    %v2650 = vunpack.c.l.b16 %v2539
    %v2651 = vunpack.c.l.b16 %v2540
    %v2652 = vunpack.c.l.b16 %v2541
    %v2653 = vunpack.c.l.b16 %v2542
    %v2654 = vunpack.c.l.b16 %v2543
    %v2655 = vunpack.c.l.b16 %v2544
    %v2656 = vunpack.c.l.b16 %v2545
    %v2657 = vunpack.c.l.b16 %v2546
    %v2658 = vunpack.c.l.b16 %v2547
    %v2659 = vunpack.c.l.b16 %v2548
    %v2660 = vunpack.c.l.b16 %v2549
    %v2661 = vpack.c.b16 %v2610, %v2609
    %v2662 = vpack.c.b16 %v2612, %v2611
    %v2663 = vpack.c.b16 %v2614, %v2613
    %v2664 = vpack.c.b16 %v2616, %v2615
    %v2665 = vpack.c.b16 %v2618, %v2617
    %v2666 = vpack.c.b16 %v2620, %v2619
    %v2667 = vpack.c.b16 %v2622, %v2621
    %v2668 = vpack.c.b16 %v2624, %v2623
    %v2669 = vpack.c.b16 %v2626, %v2625
    %v2670 = vpack.c.b16 %v2628, %v2627
    %v2671 = vpack.c.b16 %v2630, %v2629
    %v2672 = vpack.c.b16 %v2632, %v2631
    %v2673 = vpack.c.b16 %v2634, %v2633
    %v2674 = vpack.c.b16 %v2636, %v2635
    %v2675 = vpack.c.b16 %v2638, %v2637
    %v2676 = vpack.c.b16 %v2640, %v2639
    %v2677 = vpack.c.b16 %v2642, %v2641
    %v2678 = vpack.c.b16 %v2644, %v2643
    %v2679 = vpack.c.b16 %v2646, %v2645
    %v2680 = vpack.c.b16 %v2648, %v2647
    %v2681 = vpack.c.b16 %v2650, %v2649
    %v2682 = vpack.c.b16 %v2652, %v2651
    %v2683 = vpack.c.b16 %v2654, %v2653
    %v2684 = vpack.c.b16 %v2656, %v2655
    %v2685 = vpack.c.b16 %v2658, %v2657
    %v2686 = vpack.c.b16 %v2660, %v2659
    %v2714 = vsel %vm1022, %v2553, 0
    %2716 = vmatprep.subr.bf16.mxu0 0
    %2717 = vmatpush1.bf16.msra.mxu0 %v2661
    %2718 = vmatprep.subr.bf16.mxu0 0
    %2719 = vmatpush1.bf16.msra.mxu0 %v2662
    %2720 = vmatprep.subr.bf16.mxu0 0
    %2721 = vmatpush1.bf16.msra.mxu0 %v2663
    %2722 = vmatprep.subr.bf16.mxu0 0
    %2723 = vmatpush1.bf16.msra.mxu0 %v2664
    %2724 = vmatprep.subr.bf16.mxu0 0
    %2725 = vmatpush1.bf16.msra.mxu0 %v2665
    %2726 = vmatprep.subr.bf16.mxu0 0
    %2727 = vmatpush1.bf16.msra.mxu0 %v2666
    %2728 = vmatprep.subr.bf16.mxu0 0
    %2729 = vmatpush1.bf16.msra.mxu0 %v2667
    %2730 = vmatprep.subr.bf16.mxu0 0
    %2731 = vmatpush1.bf16.msra.mxu0 %v2668
    %2732 = vmatprep.subr.bf16.mxu0 0
    %2733 = vmatpush1.bf16.msra.mxu0 %v2669
    %2734 = vmatprep.subr.bf16.mxu0 0
    %2735 = vmatpush1.bf16.msra.mxu0 %v2670
    %2736 = vmatprep.subr.bf16.mxu0 0
    %2737 = vmatpush1.bf16.msra.mxu0 %v2671
    %2738 = vmatprep.subr.bf16.mxu0 0
    %2739 = vmatpush1.bf16.msra.mxu0 %v2672
    %2740 = vmatprep.subr.bf16.mxu0 0
    %2741 = vmatpush1.bf16.msra.mxu0 %v2673
    %2742 = vmatprep.subr.bf16.mxu0 0
    %2743 = vmatpush1.bf16.msra.mxu0 %v2674
    %2744 = vmatprep.subr.bf16.mxu0 0
    %2745 = vmatpush1.bf16.msra.mxu0 %v2675
    %2746 = vmatprep.subr.bf16.mxu0 0
    %2747 = vmatpush1.bf16.msra.mxu0 %v2676
    %2748 = vmatprep.mubr.bf16.mxu0 %v2551
    %2749 = vmatmul.mubr.bf16.gmra.mrb[0].mxu0 %v2550
    %v2750 = vpop.f32.mrb[0].mxu0
    %v2751 = vadd.f32 0.0, %v2750
    %v2752 = vpop.f32.mrb[0].mxu0
    %v2753 = vpop.f32.mrb[0].mxu0
    %v2754 = vpop.f32.mrb[0].mxu0
    %2755 = vdwg.mxu0
    %2756 = vmatprep.subr.bf16.mxu0 0
    %2757 = vmatpush1.bf16.msra.mxu0 %v2677
    %2758 = vmatprep.subr.bf16.mxu0 0
    %2759 = vmatpush1.bf16.msra.mxu0 %v2678
    %2760 = vmatprep.subr.bf16.mxu0 0
    %2761 = vmatpush1.bf16.msra.mxu0 %v2679
    %2762 = vmatprep.subr.bf16.mxu0 0
    %2763 = vmatpush1.bf16.msra.mxu0 %v2680
    %2764 = vmatprep.subr.bf16.mxu0 0
    %2765 = vmatpush1.bf16.msra.mxu0 %v2681
    %2766 = vmatprep.subr.bf16.mxu0 0
    %2767 = vmatpush1.bf16.msra.mxu0 %v2682
    %2768 = vmatprep.subr.bf16.mxu0 0
    %2769 = vmatpush1.bf16.msra.mxu0 %v2683
    %2770 = vmatprep.subr.bf16.mxu0 0
    %2771 = vmatpush1.bf16.msra.mxu0 %v2684
    %2772 = vmatprep.subr.bf16.mxu0 0
    %2773 = vmatpush1.bf16.msra.mxu0 %v2685
    %2774 = vmatprep.subr.bf16.mxu0 0
    %2775 = vmatpush1.bf16.msra.mxu0 %v2686
    %2776 = vmatprep.subr.bf16.mxu0 0
    %2777 = vmatpush1.bf16.msra.mxu0 0
    %2778 = vmatprep.subr.bf16.mxu0 0
    %2779 = vmatpush1.bf16.msra.mxu0 0
    %2780 = vmatprep.subr.bf16.mxu0 0
    %2781 = vmatpush1.bf16.msra.mxu0 0
    %2782 = vmatprep.subr.bf16.mxu0 0
    %2783 = vmatpush1.bf16.msra.mxu0 0
    %2784 = vmatprep.subr.bf16.mxu0 0
    %2785 = vmatpush1.bf16.msra.mxu0 0
    %2786 = vmatprep.subr.bf16.mxu0 0
    %2787 = vmatpush1.bf16.msra.mxu0 0
    %2788 = vmatprep.mubr.bf16.mxu0 %v2714
    %2789 = vmatmul.mubr.bf16.gmra.mrb[0].mxu0 %v2552
    %v2790 = vpop.f32.mrb[0].mxu0
    %v2791 = vadd.f32 %v2751, %v2790
    %v2792 = vpop.f32.mrb[0].mxu0
    %v2793 = vpop.f32.mrb[0].mxu0
    %v2794 = vpop.f32.mrb[0].mxu0
    %2795 = vdwg.mxu0
    %v2796 = vadd.f32 %v2196, %v2791
    %s2797 = scalar_lea.vmem [#allocation9], 1456
    %v2798 = vld [vmem:[%s2797] sm:$0xf]
    %v2799 = vld [vmem:[%s2797 + $0x4] sm:$0xf]
    %v2800 = vld [vmem:[%s2797 + $0x8] sm:$0xf]
    %v2801 = vld [vmem:[%s2797 + $0xc] sm:$0xf]
    %v2802 = vld [vmem:[%s2797 + $0x10] sm:$0xf]
    %v2803 = vld [vmem:[%s2797 + $0x14] sm:$0xf]
    %v2804 = vld [vmem:[%s2797 + $0x18] sm:$0xf]
    %v2805 = vld [vmem:[%s2797 + $0x1c] sm:$0xf]
    %v2806 = vld [vmem:[%s2797 + $0x20] sm:$0xf]
    %v2807 = vld [vmem:[%s2797 + $0x24] sm:$0xf]
    %v2808 = vld [vmem:[%s2797 + $0x28] sm:$0xf]
    %v2809 = vld [vmem:[%s2797 + $0x2c] sm:$0xf]
    %v2810 = vld [vmem:[%s2797 + $0x30] sm:$0xf]
    %v2811 = vld [vmem:[%s2797 + $0x34] sm:$0xf]
    %v2812 = vld [vmem:[%s2797 + $0x38] sm:$0xf]
    %v2813 = vld [vmem:[%s2797 + $0x3c] sm:$0xf]
    %v2814 = vld [vmem:[%s2797 + $0x40] sm:$0xf]
    %v2815 = vld [vmem:[%s2797 + $0x44] sm:$0xf]
    %v2816 = vld [vmem:[%s2797 + $0x48] sm:$0xf]
    %v2817 = vld [vmem:[%s2797 + $0x4c] sm:$0xf]
    %v2818 = vld [vmem:[%s2797 + $0x50] sm:$0xf]
    %v2819 = vld [vmem:[%s2797 + $0x54] sm:$0xf]
    %v2820 = vld [vmem:[%s2797 + $0x58] sm:$0xf]
    %v2821 = vld [vmem:[%s2797 + $0x5c] sm:$0xf]
    %v2822 = vld [vmem:[%s2797 + $0x60] sm:$0xf]
    %v2823 = vld [vmem:[%s2797 + $0x64] sm:$0xf]
    %v2824 = vld [vmem:[%s2797 + $0x68] sm:$0xf]
    %v2825 = vld [vmem:[%s2797 + $0x6c] sm:$0xf]
    %v2826 = vld [vmem:[%s2797 + $0x70] sm:$0xf]
    %v2827 = vld [vmem:[%s2797 + $0x74] sm:$0xf]
    %v2828 = vld [vmem:[%s2797 + $0x78] sm:$0xf]
    %v2829 = vld [vmem:[%s2797 + $0x7c] sm:$0xf]
    %v2830 = vld [vmem:[%s2797 + $0x80] sm:$0xf]
    %v2831 = vld [vmem:[%s2797 + $0x84] sm:$0xf]
    %v2832 = vld [vmem:[%s2797 + $0x88] sm:$0xf]
    %v2833 = vld [vmem:[%s2797 + $0x8c] sm:$0xf]
    %v2834 = vld [vmem:[%s2797 + $0x90] sm:$0xf]
    %v2835 = vld [vmem:[%s2797 + $0x94] sm:$0xf]
    %v2836 = vld [vmem:[%s2797 + $0x98] sm:$0xf]
    %v2837 = vld [vmem:[%s2797 + $0x9c] sm:$0xf]
    %v2838 = vld [vmem:[%s2797 + $0xa0] sm:$0xf]
    %v2839 = vld [vmem:[%s2797 + $0xa4] sm:$0xf]
    %v2840 = vld [vmem:[%s2797 + $0xa8] sm:$0xf]
    %v2841 = vld [vmem:[%s2797 + $0xac] sm:$0xf]
    %v2842 = vld [vmem:[%s2797 + $0xb0] sm:$0xf]
    %v2843 = vld [vmem:[%s2797 + $0xb4] sm:$0xf]
    %v2844 = vld [vmem:[%s2797 + $0xb8] sm:$0xf]
    %v2845 = vld [vmem:[%s2797 + $0xbc] sm:$0xf]
    %v2846 = vld [vmem:[%s2797 + $0xc0] sm:$0xf]
    %v2847 = vld [vmem:[%s2797 + $0xc4] sm:$0xf]
    %v2848 = vld [vmem:[%s2797 + $0xc8] sm:$0xf]
    %v2849 = vld [vmem:[%s2797 + $0xcc] sm:$0xf]
    %v2850 = vrot.slane %v1399, 3
    %v2851 = vrot.slane %v1403, 3
    %v2852 = vrot.slane %v1407, 3
    %v2853 = vrot.slane %v1410, 3
    %v2909 = vunpack.c.l.b16 %v2798
    %v2910 = vunpack.c.l.b16 %v2799
    %v2911 = vunpack.c.l.b16 %v2800
    %v2912 = vunpack.c.l.b16 %v2801
    %v2913 = vunpack.c.l.b16 %v2802
    %v2914 = vunpack.c.l.b16 %v2803
    %v2915 = vunpack.c.l.b16 %v2804
    %v2916 = vunpack.c.l.b16 %v2805
    %v2917 = vunpack.c.l.b16 %v2806
    %v2918 = vunpack.c.l.b16 %v2807
    %v2919 = vunpack.c.l.b16 %v2808
    %v2920 = vunpack.c.l.b16 %v2809
    %v2921 = vunpack.c.l.b16 %v2810
    %v2922 = vunpack.c.l.b16 %v2811
    %v2923 = vunpack.c.l.b16 %v2812
    %v2924 = vunpack.c.l.b16 %v2813
    %v2925 = vunpack.c.l.b16 %v2814
    %v2926 = vunpack.c.l.b16 %v2815
    %v2927 = vunpack.c.l.b16 %v2816
    %v2928 = vunpack.c.l.b16 %v2817
    %v2929 = vunpack.c.l.b16 %v2818
    %v2930 = vunpack.c.l.b16 %v2819
    %v2931 = vunpack.c.l.b16 %v2820
    %v2932 = vunpack.c.l.b16 %v2821
    %v2933 = vunpack.c.l.b16 %v2822
    %v2934 = vunpack.c.l.b16 %v2823
    %v2935 = vunpack.c.l.b16 %v2824
    %v2936 = vunpack.c.l.b16 %v2825
    %v2937 = vunpack.c.l.b16 %v2826
    %v2938 = vunpack.c.l.b16 %v2827
    %v2939 = vunpack.c.l.b16 %v2828
    %v2940 = vunpack.c.l.b16 %v2829
    %v2941 = vunpack.c.l.b16 %v2830
    %v2942 = vunpack.c.l.b16 %v2831
    %v2943 = vunpack.c.l.b16 %v2832
    %v2944 = vunpack.c.l.b16 %v2833
    %v2945 = vunpack.c.l.b16 %v2834
    %v2946 = vunpack.c.l.b16 %v2835
    %v2947 = vunpack.c.l.b16 %v2836
    %v2948 = vunpack.c.l.b16 %v2837
    %v2949 = vunpack.c.l.b16 %v2838
    %v2950 = vunpack.c.l.b16 %v2839
    %v2951 = vunpack.c.l.b16 %v2840
    %v2952 = vunpack.c.l.b16 %v2841
    %v2953 = vunpack.c.l.b16 %v2842
    %v2954 = vunpack.c.l.b16 %v2843
    %v2955 = vunpack.c.l.b16 %v2844
    %v2956 = vunpack.c.l.b16 %v2845
    %v2957 = vunpack.c.l.b16 %v2846
    %v2958 = vunpack.c.l.b16 %v2847
    %v2959 = vunpack.c.l.b16 %v2848
    %v2960 = vunpack.c.l.b16 %v2849
    %v2961 = vpack.c.b16 %v2910, %v2909
    %v2962 = vpack.c.b16 %v2912, %v2911
    %v2963 = vpack.c.b16 %v2914, %v2913
    %v2964 = vpack.c.b16 %v2916, %v2915
    %v2965 = vpack.c.b16 %v2918, %v2917
    %v2966 = vpack.c.b16 %v2920, %v2919
    %v2967 = vpack.c.b16 %v2922, %v2921
    %v2968 = vpack.c.b16 %v2924, %v2923
    %v2969 = vpack.c.b16 %v2926, %v2925
    %v2970 = vpack.c.b16 %v2928, %v2927
    %v2971 = vpack.c.b16 %v2930, %v2929
    %v2972 = vpack.c.b16 %v2932, %v2931
    %v2973 = vpack.c.b16 %v2934, %v2933
    %v2974 = vpack.c.b16 %v2936, %v2935
    %v2975 = vpack.c.b16 %v2938, %v2937
    %v2976 = vpack.c.b16 %v2940, %v2939
    %v2977 = vpack.c.b16 %v2942, %v2941
    %v2978 = vpack.c.b16 %v2944, %v2943
    %v2979 = vpack.c.b16 %v2946, %v2945
    %v2980 = vpack.c.b16 %v2948, %v2947
    %v2981 = vpack.c.b16 %v2950, %v2949
    %v2982 = vpack.c.b16 %v2952, %v2951
    %v2983 = vpack.c.b16 %v2954, %v2953
    %v2984 = vpack.c.b16 %v2956, %v2955
    %v2985 = vpack.c.b16 %v2958, %v2957
    %v2986 = vpack.c.b16 %v2960, %v2959
    %v3014 = vsel %vm1022, %v2853, 0
    %3016 = vmatprep.subr.bf16.mxu0 0
    %3017 = vmatpush1.bf16.msra.mxu0 %v2961
    %3018 = vmatprep.subr.bf16.mxu0 0
    %3019 = vmatpush1.bf16.msra.mxu0 %v2962
    %3020 = vmatprep.subr.bf16.mxu0 0
    %3021 = vmatpush1.bf16.msra.mxu0 %v2963
    %3022 = vmatprep.subr.bf16.mxu0 0
    %3023 = vmatpush1.bf16.msra.mxu0 %v2964
    %3024 = vmatprep.subr.bf16.mxu0 0
    %3025 = vmatpush1.bf16.msra.mxu0 %v2965
    %3026 = vmatprep.subr.bf16.mxu0 0
    %3027 = vmatpush1.bf16.msra.mxu0 %v2966
    %3028 = vmatprep.subr.bf16.mxu0 0
    %3029 = vmatpush1.bf16.msra.mxu0 %v2967
    %3030 = vmatprep.subr.bf16.mxu0 0
    %3031 = vmatpush1.bf16.msra.mxu0 %v2968
    %3032 = vmatprep.subr.bf16.mxu0 0
    %3033 = vmatpush1.bf16.msra.mxu0 %v2969
    %3034 = vmatprep.subr.bf16.mxu0 0
    %3035 = vmatpush1.bf16.msra.mxu0 %v2970
    %3036 = vmatprep.subr.bf16.mxu0 0
    %3037 = vmatpush1.bf16.msra.mxu0 %v2971
    %3038 = vmatprep.subr.bf16.mxu0 0
    %3039 = vmatpush1.bf16.msra.mxu0 %v2972
    %3040 = vmatprep.subr.bf16.mxu0 0
    %3041 = vmatpush1.bf16.msra.mxu0 %v2973
    %3042 = vmatprep.subr.bf16.mxu0 0
    %3043 = vmatpush1.bf16.msra.mxu0 %v2974
    %3044 = vmatprep.subr.bf16.mxu0 0
    %3045 = vmatpush1.bf16.msra.mxu0 %v2975
    %3046 = vmatprep.subr.bf16.mxu0 0
    %3047 = vmatpush1.bf16.msra.mxu0 %v2976
    %3048 = vmatprep.mubr.bf16.mxu0 %v2851
    %3049 = vmatmul.mubr.bf16.gmra.mrb[0].mxu0 %v2850
    %v3050 = vpop.f32.mrb[0].mxu0
    %v3051 = vadd.f32 0.0, %v3050
    %v3052 = vpop.f32.mrb[0].mxu0
    %v3053 = vpop.f32.mrb[0].mxu0
    %v3054 = vpop.f32.mrb[0].mxu0
    %3055 = vdwg.mxu0
    %3056 = vmatprep.subr.bf16.mxu0 0
    %3057 = vmatpush1.bf16.msra.mxu0 %v2977
    %3058 = vmatprep.subr.bf16.mxu0 0
    %3059 = vmatpush1.bf16.msra.mxu0 %v2978
    %3060 = vmatprep.subr.bf16.mxu0 0
    %3061 = vmatpush1.bf16.msra.mxu0 %v2979
    %3062 = vmatprep.subr.bf16.mxu0 0
    %3063 = vmatpush1.bf16.msra.mxu0 %v2980
    %3064 = vmatprep.subr.bf16.mxu0 0
    %3065 = vmatpush1.bf16.msra.mxu0 %v2981
    %3066 = vmatprep.subr.bf16.mxu0 0
    %3067 = vmatpush1.bf16.msra.mxu0 %v2982
    %3068 = vmatprep.subr.bf16.mxu0 0
    %3069 = vmatpush1.bf16.msra.mxu0 %v2983
    %3070 = vmatprep.subr.bf16.mxu0 0
    %3071 = vmatpush1.bf16.msra.mxu0 %v2984
    %3072 = vmatprep.subr.bf16.mxu0 0
    %3073 = vmatpush1.bf16.msra.mxu0 %v2985
    %3074 = vmatprep.subr.bf16.mxu0 0
    %3075 = vmatpush1.bf16.msra.mxu0 %v2986
    %3076 = vmatprep.subr.bf16.mxu0 0
    %3077 = vmatpush1.bf16.msra.mxu0 0
    %3078 = vmatprep.subr.bf16.mxu0 0
    %3079 = vmatpush1.bf16.msra.mxu0 0
    %3080 = vmatprep.subr.bf16.mxu0 0
    %3081 = vmatpush1.bf16.msra.mxu0 0
    %3082 = vmatprep.subr.bf16.mxu0 0
    %3083 = vmatpush1.bf16.msra.mxu0 0
    %3084 = vmatprep.subr.bf16.mxu0 0
    %3085 = vmatpush1.bf16.msra.mxu0 0
    %3086 = vmatprep.subr.bf16.mxu0 0
    %3087 = vmatpush1.bf16.msra.mxu0 0
    %3088 = vmatprep.mubr.bf16.mxu0 %v3014
    %3089 = vmatmul.mubr.bf16.gmra.mrb[0].mxu0 %v2852
    %v3090 = vpop.f32.mrb[0].mxu0
    %v3091 = vadd.f32 %v3051, %v3090
    %v3092 = vpop.f32.mrb[0].mxu0
    %v3093 = vpop.f32.mrb[0].mxu0
    %v3094 = vpop.f32.mrb[0].mxu0
    %3095 = vdwg.mxu0
    %v3096 = vadd.f32 %v2496, %v3091
    %v3097 = vpack.c.bf16 %v689, %v689
    %v3098 = vpack.c.bf16 %v690, %v690
    %v3099 = vpack.c.bf16 %v691, %v691
    %v3100 = vpack.c.bf16 %v692, %v692
    %s3101 = scalar_lea.vmem [#allocation9], 1664
    %v3102 = vld [vmem:[%s3101] sm:$0xf]
    %v3103 = vld [vmem:[%s3101 + $0x4] sm:$0xf]
    %v3104 = vld [vmem:[%s3101 + $0x8] sm:$0xf]
    %v3105 = vld [vmem:[%s3101 + $0xc] sm:$0xf]
    %v3106 = vld [vmem:[%s3101 + $0x10] sm:$0xf]
    %v3107 = vld [vmem:[%s3101 + $0x14] sm:$0xf]
    %v3108 = vld [vmem:[%s3101 + $0x18] sm:$0xf]
    %v3109 = vld [vmem:[%s3101 + $0x1c] sm:$0xf]
    %v3110 = vld [vmem:[%s3101 + $0x20] sm:$0xf]
    %v3111 = vld [vmem:[%s3101 + $0x24] sm:$0xf]
    %v3112 = vld [vmem:[%s3101 + $0x28] sm:$0xf]
    %v3113 = vld [vmem:[%s3101 + $0x2c] sm:$0xf]
    %v3114 = vld [vmem:[%s3101 + $0x30] sm:$0xf]
    %v3115 = vld [vmem:[%s3101 + $0x34] sm:$0xf]
    %v3116 = vld [vmem:[%s3101 + $0x38] sm:$0xf]
    %v3117 = vld [vmem:[%s3101 + $0x3c] sm:$0xf]
    %v3118 = vld [vmem:[%s3101 + $0x40] sm:$0xf]
    %v3119 = vld [vmem:[%s3101 + $0x44] sm:$0xf]
    %v3120 = vld [vmem:[%s3101 + $0x48] sm:$0xf]
    %v3121 = vld [vmem:[%s3101 + $0x4c] sm:$0xf]
    %v3122 = vld [vmem:[%s3101 + $0x50] sm:$0xf]
    %v3123 = vld [vmem:[%s3101 + $0x54] sm:$0xf]
    %v3124 = vld [vmem:[%s3101 + $0x58] sm:$0xf]
    %v3125 = vld [vmem:[%s3101 + $0x5c] sm:$0xf]
    %v3126 = vld [vmem:[%s3101 + $0x60] sm:$0xf]
    %v3127 = vld [vmem:[%s3101 + $0x64] sm:$0xf]
    %v3128 = vld [vmem:[%s3101 + $0x68] sm:$0xf]
    %v3129 = vld [vmem:[%s3101 + $0x6c] sm:$0xf]
    %v3130 = vld [vmem:[%s3101 + $0x70] sm:$0xf]
    %v3131 = vld [vmem:[%s3101 + $0x74] sm:$0xf]
    %v3132 = vld [vmem:[%s3101 + $0x78] sm:$0xf]
    %v3133 = vld [vmem:[%s3101 + $0x7c] sm:$0xf]
    %v3134 = vld [vmem:[%s3101 + $0x80] sm:$0xf]
    %v3135 = vld [vmem:[%s3101 + $0x84] sm:$0xf]
    %v3136 = vld [vmem:[%s3101 + $0x88] sm:$0xf]
    %v3137 = vld [vmem:[%s3101 + $0x8c] sm:$0xf]
    %v3138 = vld [vmem:[%s3101 + $0x90] sm:$0xf]
    %v3139 = vld [vmem:[%s3101 + $0x94] sm:$0xf]
    %v3140 = vld [vmem:[%s3101 + $0x98] sm:$0xf]
    %v3141 = vld [vmem:[%s3101 + $0x9c] sm:$0xf]
    %v3142 = vld [vmem:[%s3101 + $0xa0] sm:$0xf]
    %v3143 = vld [vmem:[%s3101 + $0xa4] sm:$0xf]
    %v3144 = vld [vmem:[%s3101 + $0xa8] sm:$0xf]
    %v3145 = vld [vmem:[%s3101 + $0xac] sm:$0xf]
    %v3146 = vld [vmem:[%s3101 + $0xb0] sm:$0xf]
    %v3147 = vld [vmem:[%s3101 + $0xb4] sm:$0xf]
    %v3148 = vld [vmem:[%s3101 + $0xb8] sm:$0xf]
    %v3149 = vld [vmem:[%s3101 + $0xbc] sm:$0xf]
    %v3150 = vld [vmem:[%s3101 + $0xc0] sm:$0xf]
    %v3151 = vld [vmem:[%s3101 + $0xc4] sm:$0xf]
    %v3152 = vld [vmem:[%s3101 + $0xc8] sm:$0xf]
    %v3153 = vld [vmem:[%s3101 + $0xcc] sm:$0xf]
    %v3206 = vunpack.c.l.b16 %v3102
    %v3207 = vunpack.c.l.b16 %v3103
    %v3208 = vunpack.c.l.b16 %v3104
    %v3209 = vunpack.c.l.b16 %v3105
    %v3210 = vunpack.c.l.b16 %v3106
    %v3211 = vunpack.c.l.b16 %v3107
    %v3212 = vunpack.c.l.b16 %v3108
    %v3213 = vunpack.c.l.b16 %v3109
    %v3214 = vunpack.c.l.b16 %v3110
    %v3215 = vunpack.c.l.b16 %v3111
    %v3216 = vunpack.c.l.b16 %v3112
    %v3217 = vunpack.c.l.b16 %v3113
    %v3218 = vunpack.c.l.b16 %v3114
    %v3219 = vunpack.c.l.b16 %v3115
    %v3220 = vunpack.c.l.b16 %v3116
    %v3221 = vunpack.c.l.b16 %v3117
    %v3222 = vunpack.c.l.b16 %v3118
    %v3223 = vunpack.c.l.b16 %v3119
    %v3224 = vunpack.c.l.b16 %v3120
    %v3225 = vunpack.c.l.b16 %v3121
    %v3226 = vunpack.c.l.b16 %v3122
    %v3227 = vunpack.c.l.b16 %v3123
    %v3228 = vunpack.c.l.b16 %v3124
    %v3229 = vunpack.c.l.b16 %v3125
    %v3230 = vunpack.c.l.b16 %v3126
    %v3231 = vunpack.c.l.b16 %v3127
    %v3232 = vunpack.c.l.b16 %v3128
    %v3233 = vunpack.c.l.b16 %v3129
    %v3234 = vunpack.c.l.b16 %v3130
    %v3235 = vunpack.c.l.b16 %v3131
    %v3236 = vunpack.c.l.b16 %v3132
    %v3237 = vunpack.c.l.b16 %v3133
    %v3238 = vunpack.c.l.b16 %v3134
    %v3239 = vunpack.c.l.b16 %v3135
    %v3240 = vunpack.c.l.b16 %v3136
    %v3241 = vunpack.c.l.b16 %v3137
    %v3242 = vunpack.c.l.b16 %v3138
    %v3243 = vunpack.c.l.b16 %v3139
    %v3244 = vunpack.c.l.b16 %v3140
    %v3245 = vunpack.c.l.b16 %v3141
    %v3246 = vunpack.c.l.b16 %v3142
    %v3247 = vunpack.c.l.b16 %v3143
    %v3248 = vunpack.c.l.b16 %v3144
    %v3249 = vunpack.c.l.b16 %v3145
    %v3250 = vunpack.c.l.b16 %v3146
    %v3251 = vunpack.c.l.b16 %v3147
    %v3252 = vunpack.c.l.b16 %v3148
    %v3253 = vunpack.c.l.b16 %v3149
    %v3254 = vunpack.c.l.b16 %v3150
    %v3255 = vunpack.c.l.b16 %v3151
    %v3256 = vunpack.c.l.b16 %v3152
    %v3257 = vunpack.c.l.b16 %v3153
    %v3258 = vpack.c.b16 %v3207, %v3206
    %v3259 = vpack.c.b16 %v3209, %v3208
    %v3260 = vpack.c.b16 %v3211, %v3210
    %v3261 = vpack.c.b16 %v3213, %v3212
    %v3262 = vpack.c.b16 %v3215, %v3214
    %v3263 = vpack.c.b16 %v3217, %v3216
    %v3264 = vpack.c.b16 %v3219, %v3218
    %v3265 = vpack.c.b16 %v3221, %v3220
    %v3266 = vpack.c.b16 %v3223, %v3222
    %v3267 = vpack.c.b16 %v3225, %v3224
    %v3268 = vpack.c.b16 %v3227, %v3226
    %v3269 = vpack.c.b16 %v3229, %v3228
    %v3270 = vpack.c.b16 %v3231, %v3230
    %v3271 = vpack.c.b16 %v3233, %v3232
    %v3272 = vpack.c.b16 %v3235, %v3234
    %v3273 = vpack.c.b16 %v3237, %v3236
    %v3274 = vpack.c.b16 %v3239, %v3238
    %v3275 = vpack.c.b16 %v3241, %v3240
    %v3276 = vpack.c.b16 %v3243, %v3242
    %v3277 = vpack.c.b16 %v3245, %v3244
    %v3278 = vpack.c.b16 %v3247, %v3246
    %v3279 = vpack.c.b16 %v3249, %v3248
    %v3280 = vpack.c.b16 %v3251, %v3250
    %v3281 = vpack.c.b16 %v3253, %v3252
    %v3282 = vpack.c.b16 %v3255, %v3254
    %v3283 = vpack.c.b16 %v3257, %v3256
    %v3311 = vsel %vm1022, %v3100, 0
    %3313 = vmatprep.subr.bf16.mxu0 0
    %3314 = vmatpush1.bf16.msra.mxu0 %v3258
    %3315 = vmatprep.subr.bf16.mxu0 0
    %3316 = vmatpush1.bf16.msra.mxu0 %v3259
    %3317 = vmatprep.subr.bf16.mxu0 0
    %3318 = vmatpush1.bf16.msra.mxu0 %v3260
    %3319 = vmatprep.subr.bf16.mxu0 0
    %3320 = vmatpush1.bf16.msra.mxu0 %v3261
    %3321 = vmatprep.subr.bf16.mxu0 0
    %3322 = vmatpush1.bf16.msra.mxu0 %v3262
    %3323 = vmatprep.subr.bf16.mxu0 0
    %3324 = vmatpush1.bf16.msra.mxu0 %v3263
    %3325 = vmatprep.subr.bf16.mxu0 0
    %3326 = vmatpush1.bf16.msra.mxu0 %v3264
    %3327 = vmatprep.subr.bf16.mxu0 0
    %3328 = vmatpush1.bf16.msra.mxu0 %v3265
    %3329 = vmatprep.subr.bf16.mxu0 0
    %3330 = vmatpush1.bf16.msra.mxu0 %v3266
    %3331 = vmatprep.subr.bf16.mxu0 0
    %3332 = vmatpush1.bf16.msra.mxu0 %v3267
    %3333 = vmatprep.subr.bf16.mxu0 0
    %3334 = vmatpush1.bf16.msra.mxu0 %v3268
    %3335 = vmatprep.subr.bf16.mxu0 0
    %3336 = vmatpush1.bf16.msra.mxu0 %v3269
    %3337 = vmatprep.subr.bf16.mxu0 0
    %3338 = vmatpush1.bf16.msra.mxu0 %v3270
    %3339 = vmatprep.subr.bf16.mxu0 0
    %3340 = vmatpush1.bf16.msra.mxu0 %v3271
    %3341 = vmatprep.subr.bf16.mxu0 0
    %3342 = vmatpush1.bf16.msra.mxu0 %v3272
    %3343 = vmatprep.subr.bf16.mxu0 0
    %3344 = vmatpush1.bf16.msra.mxu0 %v3273
    %3345 = vmatprep.mubr.bf16.mxu0 %v3098
    %3346 = vmatmul.mubr.bf16.gmra.mrb[0].mxu0 %v3097
    %v3347 = vpop.f32.mrb[0].mxu0
    %v3348 = vadd.f32 0.0, %v3347
    %v3349 = vpop.f32.mrb[0].mxu0
    %v3350 = vpop.f32.mrb[0].mxu0
    %v3351 = vpop.f32.mrb[0].mxu0
    %3352 = vdwg.mxu0
    %3353 = vmatprep.subr.bf16.mxu0 0
    %3354 = vmatpush1.bf16.msra.mxu0 %v3274
    %3355 = vmatprep.subr.bf16.mxu0 0
    %3356 = vmatpush1.bf16.msra.mxu0 %v3275
    %3357 = vmatprep.subr.bf16.mxu0 0
    %3358 = vmatpush1.bf16.msra.mxu0 %v3276
    %3359 = vmatprep.subr.bf16.mxu0 0
    %3360 = vmatpush1.bf16.msra.mxu0 %v3277
    %3361 = vmatprep.subr.bf16.mxu0 0
    %3362 = vmatpush1.bf16.msra.mxu0 %v3278
    %3363 = vmatprep.subr.bf16.mxu0 0
    %3364 = vmatpush1.bf16.msra.mxu0 %v3279
    %3365 = vmatprep.subr.bf16.mxu0 0
    %3366 = vmatpush1.bf16.msra.mxu0 %v3280
    %3367 = vmatprep.subr.bf16.mxu0 0
    %3368 = vmatpush1.bf16.msra.mxu0 %v3281
    %3369 = vmatprep.subr.bf16.mxu0 0
    %3370 = vmatpush1.bf16.msra.mxu0 %v3282
    %3371 = vmatprep.subr.bf16.mxu0 0
    %3372 = vmatpush1.bf16.msra.mxu0 %v3283
    %3373 = vmatprep.subr.bf16.mxu0 0
    %3374 = vmatpush1.bf16.msra.mxu0 0
    %3375 = vmatprep.subr.bf16.mxu0 0
    %3376 = vmatpush1.bf16.msra.mxu0 0
    %3377 = vmatprep.subr.bf16.mxu0 0
    %3378 = vmatpush1.bf16.msra.mxu0 0
    %3379 = vmatprep.subr.bf16.mxu0 0
    %3380 = vmatpush1.bf16.msra.mxu0 0
    %3381 = vmatprep.subr.bf16.mxu0 0
    %3382 = vmatpush1.bf16.msra.mxu0 0
    %3383 = vmatprep.subr.bf16.mxu0 0
    %3384 = vmatpush1.bf16.msra.mxu0 0
    %3385 = vmatprep.mubr.bf16.mxu0 %v3311
    %3386 = vmatmul.mubr.bf16.gmra.mrb[0].mxu0 %v3099
    %v3387 = vpop.f32.mrb[0].mxu0
    %v3388 = vadd.f32 %v3348, %v3387
    %v3389 = vpop.f32.mrb[0].mxu0
    %v3390 = vpop.f32.mrb[0].mxu0
    %v3391 = vpop.f32.mrb[0].mxu0
    %3392 = vdwg.mxu0
    %v3393 = vadd.f32 %v2796, %v3388
    %s3394 = scalar_lea.vmem [#allocation9], 1872
    %v3395 = vld [vmem:[%s3394] sm:$0xf]
    %v3396 = vld [vmem:[%s3394 + $0x4] sm:$0xf]
    %v3397 = vld [vmem:[%s3394 + $0x8] sm:$0xf]
    %v3398 = vld [vmem:[%s3394 + $0xc] sm:$0xf]
    %v3399 = vld [vmem:[%s3394 + $0x10] sm:$0xf]
    %v3400 = vld [vmem:[%s3394 + $0x14] sm:$0xf]
    %v3401 = vld [vmem:[%s3394 + $0x18] sm:$0xf]
    %v3402 = vld [vmem:[%s3394 + $0x1c] sm:$0xf]
    %v3403 = vld [vmem:[%s3394 + $0x20] sm:$0xf]
    %v3404 = vld [vmem:[%s3394 + $0x24] sm:$0xf]
    %v3405 = vld [vmem:[%s3394 + $0x28] sm:$0xf]
    %v3406 = vld [vmem:[%s3394 + $0x2c] sm:$0xf]
    %v3407 = vld [vmem:[%s3394 + $0x30] sm:$0xf]
    %v3408 = vld [vmem:[%s3394 + $0x34] sm:$0xf]
    %v3409 = vld [vmem:[%s3394 + $0x38] sm:$0xf]
    %v3410 = vld [vmem:[%s3394 + $0x3c] sm:$0xf]
    %v3411 = vld [vmem:[%s3394 + $0x40] sm:$0xf]
    %v3412 = vld [vmem:[%s3394 + $0x44] sm:$0xf]
    %v3413 = vld [vmem:[%s3394 + $0x48] sm:$0xf]
    %v3414 = vld [vmem:[%s3394 + $0x4c] sm:$0xf]
    %v3415 = vld [vmem:[%s3394 + $0x50] sm:$0xf]
    %v3416 = vld [vmem:[%s3394 + $0x54] sm:$0xf]
    %v3417 = vld [vmem:[%s3394 + $0x58] sm:$0xf]
    %v3418 = vld [vmem:[%s3394 + $0x5c] sm:$0xf]
    %v3419 = vld [vmem:[%s3394 + $0x60] sm:$0xf]
    %v3420 = vld [vmem:[%s3394 + $0x64] sm:$0xf]
    %v3421 = vld [vmem:[%s3394 + $0x68] sm:$0xf]
    %v3422 = vld [vmem:[%s3394 + $0x6c] sm:$0xf]
    %v3423 = vld [vmem:[%s3394 + $0x70] sm:$0xf]
    %v3424 = vld [vmem:[%s3394 + $0x74] sm:$0xf]
    %v3425 = vld [vmem:[%s3394 + $0x78] sm:$0xf]
    %v3426 = vld [vmem:[%s3394 + $0x7c] sm:$0xf]
    %v3427 = vld [vmem:[%s3394 + $0x80] sm:$0xf]
    %v3428 = vld [vmem:[%s3394 + $0x84] sm:$0xf]
    %v3429 = vld [vmem:[%s3394 + $0x88] sm:$0xf]
    %v3430 = vld [vmem:[%s3394 + $0x8c] sm:$0xf]
    %v3431 = vld [vmem:[%s3394 + $0x90] sm:$0xf]
    %v3432 = vld [vmem:[%s3394 + $0x94] sm:$0xf]
    %v3433 = vld [vmem:[%s3394 + $0x98] sm:$0xf]
    %v3434 = vld [vmem:[%s3394 + $0x9c] sm:$0xf]
    %v3435 = vld [vmem:[%s3394 + $0xa0] sm:$0xf]
    %v3436 = vld [vmem:[%s3394 + $0xa4] sm:$0xf]
    %v3437 = vld [vmem:[%s3394 + $0xa8] sm:$0xf]
    %v3438 = vld [vmem:[%s3394 + $0xac] sm:$0xf]
    %v3439 = vld [vmem:[%s3394 + $0xb0] sm:$0xf]
    %v3440 = vld [vmem:[%s3394 + $0xb4] sm:$0xf]
    %v3441 = vld [vmem:[%s3394 + $0xb8] sm:$0xf]
    %v3442 = vld [vmem:[%s3394 + $0xbc] sm:$0xf]
    %v3443 = vld [vmem:[%s3394 + $0xc0] sm:$0xf]
    %v3444 = vld [vmem:[%s3394 + $0xc4] sm:$0xf]
    %v3445 = vld [vmem:[%s3394 + $0xc8] sm:$0xf]
    %v3446 = vld [vmem:[%s3394 + $0xcc] sm:$0xf]
    %v3448 = vshrl.u32 %v3097, 16
    %v3451 = vshrl.u32 %v3098, 16
    %v3454 = vshrl.u32 %v3099, 16
    %v3456 = vshrl.u32 %v3100, 16
    %v3513 = vunpack.c.l.b16 %v3395
    %v3514 = vunpack.c.l.b16 %v3396
    %v3515 = vunpack.c.l.b16 %v3397
    %v3516 = vunpack.c.l.b16 %v3398
    %v3517 = vunpack.c.l.b16 %v3399
    %v3518 = vunpack.c.l.b16 %v3400
    %v3519 = vunpack.c.l.b16 %v3401
    %v3520 = vunpack.c.l.b16 %v3402
    %v3521 = vunpack.c.l.b16 %v3403
    %v3522 = vunpack.c.l.b16 %v3404
    %v3523 = vunpack.c.l.b16 %v3405
    %v3524 = vunpack.c.l.b16 %v3406
    %v3525 = vunpack.c.l.b16 %v3407
    %v3526 = vunpack.c.l.b16 %v3408
    %v3527 = vunpack.c.l.b16 %v3409
    %v3528 = vunpack.c.l.b16 %v3410
    %v3529 = vunpack.c.l.b16 %v3411
    %v3530 = vunpack.c.l.b16 %v3412
    %v3531 = vunpack.c.l.b16 %v3413
    %v3532 = vunpack.c.l.b16 %v3414
    %v3533 = vunpack.c.l.b16 %v3415
    %v3534 = vunpack.c.l.b16 %v3416
    %v3535 = vunpack.c.l.b16 %v3417
    %v3536 = vunpack.c.l.b16 %v3418
    %v3537 = vunpack.c.l.b16 %v3419
    %v3538 = vunpack.c.l.b16 %v3420
    %v3539 = vunpack.c.l.b16 %v3421
    %v3540 = vunpack.c.l.b16 %v3422
    %v3541 = vunpack.c.l.b16 %v3423
    %v3542 = vunpack.c.l.b16 %v3424
    %v3543 = vunpack.c.l.b16 %v3425
    %v3544 = vunpack.c.l.b16 %v3426
    %v3545 = vunpack.c.l.b16 %v3427
    %v3546 = vunpack.c.l.b16 %v3428
    %v3547 = vunpack.c.l.b16 %v3429
    %v3548 = vunpack.c.l.b16 %v3430
    %v3549 = vunpack.c.l.b16 %v3431
    %v3550 = vunpack.c.l.b16 %v3432
    %v3551 = vunpack.c.l.b16 %v3433
    %v3552 = vunpack.c.l.b16 %v3434
    %v3553 = vunpack.c.l.b16 %v3435
    %v3554 = vunpack.c.l.b16 %v3436
    %v3555 = vunpack.c.l.b16 %v3437
    %v3556 = vunpack.c.l.b16 %v3438
    %v3557 = vunpack.c.l.b16 %v3439
    %v3558 = vunpack.c.l.b16 %v3440
    %v3559 = vunpack.c.l.b16 %v3441
    %v3560 = vunpack.c.l.b16 %v3442
    %v3561 = vunpack.c.l.b16 %v3443
    %v3562 = vunpack.c.l.b16 %v3444
    %v3563 = vunpack.c.l.b16 %v3445
    %v3564 = vunpack.c.l.b16 %v3446
    %v3565 = vpack.c.b16 %v3514, %v3513
    %v3566 = vpack.c.b16 %v3516, %v3515
    %v3567 = vpack.c.b16 %v3518, %v3517
    %v3568 = vpack.c.b16 %v3520, %v3519
    %v3569 = vpack.c.b16 %v3522, %v3521
    %v3570 = vpack.c.b16 %v3524, %v3523
    %v3571 = vpack.c.b16 %v3526, %v3525
    %v3572 = vpack.c.b16 %v3528, %v3527
    %v3573 = vpack.c.b16 %v3530, %v3529
    %v3574 = vpack.c.b16 %v3532, %v3531
    %v3575 = vpack.c.b16 %v3534, %v3533
    %v3576 = vpack.c.b16 %v3536, %v3535
    %v3577 = vpack.c.b16 %v3538, %v3537
    %v3578 = vpack.c.b16 %v3540, %v3539
    %v3579 = vpack.c.b16 %v3542, %v3541
    %v3580 = vpack.c.b16 %v3544, %v3543
    %v3581 = vpack.c.b16 %v3546, %v3545
    %v3582 = vpack.c.b16 %v3548, %v3547
    %v3583 = vpack.c.b16 %v3550, %v3549
    %v3584 = vpack.c.b16 %v3552, %v3551
    %v3585 = vpack.c.b16 %v3554, %v3553
    %v3586 = vpack.c.b16 %v3556, %v3555
    %v3587 = vpack.c.b16 %v3558, %v3557
    %v3588 = vpack.c.b16 %v3560, %v3559
    %v3589 = vpack.c.b16 %v3562, %v3561
    %v3590 = vpack.c.b16 %v3564, %v3563
    %v3618 = vsel %vm1022, %v3456, 0
    %3620 = vmatprep.subr.bf16.mxu0 0
    %3621 = vmatpush1.bf16.msra.mxu0 %v3565
    %3622 = vmatprep.subr.bf16.mxu0 0
    %3623 = vmatpush1.bf16.msra.mxu0 %v3566
    %3624 = vmatprep.subr.bf16.mxu0 0
    %3625 = vmatpush1.bf16.msra.mxu0 %v3567
    %3626 = vmatprep.subr.bf16.mxu0 0
    %3627 = vmatpush1.bf16.msra.mxu0 %v3568
    %3628 = vmatprep.subr.bf16.mxu0 0
    %3629 = vmatpush1.bf16.msra.mxu0 %v3569
    %3630 = vmatprep.subr.bf16.mxu0 0
    %3631 = vmatpush1.bf16.msra.mxu0 %v3570
    %3632 = vmatprep.subr.bf16.mxu0 0
    %3633 = vmatpush1.bf16.msra.mxu0 %v3571
    %3634 = vmatprep.subr.bf16.mxu0 0
    %3635 = vmatpush1.bf16.msra.mxu0 %v3572
    %3636 = vmatprep.subr.bf16.mxu0 0
    %3637 = vmatpush1.bf16.msra.mxu0 %v3573
    %3638 = vmatprep.subr.bf16.mxu0 0
    %3639 = vmatpush1.bf16.msra.mxu0 %v3574
    %3640 = vmatprep.subr.bf16.mxu0 0
    %3641 = vmatpush1.bf16.msra.mxu0 %v3575
    %3642 = vmatprep.subr.bf16.mxu0 0
    %3643 = vmatpush1.bf16.msra.mxu0 %v3576
    %3644 = vmatprep.subr.bf16.mxu0 0
    %3645 = vmatpush1.bf16.msra.mxu0 %v3577
    %3646 = vmatprep.subr.bf16.mxu0 0
    %3647 = vmatpush1.bf16.msra.mxu0 %v3578
    %3648 = vmatprep.subr.bf16.mxu0 0
    %3649 = vmatpush1.bf16.msra.mxu0 %v3579
    %3650 = vmatprep.subr.bf16.mxu0 0
    %3651 = vmatpush1.bf16.msra.mxu0 %v3580
    %3652 = vmatprep.mubr.bf16.mxu0 %v3451
    %3653 = vmatmul.mubr.bf16.gmra.mrb[0].mxu0 %v3448
    %v3654 = vpop.f32.mrb[0].mxu0
    %v3655 = vadd.f32 0.0, %v3654
    %v3656 = vpop.f32.mrb[0].mxu0
    %v3657 = vpop.f32.mrb[0].mxu0
    %v3658 = vpop.f32.mrb[0].mxu0
    %3659 = vdwg.mxu0
    %3660 = vmatprep.subr.bf16.mxu0 0
    %3661 = vmatpush1.bf16.msra.mxu0 %v3581
    %3662 = vmatprep.subr.bf16.mxu0 0
    %3663 = vmatpush1.bf16.msra.mxu0 %v3582
    %3664 = vmatprep.subr.bf16.mxu0 0
    %3665 = vmatpush1.bf16.msra.mxu0 %v3583
    %3666 = vmatprep.subr.bf16.mxu0 0
    %3667 = vmatpush1.bf16.msra.mxu0 %v3584
    %3668 = vmatprep.subr.bf16.mxu0 0
    %3669 = vmatpush1.bf16.msra.mxu0 %v3585
    %3670 = vmatprep.subr.bf16.mxu0 0
    %3671 = vmatpush1.bf16.msra.mxu0 %v3586
    %3672 = vmatprep.subr.bf16.mxu0 0
    %3673 = vmatpush1.bf16.msra.mxu0 %v3587
    %3674 = vmatprep.subr.bf16.mxu0 0
    %3675 = vmatpush1.bf16.msra.mxu0 %v3588
    %3676 = vmatprep.subr.bf16.mxu0 0
    %3677 = vmatpush1.bf16.msra.mxu0 %v3589
    %3678 = vmatprep.subr.bf16.mxu0 0
    %3679 = vmatpush1.bf16.msra.mxu0 %v3590
    %3680 = vmatprep.subr.bf16.mxu0 0
    %3681 = vmatpush1.bf16.msra.mxu0 0
    %3682 = vmatprep.subr.bf16.mxu0 0
    %3683 = vmatpush1.bf16.msra.mxu0 0
    %3684 = vmatprep.subr.bf16.mxu0 0
    %3685 = vmatpush1.bf16.msra.mxu0 0
    %3686 = vmatprep.subr.bf16.mxu0 0
    %3687 = vmatpush1.bf16.msra.mxu0 0
    %3688 = vmatprep.subr.bf16.mxu0 0
    %3689 = vmatpush1.bf16.msra.mxu0 0
    %3690 = vmatprep.subr.bf16.mxu0 0
    %3691 = vmatpush1.bf16.msra.mxu0 0
    %3692 = vmatprep.mubr.bf16.mxu0 %v3618
    %3693 = vmatmul.mubr.bf16.gmra.mrb[0].mxu0 %v3454
    %v3694 = vpop.f32.mrb[0].mxu0
    %v3695 = vadd.f32 %v3655, %v3694
    %v3696 = vpop.f32.mrb[0].mxu0
    %v3697 = vpop.f32.mrb[0].mxu0
    %v3698 = vpop.f32.mrb[0].mxu0
    %3699 = vdwg.mxu0
    %v3700 = vadd.f32 %v3096, %v3695
    %s3701 = scalar_lea.vmem [#allocation9], 2080
    %v3702 = vld [vmem:[%s3701] sm:$0xf]
    %v3703 = vld [vmem:[%s3701 + $0x4] sm:$0xf]
    %v3704 = vld [vmem:[%s3701 + $0x8] sm:$0xf]
    %v3705 = vld [vmem:[%s3701 + $0xc] sm:$0xf]
    %v3706 = vld [vmem:[%s3701 + $0x10] sm:$0xf]
    %v3707 = vld [vmem:[%s3701 + $0x14] sm:$0xf]
    %v3708 = vld [vmem:[%s3701 + $0x18] sm:$0xf]
    %v3709 = vld [vmem:[%s3701 + $0x1c] sm:$0xf]
    %v3710 = vld [vmem:[%s3701 + $0x20] sm:$0xf]
    %v3711 = vld [vmem:[%s3701 + $0x24] sm:$0xf]
    %v3712 = vld [vmem:[%s3701 + $0x28] sm:$0xf]
    %v3713 = vld [vmem:[%s3701 + $0x2c] sm:$0xf]
    %v3714 = vld [vmem:[%s3701 + $0x30] sm:$0xf]
    %v3715 = vld [vmem:[%s3701 + $0x34] sm:$0xf]
    %v3716 = vld [vmem:[%s3701 + $0x38] sm:$0xf]
    %v3717 = vld [vmem:[%s3701 + $0x3c] sm:$0xf]
    %v3718 = vld [vmem:[%s3701 + $0x40] sm:$0xf]
    %v3719 = vld [vmem:[%s3701 + $0x44] sm:$0xf]
    %v3720 = vld [vmem:[%s3701 + $0x48] sm:$0xf]
    %v3721 = vld [vmem:[%s3701 + $0x4c] sm:$0xf]
    %v3722 = vld [vmem:[%s3701 + $0x50] sm:$0xf]
    %v3723 = vld [vmem:[%s3701 + $0x54] sm:$0xf]
    %v3724 = vld [vmem:[%s3701 + $0x58] sm:$0xf]
    %v3725 = vld [vmem:[%s3701 + $0x5c] sm:$0xf]
    %v3726 = vld [vmem:[%s3701 + $0x60] sm:$0xf]
    %v3727 = vld [vmem:[%s3701 + $0x64] sm:$0xf]
    %v3728 = vld [vmem:[%s3701 + $0x68] sm:$0xf]
    %v3729 = vld [vmem:[%s3701 + $0x6c] sm:$0xf]
    %v3730 = vld [vmem:[%s3701 + $0x70] sm:$0xf]
    %v3731 = vld [vmem:[%s3701 + $0x74] sm:$0xf]
    %v3732 = vld [vmem:[%s3701 + $0x78] sm:$0xf]
    %v3733 = vld [vmem:[%s3701 + $0x7c] sm:$0xf]
    %v3734 = vld [vmem:[%s3701 + $0x80] sm:$0xf]
    %v3735 = vld [vmem:[%s3701 + $0x84] sm:$0xf]
    %v3736 = vld [vmem:[%s3701 + $0x88] sm:$0xf]
    %v3737 = vld [vmem:[%s3701 + $0x8c] sm:$0xf]
    %v3738 = vld [vmem:[%s3701 + $0x90] sm:$0xf]
    %v3739 = vld [vmem:[%s3701 + $0x94] sm:$0xf]
    %v3740 = vld [vmem:[%s3701 + $0x98] sm:$0xf]
    %v3741 = vld [vmem:[%s3701 + $0x9c] sm:$0xf]
    %v3742 = vld [vmem:[%s3701 + $0xa0] sm:$0xf]
    %v3743 = vld [vmem:[%s3701 + $0xa4] sm:$0xf]
    %v3744 = vld [vmem:[%s3701 + $0xa8] sm:$0xf]
    %v3745 = vld [vmem:[%s3701 + $0xac] sm:$0xf]
    %v3746 = vld [vmem:[%s3701 + $0xb0] sm:$0xf]
    %v3747 = vld [vmem:[%s3701 + $0xb4] sm:$0xf]
    %v3748 = vld [vmem:[%s3701 + $0xb8] sm:$0xf]
    %v3749 = vld [vmem:[%s3701 + $0xbc] sm:$0xf]
    %v3750 = vld [vmem:[%s3701 + $0xc0] sm:$0xf]
    %v3751 = vld [vmem:[%s3701 + $0xc4] sm:$0xf]
    %v3752 = vld [vmem:[%s3701 + $0xc8] sm:$0xf]
    %v3753 = vld [vmem:[%s3701 + $0xcc] sm:$0xf]
    %v3758 = vrot.slane %v3097, 1
    %v3759 = vrot.slane %v3098, 1
    %v3760 = vrot.slane %v3099, 1
    %v3761 = vrot.slane %v3100, 1
    %v3817 = vunpack.c.l.b16 %v3702
    %v3818 = vunpack.c.l.b16 %v3703
    %v3819 = vunpack.c.l.b16 %v3704
    %v3820 = vunpack.c.l.b16 %v3705
    %v3821 = vunpack.c.l.b16 %v3706
    %v3822 = vunpack.c.l.b16 %v3707
    %v3823 = vunpack.c.l.b16 %v3708
    %v3824 = vunpack.c.l.b16 %v3709
    %v3825 = vunpack.c.l.b16 %v3710
    %v3826 = vunpack.c.l.b16 %v3711
    %v3827 = vunpack.c.l.b16 %v3712
    %v3828 = vunpack.c.l.b16 %v3713
    %v3829 = vunpack.c.l.b16 %v3714
    %v3830 = vunpack.c.l.b16 %v3715
    %v3831 = vunpack.c.l.b16 %v3716
    %v3832 = vunpack.c.l.b16 %v3717
    %v3833 = vunpack.c.l.b16 %v3718
    %v3834 = vunpack.c.l.b16 %v3719
    %v3835 = vunpack.c.l.b16 %v3720
    %v3836 = vunpack.c.l.b16 %v3721
    %v3837 = vunpack.c.l.b16 %v3722
    %v3838 = vunpack.c.l.b16 %v3723
    %v3839 = vunpack.c.l.b16 %v3724
    %v3840 = vunpack.c.l.b16 %v3725
    %v3841 = vunpack.c.l.b16 %v3726
    %v3842 = vunpack.c.l.b16 %v3727
    %v3843 = vunpack.c.l.b16 %v3728
    %v3844 = vunpack.c.l.b16 %v3729
    %v3845 = vunpack.c.l.b16 %v3730
    %v3846 = vunpack.c.l.b16 %v3731
    %v3847 = vunpack.c.l.b16 %v3732
    %v3848 = vunpack.c.l.b16 %v3733
    %v3849 = vunpack.c.l.b16 %v3734
    %v3850 = vunpack.c.l.b16 %v3735
    %v3851 = vunpack.c.l.b16 %v3736
    %v3852 = vunpack.c.l.b16 %v3737
    %v3853 = vunpack.c.l.b16 %v3738
    %v3854 = vunpack.c.l.b16 %v3739
    %v3855 = vunpack.c.l.b16 %v3740
    %v3856 = vunpack.c.l.b16 %v3741
    %v3857 = vunpack.c.l.b16 %v3742
    %v3858 = vunpack.c.l.b16 %v3743
    %v3859 = vunpack.c.l.b16 %v3744
    %v3860 = vunpack.c.l.b16 %v3745
    %v3861 = vunpack.c.l.b16 %v3746
    %v3862 = vunpack.c.l.b16 %v3747
    %v3863 = vunpack.c.l.b16 %v3748
    %v3864 = vunpack.c.l.b16 %v3749
    %v3865 = vunpack.c.l.b16 %v3750
    %v3866 = vunpack.c.l.b16 %v3751
    %v3867 = vunpack.c.l.b16 %v3752
    %v3868 = vunpack.c.l.b16 %v3753
    %v3869 = vpack.c.b16 %v3818, %v3817
    %v3870 = vpack.c.b16 %v3820, %v3819
    %v3871 = vpack.c.b16 %v3822, %v3821
    %v3872 = vpack.c.b16 %v3824, %v3823
    %v3873 = vpack.c.b16 %v3826, %v3825
    %v3874 = vpack.c.b16 %v3828, %v3827
    %v3875 = vpack.c.b16 %v3830, %v3829
    %v3876 = vpack.c.b16 %v3832, %v3831
    %v3877 = vpack.c.b16 %v3834, %v3833
    %v3878 = vpack.c.b16 %v3836, %v3835
    %v3879 = vpack.c.b16 %v3838, %v3837
    %v3880 = vpack.c.b16 %v3840, %v3839
    %v3881 = vpack.c.b16 %v3842, %v3841
    %v3882 = vpack.c.b16 %v3844, %v3843
    %v3883 = vpack.c.b16 %v3846, %v3845
    %v3884 = vpack.c.b16 %v3848, %v3847
    %v3885 = vpack.c.b16 %v3850, %v3849
    %v3886 = vpack.c.b16 %v3852, %v3851
    %v3887 = vpack.c.b16 %v3854, %v3853
    %v3888 = vpack.c.b16 %v3856, %v3855
    %v3889 = vpack.c.b16 %v3858, %v3857
    %v3890 = vpack.c.b16 %v3860, %v3859
    %v3891 = vpack.c.b16 %v3862, %v3861
    %v3892 = vpack.c.b16 %v3864, %v3863
    %v3893 = vpack.c.b16 %v3866, %v3865
    %v3894 = vpack.c.b16 %v3868, %v3867
    %v3922 = vsel %vm1022, %v3761, 0
    %3924 = vmatprep.subr.bf16.mxu0 0
    %3925 = vmatpush1.bf16.msra.mxu0 %v3869
    %3926 = vmatprep.subr.bf16.mxu0 0
    %3927 = vmatpush1.bf16.msra.mxu0 %v3870
    %3928 = vmatprep.subr.bf16.mxu0 0
    %3929 = vmatpush1.bf16.msra.mxu0 %v3871
    %3930 = vmatprep.subr.bf16.mxu0 0
    %3931 = vmatpush1.bf16.msra.mxu0 %v3872
    %3932 = vmatprep.subr.bf16.mxu0 0
    %3933 = vmatpush1.bf16.msra.mxu0 %v3873
    %3934 = vmatprep.subr.bf16.mxu0 0
    %3935 = vmatpush1.bf16.msra.mxu0 %v3874
    %3936 = vmatprep.subr.bf16.mxu0 0
    %3937 = vmatpush1.bf16.msra.mxu0 %v3875
    %3938 = vmatprep.subr.bf16.mxu0 0
    %3939 = vmatpush1.bf16.msra.mxu0 %v3876
    %3940 = vmatprep.subr.bf16.mxu0 0
    %3941 = vmatpush1.bf16.msra.mxu0 %v3877
    %3942 = vmatprep.subr.bf16.mxu0 0
    %3943 = vmatpush1.bf16.msra.mxu0 %v3878
    %3944 = vmatprep.subr.bf16.mxu0 0
    %3945 = vmatpush1.bf16.msra.mxu0 %v3879
    %3946 = vmatprep.subr.bf16.mxu0 0
    %3947 = vmatpush1.bf16.msra.mxu0 %v3880
    %3948 = vmatprep.subr.bf16.mxu0 0
    %3949 = vmatpush1.bf16.msra.mxu0 %v3881
    %3950 = vmatprep.subr.bf16.mxu0 0
    %3951 = vmatpush1.bf16.msra.mxu0 %v3882
    %3952 = vmatprep.subr.bf16.mxu0 0
    %3953 = vmatpush1.bf16.msra.mxu0 %v3883
    %3954 = vmatprep.subr.bf16.mxu0 0
    %3955 = vmatpush1.bf16.msra.mxu0 %v3884
    %3956 = vmatprep.mubr.bf16.mxu0 %v3759
    %3957 = vmatmul.mubr.bf16.gmra.mrb[0].mxu0 %v3758
    %v3958 = vpop.f32.mrb[0].mxu0
    %v3959 = vadd.f32 0.0, %v3958
    %v3960 = vpop.f32.mrb[0].mxu0
    %v3961 = vpop.f32.mrb[0].mxu0
    %v3962 = vpop.f32.mrb[0].mxu0
    %3963 = vdwg.mxu0
    %3964 = vmatprep.subr.bf16.mxu0 0
    %3965 = vmatpush1.bf16.msra.mxu0 %v3885
    %3966 = vmatprep.subr.bf16.mxu0 0
    %3967 = vmatpush1.bf16.msra.mxu0 %v3886
    %3968 = vmatprep.subr.bf16.mxu0 0
    %3969 = vmatpush1.bf16.msra.mxu0 %v3887
    %3970 = vmatprep.subr.bf16.mxu0 0
    %3971 = vmatpush1.bf16.msra.mxu0 %v3888
    %3972 = vmatprep.subr.bf16.mxu0 0
    %3973 = vmatpush1.bf16.msra.mxu0 %v3889
    %3974 = vmatprep.subr.bf16.mxu0 0
    %3975 = vmatpush1.bf16.msra.mxu0 %v3890
    %3976 = vmatprep.subr.bf16.mxu0 0
    %3977 = vmatpush1.bf16.msra.mxu0 %v3891
    %3978 = vmatprep.subr.bf16.mxu0 0
    %3979 = vmatpush1.bf16.msra.mxu0 %v3892
    %3980 = vmatprep.subr.bf16.mxu0 0
    %3981 = vmatpush1.bf16.msra.mxu0 %v3893
    %3982 = vmatprep.subr.bf16.mxu0 0
    %3983 = vmatpush1.bf16.msra.mxu0 %v3894
    %3984 = vmatprep.subr.bf16.mxu0 0
    %3985 = vmatpush1.bf16.msra.mxu0 0
    %3986 = vmatprep.subr.bf16.mxu0 0
    %3987 = vmatpush1.bf16.msra.mxu0 0
    %3988 = vmatprep.subr.bf16.mxu0 0
    %3989 = vmatpush1.bf16.msra.mxu0 0
    %3990 = vmatprep.subr.bf16.mxu0 0
    %3991 = vmatpush1.bf16.msra.mxu0 0
    %3992 = vmatprep.subr.bf16.mxu0 0
    %3993 = vmatpush1.bf16.msra.mxu0 0
    %3994 = vmatprep.subr.bf16.mxu0 0
    %3995 = vmatpush1.bf16.msra.mxu0 0
    %3996 = vmatprep.mubr.bf16.mxu0 %v3922
    %3997 = vmatmul.mubr.bf16.gmra.mrb[0].mxu0 %v3760
    %v3998 = vpop.f32.mrb[0].mxu0
    %v3999 = vadd.f32 %v3959, %v3998
    %v4000 = vpop.f32.mrb[0].mxu0
    %v4001 = vpop.f32.mrb[0].mxu0
    %v4002 = vpop.f32.mrb[0].mxu0
    %4003 = vdwg.mxu0
    %v4004 = vadd.f32 %v3393, %v3999
    %s4005 = scalar_lea.vmem [#allocation9], 2288
    %v4006 = vld [vmem:[%s4005] sm:$0xf]
    %v4007 = vld [vmem:[%s4005 + $0x4] sm:$0xf]
    %v4008 = vld [vmem:[%s4005 + $0x8] sm:$0xf]
    %v4009 = vld [vmem:[%s4005 + $0xc] sm:$0xf]
    %v4010 = vld [vmem:[%s4005 + $0x10] sm:$0xf]
    %v4011 = vld [vmem:[%s4005 + $0x14] sm:$0xf]
    %v4012 = vld [vmem:[%s4005 + $0x18] sm:$0xf]
    %v4013 = vld [vmem:[%s4005 + $0x1c] sm:$0xf]
    %v4014 = vld [vmem:[%s4005 + $0x20] sm:$0xf]
    %v4015 = vld [vmem:[%s4005 + $0x24] sm:$0xf]
    %v4016 = vld [vmem:[%s4005 + $0x28] sm:$0xf]
    %v4017 = vld [vmem:[%s4005 + $0x2c] sm:$0xf]
    %v4018 = vld [vmem:[%s4005 + $0x30] sm:$0xf]
    %v4019 = vld [vmem:[%s4005 + $0x34] sm:$0xf]
    %v4020 = vld [vmem:[%s4005 + $0x38] sm:$0xf]
    %v4021 = vld [vmem:[%s4005 + $0x3c] sm:$0xf]
    %v4022 = vld [vmem:[%s4005 + $0x40] sm:$0xf]
    %v4023 = vld [vmem:[%s4005 + $0x44] sm:$0xf]
    %v4024 = vld [vmem:[%s4005 + $0x48] sm:$0xf]
    %v4025 = vld [vmem:[%s4005 + $0x4c] sm:$0xf]
    %v4026 = vld [vmem:[%s4005 + $0x50] sm:$0xf]
    %v4027 = vld [vmem:[%s4005 + $0x54] sm:$0xf]
    %v4028 = vld [vmem:[%s4005 + $0x58] sm:$0xf]
    %v4029 = vld [vmem:[%s4005 + $0x5c] sm:$0xf]
    %v4030 = vld [vmem:[%s4005 + $0x60] sm:$0xf]
    %v4031 = vld [vmem:[%s4005 + $0x64] sm:$0xf]
    %v4032 = vld [vmem:[%s4005 + $0x68] sm:$0xf]
    %v4033 = vld [vmem:[%s4005 + $0x6c] sm:$0xf]
    %v4034 = vld [vmem:[%s4005 + $0x70] sm:$0xf]
    %v4035 = vld [vmem:[%s4005 + $0x74] sm:$0xf]
    %v4036 = vld [vmem:[%s4005 + $0x78] sm:$0xf]
    %v4037 = vld [vmem:[%s4005 + $0x7c] sm:$0xf]
    %v4038 = vld [vmem:[%s4005 + $0x80] sm:$0xf]
    %v4039 = vld [vmem:[%s4005 + $0x84] sm:$0xf]
    %v4040 = vld [vmem:[%s4005 + $0x88] sm:$0xf]
    %v4041 = vld [vmem:[%s4005 + $0x8c] sm:$0xf]
    %v4042 = vld [vmem:[%s4005 + $0x90] sm:$0xf]
    %v4043 = vld [vmem:[%s4005 + $0x94] sm:$0xf]
    %v4044 = vld [vmem:[%s4005 + $0x98] sm:$0xf]
    %v4045 = vld [vmem:[%s4005 + $0x9c] sm:$0xf]
    %v4046 = vld [vmem:[%s4005 + $0xa0] sm:$0xf]
    %v4047 = vld [vmem:[%s4005 + $0xa4] sm:$0xf]
    %v4048 = vld [vmem:[%s4005 + $0xa8] sm:$0xf]
    %v4049 = vld [vmem:[%s4005 + $0xac] sm:$0xf]
    %v4050 = vld [vmem:[%s4005 + $0xb0] sm:$0xf]
    %v4051 = vld [vmem:[%s4005 + $0xb4] sm:$0xf]
    %v4052 = vld [vmem:[%s4005 + $0xb8] sm:$0xf]
    %v4053 = vld [vmem:[%s4005 + $0xbc] sm:$0xf]
    %v4054 = vld [vmem:[%s4005 + $0xc0] sm:$0xf]
    %v4055 = vld [vmem:[%s4005 + $0xc4] sm:$0xf]
    %v4056 = vld [vmem:[%s4005 + $0xc8] sm:$0xf]
    %v4057 = vld [vmem:[%s4005 + $0xcc] sm:$0xf]
    %v4058 = vrot.slane %v3448, 1
    %v4059 = vrot.slane %v3451, 1
    %v4060 = vrot.slane %v3454, 1
    %v4061 = vrot.slane %v3456, 1
    %v4117 = vunpack.c.l.b16 %v4006
    %v4118 = vunpack.c.l.b16 %v4007
    %v4119 = vunpack.c.l.b16 %v4008
    %v4120 = vunpack.c.l.b16 %v4009
    %v4121 = vunpack.c.l.b16 %v4010
    %v4122 = vunpack.c.l.b16 %v4011
    %v4123 = vunpack.c.l.b16 %v4012
    %v4124 = vunpack.c.l.b16 %v4013
    %v4125 = vunpack.c.l.b16 %v4014
    %v4126 = vunpack.c.l.b16 %v4015
    %v4127 = vunpack.c.l.b16 %v4016
    %v4128 = vunpack.c.l.b16 %v4017
    %v4129 = vunpack.c.l.b16 %v4018
    %v4130 = vunpack.c.l.b16 %v4019
    %v4131 = vunpack.c.l.b16 %v4020
    %v4132 = vunpack.c.l.b16 %v4021
    %v4133 = vunpack.c.l.b16 %v4022
    %v4134 = vunpack.c.l.b16 %v4023
    %v4135 = vunpack.c.l.b16 %v4024
    %v4136 = vunpack.c.l.b16 %v4025
    %v4137 = vunpack.c.l.b16 %v4026
    %v4138 = vunpack.c.l.b16 %v4027
    %v4139 = vunpack.c.l.b16 %v4028
    %v4140 = vunpack.c.l.b16 %v4029
    %v4141 = vunpack.c.l.b16 %v4030
    %v4142 = vunpack.c.l.b16 %v4031
    %v4143 = vunpack.c.l.b16 %v4032
    %v4144 = vunpack.c.l.b16 %v4033
    %v4145 = vunpack.c.l.b16 %v4034
    %v4146 = vunpack.c.l.b16 %v4035
    %v4147 = vunpack.c.l.b16 %v4036
    %v4148 = vunpack.c.l.b16 %v4037
    %v4149 = vunpack.c.l.b16 %v4038
    %v4150 = vunpack.c.l.b16 %v4039
    %v4151 = vunpack.c.l.b16 %v4040
    %v4152 = vunpack.c.l.b16 %v4041
    %v4153 = vunpack.c.l.b16 %v4042
    %v4154 = vunpack.c.l.b16 %v4043
    %v4155 = vunpack.c.l.b16 %v4044
    %v4156 = vunpack.c.l.b16 %v4045
    %v4157 = vunpack.c.l.b16 %v4046
    %v4158 = vunpack.c.l.b16 %v4047
    %v4159 = vunpack.c.l.b16 %v4048
    %v4160 = vunpack.c.l.b16 %v4049
    %v4161 = vunpack.c.l.b16 %v4050
    %v4162 = vunpack.c.l.b16 %v4051
    %v4163 = vunpack.c.l.b16 %v4052
    %v4164 = vunpack.c.l.b16 %v4053
    %v4165 = vunpack.c.l.b16 %v4054
    %v4166 = vunpack.c.l.b16 %v4055
    %v4167 = vunpack.c.l.b16 %v4056
    %v4168 = vunpack.c.l.b16 %v4057
    %v4169 = vpack.c.b16 %v4118, %v4117
    %v4170 = vpack.c.b16 %v4120, %v4119
    %v4171 = vpack.c.b16 %v4122, %v4121
    %v4172 = vpack.c.b16 %v4124, %v4123
    %v4173 = vpack.c.b16 %v4126, %v4125
    %v4174 = vpack.c.b16 %v4128, %v4127
    %v4175 = vpack.c.b16 %v4130, %v4129
    %v4176 = vpack.c.b16 %v4132, %v4131
    %v4177 = vpack.c.b16 %v4134, %v4133
    %v4178 = vpack.c.b16 %v4136, %v4135
    %v4179 = vpack.c.b16 %v4138, %v4137
    %v4180 = vpack.c.b16 %v4140, %v4139
    %v4181 = vpack.c.b16 %v4142, %v4141
    %v4182 = vpack.c.b16 %v4144, %v4143
    %v4183 = vpack.c.b16 %v4146, %v4145
    %v4184 = vpack.c.b16 %v4148, %v4147
    %v4185 = vpack.c.b16 %v4150, %v4149
    %v4186 = vpack.c.b16 %v4152, %v4151
    %v4187 = vpack.c.b16 %v4154, %v4153
    %v4188 = vpack.c.b16 %v4156, %v4155
    %v4189 = vpack.c.b16 %v4158, %v4157
    %v4190 = vpack.c.b16 %v4160, %v4159
    %v4191 = vpack.c.b16 %v4162, %v4161
    %v4192 = vpack.c.b16 %v4164, %v4163
    %v4193 = vpack.c.b16 %v4166, %v4165
    %v4194 = vpack.c.b16 %v4168, %v4167
    %v4222 = vsel %vm1022, %v4061, 0
    %4224 = vmatprep.subr.bf16.mxu0 0
    %4225 = vmatpush1.bf16.msra.mxu0 %v4169
    %4226 = vmatprep.subr.bf16.mxu0 0
    %4227 = vmatpush1.bf16.msra.mxu0 %v4170
    %4228 = vmatprep.subr.bf16.mxu0 0
    %4229 = vmatpush1.bf16.msra.mxu0 %v4171
    %4230 = vmatprep.subr.bf16.mxu0 0
    %4231 = vmatpush1.bf16.msra.mxu0 %v4172
    %4232 = vmatprep.subr.bf16.mxu0 0
    %4233 = vmatpush1.bf16.msra.mxu0 %v4173
    %4234 = vmatprep.subr.bf16.mxu0 0
    %4235 = vmatpush1.bf16.msra.mxu0 %v4174
    %4236 = vmatprep.subr.bf16.mxu0 0
    %4237 = vmatpush1.bf16.msra.mxu0 %v4175
    %4238 = vmatprep.subr.bf16.mxu0 0
    %4239 = vmatpush1.bf16.msra.mxu0 %v4176
    %4240 = vmatprep.subr.bf16.mxu0 0
    %4241 = vmatpush1.bf16.msra.mxu0 %v4177
    %4242 = vmatprep.subr.bf16.mxu0 0
    %4243 = vmatpush1.bf16.msra.mxu0 %v4178
    %4244 = vmatprep.subr.bf16.mxu0 0
    %4245 = vmatpush1.bf16.msra.mxu0 %v4179
    %4246 = vmatprep.subr.bf16.mxu0 0
    %4247 = vmatpush1.bf16.msra.mxu0 %v4180
    %4248 = vmatprep.subr.bf16.mxu0 0
    %4249 = vmatpush1.bf16.msra.mxu0 %v4181
    %4250 = vmatprep.subr.bf16.mxu0 0
    %4251 = vmatpush1.bf16.msra.mxu0 %v4182
    %4252 = vmatprep.subr.bf16.mxu0 0
    %4253 = vmatpush1.bf16.msra.mxu0 %v4183
    %4254 = vmatprep.subr.bf16.mxu0 0
    %4255 = vmatpush1.bf16.msra.mxu0 %v4184
    %4256 = vmatprep.mubr.bf16.mxu0 %v4059
    %4257 = vmatmul.mubr.bf16.gmra.mrb[0].mxu0 %v4058
    %v4258 = vpop.f32.mrb[0].mxu0
    %v4259 = vadd.f32 0.0, %v4258
    %v4260 = vpop.f32.mrb[0].mxu0
    %v4261 = vpop.f32.mrb[0].mxu0
    %v4262 = vpop.f32.mrb[0].mxu0
    %4263 = vdwg.mxu0
    %4264 = vmatprep.subr.bf16.mxu0 0
    %4265 = vmatpush1.bf16.msra.mxu0 %v4185
    %4266 = vmatprep.subr.bf16.mxu0 0
    %4267 = vmatpush1.bf16.msra.mxu0 %v4186
    %4268 = vmatprep.subr.bf16.mxu0 0
    %4269 = vmatpush1.bf16.msra.mxu0 %v4187
    %4270 = vmatprep.subr.bf16.mxu0 0
    %4271 = vmatpush1.bf16.msra.mxu0 %v4188
    %4272 = vmatprep.subr.bf16.mxu0 0
    %4273 = vmatpush1.bf16.msra.mxu0 %v4189
    %4274 = vmatprep.subr.bf16.mxu0 0
    %4275 = vmatpush1.bf16.msra.mxu0 %v4190
    %4276 = vmatprep.subr.bf16.mxu0 0
    %4277 = vmatpush1.bf16.msra.mxu0 %v4191
    %4278 = vmatprep.subr.bf16.mxu0 0
    %4279 = vmatpush1.bf16.msra.mxu0 %v4192
    %4280 = vmatprep.subr.bf16.mxu0 0
    %4281 = vmatpush1.bf16.msra.mxu0 %v4193
    %4282 = vmatprep.subr.bf16.mxu0 0
    %4283 = vmatpush1.bf16.msra.mxu0 %v4194
    %4284 = vmatprep.subr.bf16.mxu0 0
    %4285 = vmatpush1.bf16.msra.mxu0 0
    %4286 = vmatprep.subr.bf16.mxu0 0
    %4287 = vmatpush1.bf16.msra.mxu0 0
    %4288 = vmatprep.subr.bf16.mxu0 0
    %4289 = vmatpush1.bf16.msra.mxu0 0
    %4290 = vmatprep.subr.bf16.mxu0 0
    %4291 = vmatpush1.bf16.msra.mxu0 0
    %4292 = vmatprep.subr.bf16.mxu0 0
    %4293 = vmatpush1.bf16.msra.mxu0 0
    %4294 = vmatprep.subr.bf16.mxu0 0
    %4295 = vmatpush1.bf16.msra.mxu0 0
    %4296 = vmatprep.mubr.bf16.mxu0 %v4222
    %4297 = vmatmul.mubr.bf16.gmra.mrb[0].mxu0 %v4060
    %v4298 = vpop.f32.mrb[0].mxu0
    %v4299 = vadd.f32 %v4259, %v4298
    %v4300 = vpop.f32.mrb[0].mxu0
    %v4301 = vpop.f32.mrb[0].mxu0
    %v4302 = vpop.f32.mrb[0].mxu0
    %4303 = vdwg.mxu0
    %v4304 = vadd.f32 %v3700, %v4299
    %s4305 = scalar_lea.vmem [#allocation9], 2496
    %v4306 = vld [vmem:[%s4305] sm:$0xf]
    %v4307 = vld [vmem:[%s4305 + $0x4] sm:$0xf]
    %v4308 = vld [vmem:[%s4305 + $0x8] sm:$0xf]
    %v4309 = vld [vmem:[%s4305 + $0xc] sm:$0xf]
    %v4310 = vld [vmem:[%s4305 + $0x10] sm:$0xf]
    %v4311 = vld [vmem:[%s4305 + $0x14] sm:$0xf]
    %v4312 = vld [vmem:[%s4305 + $0x18] sm:$0xf]
    %v4313 = vld [vmem:[%s4305 + $0x1c] sm:$0xf]
    %v4314 = vld [vmem:[%s4305 + $0x20] sm:$0xf]
    %v4315 = vld [vmem:[%s4305 + $0x24] sm:$0xf]
    %v4316 = vld [vmem:[%s4305 + $0x28] sm:$0xf]
    %v4317 = vld [vmem:[%s4305 + $0x2c] sm:$0xf]
    %v4318 = vld [vmem:[%s4305 + $0x30] sm:$0xf]
    %v4319 = vld [vmem:[%s4305 + $0x34] sm:$0xf]
    %v4320 = vld [vmem:[%s4305 + $0x38] sm:$0xf]
    %v4321 = vld [vmem:[%s4305 + $0x3c] sm:$0xf]
    %v4322 = vld [vmem:[%s4305 + $0x40] sm:$0xf]
    %v4323 = vld [vmem:[%s4305 + $0x44] sm:$0xf]
    %v4324 = vld [vmem:[%s4305 + $0x48] sm:$0xf]
    %v4325 = vld [vmem:[%s4305 + $0x4c] sm:$0xf]
    %v4326 = vld [vmem:[%s4305 + $0x50] sm:$0xf]
    %v4327 = vld [vmem:[%s4305 + $0x54] sm:$0xf]
    %v4328 = vld [vmem:[%s4305 + $0x58] sm:$0xf]
    %v4329 = vld [vmem:[%s4305 + $0x5c] sm:$0xf]
    %v4330 = vld [vmem:[%s4305 + $0x60] sm:$0xf]
    %v4331 = vld [vmem:[%s4305 + $0x64] sm:$0xf]
    %v4332 = vld [vmem:[%s4305 + $0x68] sm:$0xf]
    %v4333 = vld [vmem:[%s4305 + $0x6c] sm:$0xf]
    %v4334 = vld [vmem:[%s4305 + $0x70] sm:$0xf]
    %v4335 = vld [vmem:[%s4305 + $0x74] sm:$0xf]
    %v4336 = vld [vmem:[%s4305 + $0x78] sm:$0xf]
    %v4337 = vld [vmem:[%s4305 + $0x7c] sm:$0xf]
    %v4338 = vld [vmem:[%s4305 + $0x80] sm:$0xf]
    %v4339 = vld [vmem:[%s4305 + $0x84] sm:$0xf]
    %v4340 = vld [vmem:[%s4305 + $0x88] sm:$0xf]
    %v4341 = vld [vmem:[%s4305 + $0x8c] sm:$0xf]
    %v4342 = vld [vmem:[%s4305 + $0x90] sm:$0xf]
    %v4343 = vld [vmem:[%s4305 + $0x94] sm:$0xf]
    %v4344 = vld [vmem:[%s4305 + $0x98] sm:$0xf]
    %v4345 = vld [vmem:[%s4305 + $0x9c] sm:$0xf]
    %v4346 = vld [vmem:[%s4305 + $0xa0] sm:$0xf]
    %v4347 = vld [vmem:[%s4305 + $0xa4] sm:$0xf]
    %v4348 = vld [vmem:[%s4305 + $0xa8] sm:$0xf]
    %v4349 = vld [vmem:[%s4305 + $0xac] sm:$0xf]
    %v4350 = vld [vmem:[%s4305 + $0xb0] sm:$0xf]
    %v4351 = vld [vmem:[%s4305 + $0xb4] sm:$0xf]
    %v4352 = vld [vmem:[%s4305 + $0xb8] sm:$0xf]
    %v4353 = vld [vmem:[%s4305 + $0xbc] sm:$0xf]
    %v4354 = vld [vmem:[%s4305 + $0xc0] sm:$0xf]
    %v4355 = vld [vmem:[%s4305 + $0xc4] sm:$0xf]
    %v4356 = vld [vmem:[%s4305 + $0xc8] sm:$0xf]
    %v4357 = vld [vmem:[%s4305 + $0xcc] sm:$0xf]
    %v4358 = vrot.slane %v3097, 2
    %v4359 = vrot.slane %v3098, 2
    %v4360 = vrot.slane %v3099, 2
    %v4361 = vrot.slane %v3100, 2
    %v4417 = vunpack.c.l.b16 %v4306
    %v4418 = vunpack.c.l.b16 %v4307
    %v4419 = vunpack.c.l.b16 %v4308
    %v4420 = vunpack.c.l.b16 %v4309
    %v4421 = vunpack.c.l.b16 %v4310
    %v4422 = vunpack.c.l.b16 %v4311
    %v4423 = vunpack.c.l.b16 %v4312
    %v4424 = vunpack.c.l.b16 %v4313
    %v4425 = vunpack.c.l.b16 %v4314
    %v4426 = vunpack.c.l.b16 %v4315
    %v4427 = vunpack.c.l.b16 %v4316
    %v4428 = vunpack.c.l.b16 %v4317
    %v4429 = vunpack.c.l.b16 %v4318
    %v4430 = vunpack.c.l.b16 %v4319
    %v4431 = vunpack.c.l.b16 %v4320
    %v4432 = vunpack.c.l.b16 %v4321
    %v4433 = vunpack.c.l.b16 %v4322
    %v4434 = vunpack.c.l.b16 %v4323
    %v4435 = vunpack.c.l.b16 %v4324
    %v4436 = vunpack.c.l.b16 %v4325
    %v4437 = vunpack.c.l.b16 %v4326
    %v4438 = vunpack.c.l.b16 %v4327
    %v4439 = vunpack.c.l.b16 %v4328
    %v4440 = vunpack.c.l.b16 %v4329
    %v4441 = vunpack.c.l.b16 %v4330
    %v4442 = vunpack.c.l.b16 %v4331
    %v4443 = vunpack.c.l.b16 %v4332
    %v4444 = vunpack.c.l.b16 %v4333
    %v4445 = vunpack.c.l.b16 %v4334
    %v4446 = vunpack.c.l.b16 %v4335
    %v4447 = vunpack.c.l.b16 %v4336
    %v4448 = vunpack.c.l.b16 %v4337
    %v4449 = vunpack.c.l.b16 %v4338
    %v4450 = vunpack.c.l.b16 %v4339
    %v4451 = vunpack.c.l.b16 %v4340
    %v4452 = vunpack.c.l.b16 %v4341
    %v4453 = vunpack.c.l.b16 %v4342
    %v4454 = vunpack.c.l.b16 %v4343
    %v4455 = vunpack.c.l.b16 %v4344
    %v4456 = vunpack.c.l.b16 %v4345
    %v4457 = vunpack.c.l.b16 %v4346
    %v4458 = vunpack.c.l.b16 %v4347
    %v4459 = vunpack.c.l.b16 %v4348
    %v4460 = vunpack.c.l.b16 %v4349
    %v4461 = vunpack.c.l.b16 %v4350
    %v4462 = vunpack.c.l.b16 %v4351
    %v4463 = vunpack.c.l.b16 %v4352
    %v4464 = vunpack.c.l.b16 %v4353
    %v4465 = vunpack.c.l.b16 %v4354
    %v4466 = vunpack.c.l.b16 %v4355
    %v4467 = vunpack.c.l.b16 %v4356
    %v4468 = vunpack.c.l.b16 %v4357
    %v4469 = vpack.c.b16 %v4418, %v4417
    %v4470 = vpack.c.b16 %v4420, %v4419
    %v4471 = vpack.c.b16 %v4422, %v4421
    %v4472 = vpack.c.b16 %v4424, %v4423
    %v4473 = vpack.c.b16 %v4426, %v4425
    %v4474 = vpack.c.b16 %v4428, %v4427
    %v4475 = vpack.c.b16 %v4430, %v4429
    %v4476 = vpack.c.b16 %v4432, %v4431
    %v4477 = vpack.c.b16 %v4434, %v4433
    %v4478 = vpack.c.b16 %v4436, %v4435
    %v4479 = vpack.c.b16 %v4438, %v4437
    %v4480 = vpack.c.b16 %v4440, %v4439
    %v4481 = vpack.c.b16 %v4442, %v4441
    %v4482 = vpack.c.b16 %v4444, %v4443
    %v4483 = vpack.c.b16 %v4446, %v4445
    %v4484 = vpack.c.b16 %v4448, %v4447
    %v4485 = vpack.c.b16 %v4450, %v4449
    %v4486 = vpack.c.b16 %v4452, %v4451
    %v4487 = vpack.c.b16 %v4454, %v4453
    %v4488 = vpack.c.b16 %v4456, %v4455
    %v4489 = vpack.c.b16 %v4458, %v4457
    %v4490 = vpack.c.b16 %v4460, %v4459
    %v4491 = vpack.c.b16 %v4462, %v4461
    %v4492 = vpack.c.b16 %v4464, %v4463
    %v4493 = vpack.c.b16 %v4466, %v4465
    %v4494 = vpack.c.b16 %v4468, %v4467
    %v4522 = vsel %vm1022, %v4361, 0
    %4524 = vmatprep.subr.bf16.mxu0 0
    %4525 = vmatpush1.bf16.msra.mxu0 %v4469
    %4526 = vmatprep.subr.bf16.mxu0 0
    %4527 = vmatpush1.bf16.msra.mxu0 %v4470
    %4528 = vmatprep.subr.bf16.mxu0 0
    %4529 = vmatpush1.bf16.msra.mxu0 %v4471
    %4530 = vmatprep.subr.bf16.mxu0 0
    %4531 = vmatpush1.bf16.msra.mxu0 %v4472
    %4532 = vmatprep.subr.bf16.mxu0 0
    %4533 = vmatpush1.bf16.msra.mxu0 %v4473
    %4534 = vmatprep.subr.bf16.mxu0 0
    %4535 = vmatpush1.bf16.msra.mxu0 %v4474
    %4536 = vmatprep.subr.bf16.mxu0 0
    %4537 = vmatpush1.bf16.msra.mxu0 %v4475
    %4538 = vmatprep.subr.bf16.mxu0 0
    %4539 = vmatpush1.bf16.msra.mxu0 %v4476
    %4540 = vmatprep.subr.bf16.mxu0 0
    %4541 = vmatpush1.bf16.msra.mxu0 %v4477
    %4542 = vmatprep.subr.bf16.mxu0 0
    %4543 = vmatpush1.bf16.msra.mxu0 %v4478
    %4544 = vmatprep.subr.bf16.mxu0 0
    %4545 = vmatpush1.bf16.msra.mxu0 %v4479
    %4546 = vmatprep.subr.bf16.mxu0 0
    %4547 = vmatpush1.bf16.msra.mxu0 %v4480
    %4548 = vmatprep.subr.bf16.mxu0 0
    %4549 = vmatpush1.bf16.msra.mxu0 %v4481
    %4550 = vmatprep.subr.bf16.mxu0 0
    %4551 = vmatpush1.bf16.msra.mxu0 %v4482
    %4552 = vmatprep.subr.bf16.mxu0 0
    %4553 = vmatpush1.bf16.msra.mxu0 %v4483
    %4554 = vmatprep.subr.bf16.mxu0 0
    %4555 = vmatpush1.bf16.msra.mxu0 %v4484
    %4556 = vmatprep.mubr.bf16.mxu0 %v4359
    %4557 = vmatmul.mubr.bf16.gmra.mrb[0].mxu0 %v4358
    %v4558 = vpop.f32.mrb[0].mxu0
    %v4559 = vadd.f32 0.0, %v4558
    %v4560 = vpop.f32.mrb[0].mxu0
    %v4561 = vpop.f32.mrb[0].mxu0
    %v4562 = vpop.f32.mrb[0].mxu0
    %4563 = vdwg.mxu0
    %4564 = vmatprep.subr.bf16.mxu0 0
    %4565 = vmatpush1.bf16.msra.mxu0 %v4485
    %4566 = vmatprep.subr.bf16.mxu0 0
    %4567 = vmatpush1.bf16.msra.mxu0 %v4486
    %4568 = vmatprep.subr.bf16.mxu0 0
    %4569 = vmatpush1.bf16.msra.mxu0 %v4487
    %4570 = vmatprep.subr.bf16.mxu0 0
    %4571 = vmatpush1.bf16.msra.mxu0 %v4488
    %4572 = vmatprep.subr.bf16.mxu0 0
    %4573 = vmatpush1.bf16.msra.mxu0 %v4489
    %4574 = vmatprep.subr.bf16.mxu0 0
    %4575 = vmatpush1.bf16.msra.mxu0 %v4490
    %4576 = vmatprep.subr.bf16.mxu0 0
    %4577 = vmatpush1.bf16.msra.mxu0 %v4491
    %4578 = vmatprep.subr.bf16.mxu0 0
    %4579 = vmatpush1.bf16.msra.mxu0 %v4492
    %4580 = vmatprep.subr.bf16.mxu0 0
    %4581 = vmatpush1.bf16.msra.mxu0 %v4493
    %4582 = vmatprep.subr.bf16.mxu0 0
    %4583 = vmatpush1.bf16.msra.mxu0 %v4494
    %4584 = vmatprep.subr.bf16.mxu0 0
    %4585 = vmatpush1.bf16.msra.mxu0 0
    %4586 = vmatprep.subr.bf16.mxu0 0
    %4587 = vmatpush1.bf16.msra.mxu0 0
    %4588 = vmatprep.subr.bf16.mxu0 0
    %4589 = vmatpush1.bf16.msra.mxu0 0
    %4590 = vmatprep.subr.bf16.mxu0 0
    %4591 = vmatpush1.bf16.msra.mxu0 0
    %4592 = vmatprep.subr.bf16.mxu0 0
    %4593 = vmatpush1.bf16.msra.mxu0 0
    %4594 = vmatprep.subr.bf16.mxu0 0
    %4595 = vmatpush1.bf16.msra.mxu0 0
    %4596 = vmatprep.mubr.bf16.mxu0 %v4522
    %4597 = vmatmul.mubr.bf16.gmra.mrb[0].mxu0 %v4360
    %v4598 = vpop.f32.mrb[0].mxu0
    %v4599 = vadd.f32 %v4559, %v4598
    %v4600 = vpop.f32.mrb[0].mxu0
    %v4601 = vpop.f32.mrb[0].mxu0
    %v4602 = vpop.f32.mrb[0].mxu0
    %4603 = vdwg.mxu0
    %v4604 = vadd.f32 %v4004, %v4599
    %v4605 = vadd.f32 %v4604, %v4304
    %v4606 = vadd.f32 %v4605, %v236
    %v4607 = vmax.f32 %v4606, 0.0
    %4608 = vst [vmem:[#allocation2] sm:$0x1] %v4607
    %s4609 = scalar_lea.vmem %s0, 16
    %v4610 = vld [vmem:[%s4609] sm:$0xff]
    %v4611 = vld [vmem:[%s4609 + $0x8] sm:$0x3f]
    %v4613 = vsel %vm245, %v4610, 0
    %v4616 = vsel %vm245, %v4611, 0
    %4618 = vmatprep.subr.mxu0 0.0
    %4619 = vmatpush1.msra.mxu0 %v111
    %4620 = vmatprep.subr.mxu0 0.0
    %4621 = vmatpush1.msra.mxu0 %v112
    %4622 = vmatprep.subr.mxu0 0.0
    %4623 = vmatpush1.msra.mxu0 %v113
    %4624 = vmatprep.subr.mxu0 0.0
    %4625 = vmatpush1.msra.mxu0 %v114
    %4626 = vmatprep.subr.mxu0 0.0
    %4627 = vmatpush1.msra.mxu0 %v115
    %4628 = vmatprep.subr.mxu0 0.0
    %4629 = vmatpush1.msra.mxu0 %v116
    %4630 = vmatprep.subr.mxu0 0.0
    %4631 = vmatpush1.msra.mxu0 %v117
    %4632 = vmatprep.subr.mxu0 0.0
    %4633 = vmatpush1.msra.mxu0 %v118
    %4634 = vmatprep.subr.mxu0 0.0
    %4635 = vmatpush1.msra.mxu0 %v119
    %4636 = vmatprep.subr.mxu0 0.0
    %4637 = vmatpush1.msra.mxu0 %v120
    %4638 = vmatprep.subr.mxu0 0.0
    %4639 = vmatpush1.msra.mxu0 %v254
    %4640 = vmatprep.subr.mxu0 0.0
    %4641 = vmatpush1.msra.mxu0 0.0
    %4642 = vmatprep.subr.mxu0 0.0
    %4643 = vmatpush1.msra.mxu0 0.0
    %4644 = vmatprep.subr.mxu0 0.0
    %4645 = vmatpush1.msra.mxu0 0.0
    %4646 = vmatprep.subr.mxu0 0.0
    %4647 = vmatpush1.msra.mxu0 0.0
    %4648 = vmatprep.subr.mxu0 0.0
    %4649 = vmatpush1.msra.mxu0 0.0
    %4650 = vmatprep.subr.mxu0 0.0
    %4651 = vmatpush1.msra.mxu0 0.0
    %4652 = vmatprep.subr.mxu0 0.0
    %4653 = vmatpush1.msra.mxu0 0.0
    %4654 = vmatprep.subr.mxu0 0.0
    %4655 = vmatpush1.msra.mxu0 0.0
    %4656 = vmatprep.subr.mxu0 0.0
    %4657 = vmatpush1.msra.mxu0 0.0
    %4658 = vmatprep.subr.mxu0 0.0
    %4659 = vmatpush1.msra.mxu0 0.0
    %4660 = vmatprep.subr.mxu0 0.0
    %4661 = vmatpush1.msra.mxu0 0.0
    %4662 = vmatprep.subr.mxu0 0.0
    %4663 = vmatpush1.msra.mxu0 0.0
    %4664 = vmatprep.subr.mxu0 0.0
    %4665 = vmatpush1.msra.mxu0 0.0
    %4666 = vmatprep.subr.mxu0 0.0
    %4667 = vmatpush1.msra.mxu0 0.0
    %4668 = vmatprep.subr.mxu0 0.0
    %4669 = vmatpush1.msra.mxu0 0.0
    %4670 = vmatprep.subr.mxu0 0.0
    %4671 = vmatpush1.msra.mxu0 0.0
    %4672 = vmatprep.subr.mxu0 0.0
    %4673 = vmatpush1.msra.mxu0 0.0
    %4674 = vmatprep.subr.mxu0 0.0
    %4675 = vmatpush1.msra.mxu0 0.0
    %4676 = vmatprep.subr.mxu0 0.0
    %4677 = vmatpush1.msra.mxu0 0.0
    %4678 = vmatprep.subr.mxu0 0.0
    %4679 = vmatpush1.msra.mxu0 0.0
    %4680 = vmatprep.subr.mxu0 0.0
    %4681 = vmatpush1.msra.mxu0 0.0
    %4682 = vmatprep.mubr.f32.mxu0 0.0
    %4683 = vmatmul.mubr.f32.gmra.mrb[0].mxu0 %v4613
    %v4684 = vpop.f32.mrb[0].mxu0
    %v4685 = vadd.f32 %v243, %v4684
    %v4686 = vpop.f32.mrb[0].mxu0
    %4687 = vmatprep.mubr.f32.mxu0 0.0
    %4688 = vmatmul.mubr.f32.gmra.mrb[0].mxu0 %v4616
    %v4689 = vpop.f32.mrb[0].mxu0
    %v4690 = vadd.f32 %v243, %v4689
    %v4691 = vpop.f32.mrb[0].mxu0
    %4692 = vdwg.mxu0
    %v4693 = vmax.f32 %v4685, 0.0
    %v4694 = vmax.f32 %v4690, 0.0
    %v4697 = vrot.slane %v4693, 1
    %v4698 = vrot.slane %v4694, 1
    %v4699 = vsel %vm335, %v4697, %v4698
    %v4700 = vsel %vm339, %v4699, 0
    %v4702 = vsel %vm339, %v4698, 0
    %4704 = vmatprep.subr.mxu0 %v180
    %4705 = vmatpush1.msra.mxu0 %v179
    %4706 = vmatprep.subr.mxu0 %v184
    %4707 = vmatpush1.msra.mxu0 %v183
    %4708 = vmatprep.subr.mxu0 %v188
    %4709 = vmatpush1.msra.mxu0 %v187
    %4710 = vmatprep.subr.mxu0 %v192
    %4711 = vmatpush1.msra.mxu0 %v191
    %4712 = vmatprep.subr.mxu0 %v196
    %4713 = vmatpush1.msra.mxu0 %v195
    %4714 = vmatprep.subr.mxu0 %v200
    %4715 = vmatpush1.msra.mxu0 %v199
    %4716 = vmatprep.subr.mxu0 %v204
    %4717 = vmatpush1.msra.mxu0 %v203
    %4718 = vmatprep.subr.mxu0 %v208
    %4719 = vmatpush1.msra.mxu0 %v207
    %4720 = vmatprep.subr.mxu0 %v212
    %4721 = vmatpush1.msra.mxu0 %v211
    %4722 = vmatprep.subr.mxu0 %v216
    %4723 = vmatpush1.msra.mxu0 %v215
    %4724 = vmatprep.subr.mxu0 %v220
    %4725 = vmatpush1.msra.mxu0 %v219
    %4726 = vmatprep.subr.mxu0 %v224
    %4727 = vmatpush1.msra.mxu0 %v223
    %4728 = vmatprep.subr.mxu0 %v228
    %4729 = vmatpush1.msra.mxu0 %v227
    %4730 = vmatprep.subr.mxu0 %v232
    %4731 = vmatpush1.msra.mxu0 %v231
    %4732 = vmatprep.subr.mxu0 0.0
    %4733 = vmatpush1.msra.mxu0 0.0
    %4734 = vmatprep.subr.mxu0 0.0
    %4735 = vmatpush1.msra.mxu0 0.0
    %4736 = vmatprep.subr.mxu0 0.0
    %4737 = vmatpush1.msra.mxu0 0.0
    %4738 = vmatprep.subr.mxu0 0.0
    %4739 = vmatpush1.msra.mxu0 0.0
    %4740 = vmatprep.subr.mxu0 0.0
    %4741 = vmatpush1.msra.mxu0 0.0
    %4742 = vmatprep.subr.mxu0 0.0
    %4743 = vmatpush1.msra.mxu0 0.0
    %4744 = vmatprep.subr.mxu0 0.0
    %4745 = vmatpush1.msra.mxu0 0.0
    %4746 = vmatprep.subr.mxu0 0.0
    %4747 = vmatpush1.msra.mxu0 0.0
    %4748 = vmatprep.subr.mxu0 0.0
    %4749 = vmatpush1.msra.mxu0 0.0
    %4750 = vmatprep.subr.mxu0 0.0
    %4751 = vmatpush1.msra.mxu0 0.0
    %4752 = vmatprep.subr.mxu0 0.0
    %4753 = vmatpush1.msra.mxu0 0.0
    %4754 = vmatprep.subr.mxu0 0.0
    %4755 = vmatpush1.msra.mxu0 0.0
    %4756 = vmatprep.subr.mxu0 0.0
    %4757 = vmatpush1.msra.mxu0 0.0
    %4758 = vmatprep.subr.mxu0 0.0
    %4759 = vmatpush1.msra.mxu0 0.0
    %4760 = vmatprep.subr.mxu0 0.0
    %4761 = vmatpush1.msra.mxu0 0.0
    %4762 = vmatprep.subr.mxu0 0.0
    %4763 = vmatpush1.msra.mxu0 0.0
    %4764 = vmatprep.subr.mxu0 0.0
    %4765 = vmatpush1.msra.mxu0 0.0
    %4766 = vmatprep.subr.mxu0 0.0
    %4767 = vmatpush1.msra.mxu0 0.0
    %4768 = vmatprep.mubr.f32.mxu0 0.0
    %4769 = vmatmul.mubr.f32.gmra.mrb[0].mxu0 %v4700
    %v4770 = vpop.f32.mrb[0].mxu0
    %v4771 = vadd.f32 0.0, %v4770
    %v4772 = vpop.f32.mrb[0].mxu0
    %v4773 = vadd.f32 0.0, %v4772
    %4774 = vmatprep.mubr.f32.mxu0 0.0
    %4775 = vmatmul.mubr.f32.gmra.mrb[0].mxu0 %v4702
    %v4776 = vpop.f32.mrb[0].mxu0
    %v4777 = vadd.f32 0.0, %v4776
    %v4778 = vpop.f32.mrb[0].mxu0
    %v4779 = vadd.f32 0.0, %v4778
    %4780 = vdwg.mxu0
    %4781 = vmatprep.subr.mxu0 %v182
    %4782 = vmatpush1.msra.mxu0 %v181
    %4783 = vmatprep.subr.mxu0 %v186
    %4784 = vmatpush1.msra.mxu0 %v185
    %4785 = vmatprep.subr.mxu0 %v190
    %4786 = vmatpush1.msra.mxu0 %v189
    %4787 = vmatprep.subr.mxu0 %v194
    %4788 = vmatpush1.msra.mxu0 %v193
    %4789 = vmatprep.subr.mxu0 %v198
    %4790 = vmatpush1.msra.mxu0 %v197
    %4791 = vmatprep.subr.mxu0 %v202
    %4792 = vmatpush1.msra.mxu0 %v201
    %4793 = vmatprep.subr.mxu0 %v206
    %4794 = vmatpush1.msra.mxu0 %v205
    %4795 = vmatprep.subr.mxu0 %v210
    %4796 = vmatpush1.msra.mxu0 %v209
    %4797 = vmatprep.subr.mxu0 %v214
    %4798 = vmatpush1.msra.mxu0 %v213
    %4799 = vmatprep.subr.mxu0 %v218
    %4800 = vmatpush1.msra.mxu0 %v217
    %4801 = vmatprep.subr.mxu0 %v222
    %4802 = vmatpush1.msra.mxu0 %v221
    %4803 = vmatprep.subr.mxu0 %v226
    %4804 = vmatpush1.msra.mxu0 %v225
    %4805 = vmatprep.subr.mxu0 %v230
    %4806 = vmatpush1.msra.mxu0 %v229
    %4807 = vmatprep.subr.mxu0 %v234
    %4808 = vmatpush1.msra.mxu0 %v233
    %4809 = vmatprep.subr.mxu0 0.0
    %4810 = vmatpush1.msra.mxu0 0.0
    %4811 = vmatprep.subr.mxu0 0.0
    %4812 = vmatpush1.msra.mxu0 0.0
    %4813 = vmatprep.subr.mxu0 0.0
    %4814 = vmatpush1.msra.mxu0 0.0
    %4815 = vmatprep.subr.mxu0 0.0
    %4816 = vmatpush1.msra.mxu0 0.0
    %4817 = vmatprep.subr.mxu0 0.0
    %4818 = vmatpush1.msra.mxu0 0.0
    %4819 = vmatprep.subr.mxu0 0.0
    %4820 = vmatpush1.msra.mxu0 0.0
    %4821 = vmatprep.subr.mxu0 0.0
    %4822 = vmatpush1.msra.mxu0 0.0
    %4823 = vmatprep.subr.mxu0 0.0
    %4824 = vmatpush1.msra.mxu0 0.0
    %4825 = vmatprep.subr.mxu0 0.0
    %4826 = vmatpush1.msra.mxu0 0.0
    %4827 = vmatprep.subr.mxu0 0.0
    %4828 = vmatpush1.msra.mxu0 0.0
    %4829 = vmatprep.subr.mxu0 0.0
    %4830 = vmatpush1.msra.mxu0 0.0
    %4831 = vmatprep.subr.mxu0 0.0
    %4832 = vmatpush1.msra.mxu0 0.0
    %4833 = vmatprep.subr.mxu0 0.0
    %4834 = vmatpush1.msra.mxu0 0.0
    %4835 = vmatprep.subr.mxu0 0.0
    %4836 = vmatpush1.msra.mxu0 0.0
    %4837 = vmatprep.subr.mxu0 0.0
    %4838 = vmatpush1.msra.mxu0 0.0
    %4839 = vmatprep.subr.mxu0 0.0
    %4840 = vmatpush1.msra.mxu0 0.0
    %4841 = vmatprep.subr.mxu0 0.0
    %4842 = vmatpush1.msra.mxu0 0.0
    %4843 = vmatprep.subr.mxu0 0.0
    %4844 = vmatpush1.msra.mxu0 0.0
    %4845 = vmatprep.mubr.f32.mxu0 0.0
    %4846 = vmatmul.mubr.f32.gmra.mrb[0].mxu0 %v4700
    %v4847 = vpop.f32.mrb[0].mxu0
    %v4848 = vadd.f32 0.0, %v4847
    %v4849 = vpop.f32.mrb[0].mxu0
    %v4850 = vadd.f32 0.0, %v4849
    %4851 = vmatprep.mubr.f32.mxu0 0.0
    %4852 = vmatmul.mubr.f32.gmra.mrb[0].mxu0 %v4702
    %v4853 = vpop.f32.mrb[0].mxu0
    %v4854 = vadd.f32 0.0, %v4853
    %v4855 = vpop.f32.mrb[0].mxu0
    %v4856 = vadd.f32 0.0, %v4855
    %4857 = vdwg.mxu0
    %v4858 = vsel %vm339, %v4693, 0
    %v4860 = vsel %vm339, %v4694, 0
    %4862 = vmatprep.subr.mxu0 %v124
    %4863 = vmatpush1.msra.mxu0 %v123
    %4864 = vmatprep.subr.mxu0 %v128
    %4865 = vmatpush1.msra.mxu0 %v127
    %4866 = vmatprep.subr.mxu0 %v132
    %4867 = vmatpush1.msra.mxu0 %v131
    %4868 = vmatprep.subr.mxu0 %v136
    %4869 = vmatpush1.msra.mxu0 %v135
    %4870 = vmatprep.subr.mxu0 %v140
    %4871 = vmatpush1.msra.mxu0 %v139
    %4872 = vmatprep.subr.mxu0 %v144
    %4873 = vmatpush1.msra.mxu0 %v143
    %4874 = vmatprep.subr.mxu0 %v148
    %4875 = vmatpush1.msra.mxu0 %v147
    %4876 = vmatprep.subr.mxu0 %v152
    %4877 = vmatpush1.msra.mxu0 %v151
    %4878 = vmatprep.subr.mxu0 %v156
    %4879 = vmatpush1.msra.mxu0 %v155
    %4880 = vmatprep.subr.mxu0 %v160
    %4881 = vmatpush1.msra.mxu0 %v159
    %4882 = vmatprep.subr.mxu0 %v164
    %4883 = vmatpush1.msra.mxu0 %v163
    %4884 = vmatprep.subr.mxu0 %v168
    %4885 = vmatpush1.msra.mxu0 %v167
    %4886 = vmatprep.subr.mxu0 %v172
    %4887 = vmatpush1.msra.mxu0 %v171
    %4888 = vmatprep.subr.mxu0 %v176
    %4889 = vmatpush1.msra.mxu0 %v175
    %4890 = vmatprep.subr.mxu0 0.0
    %4891 = vmatpush1.msra.mxu0 0.0
    %4892 = vmatprep.subr.mxu0 0.0
    %4893 = vmatpush1.msra.mxu0 0.0
    %4894 = vmatprep.subr.mxu0 0.0
    %4895 = vmatpush1.msra.mxu0 0.0
    %4896 = vmatprep.subr.mxu0 0.0
    %4897 = vmatpush1.msra.mxu0 0.0
    %4898 = vmatprep.subr.mxu0 0.0
    %4899 = vmatpush1.msra.mxu0 0.0
    %4900 = vmatprep.subr.mxu0 0.0
    %4901 = vmatpush1.msra.mxu0 0.0
    %4902 = vmatprep.subr.mxu0 0.0
    %4903 = vmatpush1.msra.mxu0 0.0
    %4904 = vmatprep.subr.mxu0 0.0
    %4905 = vmatpush1.msra.mxu0 0.0
    %4906 = vmatprep.subr.mxu0 0.0
    %4907 = vmatpush1.msra.mxu0 0.0
    %4908 = vmatprep.subr.mxu0 0.0
    %4909 = vmatpush1.msra.mxu0 0.0
    %4910 = vmatprep.subr.mxu0 0.0
    %4911 = vmatpush1.msra.mxu0 0.0
    %4912 = vmatprep.subr.mxu0 0.0
    %4913 = vmatpush1.msra.mxu0 0.0
    %4914 = vmatprep.subr.mxu0 0.0
    %4915 = vmatpush1.msra.mxu0 0.0
    %4916 = vmatprep.subr.mxu0 0.0
    %4917 = vmatpush1.msra.mxu0 0.0
    %4918 = vmatprep.subr.mxu0 0.0
    %4919 = vmatpush1.msra.mxu0 0.0
    %4920 = vmatprep.subr.mxu0 0.0
    %4921 = vmatpush1.msra.mxu0 0.0
    %4922 = vmatprep.subr.mxu0 0.0
    %4923 = vmatpush1.msra.mxu0 0.0
    %4924 = vmatprep.subr.mxu0 0.0
    %4925 = vmatpush1.msra.mxu0 0.0
    %4926 = vmatprep.mubr.f32.mxu0 0.0
    %4927 = vmatmul.mubr.f32.gmra.mrb[0].mxu0 %v4858
    %v4928 = vpop.f32.mrb[0].mxu0
    %v4929 = vadd.f32 %v4771, %v4928
    %v4930 = vpop.f32.mrb[0].mxu0
    %v4931 = vadd.f32 %v4773, %v4930
    %4932 = vmatprep.mubr.f32.mxu0 0.0
    %4933 = vmatmul.mubr.f32.gmra.mrb[0].mxu0 %v4860
    %v4934 = vpop.f32.mrb[0].mxu0
    %v4935 = vadd.f32 %v4777, %v4934
    %v4936 = vpop.f32.mrb[0].mxu0
    %v4937 = vadd.f32 %v4779, %v4936
    %4938 = vdwg.mxu0
    %4939 = vmatprep.subr.mxu0 %v126
    %4940 = vmatpush1.msra.mxu0 %v125
    %4941 = vmatprep.subr.mxu0 %v130
    %4942 = vmatpush1.msra.mxu0 %v129
    %4943 = vmatprep.subr.mxu0 %v134
    %4944 = vmatpush1.msra.mxu0 %v133
    %4945 = vmatprep.subr.mxu0 %v138
    %4946 = vmatpush1.msra.mxu0 %v137
    %4947 = vmatprep.subr.mxu0 %v142
    %4948 = vmatpush1.msra.mxu0 %v141
    %4949 = vmatprep.subr.mxu0 %v146
    %4950 = vmatpush1.msra.mxu0 %v145
    %4951 = vmatprep.subr.mxu0 %v150
    %4952 = vmatpush1.msra.mxu0 %v149
    %4953 = vmatprep.subr.mxu0 %v154
    %4954 = vmatpush1.msra.mxu0 %v153
    %4955 = vmatprep.subr.mxu0 %v158
    %4956 = vmatpush1.msra.mxu0 %v157
    %4957 = vmatprep.subr.mxu0 %v162
    %4958 = vmatpush1.msra.mxu0 %v161
    %4959 = vmatprep.subr.mxu0 %v166
    %4960 = vmatpush1.msra.mxu0 %v165
    %4961 = vmatprep.subr.mxu0 %v170
    %4962 = vmatpush1.msra.mxu0 %v169
    %4963 = vmatprep.subr.mxu0 %v174
    %4964 = vmatpush1.msra.mxu0 %v173
    %4965 = vmatprep.subr.mxu0 %v178
    %4966 = vmatpush1.msra.mxu0 %v177
    %4967 = vmatprep.subr.mxu0 0.0
    %4968 = vmatpush1.msra.mxu0 0.0
    %4969 = vmatprep.subr.mxu0 0.0
    %4970 = vmatpush1.msra.mxu0 0.0
    %4971 = vmatprep.subr.mxu0 0.0
    %4972 = vmatpush1.msra.mxu0 0.0
    %4973 = vmatprep.subr.mxu0 0.0
    %4974 = vmatpush1.msra.mxu0 0.0
    %4975 = vmatprep.subr.mxu0 0.0
    %4976 = vmatpush1.msra.mxu0 0.0
    %4977 = vmatprep.subr.mxu0 0.0
    %4978 = vmatpush1.msra.mxu0 0.0
    %4979 = vmatprep.subr.mxu0 0.0
    %4980 = vmatpush1.msra.mxu0 0.0
    %4981 = vmatprep.subr.mxu0 0.0
    %4982 = vmatpush1.msra.mxu0 0.0
    %4983 = vmatprep.subr.mxu0 0.0
    %4984 = vmatpush1.msra.mxu0 0.0
    %4985 = vmatprep.subr.mxu0 0.0
    %4986 = vmatpush1.msra.mxu0 0.0
    %4987 = vmatprep.subr.mxu0 0.0
    %4988 = vmatpush1.msra.mxu0 0.0
    %4989 = vmatprep.subr.mxu0 0.0
    %4990 = vmatpush1.msra.mxu0 0.0
    %4991 = vmatprep.subr.mxu0 0.0
    %4992 = vmatpush1.msra.mxu0 0.0
    %4993 = vmatprep.subr.mxu0 0.0
    %4994 = vmatpush1.msra.mxu0 0.0
    %4995 = vmatprep.subr.mxu0 0.0
    %4996 = vmatpush1.msra.mxu0 0.0
    %4997 = vmatprep.subr.mxu0 0.0
    %4998 = vmatpush1.msra.mxu0 0.0
    %4999 = vmatprep.subr.mxu0 0.0
    %5000 = vmatpush1.msra.mxu0 0.0
    %5001 = vmatprep.subr.mxu0 0.0
    %5002 = vmatpush1.msra.mxu0 0.0
    %5003 = vmatprep.mubr.f32.mxu0 0.0
    %5004 = vmatmul.mubr.f32.gmra.mrb[0].mxu0 %v4858
    %v5005 = vpop.f32.mrb[0].mxu0
    %v5006 = vadd.f32 %v4848, %v5005
    %v5007 = vpop.f32.mrb[0].mxu0
    %v5008 = vadd.f32 %v4850, %v5007
    %5009 = vmatprep.mubr.f32.mxu0 0.0
    %5010 = vmatmul.mubr.f32.gmra.mrb[0].mxu0 %v4860
    %v5011 = vpop.f32.mrb[0].mxu0
    %v5012 = vadd.f32 %v4854, %v5011
    %v5013 = vpop.f32.mrb[0].mxu0
    %v5014 = vadd.f32 %v4856, %v5013
    %5015 = vdwg.mxu0
    %v5016 = vadd.f32 %v4929, %v660
    %v5017 = vadd.f32 %v4931, %v664
    %v5018 = vadd.f32 %v5006, %v668
    %v5019 = vadd.f32 %v5008, %v672
    %v5020 = vadd.f32 %v4935, %v660
    %v5021 = vadd.f32 %v4937, %v664
    %v5022 = vadd.f32 %v5012, %v668
    %v5023 = vadd.f32 %v5014, %v672
    %v5024 = vmax.f32 %v5016, 0.0
    %v5025 = vmax.f32 %v5017, 0.0
    %v5026 = vmax.f32 %v5018, 0.0
    %v5027 = vmax.f32 %v5019, 0.0
    %v5028 = vmax.f32 %v5020, 0.0
    %v5029 = vmax.f32 %v5021, 0.0
    %v5030 = vmax.f32 %v5022, 0.0
    %v5031 = vmax.f32 %v5023, 0.0
    %v5032 = vpack.c.bf16 %v5024, %v5024
    %v5033 = vpack.c.bf16 %v5025, %v5025
    %v5034 = vpack.c.bf16 %v5026, %v5026
    %v5035 = vpack.c.bf16 %v5027, %v5027
    %v5036 = vld [vmem:[#allocation9] sm:$0xf]
    %v5037 = vld [vmem:[#allocation9 + $0x4] sm:$0xf]
    %v5038 = vld [vmem:[#allocation9 + $0x8] sm:$0xf]
    %v5039 = vld [vmem:[#allocation9 + $0xc] sm:$0xf]
    %v5040 = vld [vmem:[#allocation9 + $0x10] sm:$0xf]
    %v5041 = vld [vmem:[#allocation9 + $0x14] sm:$0xf]
    %v5042 = vld [vmem:[#allocation9 + $0x18] sm:$0xf]
    %v5043 = vld [vmem:[#allocation9 + $0x1c] sm:$0xf]
    %v5044 = vld [vmem:[#allocation9 + $0x20] sm:$0xf]
    %v5045 = vld [vmem:[#allocation9 + $0x24] sm:$0xf]
    %v5046 = vld [vmem:[#allocation9 + $0x28] sm:$0xf]
    %v5047 = vld [vmem:[#allocation9 + $0x2c] sm:$0xf]
    %v5048 = vld [vmem:[#allocation9 + $0x30] sm:$0xf]
    %v5049 = vld [vmem:[#allocation9 + $0x34] sm:$0xf]
    %v5050 = vld [vmem:[#allocation9 + $0x38] sm:$0xf]
    %v5051 = vld [vmem:[#allocation9 + $0x3c] sm:$0xf]
    %v5052 = vld [vmem:[#allocation9 + $0x40] sm:$0xf]
    %v5053 = vld [vmem:[#allocation9 + $0x44] sm:$0xf]
    %v5054 = vld [vmem:[#allocation9 + $0x48] sm:$0xf]
    %v5055 = vld [vmem:[#allocation9 + $0x4c] sm:$0xf]
    %v5056 = vld [vmem:[#allocation9 + $0x50] sm:$0xf]
    %v5057 = vld [vmem:[#allocation9 + $0x54] sm:$0xf]
    %v5058 = vld [vmem:[#allocation9 + $0x58] sm:$0xf]
    %v5059 = vld [vmem:[#allocation9 + $0x5c] sm:$0xf]
    %v5060 = vld [vmem:[#allocation9 + $0x60] sm:$0xf]
    %v5061 = vld [vmem:[#allocation9 + $0x64] sm:$0xf]
    %v5062 = vld [vmem:[#allocation9 + $0x68] sm:$0xf]
    %v5063 = vld [vmem:[#allocation9 + $0x6c] sm:$0xf]
    %v5064 = vld [vmem:[#allocation9 + $0x70] sm:$0xf]
    %v5065 = vld [vmem:[#allocation9 + $0x74] sm:$0xf]
    %v5066 = vld [vmem:[#allocation9 + $0x78] sm:$0xf]
    %v5067 = vld [vmem:[#allocation9 + $0x7c] sm:$0xf]
    %v5068 = vld [vmem:[#allocation9 + $0x80] sm:$0xf]
    %v5069 = vld [vmem:[#allocation9 + $0x84] sm:$0xf]
    %v5070 = vld [vmem:[#allocation9 + $0x88] sm:$0xf]
    %v5071 = vld [vmem:[#allocation9 + $0x8c] sm:$0xf]
    %v5072 = vld [vmem:[#allocation9 + $0x90] sm:$0xf]
    %v5073 = vld [vmem:[#allocation9 + $0x94] sm:$0xf]
    %v5074 = vld [vmem:[#allocation9 + $0x98] sm:$0xf]
    %v5075 = vld [vmem:[#allocation9 + $0x9c] sm:$0xf]
    %v5076 = vld [vmem:[#allocation9 + $0xa0] sm:$0xf]
    %v5077 = vld [vmem:[#allocation9 + $0xa4] sm:$0xf]
    %v5078 = vld [vmem:[#allocation9 + $0xa8] sm:$0xf]
    %v5079 = vld [vmem:[#allocation9 + $0xac] sm:$0xf]
    %v5080 = vld [vmem:[#allocation9 + $0xb0] sm:$0xf]
    %v5081 = vld [vmem:[#allocation9 + $0xb4] sm:$0xf]
    %v5082 = vld [vmem:[#allocation9 + $0xb8] sm:$0xf]
    %v5083 = vld [vmem:[#allocation9 + $0xbc] sm:$0xf]
    %v5084 = vld [vmem:[#allocation9 + $0xc0] sm:$0xf]
    %v5085 = vld [vmem:[#allocation9 + $0xc4] sm:$0xf]
    %v5086 = vld [vmem:[#allocation9 + $0xc8] sm:$0xf]
    %v5087 = vld [vmem:[#allocation9 + $0xcc] sm:$0xf]
    %v5088 = vld [vmem:[%s749] sm:$0xf]
    %v5089 = vld [vmem:[%s749 + $0x4] sm:$0xf]
    %v5090 = vld [vmem:[%s749 + $0x8] sm:$0xf]
    %v5091 = vld [vmem:[%s749 + $0xc] sm:$0xf]
    %v5092 = vld [vmem:[%s749 + $0x10] sm:$0xf]
    %v5093 = vld [vmem:[%s749 + $0x14] sm:$0xf]
    %v5094 = vld [vmem:[%s749 + $0x18] sm:$0xf]
    %v5095 = vld [vmem:[%s749 + $0x1c] sm:$0xf]
    %v5096 = vld [vmem:[%s749 + $0x20] sm:$0xf]
    %v5097 = vld [vmem:[%s749 + $0x24] sm:$0xf]
    %v5098 = vld [vmem:[%s749 + $0x28] sm:$0xf]
    %v5099 = vld [vmem:[%s749 + $0x2c] sm:$0xf]
    %v5100 = vld [vmem:[%s749 + $0x30] sm:$0xf]
    %v5101 = vld [vmem:[%s749 + $0x34] sm:$0xf]
    %v5102 = vld [vmem:[%s749 + $0x38] sm:$0xf]
    %v5103 = vld [vmem:[%s749 + $0x3c] sm:$0xf]
    %v5104 = vld [vmem:[%s749 + $0x40] sm:$0xf]
    %v5105 = vld [vmem:[%s749 + $0x44] sm:$0xf]
    %v5106 = vld [vmem:[%s749 + $0x48] sm:$0xf]
    %v5107 = vld [vmem:[%s749 + $0x4c] sm:$0xf]
    %v5108 = vld [vmem:[%s749 + $0x50] sm:$0xf]
    %v5109 = vld [vmem:[%s749 + $0x54] sm:$0xf]
    %v5110 = vld [vmem:[%s749 + $0x58] sm:$0xf]
    %v5111 = vld [vmem:[%s749 + $0x5c] sm:$0xf]
    %v5112 = vld [vmem:[%s749 + $0x60] sm:$0xf]
    %v5113 = vld [vmem:[%s749 + $0x64] sm:$0xf]
    %v5114 = vld [vmem:[%s749 + $0x68] sm:$0xf]
    %v5115 = vld [vmem:[%s749 + $0x6c] sm:$0xf]
    %v5116 = vld [vmem:[%s749 + $0x70] sm:$0xf]
    %v5117 = vld [vmem:[%s749 + $0x74] sm:$0xf]
    %v5118 = vld [vmem:[%s749 + $0x78] sm:$0xf]
    %v5119 = vld [vmem:[%s749 + $0x7c] sm:$0xf]
    %v5120 = vld [vmem:[%s749 + $0x80] sm:$0xf]
    %v5121 = vld [vmem:[%s749 + $0x84] sm:$0xf]
    %v5122 = vld [vmem:[%s749 + $0x88] sm:$0xf]
    %v5123 = vld [vmem:[%s749 + $0x8c] sm:$0xf]
    %v5124 = vld [vmem:[%s749 + $0x90] sm:$0xf]
    %v5125 = vld [vmem:[%s749 + $0x94] sm:$0xf]
    %v5126 = vld [vmem:[%s749 + $0x98] sm:$0xf]
    %v5127 = vld [vmem:[%s749 + $0x9c] sm:$0xf]
    %v5128 = vld [vmem:[%s749 + $0xa0] sm:$0xf]
    %v5129 = vld [vmem:[%s749 + $0xa4] sm:$0xf]
    %v5130 = vld [vmem:[%s749 + $0xa8] sm:$0xf]
    %v5131 = vld [vmem:[%s749 + $0xac] sm:$0xf]
    %v5132 = vld [vmem:[%s749 + $0xb0] sm:$0xf]
    %v5133 = vld [vmem:[%s749 + $0xb4] sm:$0xf]
    %v5134 = vld [vmem:[%s749 + $0xb8] sm:$0xf]
    %v5135 = vld [vmem:[%s749 + $0xbc] sm:$0xf]
    %v5136 = vld [vmem:[%s749 + $0xc0] sm:$0xf]
    %v5137 = vld [vmem:[%s749 + $0xc4] sm:$0xf]
    %v5138 = vld [vmem:[%s749 + $0xc8] sm:$0xf]
    %v5139 = vld [vmem:[%s749 + $0xcc] sm:$0xf]
    %v5140 = vld [vmem:[%s802] sm:$0xf]
    %v5141 = vld [vmem:[%s802 + $0x4] sm:$0xf]
    %v5142 = vld [vmem:[%s802 + $0x8] sm:$0xf]
    %v5143 = vld [vmem:[%s802 + $0xc] sm:$0xf]
    %v5144 = vld [vmem:[%s802 + $0x10] sm:$0xf]
    %v5145 = vld [vmem:[%s802 + $0x14] sm:$0xf]
    %v5146 = vld [vmem:[%s802 + $0x18] sm:$0xf]
    %v5147 = vld [vmem:[%s802 + $0x1c] sm:$0xf]
    %v5148 = vld [vmem:[%s802 + $0x20] sm:$0xf]
    %v5149 = vld [vmem:[%s802 + $0x24] sm:$0xf]
    %v5150 = vld [vmem:[%s802 + $0x28] sm:$0xf]
    %v5151 = vld [vmem:[%s802 + $0x2c] sm:$0xf]
    %v5152 = vld [vmem:[%s802 + $0x30] sm:$0xf]
    %v5153 = vld [vmem:[%s802 + $0x34] sm:$0xf]
    %v5154 = vld [vmem:[%s802 + $0x38] sm:$0xf]
    %v5155 = vld [vmem:[%s802 + $0x3c] sm:$0xf]
    %v5156 = vld [vmem:[%s802 + $0x40] sm:$0xf]
    %v5157 = vld [vmem:[%s802 + $0x44] sm:$0xf]
    %v5158 = vld [vmem:[%s802 + $0x48] sm:$0xf]
    %v5159 = vld [vmem:[%s802 + $0x4c] sm:$0xf]
    %v5160 = vld [vmem:[%s802 + $0x50] sm:$0xf]
    %v5161 = vld [vmem:[%s802 + $0x54] sm:$0xf]
    %v5162 = vld [vmem:[%s802 + $0x58] sm:$0xf]
    %v5163 = vld [vmem:[%s802 + $0x5c] sm:$0xf]
    %v5164 = vld [vmem:[%s802 + $0x60] sm:$0xf]
    %v5165 = vld [vmem:[%s802 + $0x64] sm:$0xf]
    %v5166 = vld [vmem:[%s802 + $0x68] sm:$0xf]
    %v5167 = vld [vmem:[%s802 + $0x6c] sm:$0xf]
    %v5168 = vld [vmem:[%s802 + $0x70] sm:$0xf]
    %v5169 = vld [vmem:[%s802 + $0x74] sm:$0xf]
    %v5170 = vld [vmem:[%s802 + $0x78] sm:$0xf]
    %v5171 = vld [vmem:[%s802 + $0x7c] sm:$0xf]
    %v5172 = vld [vmem:[%s802 + $0x80] sm:$0xf]
    %v5173 = vld [vmem:[%s802 + $0x84] sm:$0xf]
    %v5174 = vld [vmem:[%s802 + $0x88] sm:$0xf]
    %v5175 = vld [vmem:[%s802 + $0x8c] sm:$0xf]
    %v5176 = vld [vmem:[%s802 + $0x90] sm:$0xf]
    %v5177 = vld [vmem:[%s802 + $0x94] sm:$0xf]
    %v5178 = vld [vmem:[%s802 + $0x98] sm:$0xf]
    %v5179 = vld [vmem:[%s802 + $0x9c] sm:$0xf]
    %v5180 = vld [vmem:[%s802 + $0xa0] sm:$0xf]
    %v5181 = vld [vmem:[%s802 + $0xa4] sm:$0xf]
    %v5182 = vld [vmem:[%s802 + $0xa8] sm:$0xf]
    %v5183 = vld [vmem:[%s802 + $0xac] sm:$0xf]
    %v5184 = vld [vmem:[%s802 + $0xb0] sm:$0xf]
    %v5185 = vld [vmem:[%s802 + $0xb4] sm:$0xf]
    %v5186 = vld [vmem:[%s802 + $0xb8] sm:$0xf]
    %v5187 = vld [vmem:[%s802 + $0xbc] sm:$0xf]
    %v5188 = vld [vmem:[%s802 + $0xc0] sm:$0xf]
    %v5189 = vld [vmem:[%s802 + $0xc4] sm:$0xf]
    %v5190 = vld [vmem:[%s802 + $0xc8] sm:$0xf]
    %v5191 = vld [vmem:[%s802 + $0xcc] sm:$0xf]
    %v5196 = vrot.slane %v5032, 1
    %v5197 = vrot.slane %v5033, 1
    %v5198 = vrot.slane %v5034, 1
    %v5199 = vrot.slane %v5035, 1
    %v5255 = vunpack.c.l.b16 %v5140
    %v5256 = vunpack.c.l.b16 %v5141
    %v5257 = vunpack.c.l.b16 %v5142
    %v5258 = vunpack.c.l.b16 %v5143
    %v5259 = vunpack.c.l.b16 %v5144
    %v5260 = vunpack.c.l.b16 %v5145
    %v5261 = vunpack.c.l.b16 %v5146
    %v5262 = vunpack.c.l.b16 %v5147
    %v5263 = vunpack.c.l.b16 %v5148
    %v5264 = vunpack.c.l.b16 %v5149
    %v5265 = vunpack.c.l.b16 %v5150
    %v5266 = vunpack.c.l.b16 %v5151
    %v5267 = vunpack.c.l.b16 %v5152
    %v5268 = vunpack.c.l.b16 %v5153
    %v5269 = vunpack.c.l.b16 %v5154
    %v5270 = vunpack.c.l.b16 %v5155
    %v5271 = vunpack.c.l.b16 %v5156
    %v5272 = vunpack.c.l.b16 %v5157
    %v5273 = vunpack.c.l.b16 %v5158
    %v5274 = vunpack.c.l.b16 %v5159
    %v5275 = vunpack.c.l.b16 %v5160
    %v5276 = vunpack.c.l.b16 %v5161
    %v5277 = vunpack.c.l.b16 %v5162
    %v5278 = vunpack.c.l.b16 %v5163
    %v5279 = vunpack.c.l.b16 %v5164
    %v5280 = vunpack.c.l.b16 %v5165
    %v5281 = vunpack.c.l.b16 %v5166
    %v5282 = vunpack.c.l.b16 %v5167
    %v5283 = vunpack.c.l.b16 %v5168
    %v5284 = vunpack.c.l.b16 %v5169
    %v5285 = vunpack.c.l.b16 %v5170
    %v5286 = vunpack.c.l.b16 %v5171
    %v5287 = vunpack.c.l.b16 %v5172
    %v5288 = vunpack.c.l.b16 %v5173
    %v5289 = vunpack.c.l.b16 %v5174
    %v5290 = vunpack.c.l.b16 %v5175
    %v5291 = vunpack.c.l.b16 %v5176
    %v5292 = vunpack.c.l.b16 %v5177
    %v5293 = vunpack.c.l.b16 %v5178
    %v5294 = vunpack.c.l.b16 %v5179
    %v5295 = vunpack.c.l.b16 %v5180
    %v5296 = vunpack.c.l.b16 %v5181
    %v5297 = vunpack.c.l.b16 %v5182
    %v5298 = vunpack.c.l.b16 %v5183
    %v5299 = vunpack.c.l.b16 %v5184
    %v5300 = vunpack.c.l.b16 %v5185
    %v5301 = vunpack.c.l.b16 %v5186
    %v5302 = vunpack.c.l.b16 %v5187
    %v5303 = vunpack.c.l.b16 %v5188
    %v5304 = vunpack.c.l.b16 %v5189
    %v5305 = vunpack.c.l.b16 %v5190
    %v5306 = vunpack.c.l.b16 %v5191
    %v5307 = vpack.c.b16 %v5256, %v5255
    %v5308 = vpack.c.b16 %v5258, %v5257
    %v5309 = vpack.c.b16 %v5260, %v5259
    %v5310 = vpack.c.b16 %v5262, %v5261
    %v5311 = vpack.c.b16 %v5264, %v5263
    %v5312 = vpack.c.b16 %v5266, %v5265
    %v5313 = vpack.c.b16 %v5268, %v5267
    %v5314 = vpack.c.b16 %v5270, %v5269
    %v5315 = vpack.c.b16 %v5272, %v5271
    %v5316 = vpack.c.b16 %v5274, %v5273
    %v5317 = vpack.c.b16 %v5276, %v5275
    %v5318 = vpack.c.b16 %v5278, %v5277
    %v5319 = vpack.c.b16 %v5280, %v5279
    %v5320 = vpack.c.b16 %v5282, %v5281
    %v5321 = vpack.c.b16 %v5284, %v5283
    %v5322 = vpack.c.b16 %v5286, %v5285
    %v5323 = vpack.c.b16 %v5288, %v5287
    %v5324 = vpack.c.b16 %v5290, %v5289
    %v5325 = vpack.c.b16 %v5292, %v5291
    %v5326 = vpack.c.b16 %v5294, %v5293
    %v5327 = vpack.c.b16 %v5296, %v5295
    %v5328 = vpack.c.b16 %v5298, %v5297
    %v5329 = vpack.c.b16 %v5300, %v5299
    %v5330 = vpack.c.b16 %v5302, %v5301
    %v5331 = vpack.c.b16 %v5304, %v5303
    %v5332 = vpack.c.b16 %v5306, %v5305
    %v5360 = vsel %vm1022, %v5199, 0
    %5362 = vmatprep.subr.bf16.mxu0 0
    %5363 = vmatpush1.bf16.msra.mxu0 %v5307
    %5364 = vmatprep.subr.bf16.mxu0 0
    %5365 = vmatpush1.bf16.msra.mxu0 %v5308
    %5366 = vmatprep.subr.bf16.mxu0 0
    %5367 = vmatpush1.bf16.msra.mxu0 %v5309
    %5368 = vmatprep.subr.bf16.mxu0 0
    %5369 = vmatpush1.bf16.msra.mxu0 %v5310
    %5370 = vmatprep.subr.bf16.mxu0 0
    %5371 = vmatpush1.bf16.msra.mxu0 %v5311
    %5372 = vmatprep.subr.bf16.mxu0 0
    %5373 = vmatpush1.bf16.msra.mxu0 %v5312
    %5374 = vmatprep.subr.bf16.mxu0 0
    %5375 = vmatpush1.bf16.msra.mxu0 %v5313
    %5376 = vmatprep.subr.bf16.mxu0 0
    %5377 = vmatpush1.bf16.msra.mxu0 %v5314
    %5378 = vmatprep.subr.bf16.mxu0 0
    %5379 = vmatpush1.bf16.msra.mxu0 %v5315
    %5380 = vmatprep.subr.bf16.mxu0 0
    %5381 = vmatpush1.bf16.msra.mxu0 %v5316
    %5382 = vmatprep.subr.bf16.mxu0 0
    %5383 = vmatpush1.bf16.msra.mxu0 %v5317
    %5384 = vmatprep.subr.bf16.mxu0 0
    %5385 = vmatpush1.bf16.msra.mxu0 %v5318
    %5386 = vmatprep.subr.bf16.mxu0 0
    %5387 = vmatpush1.bf16.msra.mxu0 %v5319
    %5388 = vmatprep.subr.bf16.mxu0 0
    %5389 = vmatpush1.bf16.msra.mxu0 %v5320
    %5390 = vmatprep.subr.bf16.mxu0 0
    %5391 = vmatpush1.bf16.msra.mxu0 %v5321
    %5392 = vmatprep.subr.bf16.mxu0 0
    %5393 = vmatpush1.bf16.msra.mxu0 %v5322
    %5394 = vmatprep.mubr.bf16.mxu0 %v5197
    %5395 = vmatmul.mubr.bf16.gmra.mrb[0].mxu0 %v5196
    %v5396 = vpop.f32.mrb[0].mxu0
    %v5397 = vadd.f32 0.0, %v5396
    %v5398 = vpop.f32.mrb[0].mxu0
    %v5399 = vpop.f32.mrb[0].mxu0
    %v5400 = vpop.f32.mrb[0].mxu0
    %5401 = vdwg.mxu0
    %5402 = vmatprep.subr.bf16.mxu0 0
    %5403 = vmatpush1.bf16.msra.mxu0 %v5323
    %5404 = vmatprep.subr.bf16.mxu0 0
    %5405 = vmatpush1.bf16.msra.mxu0 %v5324
    %5406 = vmatprep.subr.bf16.mxu0 0
    %5407 = vmatpush1.bf16.msra.mxu0 %v5325
    %5408 = vmatprep.subr.bf16.mxu0 0
    %5409 = vmatpush1.bf16.msra.mxu0 %v5326
    %5410 = vmatprep.subr.bf16.mxu0 0
    %5411 = vmatpush1.bf16.msra.mxu0 %v5327
    %5412 = vmatprep.subr.bf16.mxu0 0
    %5413 = vmatpush1.bf16.msra.mxu0 %v5328
    %5414 = vmatprep.subr.bf16.mxu0 0
    %5415 = vmatpush1.bf16.msra.mxu0 %v5329
    %5416 = vmatprep.subr.bf16.mxu0 0
    %5417 = vmatpush1.bf16.msra.mxu0 %v5330
    %5418 = vmatprep.subr.bf16.mxu0 0
    %5419 = vmatpush1.bf16.msra.mxu0 %v5331
    %5420 = vmatprep.subr.bf16.mxu0 0
    %5421 = vmatpush1.bf16.msra.mxu0 %v5332
    %5422 = vmatprep.subr.bf16.mxu0 0
    %5423 = vmatpush1.bf16.msra.mxu0 0
    %5424 = vmatprep.subr.bf16.mxu0 0
    %5425 = vmatpush1.bf16.msra.mxu0 0
    %5426 = vmatprep.subr.bf16.mxu0 0
    %5427 = vmatpush1.bf16.msra.mxu0 0
    %5428 = vmatprep.subr.bf16.mxu0 0
    %5429 = vmatpush1.bf16.msra.mxu0 0
    %5430 = vmatprep.subr.bf16.mxu0 0
    %5431 = vmatpush1.bf16.msra.mxu0 0
    %5432 = vmatprep.subr.bf16.mxu0 0
    %5433 = vmatpush1.bf16.msra.mxu0 0
    %5434 = vmatprep.mubr.bf16.mxu0 %v5360
    %5435 = vmatmul.mubr.bf16.gmra.mrb[0].mxu0 %v5198
    %v5436 = vpop.f32.mrb[0].mxu0
    %v5437 = vadd.f32 %v5397, %v5436
    %v5438 = vpop.f32.mrb[0].mxu0
    %v5439 = vpop.f32.mrb[0].mxu0
    %v5440 = vpop.f32.mrb[0].mxu0
    %5441 = vdwg.mxu0
    %v5494 = vunpack.c.l.b16 %v5036
    %v5495 = vunpack.c.l.b16 %v5037
    %v5496 = vunpack.c.l.b16 %v5038
    %v5497 = vunpack.c.l.b16 %v5039
    %v5498 = vunpack.c.l.b16 %v5040
    %v5499 = vunpack.c.l.b16 %v5041
    %v5500 = vunpack.c.l.b16 %v5042
    %v5501 = vunpack.c.l.b16 %v5043
    %v5502 = vunpack.c.l.b16 %v5044
    %v5503 = vunpack.c.l.b16 %v5045
    %v5504 = vunpack.c.l.b16 %v5046
    %v5505 = vunpack.c.l.b16 %v5047
    %v5506 = vunpack.c.l.b16 %v5048
    %v5507 = vunpack.c.l.b16 %v5049
    %v5508 = vunpack.c.l.b16 %v5050
    %v5509 = vunpack.c.l.b16 %v5051
    %v5510 = vunpack.c.l.b16 %v5052
    %v5511 = vunpack.c.l.b16 %v5053
    %v5512 = vunpack.c.l.b16 %v5054
    %v5513 = vunpack.c.l.b16 %v5055
    %v5514 = vunpack.c.l.b16 %v5056
    %v5515 = vunpack.c.l.b16 %v5057
    %v5516 = vunpack.c.l.b16 %v5058
    %v5517 = vunpack.c.l.b16 %v5059
    %v5518 = vunpack.c.l.b16 %v5060
    %v5519 = vunpack.c.l.b16 %v5061
    %v5520 = vunpack.c.l.b16 %v5062
    %v5521 = vunpack.c.l.b16 %v5063
    %v5522 = vunpack.c.l.b16 %v5064
    %v5523 = vunpack.c.l.b16 %v5065
    %v5524 = vunpack.c.l.b16 %v5066
    %v5525 = vunpack.c.l.b16 %v5067
    %v5526 = vunpack.c.l.b16 %v5068
    %v5527 = vunpack.c.l.b16 %v5069
    %v5528 = vunpack.c.l.b16 %v5070
    %v5529 = vunpack.c.l.b16 %v5071
    %v5530 = vunpack.c.l.b16 %v5072
    %v5531 = vunpack.c.l.b16 %v5073
    %v5532 = vunpack.c.l.b16 %v5074
    %v5533 = vunpack.c.l.b16 %v5075
    %v5534 = vunpack.c.l.b16 %v5076
    %v5535 = vunpack.c.l.b16 %v5077
    %v5536 = vunpack.c.l.b16 %v5078
    %v5537 = vunpack.c.l.b16 %v5079
    %v5538 = vunpack.c.l.b16 %v5080
    %v5539 = vunpack.c.l.b16 %v5081
    %v5540 = vunpack.c.l.b16 %v5082
    %v5541 = vunpack.c.l.b16 %v5083
    %v5542 = vunpack.c.l.b16 %v5084
    %v5543 = vunpack.c.l.b16 %v5085
    %v5544 = vunpack.c.l.b16 %v5086
    %v5545 = vunpack.c.l.b16 %v5087
    %v5546 = vpack.c.b16 %v5495, %v5494
    %v5547 = vpack.c.b16 %v5497, %v5496
    %v5548 = vpack.c.b16 %v5499, %v5498
    %v5549 = vpack.c.b16 %v5501, %v5500
    %v5550 = vpack.c.b16 %v5503, %v5502
    %v5551 = vpack.c.b16 %v5505, %v5504
    %v5552 = vpack.c.b16 %v5507, %v5506
    %v5553 = vpack.c.b16 %v5509, %v5508
    %v5554 = vpack.c.b16 %v5511, %v5510
    %v5555 = vpack.c.b16 %v5513, %v5512
    %v5556 = vpack.c.b16 %v5515, %v5514
    %v5557 = vpack.c.b16 %v5517, %v5516
    %v5558 = vpack.c.b16 %v5519, %v5518
    %v5559 = vpack.c.b16 %v5521, %v5520
    %v5560 = vpack.c.b16 %v5523, %v5522
    %v5561 = vpack.c.b16 %v5525, %v5524
    %v5562 = vpack.c.b16 %v5527, %v5526
    %v5563 = vpack.c.b16 %v5529, %v5528
    %v5564 = vpack.c.b16 %v5531, %v5530
    %v5565 = vpack.c.b16 %v5533, %v5532
    %v5566 = vpack.c.b16 %v5535, %v5534
    %v5567 = vpack.c.b16 %v5537, %v5536
    %v5568 = vpack.c.b16 %v5539, %v5538
    %v5569 = vpack.c.b16 %v5541, %v5540
    %v5570 = vpack.c.b16 %v5543, %v5542
    %v5571 = vpack.c.b16 %v5545, %v5544
    %v5599 = vsel %vm1022, %v5035, 0
    %5601 = vmatprep.subr.bf16.mxu0 0
    %5602 = vmatpush1.bf16.msra.mxu0 %v5546
    %5603 = vmatprep.subr.bf16.mxu0 0
    %5604 = vmatpush1.bf16.msra.mxu0 %v5547
    %5605 = vmatprep.subr.bf16.mxu0 0
    %5606 = vmatpush1.bf16.msra.mxu0 %v5548
    %5607 = vmatprep.subr.bf16.mxu0 0
    %5608 = vmatpush1.bf16.msra.mxu0 %v5549
    %5609 = vmatprep.subr.bf16.mxu0 0
    %5610 = vmatpush1.bf16.msra.mxu0 %v5550
    %5611 = vmatprep.subr.bf16.mxu0 0
    %5612 = vmatpush1.bf16.msra.mxu0 %v5551
    %5613 = vmatprep.subr.bf16.mxu0 0
    %5614 = vmatpush1.bf16.msra.mxu0 %v5552
    %5615 = vmatprep.subr.bf16.mxu0 0
    %5616 = vmatpush1.bf16.msra.mxu0 %v5553
    %5617 = vmatprep.subr.bf16.mxu0 0
    %5618 = vmatpush1.bf16.msra.mxu0 %v5554
    %5619 = vmatprep.subr.bf16.mxu0 0
    %5620 = vmatpush1.bf16.msra.mxu0 %v5555
    %5621 = vmatprep.subr.bf16.mxu0 0
    %5622 = vmatpush1.bf16.msra.mxu0 %v5556
    %5623 = vmatprep.subr.bf16.mxu0 0
    %5624 = vmatpush1.bf16.msra.mxu0 %v5557
    %5625 = vmatprep.subr.bf16.mxu0 0
    %5626 = vmatpush1.bf16.msra.mxu0 %v5558
    %5627 = vmatprep.subr.bf16.mxu0 0
    %5628 = vmatpush1.bf16.msra.mxu0 %v5559
    %5629 = vmatprep.subr.bf16.mxu0 0
    %5630 = vmatpush1.bf16.msra.mxu0 %v5560
    %5631 = vmatprep.subr.bf16.mxu0 0
    %5632 = vmatpush1.bf16.msra.mxu0 %v5561
    %5633 = vmatprep.mubr.bf16.mxu0 %v5033
    %5634 = vmatmul.mubr.bf16.gmra.mrb[0].mxu0 %v5032
    %v5635 = vpop.f32.mrb[0].mxu0
    %v5636 = vadd.f32 %v5437, %v5635
    %v5637 = vpop.f32.mrb[0].mxu0
    %v5638 = vpop.f32.mrb[0].mxu0
    %v5639 = vpop.f32.mrb[0].mxu0
    %5640 = vdwg.mxu0
    %5641 = vmatprep.subr.bf16.mxu0 0
    %5642 = vmatpush1.bf16.msra.mxu0 %v5562
    %5643 = vmatprep.subr.bf16.mxu0 0
    %5644 = vmatpush1.bf16.msra.mxu0 %v5563
    %5645 = vmatprep.subr.bf16.mxu0 0
    %5646 = vmatpush1.bf16.msra.mxu0 %v5564
    %5647 = vmatprep.subr.bf16.mxu0 0
    %5648 = vmatpush1.bf16.msra.mxu0 %v5565
    %5649 = vmatprep.subr.bf16.mxu0 0
    %5650 = vmatpush1.bf16.msra.mxu0 %v5566
    %5651 = vmatprep.subr.bf16.mxu0 0
    %5652 = vmatpush1.bf16.msra.mxu0 %v5567
    %5653 = vmatprep.subr.bf16.mxu0 0
    %5654 = vmatpush1.bf16.msra.mxu0 %v5568
    %5655 = vmatprep.subr.bf16.mxu0 0
    %5656 = vmatpush1.bf16.msra.mxu0 %v5569
    %5657 = vmatprep.subr.bf16.mxu0 0
    %5658 = vmatpush1.bf16.msra.mxu0 %v5570
    %5659 = vmatprep.subr.bf16.mxu0 0
    %5660 = vmatpush1.bf16.msra.mxu0 %v5571
    %5661 = vmatprep.subr.bf16.mxu0 0
    %5662 = vmatpush1.bf16.msra.mxu0 0
    %5663 = vmatprep.subr.bf16.mxu0 0
    %5664 = vmatpush1.bf16.msra.mxu0 0
    %5665 = vmatprep.subr.bf16.mxu0 0
    %5666 = vmatpush1.bf16.msra.mxu0 0
    %5667 = vmatprep.subr.bf16.mxu0 0
    %5668 = vmatpush1.bf16.msra.mxu0 0
    %5669 = vmatprep.subr.bf16.mxu0 0
    %5670 = vmatpush1.bf16.msra.mxu0 0
    %5671 = vmatprep.subr.bf16.mxu0 0
    %5672 = vmatpush1.bf16.msra.mxu0 0
    %5673 = vmatprep.mubr.bf16.mxu0 %v5599
    %5674 = vmatmul.mubr.bf16.gmra.mrb[0].mxu0 %v5034
    %v5675 = vpop.f32.mrb[0].mxu0
    %v5676 = vadd.f32 %v5636, %v5675
    %v5677 = vpop.f32.mrb[0].mxu0
    %v5678 = vpop.f32.mrb[0].mxu0
    %v5679 = vpop.f32.mrb[0].mxu0
    %5680 = vdwg.mxu0
    %v5681 = vld [vmem:[%s1345] sm:$0xf]
    %v5682 = vld [vmem:[%s1345 + $0x4] sm:$0xf]
    %v5683 = vld [vmem:[%s1345 + $0x8] sm:$0xf]
    %v5684 = vld [vmem:[%s1345 + $0xc] sm:$0xf]
    %v5685 = vld [vmem:[%s1345 + $0x10] sm:$0xf]
    %v5686 = vld [vmem:[%s1345 + $0x14] sm:$0xf]
    %v5687 = vld [vmem:[%s1345 + $0x18] sm:$0xf]
    %v5688 = vld [vmem:[%s1345 + $0x1c] sm:$0xf]
    %v5689 = vld [vmem:[%s1345 + $0x20] sm:$0xf]
    %v5690 = vld [vmem:[%s1345 + $0x24] sm:$0xf]
    %v5691 = vld [vmem:[%s1345 + $0x28] sm:$0xf]
    %v5692 = vld [vmem:[%s1345 + $0x2c] sm:$0xf]
    %v5693 = vld [vmem:[%s1345 + $0x30] sm:$0xf]
    %v5694 = vld [vmem:[%s1345 + $0x34] sm:$0xf]
    %v5695 = vld [vmem:[%s1345 + $0x38] sm:$0xf]
    %v5696 = vld [vmem:[%s1345 + $0x3c] sm:$0xf]
    %v5697 = vld [vmem:[%s1345 + $0x40] sm:$0xf]
    %v5698 = vld [vmem:[%s1345 + $0x44] sm:$0xf]
    %v5699 = vld [vmem:[%s1345 + $0x48] sm:$0xf]
    %v5700 = vld [vmem:[%s1345 + $0x4c] sm:$0xf]
    %v5701 = vld [vmem:[%s1345 + $0x50] sm:$0xf]
    %v5702 = vld [vmem:[%s1345 + $0x54] sm:$0xf]
    %v5703 = vld [vmem:[%s1345 + $0x58] sm:$0xf]
    %v5704 = vld [vmem:[%s1345 + $0x5c] sm:$0xf]
    %v5705 = vld [vmem:[%s1345 + $0x60] sm:$0xf]
    %v5706 = vld [vmem:[%s1345 + $0x64] sm:$0xf]
    %v5707 = vld [vmem:[%s1345 + $0x68] sm:$0xf]
    %v5708 = vld [vmem:[%s1345 + $0x6c] sm:$0xf]
    %v5709 = vld [vmem:[%s1345 + $0x70] sm:$0xf]
    %v5710 = vld [vmem:[%s1345 + $0x74] sm:$0xf]
    %v5711 = vld [vmem:[%s1345 + $0x78] sm:$0xf]
    %v5712 = vld [vmem:[%s1345 + $0x7c] sm:$0xf]
    %v5713 = vld [vmem:[%s1345 + $0x80] sm:$0xf]
    %v5714 = vld [vmem:[%s1345 + $0x84] sm:$0xf]
    %v5715 = vld [vmem:[%s1345 + $0x88] sm:$0xf]
    %v5716 = vld [vmem:[%s1345 + $0x8c] sm:$0xf]
    %v5717 = vld [vmem:[%s1345 + $0x90] sm:$0xf]
    %v5718 = vld [vmem:[%s1345 + $0x94] sm:$0xf]
    %v5719 = vld [vmem:[%s1345 + $0x98] sm:$0xf]
    %v5720 = vld [vmem:[%s1345 + $0x9c] sm:$0xf]
    %v5721 = vld [vmem:[%s1345 + $0xa0] sm:$0xf]
    %v5722 = vld [vmem:[%s1345 + $0xa4] sm:$0xf]
    %v5723 = vld [vmem:[%s1345 + $0xa8] sm:$0xf]
    %v5724 = vld [vmem:[%s1345 + $0xac] sm:$0xf]
    %v5725 = vld [vmem:[%s1345 + $0xb0] sm:$0xf]
    %v5726 = vld [vmem:[%s1345 + $0xb4] sm:$0xf]
    %v5727 = vld [vmem:[%s1345 + $0xb8] sm:$0xf]
    %v5728 = vld [vmem:[%s1345 + $0xbc] sm:$0xf]
    %v5729 = vld [vmem:[%s1345 + $0xc0] sm:$0xf]
    %v5730 = vld [vmem:[%s1345 + $0xc4] sm:$0xf]
    %v5731 = vld [vmem:[%s1345 + $0xc8] sm:$0xf]
    %v5732 = vld [vmem:[%s1345 + $0xcc] sm:$0xf]
    %v5734 = vshrl.u32 %v5032, 16
    %v5736 = vrot.slane %v5734, 1
    %v5738 = vshrl.u32 %v5033, 16
    %v5740 = vrot.slane %v5738, 1
    %v5742 = vshrl.u32 %v5034, 16
    %v5744 = vrot.slane %v5742, 1
    %v5745 = vshrl.u32 %v5035, 16
    %v5747 = vrot.slane %v5745, 1
    %v5803 = vunpack.c.l.b16 %v5681
    %v5804 = vunpack.c.l.b16 %v5682
    %v5805 = vunpack.c.l.b16 %v5683
    %v5806 = vunpack.c.l.b16 %v5684
    %v5807 = vunpack.c.l.b16 %v5685
    %v5808 = vunpack.c.l.b16 %v5686
    %v5809 = vunpack.c.l.b16 %v5687
    %v5810 = vunpack.c.l.b16 %v5688
    %v5811 = vunpack.c.l.b16 %v5689
    %v5812 = vunpack.c.l.b16 %v5690
    %v5813 = vunpack.c.l.b16 %v5691
    %v5814 = vunpack.c.l.b16 %v5692
    %v5815 = vunpack.c.l.b16 %v5693
    %v5816 = vunpack.c.l.b16 %v5694
    %v5817 = vunpack.c.l.b16 %v5695
    %v5818 = vunpack.c.l.b16 %v5696
    %v5819 = vunpack.c.l.b16 %v5697
    %v5820 = vunpack.c.l.b16 %v5698
    %v5821 = vunpack.c.l.b16 %v5699
    %v5822 = vunpack.c.l.b16 %v5700
    %v5823 = vunpack.c.l.b16 %v5701
    %v5824 = vunpack.c.l.b16 %v5702
    %v5825 = vunpack.c.l.b16 %v5703
    %v5826 = vunpack.c.l.b16 %v5704
    %v5827 = vunpack.c.l.b16 %v5705
    %v5828 = vunpack.c.l.b16 %v5706
    %v5829 = vunpack.c.l.b16 %v5707
    %v5830 = vunpack.c.l.b16 %v5708
    %v5831 = vunpack.c.l.b16 %v5709
    %v5832 = vunpack.c.l.b16 %v5710
    %v5833 = vunpack.c.l.b16 %v5711
    %v5834 = vunpack.c.l.b16 %v5712
    %v5835 = vunpack.c.l.b16 %v5713
    %v5836 = vunpack.c.l.b16 %v5714
    %v5837 = vunpack.c.l.b16 %v5715
    %v5838 = vunpack.c.l.b16 %v5716
    %v5839 = vunpack.c.l.b16 %v5717
    %v5840 = vunpack.c.l.b16 %v5718
    %v5841 = vunpack.c.l.b16 %v5719
    %v5842 = vunpack.c.l.b16 %v5720
    %v5843 = vunpack.c.l.b16 %v5721
    %v5844 = vunpack.c.l.b16 %v5722
    %v5845 = vunpack.c.l.b16 %v5723
    %v5846 = vunpack.c.l.b16 %v5724
    %v5847 = vunpack.c.l.b16 %v5725
    %v5848 = vunpack.c.l.b16 %v5726
    %v5849 = vunpack.c.l.b16 %v5727
    %v5850 = vunpack.c.l.b16 %v5728
    %v5851 = vunpack.c.l.b16 %v5729
    %v5852 = vunpack.c.l.b16 %v5730
    %v5853 = vunpack.c.l.b16 %v5731
    %v5854 = vunpack.c.l.b16 %v5732
    %v5855 = vpack.c.b16 %v5804, %v5803
    %v5856 = vpack.c.b16 %v5806, %v5805
    %v5857 = vpack.c.b16 %v5808, %v5807
    %v5858 = vpack.c.b16 %v5810, %v5809
    %v5859 = vpack.c.b16 %v5812, %v5811
    %v5860 = vpack.c.b16 %v5814, %v5813
    %v5861 = vpack.c.b16 %v5816, %v5815
    %v5862 = vpack.c.b16 %v5818, %v5817
    %v5863 = vpack.c.b16 %v5820, %v5819
    %v5864 = vpack.c.b16 %v5822, %v5821
    %v5865 = vpack.c.b16 %v5824, %v5823
    %v5866 = vpack.c.b16 %v5826, %v5825
    %v5867 = vpack.c.b16 %v5828, %v5827
    %v5868 = vpack.c.b16 %v5830, %v5829
    %v5869 = vpack.c.b16 %v5832, %v5831
    %v5870 = vpack.c.b16 %v5834, %v5833
    %v5871 = vpack.c.b16 %v5836, %v5835
    %v5872 = vpack.c.b16 %v5838, %v5837
    %v5873 = vpack.c.b16 %v5840, %v5839
    %v5874 = vpack.c.b16 %v5842, %v5841
    %v5875 = vpack.c.b16 %v5844, %v5843
    %v5876 = vpack.c.b16 %v5846, %v5845
    %v5877 = vpack.c.b16 %v5848, %v5847
    %v5878 = vpack.c.b16 %v5850, %v5849
    %v5879 = vpack.c.b16 %v5852, %v5851
    %v5880 = vpack.c.b16 %v5854, %v5853
    %v5908 = vsel %vm1022, %v5747, 0
    %5910 = vmatprep.subr.bf16.mxu0 0
    %5911 = vmatpush1.bf16.msra.mxu0 %v5855
    %5912 = vmatprep.subr.bf16.mxu0 0
    %5913 = vmatpush1.bf16.msra.mxu0 %v5856
    %5914 = vmatprep.subr.bf16.mxu0 0
    %5915 = vmatpush1.bf16.msra.mxu0 %v5857
    %5916 = vmatprep.subr.bf16.mxu0 0
    %5917 = vmatpush1.bf16.msra.mxu0 %v5858
    %5918 = vmatprep.subr.bf16.mxu0 0
    %5919 = vmatpush1.bf16.msra.mxu0 %v5859
    %5920 = vmatprep.subr.bf16.mxu0 0
    %5921 = vmatpush1.bf16.msra.mxu0 %v5860
    %5922 = vmatprep.subr.bf16.mxu0 0
    %5923 = vmatpush1.bf16.msra.mxu0 %v5861
    %5924 = vmatprep.subr.bf16.mxu0 0
    %5925 = vmatpush1.bf16.msra.mxu0 %v5862
    %5926 = vmatprep.subr.bf16.mxu0 0
    %5927 = vmatpush1.bf16.msra.mxu0 %v5863
    %5928 = vmatprep.subr.bf16.mxu0 0
    %5929 = vmatpush1.bf16.msra.mxu0 %v5864
    %5930 = vmatprep.subr.bf16.mxu0 0
    %5931 = vmatpush1.bf16.msra.mxu0 %v5865
    %5932 = vmatprep.subr.bf16.mxu0 0
    %5933 = vmatpush1.bf16.msra.mxu0 %v5866
    %5934 = vmatprep.subr.bf16.mxu0 0
    %5935 = vmatpush1.bf16.msra.mxu0 %v5867
    %5936 = vmatprep.subr.bf16.mxu0 0
    %5937 = vmatpush1.bf16.msra.mxu0 %v5868
    %5938 = vmatprep.subr.bf16.mxu0 0
    %5939 = vmatpush1.bf16.msra.mxu0 %v5869
    %5940 = vmatprep.subr.bf16.mxu0 0
    %5941 = vmatpush1.bf16.msra.mxu0 %v5870
    %5942 = vmatprep.mubr.bf16.mxu0 %v5740
    %5943 = vmatmul.mubr.bf16.gmra.mrb[0].mxu0 %v5736
    %v5944 = vpop.f32.mrb[0].mxu0
    %v5945 = vadd.f32 0.0, %v5944
    %v5946 = vpop.f32.mrb[0].mxu0
    %v5947 = vpop.f32.mrb[0].mxu0
    %v5948 = vpop.f32.mrb[0].mxu0
    %5949 = vdwg.mxu0
    %5950 = vmatprep.subr.bf16.mxu0 0
    %5951 = vmatpush1.bf16.msra.mxu0 %v5871
    %5952 = vmatprep.subr.bf16.mxu0 0
    %5953 = vmatpush1.bf16.msra.mxu0 %v5872
    %5954 = vmatprep.subr.bf16.mxu0 0
    %5955 = vmatpush1.bf16.msra.mxu0 %v5873
    %5956 = vmatprep.subr.bf16.mxu0 0
    %5957 = vmatpush1.bf16.msra.mxu0 %v5874
    %5958 = vmatprep.subr.bf16.mxu0 0
    %5959 = vmatpush1.bf16.msra.mxu0 %v5875
    %5960 = vmatprep.subr.bf16.mxu0 0
    %5961 = vmatpush1.bf16.msra.mxu0 %v5876
    %5962 = vmatprep.subr.bf16.mxu0 0
    %5963 = vmatpush1.bf16.msra.mxu0 %v5877
    %5964 = vmatprep.subr.bf16.mxu0 0
    %5965 = vmatpush1.bf16.msra.mxu0 %v5878
    %5966 = vmatprep.subr.bf16.mxu0 0
    %5967 = vmatpush1.bf16.msra.mxu0 %v5879
    %5968 = vmatprep.subr.bf16.mxu0 0
    %5969 = vmatpush1.bf16.msra.mxu0 %v5880
    %5970 = vmatprep.subr.bf16.mxu0 0
    %5971 = vmatpush1.bf16.msra.mxu0 0
    %5972 = vmatprep.subr.bf16.mxu0 0
    %5973 = vmatpush1.bf16.msra.mxu0 0
    %5974 = vmatprep.subr.bf16.mxu0 0
    %5975 = vmatpush1.bf16.msra.mxu0 0
    %5976 = vmatprep.subr.bf16.mxu0 0
    %5977 = vmatpush1.bf16.msra.mxu0 0
    %5978 = vmatprep.subr.bf16.mxu0 0
    %5979 = vmatpush1.bf16.msra.mxu0 0
    %5980 = vmatprep.subr.bf16.mxu0 0
    %5981 = vmatpush1.bf16.msra.mxu0 0
    %5982 = vmatprep.mubr.bf16.mxu0 %v5908
    %5983 = vmatmul.mubr.bf16.gmra.mrb[0].mxu0 %v5744
    %v5984 = vpop.f32.mrb[0].mxu0
    %v5985 = vadd.f32 %v5945, %v5984
    %v5986 = vpop.f32.mrb[0].mxu0
    %v5987 = vpop.f32.mrb[0].mxu0
    %v5988 = vpop.f32.mrb[0].mxu0
    %5989 = vdwg.mxu0
    %v6045 = vunpack.c.l.b16 %v5088
    %v6046 = vunpack.c.l.b16 %v5089
    %v6047 = vunpack.c.l.b16 %v5090
    %v6048 = vunpack.c.l.b16 %v5091
    %v6049 = vunpack.c.l.b16 %v5092
    %v6050 = vunpack.c.l.b16 %v5093
    %v6051 = vunpack.c.l.b16 %v5094
    %v6052 = vunpack.c.l.b16 %v5095
    %v6053 = vunpack.c.l.b16 %v5096
    %v6054 = vunpack.c.l.b16 %v5097
    %v6055 = vunpack.c.l.b16 %v5098
    %v6056 = vunpack.c.l.b16 %v5099
    %v6057 = vunpack.c.l.b16 %v5100
    %v6058 = vunpack.c.l.b16 %v5101
    %v6059 = vunpack.c.l.b16 %v5102
    %v6060 = vunpack.c.l.b16 %v5103
    %v6061 = vunpack.c.l.b16 %v5104
    %v6062 = vunpack.c.l.b16 %v5105
    %v6063 = vunpack.c.l.b16 %v5106
    %v6064 = vunpack.c.l.b16 %v5107
    %v6065 = vunpack.c.l.b16 %v5108
    %v6066 = vunpack.c.l.b16 %v5109
    %v6067 = vunpack.c.l.b16 %v5110
    %v6068 = vunpack.c.l.b16 %v5111
    %v6069 = vunpack.c.l.b16 %v5112
    %v6070 = vunpack.c.l.b16 %v5113
    %v6071 = vunpack.c.l.b16 %v5114
    %v6072 = vunpack.c.l.b16 %v5115
    %v6073 = vunpack.c.l.b16 %v5116
    %v6074 = vunpack.c.l.b16 %v5117
    %v6075 = vunpack.c.l.b16 %v5118
    %v6076 = vunpack.c.l.b16 %v5119
    %v6077 = vunpack.c.l.b16 %v5120
    %v6078 = vunpack.c.l.b16 %v5121
    %v6079 = vunpack.c.l.b16 %v5122
    %v6080 = vunpack.c.l.b16 %v5123
    %v6081 = vunpack.c.l.b16 %v5124
    %v6082 = vunpack.c.l.b16 %v5125
    %v6083 = vunpack.c.l.b16 %v5126
    %v6084 = vunpack.c.l.b16 %v5127
    %v6085 = vunpack.c.l.b16 %v5128
    %v6086 = vunpack.c.l.b16 %v5129
    %v6087 = vunpack.c.l.b16 %v5130
    %v6088 = vunpack.c.l.b16 %v5131
    %v6089 = vunpack.c.l.b16 %v5132
    %v6090 = vunpack.c.l.b16 %v5133
    %v6091 = vunpack.c.l.b16 %v5134
    %v6092 = vunpack.c.l.b16 %v5135
    %v6093 = vunpack.c.l.b16 %v5136
    %v6094 = vunpack.c.l.b16 %v5137
    %v6095 = vunpack.c.l.b16 %v5138
    %v6096 = vunpack.c.l.b16 %v5139
    %v6097 = vpack.c.b16 %v6046, %v6045
    %v6098 = vpack.c.b16 %v6048, %v6047
    %v6099 = vpack.c.b16 %v6050, %v6049
    %v6100 = vpack.c.b16 %v6052, %v6051
    %v6101 = vpack.c.b16 %v6054, %v6053
    %v6102 = vpack.c.b16 %v6056, %v6055
    %v6103 = vpack.c.b16 %v6058, %v6057
    %v6104 = vpack.c.b16 %v6060, %v6059
    %v6105 = vpack.c.b16 %v6062, %v6061
    %v6106 = vpack.c.b16 %v6064, %v6063
    %v6107 = vpack.c.b16 %v6066, %v6065
    %v6108 = vpack.c.b16 %v6068, %v6067
    %v6109 = vpack.c.b16 %v6070, %v6069
    %v6110 = vpack.c.b16 %v6072, %v6071
    %v6111 = vpack.c.b16 %v6074, %v6073
    %v6112 = vpack.c.b16 %v6076, %v6075
    %v6113 = vpack.c.b16 %v6078, %v6077
    %v6114 = vpack.c.b16 %v6080, %v6079
    %v6115 = vpack.c.b16 %v6082, %v6081
    %v6116 = vpack.c.b16 %v6084, %v6083
    %v6117 = vpack.c.b16 %v6086, %v6085
    %v6118 = vpack.c.b16 %v6088, %v6087
    %v6119 = vpack.c.b16 %v6090, %v6089
    %v6120 = vpack.c.b16 %v6092, %v6091
    %v6121 = vpack.c.b16 %v6094, %v6093
    %v6122 = vpack.c.b16 %v6096, %v6095
    %v6150 = vsel %vm1022, %v5745, 0
    %6152 = vmatprep.subr.bf16.mxu0 0
    %6153 = vmatpush1.bf16.msra.mxu0 %v6097
    %6154 = vmatprep.subr.bf16.mxu0 0
    %6155 = vmatpush1.bf16.msra.mxu0 %v6098
    %6156 = vmatprep.subr.bf16.mxu0 0
    %6157 = vmatpush1.bf16.msra.mxu0 %v6099
    %6158 = vmatprep.subr.bf16.mxu0 0
    %6159 = vmatpush1.bf16.msra.mxu0 %v6100
    %6160 = vmatprep.subr.bf16.mxu0 0
    %6161 = vmatpush1.bf16.msra.mxu0 %v6101
    %6162 = vmatprep.subr.bf16.mxu0 0
    %6163 = vmatpush1.bf16.msra.mxu0 %v6102
    %6164 = vmatprep.subr.bf16.mxu0 0
    %6165 = vmatpush1.bf16.msra.mxu0 %v6103
    %6166 = vmatprep.subr.bf16.mxu0 0
    %6167 = vmatpush1.bf16.msra.mxu0 %v6104
    %6168 = vmatprep.subr.bf16.mxu0 0
    %6169 = vmatpush1.bf16.msra.mxu0 %v6105
    %6170 = vmatprep.subr.bf16.mxu0 0
    %6171 = vmatpush1.bf16.msra.mxu0 %v6106
    %6172 = vmatprep.subr.bf16.mxu0 0
    %6173 = vmatpush1.bf16.msra.mxu0 %v6107
    %6174 = vmatprep.subr.bf16.mxu0 0
    %6175 = vmatpush1.bf16.msra.mxu0 %v6108
    %6176 = vmatprep.subr.bf16.mxu0 0
    %6177 = vmatpush1.bf16.msra.mxu0 %v6109
    %6178 = vmatprep.subr.bf16.mxu0 0
    %6179 = vmatpush1.bf16.msra.mxu0 %v6110
    %6180 = vmatprep.subr.bf16.mxu0 0
    %6181 = vmatpush1.bf16.msra.mxu0 %v6111
    %6182 = vmatprep.subr.bf16.mxu0 0
    %6183 = vmatpush1.bf16.msra.mxu0 %v6112
    %6184 = vmatprep.mubr.bf16.mxu0 %v5738
    %6185 = vmatmul.mubr.bf16.gmra.mrb[0].mxu0 %v5734
    %v6186 = vpop.f32.mrb[0].mxu0
    %v6187 = vadd.f32 %v5985, %v6186
    %v6188 = vpop.f32.mrb[0].mxu0
    %v6189 = vpop.f32.mrb[0].mxu0
    %v6190 = vpop.f32.mrb[0].mxu0
    %6191 = vdwg.mxu0
    %6192 = vmatprep.subr.bf16.mxu0 0
    %6193 = vmatpush1.bf16.msra.mxu0 %v6113
    %6194 = vmatprep.subr.bf16.mxu0 0
    %6195 = vmatpush1.bf16.msra.mxu0 %v6114
    %6196 = vmatprep.subr.bf16.mxu0 0
    %6197 = vmatpush1.bf16.msra.mxu0 %v6115
    %6198 = vmatprep.subr.bf16.mxu0 0
    %6199 = vmatpush1.bf16.msra.mxu0 %v6116
    %6200 = vmatprep.subr.bf16.mxu0 0
    %6201 = vmatpush1.bf16.msra.mxu0 %v6117
    %6202 = vmatprep.subr.bf16.mxu0 0
    %6203 = vmatpush1.bf16.msra.mxu0 %v6118
    %6204 = vmatprep.subr.bf16.mxu0 0
    %6205 = vmatpush1.bf16.msra.mxu0 %v6119
    %6206 = vmatprep.subr.bf16.mxu0 0
    %6207 = vmatpush1.bf16.msra.mxu0 %v6120
    %6208 = vmatprep.subr.bf16.mxu0 0
    %6209 = vmatpush1.bf16.msra.mxu0 %v6121
    %6210 = vmatprep.subr.bf16.mxu0 0
    %6211 = vmatpush1.bf16.msra.mxu0 %v6122
    %6212 = vmatprep.subr.bf16.mxu0 0
    %6213 = vmatpush1.bf16.msra.mxu0 0
    %6214 = vmatprep.subr.bf16.mxu0 0
    %6215 = vmatpush1.bf16.msra.mxu0 0
    %6216 = vmatprep.subr.bf16.mxu0 0
    %6217 = vmatpush1.bf16.msra.mxu0 0
    %6218 = vmatprep.subr.bf16.mxu0 0
    %6219 = vmatpush1.bf16.msra.mxu0 0
    %6220 = vmatprep.subr.bf16.mxu0 0
    %6221 = vmatpush1.bf16.msra.mxu0 0
    %6222 = vmatprep.subr.bf16.mxu0 0
    %6223 = vmatpush1.bf16.msra.mxu0 0
    %6224 = vmatprep.mubr.bf16.mxu0 %v6150
    %6225 = vmatmul.mubr.bf16.gmra.mrb[0].mxu0 %v5742
    %v6226 = vpop.f32.mrb[0].mxu0
    %v6227 = vadd.f32 %v6187, %v6226
    %v6228 = vpop.f32.mrb[0].mxu0
    %v6229 = vpop.f32.mrb[0].mxu0
    %v6230 = vpop.f32.mrb[0].mxu0
    %6231 = vdwg.mxu0
    %v6232 = vld [vmem:[%s1897] sm:$0xf]
    %v6233 = vld [vmem:[%s1897 + $0x4] sm:$0xf]
    %v6234 = vld [vmem:[%s1897 + $0x8] sm:$0xf]
    %v6235 = vld [vmem:[%s1897 + $0xc] sm:$0xf]
    %v6236 = vld [vmem:[%s1897 + $0x10] sm:$0xf]
    %v6237 = vld [vmem:[%s1897 + $0x14] sm:$0xf]
    %v6238 = vld [vmem:[%s1897 + $0x18] sm:$0xf]
    %v6239 = vld [vmem:[%s1897 + $0x1c] sm:$0xf]
    %v6240 = vld [vmem:[%s1897 + $0x20] sm:$0xf]
    %v6241 = vld [vmem:[%s1897 + $0x24] sm:$0xf]
    %v6242 = vld [vmem:[%s1897 + $0x28] sm:$0xf]
    %v6243 = vld [vmem:[%s1897 + $0x2c] sm:$0xf]
    %v6244 = vld [vmem:[%s1897 + $0x30] sm:$0xf]
    %v6245 = vld [vmem:[%s1897 + $0x34] sm:$0xf]
    %v6246 = vld [vmem:[%s1897 + $0x38] sm:$0xf]
    %v6247 = vld [vmem:[%s1897 + $0x3c] sm:$0xf]
    %v6248 = vld [vmem:[%s1897 + $0x40] sm:$0xf]
    %v6249 = vld [vmem:[%s1897 + $0x44] sm:$0xf]
    %v6250 = vld [vmem:[%s1897 + $0x48] sm:$0xf]
    %v6251 = vld [vmem:[%s1897 + $0x4c] sm:$0xf]
    %v6252 = vld [vmem:[%s1897 + $0x50] sm:$0xf]
    %v6253 = vld [vmem:[%s1897 + $0x54] sm:$0xf]
    %v6254 = vld [vmem:[%s1897 + $0x58] sm:$0xf]
    %v6255 = vld [vmem:[%s1897 + $0x5c] sm:$0xf]
    %v6256 = vld [vmem:[%s1897 + $0x60] sm:$0xf]
    %v6257 = vld [vmem:[%s1897 + $0x64] sm:$0xf]
    %v6258 = vld [vmem:[%s1897 + $0x68] sm:$0xf]
    %v6259 = vld [vmem:[%s1897 + $0x6c] sm:$0xf]
    %v6260 = vld [vmem:[%s1897 + $0x70] sm:$0xf]
    %v6261 = vld [vmem:[%s1897 + $0x74] sm:$0xf]
    %v6262 = vld [vmem:[%s1897 + $0x78] sm:$0xf]
    %v6263 = vld [vmem:[%s1897 + $0x7c] sm:$0xf]
    %v6264 = vld [vmem:[%s1897 + $0x80] sm:$0xf]
    %v6265 = vld [vmem:[%s1897 + $0x84] sm:$0xf]
    %v6266 = vld [vmem:[%s1897 + $0x88] sm:$0xf]
    %v6267 = vld [vmem:[%s1897 + $0x8c] sm:$0xf]
    %v6268 = vld [vmem:[%s1897 + $0x90] sm:$0xf]
    %v6269 = vld [vmem:[%s1897 + $0x94] sm:$0xf]
    %v6270 = vld [vmem:[%s1897 + $0x98] sm:$0xf]
    %v6271 = vld [vmem:[%s1897 + $0x9c] sm:$0xf]
    %v6272 = vld [vmem:[%s1897 + $0xa0] sm:$0xf]
    %v6273 = vld [vmem:[%s1897 + $0xa4] sm:$0xf]
    %v6274 = vld [vmem:[%s1897 + $0xa8] sm:$0xf]
    %v6275 = vld [vmem:[%s1897 + $0xac] sm:$0xf]
    %v6276 = vld [vmem:[%s1897 + $0xb0] sm:$0xf]
    %v6277 = vld [vmem:[%s1897 + $0xb4] sm:$0xf]
    %v6278 = vld [vmem:[%s1897 + $0xb8] sm:$0xf]
    %v6279 = vld [vmem:[%s1897 + $0xbc] sm:$0xf]
    %v6280 = vld [vmem:[%s1897 + $0xc0] sm:$0xf]
    %v6281 = vld [vmem:[%s1897 + $0xc4] sm:$0xf]
    %v6282 = vld [vmem:[%s1897 + $0xc8] sm:$0xf]
    %v6283 = vld [vmem:[%s1897 + $0xcc] sm:$0xf]
    %v6284 = vrot.slane %v5032, 2
    %v6285 = vrot.slane %v5033, 2
    %v6286 = vrot.slane %v5034, 2
    %v6287 = vrot.slane %v5035, 2
    %v6343 = vunpack.c.l.b16 %v6232
    %v6344 = vunpack.c.l.b16 %v6233
    %v6345 = vunpack.c.l.b16 %v6234
    %v6346 = vunpack.c.l.b16 %v6235
    %v6347 = vunpack.c.l.b16 %v6236
    %v6348 = vunpack.c.l.b16 %v6237
    %v6349 = vunpack.c.l.b16 %v6238
    %v6350 = vunpack.c.l.b16 %v6239
    %v6351 = vunpack.c.l.b16 %v6240
    %v6352 = vunpack.c.l.b16 %v6241
    %v6353 = vunpack.c.l.b16 %v6242
    %v6354 = vunpack.c.l.b16 %v6243
    %v6355 = vunpack.c.l.b16 %v6244
    %v6356 = vunpack.c.l.b16 %v6245
    %v6357 = vunpack.c.l.b16 %v6246
    %v6358 = vunpack.c.l.b16 %v6247
    %v6359 = vunpack.c.l.b16 %v6248
    %v6360 = vunpack.c.l.b16 %v6249
    %v6361 = vunpack.c.l.b16 %v6250
    %v6362 = vunpack.c.l.b16 %v6251
    %v6363 = vunpack.c.l.b16 %v6252
    %v6364 = vunpack.c.l.b16 %v6253
    %v6365 = vunpack.c.l.b16 %v6254
    %v6366 = vunpack.c.l.b16 %v6255
    %v6367 = vunpack.c.l.b16 %v6256
    %v6368 = vunpack.c.l.b16 %v6257
    %v6369 = vunpack.c.l.b16 %v6258
    %v6370 = vunpack.c.l.b16 %v6259
    %v6371 = vunpack.c.l.b16 %v6260
    %v6372 = vunpack.c.l.b16 %v6261
    %v6373 = vunpack.c.l.b16 %v6262
    %v6374 = vunpack.c.l.b16 %v6263
    %v6375 = vunpack.c.l.b16 %v6264
    %v6376 = vunpack.c.l.b16 %v6265
    %v6377 = vunpack.c.l.b16 %v6266
    %v6378 = vunpack.c.l.b16 %v6267
    %v6379 = vunpack.c.l.b16 %v6268
    %v6380 = vunpack.c.l.b16 %v6269
    %v6381 = vunpack.c.l.b16 %v6270
    %v6382 = vunpack.c.l.b16 %v6271
    %v6383 = vunpack.c.l.b16 %v6272
    %v6384 = vunpack.c.l.b16 %v6273
    %v6385 = vunpack.c.l.b16 %v6274
    %v6386 = vunpack.c.l.b16 %v6275
    %v6387 = vunpack.c.l.b16 %v6276
    %v6388 = vunpack.c.l.b16 %v6277
    %v6389 = vunpack.c.l.b16 %v6278
    %v6390 = vunpack.c.l.b16 %v6279
    %v6391 = vunpack.c.l.b16 %v6280
    %v6392 = vunpack.c.l.b16 %v6281
    %v6393 = vunpack.c.l.b16 %v6282
    %v6394 = vunpack.c.l.b16 %v6283
    %v6395 = vpack.c.b16 %v6344, %v6343
    %v6396 = vpack.c.b16 %v6346, %v6345
    %v6397 = vpack.c.b16 %v6348, %v6347
    %v6398 = vpack.c.b16 %v6350, %v6349
    %v6399 = vpack.c.b16 %v6352, %v6351
    %v6400 = vpack.c.b16 %v6354, %v6353
    %v6401 = vpack.c.b16 %v6356, %v6355
    %v6402 = vpack.c.b16 %v6358, %v6357
    %v6403 = vpack.c.b16 %v6360, %v6359
    %v6404 = vpack.c.b16 %v6362, %v6361
    %v6405 = vpack.c.b16 %v6364, %v6363
    %v6406 = vpack.c.b16 %v6366, %v6365
    %v6407 = vpack.c.b16 %v6368, %v6367
    %v6408 = vpack.c.b16 %v6370, %v6369
    %v6409 = vpack.c.b16 %v6372, %v6371
    %v6410 = vpack.c.b16 %v6374, %v6373
    %v6411 = vpack.c.b16 %v6376, %v6375
    %v6412 = vpack.c.b16 %v6378, %v6377
    %v6413 = vpack.c.b16 %v6380, %v6379
    %v6414 = vpack.c.b16 %v6382, %v6381
    %v6415 = vpack.c.b16 %v6384, %v6383
    %v6416 = vpack.c.b16 %v6386, %v6385
    %v6417 = vpack.c.b16 %v6388, %v6387
    %v6418 = vpack.c.b16 %v6390, %v6389
    %v6419 = vpack.c.b16 %v6392, %v6391
    %v6420 = vpack.c.b16 %v6394, %v6393
    %v6448 = vsel %vm1022, %v6287, 0
    %6450 = vmatprep.subr.bf16.mxu0 0
    %6451 = vmatpush1.bf16.msra.mxu0 %v6395
    %6452 = vmatprep.subr.bf16.mxu0 0
    %6453 = vmatpush1.bf16.msra.mxu0 %v6396
    %6454 = vmatprep.subr.bf16.mxu0 0
    %6455 = vmatpush1.bf16.msra.mxu0 %v6397
    %6456 = vmatprep.subr.bf16.mxu0 0
    %6457 = vmatpush1.bf16.msra.mxu0 %v6398
    %6458 = vmatprep.subr.bf16.mxu0 0
    %6459 = vmatpush1.bf16.msra.mxu0 %v6399
    %6460 = vmatprep.subr.bf16.mxu0 0
    %6461 = vmatpush1.bf16.msra.mxu0 %v6400
    %6462 = vmatprep.subr.bf16.mxu0 0
    %6463 = vmatpush1.bf16.msra.mxu0 %v6401
    %6464 = vmatprep.subr.bf16.mxu0 0
    %6465 = vmatpush1.bf16.msra.mxu0 %v6402
    %6466 = vmatprep.subr.bf16.mxu0 0
    %6467 = vmatpush1.bf16.msra.mxu0 %v6403
    %6468 = vmatprep.subr.bf16.mxu0 0
    %6469 = vmatpush1.bf16.msra.mxu0 %v6404
    %6470 = vmatprep.subr.bf16.mxu0 0
    %6471 = vmatpush1.bf16.msra.mxu0 %v6405
    %6472 = vmatprep.subr.bf16.mxu0 0
    %6473 = vmatpush1.bf16.msra.mxu0 %v6406
    %6474 = vmatprep.subr.bf16.mxu0 0
    %6475 = vmatpush1.bf16.msra.mxu0 %v6407
    %6476 = vmatprep.subr.bf16.mxu0 0
    %6477 = vmatpush1.bf16.msra.mxu0 %v6408
    %6478 = vmatprep.subr.bf16.mxu0 0
    %6479 = vmatpush1.bf16.msra.mxu0 %v6409
    %6480 = vmatprep.subr.bf16.mxu0 0
    %6481 = vmatpush1.bf16.msra.mxu0 %v6410
    %6482 = vmatprep.mubr.bf16.mxu0 %v6285
    %6483 = vmatmul.mubr.bf16.gmra.mrb[0].mxu0 %v6284
    %v6484 = vpop.f32.mrb[0].mxu0
    %v6485 = vadd.f32 0.0, %v6484
    %v6486 = vpop.f32.mrb[0].mxu0
    %v6487 = vpop.f32.mrb[0].mxu0
    %v6488 = vpop.f32.mrb[0].mxu0
    %6489 = vdwg.mxu0
    %6490 = vmatprep.subr.bf16.mxu0 0
    %6491 = vmatpush1.bf16.msra.mxu0 %v6411
    %6492 = vmatprep.subr.bf16.mxu0 0
    %6493 = vmatpush1.bf16.msra.mxu0 %v6412
    %6494 = vmatprep.subr.bf16.mxu0 0
    %6495 = vmatpush1.bf16.msra.mxu0 %v6413
    %6496 = vmatprep.subr.bf16.mxu0 0
    %6497 = vmatpush1.bf16.msra.mxu0 %v6414
    %6498 = vmatprep.subr.bf16.mxu0 0
    %6499 = vmatpush1.bf16.msra.mxu0 %v6415
    %6500 = vmatprep.subr.bf16.mxu0 0
    %6501 = vmatpush1.bf16.msra.mxu0 %v6416
    %6502 = vmatprep.subr.bf16.mxu0 0
    %6503 = vmatpush1.bf16.msra.mxu0 %v6417
    %6504 = vmatprep.subr.bf16.mxu0 0
    %6505 = vmatpush1.bf16.msra.mxu0 %v6418
    %6506 = vmatprep.subr.bf16.mxu0 0
    %6507 = vmatpush1.bf16.msra.mxu0 %v6419
    %6508 = vmatprep.subr.bf16.mxu0 0
    %6509 = vmatpush1.bf16.msra.mxu0 %v6420
    %6510 = vmatprep.subr.bf16.mxu0 0
    %6511 = vmatpush1.bf16.msra.mxu0 0
    %6512 = vmatprep.subr.bf16.mxu0 0
    %6513 = vmatpush1.bf16.msra.mxu0 0
    %6514 = vmatprep.subr.bf16.mxu0 0
    %6515 = vmatpush1.bf16.msra.mxu0 0
    %6516 = vmatprep.subr.bf16.mxu0 0
    %6517 = vmatpush1.bf16.msra.mxu0 0
    %6518 = vmatprep.subr.bf16.mxu0 0
    %6519 = vmatpush1.bf16.msra.mxu0 0
    %6520 = vmatprep.subr.bf16.mxu0 0
    %6521 = vmatpush1.bf16.msra.mxu0 0
    %6522 = vmatprep.mubr.bf16.mxu0 %v6448
    %6523 = vmatmul.mubr.bf16.gmra.mrb[0].mxu0 %v6286
    %v6524 = vpop.f32.mrb[0].mxu0
    %v6525 = vadd.f32 %v6485, %v6524
    %v6526 = vpop.f32.mrb[0].mxu0
    %v6527 = vpop.f32.mrb[0].mxu0
    %v6528 = vpop.f32.mrb[0].mxu0
    %6529 = vdwg.mxu0
    %v6530 = vadd.f32 %v5676, %v6525
    %v6531 = vld [vmem:[%s2197] sm:$0xf]
    %v6532 = vld [vmem:[%s2197 + $0x4] sm:$0xf]
    %v6533 = vld [vmem:[%s2197 + $0x8] sm:$0xf]
    %v6534 = vld [vmem:[%s2197 + $0xc] sm:$0xf]
    %v6535 = vld [vmem:[%s2197 + $0x10] sm:$0xf]
    %v6536 = vld [vmem:[%s2197 + $0x14] sm:$0xf]
    %v6537 = vld [vmem:[%s2197 + $0x18] sm:$0xf]
    %v6538 = vld [vmem:[%s2197 + $0x1c] sm:$0xf]
    %v6539 = vld [vmem:[%s2197 + $0x20] sm:$0xf]
    %v6540 = vld [vmem:[%s2197 + $0x24] sm:$0xf]
    %v6541 = vld [vmem:[%s2197 + $0x28] sm:$0xf]
    %v6542 = vld [vmem:[%s2197 + $0x2c] sm:$0xf]
    %v6543 = vld [vmem:[%s2197 + $0x30] sm:$0xf]
    %v6544 = vld [vmem:[%s2197 + $0x34] sm:$0xf]
    %v6545 = vld [vmem:[%s2197 + $0x38] sm:$0xf]
    %v6546 = vld [vmem:[%s2197 + $0x3c] sm:$0xf]
    %v6547 = vld [vmem:[%s2197 + $0x40] sm:$0xf]
    %v6548 = vld [vmem:[%s2197 + $0x44] sm:$0xf]
    %v6549 = vld [vmem:[%s2197 + $0x48] sm:$0xf]
    %v6550 = vld [vmem:[%s2197 + $0x4c] sm:$0xf]
    %v6551 = vld [vmem:[%s2197 + $0x50] sm:$0xf]
    %v6552 = vld [vmem:[%s2197 + $0x54] sm:$0xf]
    %v6553 = vld [vmem:[%s2197 + $0x58] sm:$0xf]
    %v6554 = vld [vmem:[%s2197 + $0x5c] sm:$0xf]
    %v6555 = vld [vmem:[%s2197 + $0x60] sm:$0xf]
    %v6556 = vld [vmem:[%s2197 + $0x64] sm:$0xf]
    %v6557 = vld [vmem:[%s2197 + $0x68] sm:$0xf]
    %v6558 = vld [vmem:[%s2197 + $0x6c] sm:$0xf]
    %v6559 = vld [vmem:[%s2197 + $0x70] sm:$0xf]
    %v6560 = vld [vmem:[%s2197 + $0x74] sm:$0xf]
    %v6561 = vld [vmem:[%s2197 + $0x78] sm:$0xf]
    %v6562 = vld [vmem:[%s2197 + $0x7c] sm:$0xf]
    %v6563 = vld [vmem:[%s2197 + $0x80] sm:$0xf]
    %v6564 = vld [vmem:[%s2197 + $0x84] sm:$0xf]
    %v6565 = vld [vmem:[%s2197 + $0x88] sm:$0xf]
    %v6566 = vld [vmem:[%s2197 + $0x8c] sm:$0xf]
    %v6567 = vld [vmem:[%s2197 + $0x90] sm:$0xf]
    %v6568 = vld [vmem:[%s2197 + $0x94] sm:$0xf]
    %v6569 = vld [vmem:[%s2197 + $0x98] sm:$0xf]
    %v6570 = vld [vmem:[%s2197 + $0x9c] sm:$0xf]
    %v6571 = vld [vmem:[%s2197 + $0xa0] sm:$0xf]
    %v6572 = vld [vmem:[%s2197 + $0xa4] sm:$0xf]
    %v6573 = vld [vmem:[%s2197 + $0xa8] sm:$0xf]
    %v6574 = vld [vmem:[%s2197 + $0xac] sm:$0xf]
    %v6575 = vld [vmem:[%s2197 + $0xb0] sm:$0xf]
    %v6576 = vld [vmem:[%s2197 + $0xb4] sm:$0xf]
    %v6577 = vld [vmem:[%s2197 + $0xb8] sm:$0xf]
    %v6578 = vld [vmem:[%s2197 + $0xbc] sm:$0xf]
    %v6579 = vld [vmem:[%s2197 + $0xc0] sm:$0xf]
    %v6580 = vld [vmem:[%s2197 + $0xc4] sm:$0xf]
    %v6581 = vld [vmem:[%s2197 + $0xc8] sm:$0xf]
    %v6582 = vld [vmem:[%s2197 + $0xcc] sm:$0xf]
    %v6583 = vrot.slane %v5734, 2
    %v6584 = vrot.slane %v5738, 2
    %v6585 = vrot.slane %v5742, 2
    %v6586 = vrot.slane %v5745, 2
    %v6642 = vunpack.c.l.b16 %v6531
    %v6643 = vunpack.c.l.b16 %v6532
    %v6644 = vunpack.c.l.b16 %v6533
    %v6645 = vunpack.c.l.b16 %v6534
    %v6646 = vunpack.c.l.b16 %v6535
    %v6647 = vunpack.c.l.b16 %v6536
    %v6648 = vunpack.c.l.b16 %v6537
    %v6649 = vunpack.c.l.b16 %v6538
    %v6650 = vunpack.c.l.b16 %v6539
    %v6651 = vunpack.c.l.b16 %v6540
    %v6652 = vunpack.c.l.b16 %v6541
    %v6653 = vunpack.c.l.b16 %v6542
    %v6654 = vunpack.c.l.b16 %v6543
    %v6655 = vunpack.c.l.b16 %v6544
    %v6656 = vunpack.c.l.b16 %v6545
    %v6657 = vunpack.c.l.b16 %v6546
    %v6658 = vunpack.c.l.b16 %v6547
    %v6659 = vunpack.c.l.b16 %v6548
    %v6660 = vunpack.c.l.b16 %v6549
    %v6661 = vunpack.c.l.b16 %v6550
    %v6662 = vunpack.c.l.b16 %v6551
    %v6663 = vunpack.c.l.b16 %v6552
    %v6664 = vunpack.c.l.b16 %v6553
    %v6665 = vunpack.c.l.b16 %v6554
    %v6666 = vunpack.c.l.b16 %v6555
    %v6667 = vunpack.c.l.b16 %v6556
    %v6668 = vunpack.c.l.b16 %v6557
    %v6669 = vunpack.c.l.b16 %v6558
    %v6670 = vunpack.c.l.b16 %v6559
    %v6671 = vunpack.c.l.b16 %v6560
    %v6672 = vunpack.c.l.b16 %v6561
    %v6673 = vunpack.c.l.b16 %v6562
    %v6674 = vunpack.c.l.b16 %v6563
    %v6675 = vunpack.c.l.b16 %v6564
    %v6676 = vunpack.c.l.b16 %v6565
    %v6677 = vunpack.c.l.b16 %v6566
    %v6678 = vunpack.c.l.b16 %v6567
    %v6679 = vunpack.c.l.b16 %v6568
    %v6680 = vunpack.c.l.b16 %v6569
    %v6681 = vunpack.c.l.b16 %v6570
    %v6682 = vunpack.c.l.b16 %v6571
    %v6683 = vunpack.c.l.b16 %v6572
    %v6684 = vunpack.c.l.b16 %v6573
    %v6685 = vunpack.c.l.b16 %v6574
    %v6686 = vunpack.c.l.b16 %v6575
    %v6687 = vunpack.c.l.b16 %v6576
    %v6688 = vunpack.c.l.b16 %v6577
    %v6689 = vunpack.c.l.b16 %v6578
    %v6690 = vunpack.c.l.b16 %v6579
    %v6691 = vunpack.c.l.b16 %v6580
    %v6692 = vunpack.c.l.b16 %v6581
    %v6693 = vunpack.c.l.b16 %v6582
    %v6694 = vpack.c.b16 %v6643, %v6642
    %v6695 = vpack.c.b16 %v6645, %v6644
    %v6696 = vpack.c.b16 %v6647, %v6646
    %v6697 = vpack.c.b16 %v6649, %v6648
    %v6698 = vpack.c.b16 %v6651, %v6650
    %v6699 = vpack.c.b16 %v6653, %v6652
    %v6700 = vpack.c.b16 %v6655, %v6654
    %v6701 = vpack.c.b16 %v6657, %v6656
    %v6702 = vpack.c.b16 %v6659, %v6658
    %v6703 = vpack.c.b16 %v6661, %v6660
    %v6704 = vpack.c.b16 %v6663, %v6662
    %v6705 = vpack.c.b16 %v6665, %v6664
    %v6706 = vpack.c.b16 %v6667, %v6666
    %v6707 = vpack.c.b16 %v6669, %v6668
    %v6708 = vpack.c.b16 %v6671, %v6670
    %v6709 = vpack.c.b16 %v6673, %v6672
    %v6710 = vpack.c.b16 %v6675, %v6674
    %v6711 = vpack.c.b16 %v6677, %v6676
    %v6712 = vpack.c.b16 %v6679, %v6678
    %v6713 = vpack.c.b16 %v6681, %v6680
    %v6714 = vpack.c.b16 %v6683, %v6682
    %v6715 = vpack.c.b16 %v6685, %v6684
    %v6716 = vpack.c.b16 %v6687, %v6686
    %v6717 = vpack.c.b16 %v6689, %v6688
    %v6718 = vpack.c.b16 %v6691, %v6690
    %v6719 = vpack.c.b16 %v6693, %v6692
    %v6747 = vsel %vm1022, %v6586, 0
    %6749 = vmatprep.subr.bf16.mxu0 0
    %6750 = vmatpush1.bf16.msra.mxu0 %v6694
    %6751 = vmatprep.subr.bf16.mxu0 0
    %6752 = vmatpush1.bf16.msra.mxu0 %v6695
    %6753 = vmatprep.subr.bf16.mxu0 0
    %6754 = vmatpush1.bf16.msra.mxu0 %v6696
    %6755 = vmatprep.subr.bf16.mxu0 0
    %6756 = vmatpush1.bf16.msra.mxu0 %v6697
    %6757 = vmatprep.subr.bf16.mxu0 0
    %6758 = vmatpush1.bf16.msra.mxu0 %v6698
    %6759 = vmatprep.subr.bf16.mxu0 0
    %6760 = vmatpush1.bf16.msra.mxu0 %v6699
    %6761 = vmatprep.subr.bf16.mxu0 0
    %6762 = vmatpush1.bf16.msra.mxu0 %v6700
    %6763 = vmatprep.subr.bf16.mxu0 0
    %6764 = vmatpush1.bf16.msra.mxu0 %v6701
    %6765 = vmatprep.subr.bf16.mxu0 0
    %6766 = vmatpush1.bf16.msra.mxu0 %v6702
    %6767 = vmatprep.subr.bf16.mxu0 0
    %6768 = vmatpush1.bf16.msra.mxu0 %v6703
    %6769 = vmatprep.subr.bf16.mxu0 0
    %6770 = vmatpush1.bf16.msra.mxu0 %v6704
    %6771 = vmatprep.subr.bf16.mxu0 0
    %6772 = vmatpush1.bf16.msra.mxu0 %v6705
    %6773 = vmatprep.subr.bf16.mxu0 0
    %6774 = vmatpush1.bf16.msra.mxu0 %v6706
    %6775 = vmatprep.subr.bf16.mxu0 0
    %6776 = vmatpush1.bf16.msra.mxu0 %v6707
    %6777 = vmatprep.subr.bf16.mxu0 0
    %6778 = vmatpush1.bf16.msra.mxu0 %v6708
    %6779 = vmatprep.subr.bf16.mxu0 0
    %6780 = vmatpush1.bf16.msra.mxu0 %v6709
    %6781 = vmatprep.mubr.bf16.mxu0 %v6584
    %6782 = vmatmul.mubr.bf16.gmra.mrb[0].mxu0 %v6583
    %v6783 = vpop.f32.mrb[0].mxu0
    %v6784 = vadd.f32 0.0, %v6783
    %v6785 = vpop.f32.mrb[0].mxu0
    %v6786 = vpop.f32.mrb[0].mxu0
    %v6787 = vpop.f32.mrb[0].mxu0
    %6788 = vdwg.mxu0
    %6789 = vmatprep.subr.bf16.mxu0 0
    %6790 = vmatpush1.bf16.msra.mxu0 %v6710
    %6791 = vmatprep.subr.bf16.mxu0 0
    %6792 = vmatpush1.bf16.msra.mxu0 %v6711
    %6793 = vmatprep.subr.bf16.mxu0 0
    %6794 = vmatpush1.bf16.msra.mxu0 %v6712
    %6795 = vmatprep.subr.bf16.mxu0 0
    %6796 = vmatpush1.bf16.msra.mxu0 %v6713
    %6797 = vmatprep.subr.bf16.mxu0 0
    %6798 = vmatpush1.bf16.msra.mxu0 %v6714
    %6799 = vmatprep.subr.bf16.mxu0 0
    %6800 = vmatpush1.bf16.msra.mxu0 %v6715
    %6801 = vmatprep.subr.bf16.mxu0 0
    %6802 = vmatpush1.bf16.msra.mxu0 %v6716
    %6803 = vmatprep.subr.bf16.mxu0 0
    %6804 = vmatpush1.bf16.msra.mxu0 %v6717
    %6805 = vmatprep.subr.bf16.mxu0 0
    %6806 = vmatpush1.bf16.msra.mxu0 %v6718
    %6807 = vmatprep.subr.bf16.mxu0 0
    %6808 = vmatpush1.bf16.msra.mxu0 %v6719
    %6809 = vmatprep.subr.bf16.mxu0 0
    %6810 = vmatpush1.bf16.msra.mxu0 0
    %6811 = vmatprep.subr.bf16.mxu0 0
    %6812 = vmatpush1.bf16.msra.mxu0 0
    %6813 = vmatprep.subr.bf16.mxu0 0
    %6814 = vmatpush1.bf16.msra.mxu0 0
    %6815 = vmatprep.subr.bf16.mxu0 0
    %6816 = vmatpush1.bf16.msra.mxu0 0
    %6817 = vmatprep.subr.bf16.mxu0 0
    %6818 = vmatpush1.bf16.msra.mxu0 0
    %6819 = vmatprep.subr.bf16.mxu0 0
    %6820 = vmatpush1.bf16.msra.mxu0 0
    %6821 = vmatprep.mubr.bf16.mxu0 %v6747
    %6822 = vmatmul.mubr.bf16.gmra.mrb[0].mxu0 %v6585
    %v6823 = vpop.f32.mrb[0].mxu0
    %v6824 = vadd.f32 %v6784, %v6823
    %v6825 = vpop.f32.mrb[0].mxu0
    %v6826 = vpop.f32.mrb[0].mxu0
    %v6827 = vpop.f32.mrb[0].mxu0
    %6828 = vdwg.mxu0
    %v6829 = vadd.f32 %v6227, %v6824
    %v6830 = vld [vmem:[%s2497] sm:$0xf]
    %v6831 = vld [vmem:[%s2497 + $0x4] sm:$0xf]
    %v6832 = vld [vmem:[%s2497 + $0x8] sm:$0xf]
    %v6833 = vld [vmem:[%s2497 + $0xc] sm:$0xf]
    %v6834 = vld [vmem:[%s2497 + $0x10] sm:$0xf]
    %v6835 = vld [vmem:[%s2497 + $0x14] sm:$0xf]
    %v6836 = vld [vmem:[%s2497 + $0x18] sm:$0xf]
    %v6837 = vld [vmem:[%s2497 + $0x1c] sm:$0xf]
    %v6838 = vld [vmem:[%s2497 + $0x20] sm:$0xf]
    %v6839 = vld [vmem:[%s2497 + $0x24] sm:$0xf]
    %v6840 = vld [vmem:[%s2497 + $0x28] sm:$0xf]
    %v6841 = vld [vmem:[%s2497 + $0x2c] sm:$0xf]
    %v6842 = vld [vmem:[%s2497 + $0x30] sm:$0xf]
    %v6843 = vld [vmem:[%s2497 + $0x34] sm:$0xf]
    %v6844 = vld [vmem:[%s2497 + $0x38] sm:$0xf]
    %v6845 = vld [vmem:[%s2497 + $0x3c] sm:$0xf]
    %v6846 = vld [vmem:[%s2497 + $0x40] sm:$0xf]
    %v6847 = vld [vmem:[%s2497 + $0x44] sm:$0xf]
    %v6848 = vld [vmem:[%s2497 + $0x48] sm:$0xf]
    %v6849 = vld [vmem:[%s2497 + $0x4c] sm:$0xf]
    %v6850 = vld [vmem:[%s2497 + $0x50] sm:$0xf]
    %v6851 = vld [vmem:[%s2497 + $0x54] sm:$0xf]
    %v6852 = vld [vmem:[%s2497 + $0x58] sm:$0xf]
    %v6853 = vld [vmem:[%s2497 + $0x5c] sm:$0xf]
    %v6854 = vld [vmem:[%s2497 + $0x60] sm:$0xf]
    %v6855 = vld [vmem:[%s2497 + $0x64] sm:$0xf]
    %v6856 = vld [vmem:[%s2497 + $0x68] sm:$0xf]
    %v6857 = vld [vmem:[%s2497 + $0x6c] sm:$0xf]
    %v6858 = vld [vmem:[%s2497 + $0x70] sm:$0xf]
    %v6859 = vld [vmem:[%s2497 + $0x74] sm:$0xf]
    %v6860 = vld [vmem:[%s2497 + $0x78] sm:$0xf]
    %v6861 = vld [vmem:[%s2497 + $0x7c] sm:$0xf]
    %v6862 = vld [vmem:[%s2497 + $0x80] sm:$0xf]
    %v6863 = vld [vmem:[%s2497 + $0x84] sm:$0xf]
    %v6864 = vld [vmem:[%s2497 + $0x88] sm:$0xf]
    %v6865 = vld [vmem:[%s2497 + $0x8c] sm:$0xf]
    %v6866 = vld [vmem:[%s2497 + $0x90] sm:$0xf]
    %v6867 = vld [vmem:[%s2497 + $0x94] sm:$0xf]
    %v6868 = vld [vmem:[%s2497 + $0x98] sm:$0xf]
    %v6869 = vld [vmem:[%s2497 + $0x9c] sm:$0xf]
    %v6870 = vld [vmem:[%s2497 + $0xa0] sm:$0xf]
    %v6871 = vld [vmem:[%s2497 + $0xa4] sm:$0xf]
    %v6872 = vld [vmem:[%s2497 + $0xa8] sm:$0xf]
    %v6873 = vld [vmem:[%s2497 + $0xac] sm:$0xf]
    %v6874 = vld [vmem:[%s2497 + $0xb0] sm:$0xf]
    %v6875 = vld [vmem:[%s2497 + $0xb4] sm:$0xf]
    %v6876 = vld [vmem:[%s2497 + $0xb8] sm:$0xf]
    %v6877 = vld [vmem:[%s2497 + $0xbc] sm:$0xf]
    %v6878 = vld [vmem:[%s2497 + $0xc0] sm:$0xf]
    %v6879 = vld [vmem:[%s2497 + $0xc4] sm:$0xf]
    %v6880 = vld [vmem:[%s2497 + $0xc8] sm:$0xf]
    %v6881 = vld [vmem:[%s2497 + $0xcc] sm:$0xf]
    %v6882 = vrot.slane %v5032, 3
    %v6883 = vrot.slane %v5033, 3
    %v6884 = vrot.slane %v5034, 3
    %v6885 = vrot.slane %v5035, 3
    %v6941 = vunpack.c.l.b16 %v6830
    %v6942 = vunpack.c.l.b16 %v6831
    %v6943 = vunpack.c.l.b16 %v6832
    %v6944 = vunpack.c.l.b16 %v6833
    %v6945 = vunpack.c.l.b16 %v6834
    %v6946 = vunpack.c.l.b16 %v6835
    %v6947 = vunpack.c.l.b16 %v6836
    %v6948 = vunpack.c.l.b16 %v6837
    %v6949 = vunpack.c.l.b16 %v6838
    %v6950 = vunpack.c.l.b16 %v6839
    %v6951 = vunpack.c.l.b16 %v6840
    %v6952 = vunpack.c.l.b16 %v6841
    %v6953 = vunpack.c.l.b16 %v6842
    %v6954 = vunpack.c.l.b16 %v6843
    %v6955 = vunpack.c.l.b16 %v6844
    %v6956 = vunpack.c.l.b16 %v6845
    %v6957 = vunpack.c.l.b16 %v6846
    %v6958 = vunpack.c.l.b16 %v6847
    %v6959 = vunpack.c.l.b16 %v6848
    %v6960 = vunpack.c.l.b16 %v6849
    %v6961 = vunpack.c.l.b16 %v6850
    %v6962 = vunpack.c.l.b16 %v6851
    %v6963 = vunpack.c.l.b16 %v6852
    %v6964 = vunpack.c.l.b16 %v6853
    %v6965 = vunpack.c.l.b16 %v6854
    %v6966 = vunpack.c.l.b16 %v6855
    %v6967 = vunpack.c.l.b16 %v6856
    %v6968 = vunpack.c.l.b16 %v6857
    %v6969 = vunpack.c.l.b16 %v6858
    %v6970 = vunpack.c.l.b16 %v6859
    %v6971 = vunpack.c.l.b16 %v6860
    %v6972 = vunpack.c.l.b16 %v6861
    %v6973 = vunpack.c.l.b16 %v6862
    %v6974 = vunpack.c.l.b16 %v6863
    %v6975 = vunpack.c.l.b16 %v6864
    %v6976 = vunpack.c.l.b16 %v6865
    %v6977 = vunpack.c.l.b16 %v6866
    %v6978 = vunpack.c.l.b16 %v6867
    %v6979 = vunpack.c.l.b16 %v6868
    %v6980 = vunpack.c.l.b16 %v6869
    %v6981 = vunpack.c.l.b16 %v6870
    %v6982 = vunpack.c.l.b16 %v6871
    %v6983 = vunpack.c.l.b16 %v6872
    %v6984 = vunpack.c.l.b16 %v6873
    %v6985 = vunpack.c.l.b16 %v6874
    %v6986 = vunpack.c.l.b16 %v6875
    %v6987 = vunpack.c.l.b16 %v6876
    %v6988 = vunpack.c.l.b16 %v6877
    %v6989 = vunpack.c.l.b16 %v6878
    %v6990 = vunpack.c.l.b16 %v6879
    %v6991 = vunpack.c.l.b16 %v6880
    %v6992 = vunpack.c.l.b16 %v6881
    %v6993 = vpack.c.b16 %v6942, %v6941
    %v6994 = vpack.c.b16 %v6944, %v6943
    %v6995 = vpack.c.b16 %v6946, %v6945
    %v6996 = vpack.c.b16 %v6948, %v6947
    %v6997 = vpack.c.b16 %v6950, %v6949
    %v6998 = vpack.c.b16 %v6952, %v6951
    %v6999 = vpack.c.b16 %v6954, %v6953
    %v7000 = vpack.c.b16 %v6956, %v6955
    %v7001 = vpack.c.b16 %v6958, %v6957
    %v7002 = vpack.c.b16 %v6960, %v6959
    %v7003 = vpack.c.b16 %v6962, %v6961
    %v7004 = vpack.c.b16 %v6964, %v6963
    %v7005 = vpack.c.b16 %v6966, %v6965
    %v7006 = vpack.c.b16 %v6968, %v6967
    %v7007 = vpack.c.b16 %v6970, %v6969
    %v7008 = vpack.c.b16 %v6972, %v6971
    %v7009 = vpack.c.b16 %v6974, %v6973
    %v7010 = vpack.c.b16 %v6976, %v6975
    %v7011 = vpack.c.b16 %v6978, %v6977
    %v7012 = vpack.c.b16 %v6980, %v6979
    %v7013 = vpack.c.b16 %v6982, %v6981
    %v7014 = vpack.c.b16 %v6984, %v6983
    %v7015 = vpack.c.b16 %v6986, %v6985
    %v7016 = vpack.c.b16 %v6988, %v6987
    %v7017 = vpack.c.b16 %v6990, %v6989
    %v7018 = vpack.c.b16 %v6992, %v6991
    %v7046 = vsel %vm1022, %v6885, 0
    %7048 = vmatprep.subr.bf16.mxu0 0
    %7049 = vmatpush1.bf16.msra.mxu0 %v6993
    %7050 = vmatprep.subr.bf16.mxu0 0
    %7051 = vmatpush1.bf16.msra.mxu0 %v6994
    %7052 = vmatprep.subr.bf16.mxu0 0
    %7053 = vmatpush1.bf16.msra.mxu0 %v6995
    %7054 = vmatprep.subr.bf16.mxu0 0
    %7055 = vmatpush1.bf16.msra.mxu0 %v6996
    %7056 = vmatprep.subr.bf16.mxu0 0
    %7057 = vmatpush1.bf16.msra.mxu0 %v6997
    %7058 = vmatprep.subr.bf16.mxu0 0
    %7059 = vmatpush1.bf16.msra.mxu0 %v6998
    %7060 = vmatprep.subr.bf16.mxu0 0
    %7061 = vmatpush1.bf16.msra.mxu0 %v6999
    %7062 = vmatprep.subr.bf16.mxu0 0
    %7063 = vmatpush1.bf16.msra.mxu0 %v7000
    %7064 = vmatprep.subr.bf16.mxu0 0
    %7065 = vmatpush1.bf16.msra.mxu0 %v7001
    %7066 = vmatprep.subr.bf16.mxu0 0
    %7067 = vmatpush1.bf16.msra.mxu0 %v7002
    %7068 = vmatprep.subr.bf16.mxu0 0
    %7069 = vmatpush1.bf16.msra.mxu0 %v7003
    %7070 = vmatprep.subr.bf16.mxu0 0
    %7071 = vmatpush1.bf16.msra.mxu0 %v7004
    %7072 = vmatprep.subr.bf16.mxu0 0
    %7073 = vmatpush1.bf16.msra.mxu0 %v7005
    %7074 = vmatprep.subr.bf16.mxu0 0
    %7075 = vmatpush1.bf16.msra.mxu0 %v7006
    %7076 = vmatprep.subr.bf16.mxu0 0
    %7077 = vmatpush1.bf16.msra.mxu0 %v7007
    %7078 = vmatprep.subr.bf16.mxu0 0
    %7079 = vmatpush1.bf16.msra.mxu0 %v7008
    %7080 = vmatprep.mubr.bf16.mxu0 %v6883
    %7081 = vmatmul.mubr.bf16.gmra.mrb[0].mxu0 %v6882
    %v7082 = vpop.f32.mrb[0].mxu0
    %v7083 = vadd.f32 0.0, %v7082
    %v7084 = vpop.f32.mrb[0].mxu0
    %v7085 = vpop.f32.mrb[0].mxu0
    %v7086 = vpop.f32.mrb[0].mxu0
    %7087 = vdwg.mxu0
    %7088 = vmatprep.subr.bf16.mxu0 0
    %7089 = vmatpush1.bf16.msra.mxu0 %v7009
    %7090 = vmatprep.subr.bf16.mxu0 0
    %7091 = vmatpush1.bf16.msra.mxu0 %v7010
    %7092 = vmatprep.subr.bf16.mxu0 0
    %7093 = vmatpush1.bf16.msra.mxu0 %v7011
    %7094 = vmatprep.subr.bf16.mxu0 0
    %7095 = vmatpush1.bf16.msra.mxu0 %v7012
    %7096 = vmatprep.subr.bf16.mxu0 0
    %7097 = vmatpush1.bf16.msra.mxu0 %v7013
    %7098 = vmatprep.subr.bf16.mxu0 0
    %7099 = vmatpush1.bf16.msra.mxu0 %v7014
    %7100 = vmatprep.subr.bf16.mxu0 0
    %7101 = vmatpush1.bf16.msra.mxu0 %v7015
    %7102 = vmatprep.subr.bf16.mxu0 0
    %7103 = vmatpush1.bf16.msra.mxu0 %v7016
    %7104 = vmatprep.subr.bf16.mxu0 0
    %7105 = vmatpush1.bf16.msra.mxu0 %v7017
    %7106 = vmatprep.subr.bf16.mxu0 0
    %7107 = vmatpush1.bf16.msra.mxu0 %v7018
    %7108 = vmatprep.subr.bf16.mxu0 0
    %7109 = vmatpush1.bf16.msra.mxu0 0
    %7110 = vmatprep.subr.bf16.mxu0 0
    %7111 = vmatpush1.bf16.msra.mxu0 0
    %7112 = vmatprep.subr.bf16.mxu0 0
    %7113 = vmatpush1.bf16.msra.mxu0 0
    %7114 = vmatprep.subr.bf16.mxu0 0
    %7115 = vmatpush1.bf16.msra.mxu0 0
    %7116 = vmatprep.subr.bf16.mxu0 0
    %7117 = vmatpush1.bf16.msra.mxu0 0
    %7118 = vmatprep.subr.bf16.mxu0 0
    %7119 = vmatpush1.bf16.msra.mxu0 0
    %7120 = vmatprep.mubr.bf16.mxu0 %v7046
    %7121 = vmatmul.mubr.bf16.gmra.mrb[0].mxu0 %v6884
    %v7122 = vpop.f32.mrb[0].mxu0
    %v7123 = vadd.f32 %v7083, %v7122
    %v7124 = vpop.f32.mrb[0].mxu0
    %v7125 = vpop.f32.mrb[0].mxu0
    %v7126 = vpop.f32.mrb[0].mxu0
    %7127 = vdwg.mxu0
    %v7128 = vadd.f32 %v6530, %v7123
    %v7129 = vld [vmem:[%s2797] sm:$0xf]
    %v7130 = vld [vmem:[%s2797 + $0x4] sm:$0xf]
    %v7131 = vld [vmem:[%s2797 + $0x8] sm:$0xf]
    %v7132 = vld [vmem:[%s2797 + $0xc] sm:$0xf]
    %v7133 = vld [vmem:[%s2797 + $0x10] sm:$0xf]
    %v7134 = vld [vmem:[%s2797 + $0x14] sm:$0xf]
    %v7135 = vld [vmem:[%s2797 + $0x18] sm:$0xf]
    %v7136 = vld [vmem:[%s2797 + $0x1c] sm:$0xf]
    %v7137 = vld [vmem:[%s2797 + $0x20] sm:$0xf]
    %v7138 = vld [vmem:[%s2797 + $0x24] sm:$0xf]
    %v7139 = vld [vmem:[%s2797 + $0x28] sm:$0xf]
    %v7140 = vld [vmem:[%s2797 + $0x2c] sm:$0xf]
    %v7141 = vld [vmem:[%s2797 + $0x30] sm:$0xf]
    %v7142 = vld [vmem:[%s2797 + $0x34] sm:$0xf]
    %v7143 = vld [vmem:[%s2797 + $0x38] sm:$0xf]
    %v7144 = vld [vmem:[%s2797 + $0x3c] sm:$0xf]
    %v7145 = vld [vmem:[%s2797 + $0x40] sm:$0xf]
    %v7146 = vld [vmem:[%s2797 + $0x44] sm:$0xf]
    %v7147 = vld [vmem:[%s2797 + $0x48] sm:$0xf]
    %v7148 = vld [vmem:[%s2797 + $0x4c] sm:$0xf]
    %v7149 = vld [vmem:[%s2797 + $0x50] sm:$0xf]
    %v7150 = vld [vmem:[%s2797 + $0x54] sm:$0xf]
    %v7151 = vld [vmem:[%s2797 + $0x58] sm:$0xf]
    %v7152 = vld [vmem:[%s2797 + $0x5c] sm:$0xf]
    %v7153 = vld [vmem:[%s2797 + $0x60] sm:$0xf]
    %v7154 = vld [vmem:[%s2797 + $0x64] sm:$0xf]
    %v7155 = vld [vmem:[%s2797 + $0x68] sm:$0xf]
    %v7156 = vld [vmem:[%s2797 + $0x6c] sm:$0xf]
    %v7157 = vld [vmem:[%s2797 + $0x70] sm:$0xf]
    %v7158 = vld [vmem:[%s2797 + $0x74] sm:$0xf]
    %v7159 = vld [vmem:[%s2797 + $0x78] sm:$0xf]
    %v7160 = vld [vmem:[%s2797 + $0x7c] sm:$0xf]
    %v7161 = vld [vmem:[%s2797 + $0x80] sm:$0xf]
    %v7162 = vld [vmem:[%s2797 + $0x84] sm:$0xf]
    %v7163 = vld [vmem:[%s2797 + $0x88] sm:$0xf]
    %v7164 = vld [vmem:[%s2797 + $0x8c] sm:$0xf]
    %v7165 = vld [vmem:[%s2797 + $0x90] sm:$0xf]
    %v7166 = vld [vmem:[%s2797 + $0x94] sm:$0xf]
    %v7167 = vld [vmem:[%s2797 + $0x98] sm:$0xf]
    %v7168 = vld [vmem:[%s2797 + $0x9c] sm:$0xf]
    %v7169 = vld [vmem:[%s2797 + $0xa0] sm:$0xf]
    %v7170 = vld [vmem:[%s2797 + $0xa4] sm:$0xf]
    %v7171 = vld [vmem:[%s2797 + $0xa8] sm:$0xf]
    %v7172 = vld [vmem:[%s2797 + $0xac] sm:$0xf]
    %v7173 = vld [vmem:[%s2797 + $0xb0] sm:$0xf]
    %v7174 = vld [vmem:[%s2797 + $0xb4] sm:$0xf]
    %v7175 = vld [vmem:[%s2797 + $0xb8] sm:$0xf]
    %v7176 = vld [vmem:[%s2797 + $0xbc] sm:$0xf]
    %v7177 = vld [vmem:[%s2797 + $0xc0] sm:$0xf]
    %v7178 = vld [vmem:[%s2797 + $0xc4] sm:$0xf]
    %v7179 = vld [vmem:[%s2797 + $0xc8] sm:$0xf]
    %v7180 = vld [vmem:[%s2797 + $0xcc] sm:$0xf]
    %v7181 = vrot.slane %v5734, 3
    %v7182 = vrot.slane %v5738, 3
    %v7183 = vrot.slane %v5742, 3
    %v7184 = vrot.slane %v5745, 3
    %v7240 = vunpack.c.l.b16 %v7129
    %v7241 = vunpack.c.l.b16 %v7130
    %v7242 = vunpack.c.l.b16 %v7131
    %v7243 = vunpack.c.l.b16 %v7132
    %v7244 = vunpack.c.l.b16 %v7133
    %v7245 = vunpack.c.l.b16 %v7134
    %v7246 = vunpack.c.l.b16 %v7135
    %v7247 = vunpack.c.l.b16 %v7136
    %v7248 = vunpack.c.l.b16 %v7137
    %v7249 = vunpack.c.l.b16 %v7138
    %v7250 = vunpack.c.l.b16 %v7139
    %v7251 = vunpack.c.l.b16 %v7140
    %v7252 = vunpack.c.l.b16 %v7141
    %v7253 = vunpack.c.l.b16 %v7142
    %v7254 = vunpack.c.l.b16 %v7143
    %v7255 = vunpack.c.l.b16 %v7144
    %v7256 = vunpack.c.l.b16 %v7145
    %v7257 = vunpack.c.l.b16 %v7146
    %v7258 = vunpack.c.l.b16 %v7147
    %v7259 = vunpack.c.l.b16 %v7148
    %v7260 = vunpack.c.l.b16 %v7149
    %v7261 = vunpack.c.l.b16 %v7150
    %v7262 = vunpack.c.l.b16 %v7151
    %v7263 = vunpack.c.l.b16 %v7152
    %v7264 = vunpack.c.l.b16 %v7153
    %v7265 = vunpack.c.l.b16 %v7154
    %v7266 = vunpack.c.l.b16 %v7155
    %v7267 = vunpack.c.l.b16 %v7156
    %v7268 = vunpack.c.l.b16 %v7157
    %v7269 = vunpack.c.l.b16 %v7158
    %v7270 = vunpack.c.l.b16 %v7159
    %v7271 = vunpack.c.l.b16 %v7160
    %v7272 = vunpack.c.l.b16 %v7161
    %v7273 = vunpack.c.l.b16 %v7162
    %v7274 = vunpack.c.l.b16 %v7163
    %v7275 = vunpack.c.l.b16 %v7164
    %v7276 = vunpack.c.l.b16 %v7165
    %v7277 = vunpack.c.l.b16 %v7166
    %v7278 = vunpack.c.l.b16 %v7167
    %v7279 = vunpack.c.l.b16 %v7168
    %v7280 = vunpack.c.l.b16 %v7169
    %v7281 = vunpack.c.l.b16 %v7170
    %v7282 = vunpack.c.l.b16 %v7171
    %v7283 = vunpack.c.l.b16 %v7172
    %v7284 = vunpack.c.l.b16 %v7173
    %v7285 = vunpack.c.l.b16 %v7174
    %v7286 = vunpack.c.l.b16 %v7175
    %v7287 = vunpack.c.l.b16 %v7176
    %v7288 = vunpack.c.l.b16 %v7177
    %v7289 = vunpack.c.l.b16 %v7178
    %v7290 = vunpack.c.l.b16 %v7179
    %v7291 = vunpack.c.l.b16 %v7180
    %v7292 = vpack.c.b16 %v7241, %v7240
    %v7293 = vpack.c.b16 %v7243, %v7242
    %v7294 = vpack.c.b16 %v7245, %v7244
    %v7295 = vpack.c.b16 %v7247, %v7246
    %v7296 = vpack.c.b16 %v7249, %v7248
    %v7297 = vpack.c.b16 %v7251, %v7250
    %v7298 = vpack.c.b16 %v7253, %v7252
    %v7299 = vpack.c.b16 %v7255, %v7254
    %v7300 = vpack.c.b16 %v7257, %v7256
    %v7301 = vpack.c.b16 %v7259, %v7258
    %v7302 = vpack.c.b16 %v7261, %v7260
    %v7303 = vpack.c.b16 %v7263, %v7262
    %v7304 = vpack.c.b16 %v7265, %v7264
    %v7305 = vpack.c.b16 %v7267, %v7266
    %v7306 = vpack.c.b16 %v7269, %v7268
    %v7307 = vpack.c.b16 %v7271, %v7270
    %v7308 = vpack.c.b16 %v7273, %v7272
    %v7309 = vpack.c.b16 %v7275, %v7274
    %v7310 = vpack.c.b16 %v7277, %v7276
    %v7311 = vpack.c.b16 %v7279, %v7278
    %v7312 = vpack.c.b16 %v7281, %v7280
    %v7313 = vpack.c.b16 %v7283, %v7282
    %v7314 = vpack.c.b16 %v7285, %v7284
    %v7315 = vpack.c.b16 %v7287, %v7286
    %v7316 = vpack.c.b16 %v7289, %v7288
    %v7317 = vpack.c.b16 %v7291, %v7290
    %v7345 = vsel %vm1022, %v7184, 0
    %7347 = vmatprep.subr.bf16.mxu0 0
    %7348 = vmatpush1.bf16.msra.mxu0 %v7292
    %7349 = vmatprep.subr.bf16.mxu0 0
    %7350 = vmatpush1.bf16.msra.mxu0 %v7293
    %7351 = vmatprep.subr.bf16.mxu0 0
    %7352 = vmatpush1.bf16.msra.mxu0 %v7294
    %7353 = vmatprep.subr.bf16.mxu0 0
    %7354 = vmatpush1.bf16.msra.mxu0 %v7295
    %7355 = vmatprep.subr.bf16.mxu0 0
    %7356 = vmatpush1.bf16.msra.mxu0 %v7296
    %7357 = vmatprep.subr.bf16.mxu0 0
    %7358 = vmatpush1.bf16.msra.mxu0 %v7297
    %7359 = vmatprep.subr.bf16.mxu0 0
    %7360 = vmatpush1.bf16.msra.mxu0 %v7298
    %7361 = vmatprep.subr.bf16.mxu0 0
    %7362 = vmatpush1.bf16.msra.mxu0 %v7299
    %7363 = vmatprep.subr.bf16.mxu0 0
    %7364 = vmatpush1.bf16.msra.mxu0 %v7300
    %7365 = vmatprep.subr.bf16.mxu0 0
    %7366 = vmatpush1.bf16.msra.mxu0 %v7301
    %7367 = vmatprep.subr.bf16.mxu0 0
    %7368 = vmatpush1.bf16.msra.mxu0 %v7302
    %7369 = vmatprep.subr.bf16.mxu0 0
    %7370 = vmatpush1.bf16.msra.mxu0 %v7303
    %7371 = vmatprep.subr.bf16.mxu0 0
    %7372 = vmatpush1.bf16.msra.mxu0 %v7304
    %7373 = vmatprep.subr.bf16.mxu0 0
    %7374 = vmatpush1.bf16.msra.mxu0 %v7305
    %7375 = vmatprep.subr.bf16.mxu0 0
    %7376 = vmatpush1.bf16.msra.mxu0 %v7306
    %7377 = vmatprep.subr.bf16.mxu0 0
    %7378 = vmatpush1.bf16.msra.mxu0 %v7307
    %7379 = vmatprep.mubr.bf16.mxu0 %v7182
    %7380 = vmatmul.mubr.bf16.gmra.mrb[0].mxu0 %v7181
    %v7381 = vpop.f32.mrb[0].mxu0
    %v7382 = vadd.f32 0.0, %v7381
    %v7383 = vpop.f32.mrb[0].mxu0
    %v7384 = vpop.f32.mrb[0].mxu0
    %v7385 = vpop.f32.mrb[0].mxu0
    %7386 = vdwg.mxu0
    %7387 = vmatprep.subr.bf16.mxu0 0
    %7388 = vmatpush1.bf16.msra.mxu0 %v7308
    %7389 = vmatprep.subr.bf16.mxu0 0
    %7390 = vmatpush1.bf16.msra.mxu0 %v7309
    %7391 = vmatprep.subr.bf16.mxu0 0
    %7392 = vmatpush1.bf16.msra.mxu0 %v7310
    %7393 = vmatprep.subr.bf16.mxu0 0
    %7394 = vmatpush1.bf16.msra.mxu0 %v7311
    %7395 = vmatprep.subr.bf16.mxu0 0
    %7396 = vmatpush1.bf16.msra.mxu0 %v7312
    %7397 = vmatprep.subr.bf16.mxu0 0
    %7398 = vmatpush1.bf16.msra.mxu0 %v7313
    %7399 = vmatprep.subr.bf16.mxu0 0
    %7400 = vmatpush1.bf16.msra.mxu0 %v7314
    %7401 = vmatprep.subr.bf16.mxu0 0
    %7402 = vmatpush1.bf16.msra.mxu0 %v7315
    %7403 = vmatprep.subr.bf16.mxu0 0
    %7404 = vmatpush1.bf16.msra.mxu0 %v7316
    %7405 = vmatprep.subr.bf16.mxu0 0
    %7406 = vmatpush1.bf16.msra.mxu0 %v7317
    %7407 = vmatprep.subr.bf16.mxu0 0
    %7408 = vmatpush1.bf16.msra.mxu0 0
    %7409 = vmatprep.subr.bf16.mxu0 0
    %7410 = vmatpush1.bf16.msra.mxu0 0
    %7411 = vmatprep.subr.bf16.mxu0 0
    %7412 = vmatpush1.bf16.msra.mxu0 0
    %7413 = vmatprep.subr.bf16.mxu0 0
    %7414 = vmatpush1.bf16.msra.mxu0 0
    %7415 = vmatprep.subr.bf16.mxu0 0
    %7416 = vmatpush1.bf16.msra.mxu0 0
    %7417 = vmatprep.subr.bf16.mxu0 0
    %7418 = vmatpush1.bf16.msra.mxu0 0
    %7419 = vmatprep.mubr.bf16.mxu0 %v7345
    %7420 = vmatmul.mubr.bf16.gmra.mrb[0].mxu0 %v7183
    %v7421 = vpop.f32.mrb[0].mxu0
    %v7422 = vadd.f32 %v7382, %v7421
    %v7423 = vpop.f32.mrb[0].mxu0
    %v7424 = vpop.f32.mrb[0].mxu0
    %v7425 = vpop.f32.mrb[0].mxu0
    %7426 = vdwg.mxu0
    %v7427 = vadd.f32 %v6829, %v7422
    %v7428 = vpack.c.bf16 %v5028, %v5028
    %v7429 = vpack.c.bf16 %v5029, %v5029
    %v7430 = vpack.c.bf16 %v5030, %v5030
    %v7431 = vpack.c.bf16 %v5031, %v5031
    %v7432 = vld [vmem:[%s3101] sm:$0xf]
    %v7433 = vld [vmem:[%s3101 + $0x4] sm:$0xf]
    %v7434 = vld [vmem:[%s3101 + $0x8] sm:$0xf]
    %v7435 = vld [vmem:[%s3101 + $0xc] sm:$0xf]
    %v7436 = vld [vmem:[%s3101 + $0x10] sm:$0xf]
    %v7437 = vld [vmem:[%s3101 + $0x14] sm:$0xf]
    %v7438 = vld [vmem:[%s3101 + $0x18] sm:$0xf]
    %v7439 = vld [vmem:[%s3101 + $0x1c] sm:$0xf]
    %v7440 = vld [vmem:[%s3101 + $0x20] sm:$0xf]
    %v7441 = vld [vmem:[%s3101 + $0x24] sm:$0xf]
    %v7442 = vld [vmem:[%s3101 + $0x28] sm:$0xf]
    %v7443 = vld [vmem:[%s3101 + $0x2c] sm:$0xf]
    %v7444 = vld [vmem:[%s3101 + $0x30] sm:$0xf]
    %v7445 = vld [vmem:[%s3101 + $0x34] sm:$0xf]
    %v7446 = vld [vmem:[%s3101 + $0x38] sm:$0xf]
    %v7447 = vld [vmem:[%s3101 + $0x3c] sm:$0xf]
    %v7448 = vld [vmem:[%s3101 + $0x40] sm:$0xf]
    %v7449 = vld [vmem:[%s3101 + $0x44] sm:$0xf]
    %v7450 = vld [vmem:[%s3101 + $0x48] sm:$0xf]
    %v7451 = vld [vmem:[%s3101 + $0x4c] sm:$0xf]
    %v7452 = vld [vmem:[%s3101 + $0x50] sm:$0xf]
    %v7453 = vld [vmem:[%s3101 + $0x54] sm:$0xf]
    %v7454 = vld [vmem:[%s3101 + $0x58] sm:$0xf]
    %v7455 = vld [vmem:[%s3101 + $0x5c] sm:$0xf]
    %v7456 = vld [vmem:[%s3101 + $0x60] sm:$0xf]
    %v7457 = vld [vmem:[%s3101 + $0x64] sm:$0xf]
    %v7458 = vld [vmem:[%s3101 + $0x68] sm:$0xf]
    %v7459 = vld [vmem:[%s3101 + $0x6c] sm:$0xf]
    %v7460 = vld [vmem:[%s3101 + $0x70] sm:$0xf]
    %v7461 = vld [vmem:[%s3101 + $0x74] sm:$0xf]
    %v7462 = vld [vmem:[%s3101 + $0x78] sm:$0xf]
    %v7463 = vld [vmem:[%s3101 + $0x7c] sm:$0xf]
    %v7464 = vld [vmem:[%s3101 + $0x80] sm:$0xf]
    %v7465 = vld [vmem:[%s3101 + $0x84] sm:$0xf]
    %v7466 = vld [vmem:[%s3101 + $0x88] sm:$0xf]
    %v7467 = vld [vmem:[%s3101 + $0x8c] sm:$0xf]
    %v7468 = vld [vmem:[%s3101 + $0x90] sm:$0xf]
    %v7469 = vld [vmem:[%s3101 + $0x94] sm:$0xf]
    %v7470 = vld [vmem:[%s3101 + $0x98] sm:$0xf]
    %v7471 = vld [vmem:[%s3101 + $0x9c] sm:$0xf]
    %v7472 = vld [vmem:[%s3101 + $0xa0] sm:$0xf]
    %v7473 = vld [vmem:[%s3101 + $0xa4] sm:$0xf]
    %v7474 = vld [vmem:[%s3101 + $0xa8] sm:$0xf]
    %v7475 = vld [vmem:[%s3101 + $0xac] sm:$0xf]
    %v7476 = vld [vmem:[%s3101 + $0xb0] sm:$0xf]
    %v7477 = vld [vmem:[%s3101 + $0xb4] sm:$0xf]
    %v7478 = vld [vmem:[%s3101 + $0xb8] sm:$0xf]
    %v7479 = vld [vmem:[%s3101 + $0xbc] sm:$0xf]
    %v7480 = vld [vmem:[%s3101 + $0xc0] sm:$0xf]
    %v7481 = vld [vmem:[%s3101 + $0xc4] sm:$0xf]
    %v7482 = vld [vmem:[%s3101 + $0xc8] sm:$0xf]
    %v7483 = vld [vmem:[%s3101 + $0xcc] sm:$0xf]
    %v7536 = vunpack.c.l.b16 %v7432
    %v7537 = vunpack.c.l.b16 %v7433
    %v7538 = vunpack.c.l.b16 %v7434
    %v7539 = vunpack.c.l.b16 %v7435
    %v7540 = vunpack.c.l.b16 %v7436
    %v7541 = vunpack.c.l.b16 %v7437
    %v7542 = vunpack.c.l.b16 %v7438
    %v7543 = vunpack.c.l.b16 %v7439
    %v7544 = vunpack.c.l.b16 %v7440
    %v7545 = vunpack.c.l.b16 %v7441
    %v7546 = vunpack.c.l.b16 %v7442
    %v7547 = vunpack.c.l.b16 %v7443
    %v7548 = vunpack.c.l.b16 %v7444
    %v7549 = vunpack.c.l.b16 %v7445
    %v7550 = vunpack.c.l.b16 %v7446
    %v7551 = vunpack.c.l.b16 %v7447
    %v7552 = vunpack.c.l.b16 %v7448
    %v7553 = vunpack.c.l.b16 %v7449
    %v7554 = vunpack.c.l.b16 %v7450
    %v7555 = vunpack.c.l.b16 %v7451
    %v7556 = vunpack.c.l.b16 %v7452
    %v7557 = vunpack.c.l.b16 %v7453
    %v7558 = vunpack.c.l.b16 %v7454
    %v7559 = vunpack.c.l.b16 %v7455
    %v7560 = vunpack.c.l.b16 %v7456
    %v7561 = vunpack.c.l.b16 %v7457
    %v7562 = vunpack.c.l.b16 %v7458
    %v7563 = vunpack.c.l.b16 %v7459
    %v7564 = vunpack.c.l.b16 %v7460
    %v7565 = vunpack.c.l.b16 %v7461
    %v7566 = vunpack.c.l.b16 %v7462
    %v7567 = vunpack.c.l.b16 %v7463
    %v7568 = vunpack.c.l.b16 %v7464
    %v7569 = vunpack.c.l.b16 %v7465
    %v7570 = vunpack.c.l.b16 %v7466
    %v7571 = vunpack.c.l.b16 %v7467
    %v7572 = vunpack.c.l.b16 %v7468
    %v7573 = vunpack.c.l.b16 %v7469
    %v7574 = vunpack.c.l.b16 %v7470
    %v7575 = vunpack.c.l.b16 %v7471
    %v7576 = vunpack.c.l.b16 %v7472
    %v7577 = vunpack.c.l.b16 %v7473
    %v7578 = vunpack.c.l.b16 %v7474
    %v7579 = vunpack.c.l.b16 %v7475
    %v7580 = vunpack.c.l.b16 %v7476
    %v7581 = vunpack.c.l.b16 %v7477
    %v7582 = vunpack.c.l.b16 %v7478
    %v7583 = vunpack.c.l.b16 %v7479
    %v7584 = vunpack.c.l.b16 %v7480
    %v7585 = vunpack.c.l.b16 %v7481
    %v7586 = vunpack.c.l.b16 %v7482
    %v7587 = vunpack.c.l.b16 %v7483
    %v7588 = vpack.c.b16 %v7537, %v7536
    %v7589 = vpack.c.b16 %v7539, %v7538
    %v7590 = vpack.c.b16 %v7541, %v7540
    %v7591 = vpack.c.b16 %v7543, %v7542
    %v7592 = vpack.c.b16 %v7545, %v7544
    %v7593 = vpack.c.b16 %v7547, %v7546
    %v7594 = vpack.c.b16 %v7549, %v7548
    %v7595 = vpack.c.b16 %v7551, %v7550
    %v7596 = vpack.c.b16 %v7553, %v7552
    %v7597 = vpack.c.b16 %v7555, %v7554
    %v7598 = vpack.c.b16 %v7557, %v7556
    %v7599 = vpack.c.b16 %v7559, %v7558
    %v7600 = vpack.c.b16 %v7561, %v7560
    %v7601 = vpack.c.b16 %v7563, %v7562
    %v7602 = vpack.c.b16 %v7565, %v7564
    %v7603 = vpack.c.b16 %v7567, %v7566
    %v7604 = vpack.c.b16 %v7569, %v7568
    %v7605 = vpack.c.b16 %v7571, %v7570
    %v7606 = vpack.c.b16 %v7573, %v7572
    %v7607 = vpack.c.b16 %v7575, %v7574
    %v7608 = vpack.c.b16 %v7577, %v7576
    %v7609 = vpack.c.b16 %v7579, %v7578
    %v7610 = vpack.c.b16 %v7581, %v7580
    %v7611 = vpack.c.b16 %v7583, %v7582
    %v7612 = vpack.c.b16 %v7585, %v7584
    %v7613 = vpack.c.b16 %v7587, %v7586
    %v7641 = vsel %vm1022, %v7431, 0
    %7643 = vmatprep.subr.bf16.mxu0 0
    %7644 = vmatpush1.bf16.msra.mxu0 %v7588
    %7645 = vmatprep.subr.bf16.mxu0 0
    %7646 = vmatpush1.bf16.msra.mxu0 %v7589
    %7647 = vmatprep.subr.bf16.mxu0 0
    %7648 = vmatpush1.bf16.msra.mxu0 %v7590
    %7649 = vmatprep.subr.bf16.mxu0 0
    %7650 = vmatpush1.bf16.msra.mxu0 %v7591
    %7651 = vmatprep.subr.bf16.mxu0 0
    %7652 = vmatpush1.bf16.msra.mxu0 %v7592
    %7653 = vmatprep.subr.bf16.mxu0 0
    %7654 = vmatpush1.bf16.msra.mxu0 %v7593
    %7655 = vmatprep.subr.bf16.mxu0 0
    %7656 = vmatpush1.bf16.msra.mxu0 %v7594
    %7657 = vmatprep.subr.bf16.mxu0 0
    %7658 = vmatpush1.bf16.msra.mxu0 %v7595
    %7659 = vmatprep.subr.bf16.mxu0 0
    %7660 = vmatpush1.bf16.msra.mxu0 %v7596
    %7661 = vmatprep.subr.bf16.mxu0 0
    %7662 = vmatpush1.bf16.msra.mxu0 %v7597
    %7663 = vmatprep.subr.bf16.mxu0 0
    %7664 = vmatpush1.bf16.msra.mxu0 %v7598
    %7665 = vmatprep.subr.bf16.mxu0 0
    %7666 = vmatpush1.bf16.msra.mxu0 %v7599
    %7667 = vmatprep.subr.bf16.mxu0 0
    %7668 = vmatpush1.bf16.msra.mxu0 %v7600
    %7669 = vmatprep.subr.bf16.mxu0 0
    %7670 = vmatpush1.bf16.msra.mxu0 %v7601
    %7671 = vmatprep.subr.bf16.mxu0 0
    %7672 = vmatpush1.bf16.msra.mxu0 %v7602
    %7673 = vmatprep.subr.bf16.mxu0 0
    %7674 = vmatpush1.bf16.msra.mxu0 %v7603
    %7675 = vmatprep.mubr.bf16.mxu0 %v7429
    %7676 = vmatmul.mubr.bf16.gmra.mrb[0].mxu0 %v7428
    %v7677 = vpop.f32.mrb[0].mxu0
    %v7678 = vadd.f32 0.0, %v7677
    %v7679 = vpop.f32.mrb[0].mxu0
    %v7680 = vpop.f32.mrb[0].mxu0
    %v7681 = vpop.f32.mrb[0].mxu0
    %7682 = vdwg.mxu0
    %7683 = vmatprep.subr.bf16.mxu0 0
    %7684 = vmatpush1.bf16.msra.mxu0 %v7604
    %7685 = vmatprep.subr.bf16.mxu0 0
    %7686 = vmatpush1.bf16.msra.mxu0 %v7605
    %7687 = vmatprep.subr.bf16.mxu0 0
    %7688 = vmatpush1.bf16.msra.mxu0 %v7606
    %7689 = vmatprep.subr.bf16.mxu0 0
    %7690 = vmatpush1.bf16.msra.mxu0 %v7607
    %7691 = vmatprep.subr.bf16.mxu0 0
    %7692 = vmatpush1.bf16.msra.mxu0 %v7608
    %7693 = vmatprep.subr.bf16.mxu0 0
    %7694 = vmatpush1.bf16.msra.mxu0 %v7609
    %7695 = vmatprep.subr.bf16.mxu0 0
    %7696 = vmatpush1.bf16.msra.mxu0 %v7610
    %7697 = vmatprep.subr.bf16.mxu0 0
    %7698 = vmatpush1.bf16.msra.mxu0 %v7611
    %7699 = vmatprep.subr.bf16.mxu0 0
    %7700 = vmatpush1.bf16.msra.mxu0 %v7612
    %7701 = vmatprep.subr.bf16.mxu0 0
    %7702 = vmatpush1.bf16.msra.mxu0 %v7613
    %7703 = vmatprep.subr.bf16.mxu0 0
    %7704 = vmatpush1.bf16.msra.mxu0 0
    %7705 = vmatprep.subr.bf16.mxu0 0
    %7706 = vmatpush1.bf16.msra.mxu0 0
    %7707 = vmatprep.subr.bf16.mxu0 0
    %7708 = vmatpush1.bf16.msra.mxu0 0
    %7709 = vmatprep.subr.bf16.mxu0 0
    %7710 = vmatpush1.bf16.msra.mxu0 0
    %7711 = vmatprep.subr.bf16.mxu0 0
    %7712 = vmatpush1.bf16.msra.mxu0 0
    %7713 = vmatprep.subr.bf16.mxu0 0
    %7714 = vmatpush1.bf16.msra.mxu0 0
    %7715 = vmatprep.mubr.bf16.mxu0 %v7641
    %7716 = vmatmul.mubr.bf16.gmra.mrb[0].mxu0 %v7430
    %v7717 = vpop.f32.mrb[0].mxu0
    %v7718 = vadd.f32 %v7678, %v7717
    %v7719 = vpop.f32.mrb[0].mxu0
    %v7720 = vpop.f32.mrb[0].mxu0
    %v7721 = vpop.f32.mrb[0].mxu0
    %7722 = vdwg.mxu0
    %v7723 = vadd.f32 %v7128, %v7718
    %v7724 = vld [vmem:[%s3394] sm:$0xf]
    %v7725 = vld [vmem:[%s3394 + $0x4] sm:$0xf]
    %v7726 = vld [vmem:[%s3394 + $0x8] sm:$0xf]
    %v7727 = vld [vmem:[%s3394 + $0xc] sm:$0xf]
    %v7728 = vld [vmem:[%s3394 + $0x10] sm:$0xf]
    %v7729 = vld [vmem:[%s3394 + $0x14] sm:$0xf]
    %v7730 = vld [vmem:[%s3394 + $0x18] sm:$0xf]
    %v7731 = vld [vmem:[%s3394 + $0x1c] sm:$0xf]
    %v7732 = vld [vmem:[%s3394 + $0x20] sm:$0xf]
    %v7733 = vld [vmem:[%s3394 + $0x24] sm:$0xf]
    %v7734 = vld [vmem:[%s3394 + $0x28] sm:$0xf]
    %v7735 = vld [vmem:[%s3394 + $0x2c] sm:$0xf]
    %v7736 = vld [vmem:[%s3394 + $0x30] sm:$0xf]
    %v7737 = vld [vmem:[%s3394 + $0x34] sm:$0xf]
    %v7738 = vld [vmem:[%s3394 + $0x38] sm:$0xf]
    %v7739 = vld [vmem:[%s3394 + $0x3c] sm:$0xf]
    %v7740 = vld [vmem:[%s3394 + $0x40] sm:$0xf]
    %v7741 = vld [vmem:[%s3394 + $0x44] sm:$0xf]
    %v7742 = vld [vmem:[%s3394 + $0x48] sm:$0xf]
    %v7743 = vld [vmem:[%s3394 + $0x4c] sm:$0xf]
    %v7744 = vld [vmem:[%s3394 + $0x50] sm:$0xf]
    %v7745 = vld [vmem:[%s3394 + $0x54] sm:$0xf]
    %v7746 = vld [vmem:[%s3394 + $0x58] sm:$0xf]
    %v7747 = vld [vmem:[%s3394 + $0x5c] sm:$0xf]
    %v7748 = vld [vmem:[%s3394 + $0x60] sm:$0xf]
    %v7749 = vld [vmem:[%s3394 + $0x64] sm:$0xf]
    %v7750 = vld [vmem:[%s3394 + $0x68] sm:$0xf]
    %v7751 = vld [vmem:[%s3394 + $0x6c] sm:$0xf]
    %v7752 = vld [vmem:[%s3394 + $0x70] sm:$0xf]
    %v7753 = vld [vmem:[%s3394 + $0x74] sm:$0xf]
    %v7754 = vld [vmem:[%s3394 + $0x78] sm:$0xf]
    %v7755 = vld [vmem:[%s3394 + $0x7c] sm:$0xf]
    %v7756 = vld [vmem:[%s3394 + $0x80] sm:$0xf]
    %v7757 = vld [vmem:[%s3394 + $0x84] sm:$0xf]
    %v7758 = vld [vmem:[%s3394 + $0x88] sm:$0xf]
    %v7759 = vld [vmem:[%s3394 + $0x8c] sm:$0xf]
    %v7760 = vld [vmem:[%s3394 + $0x90] sm:$0xf]
    %v7761 = vld [vmem:[%s3394 + $0x94] sm:$0xf]
    %v7762 = vld [vmem:[%s3394 + $0x98] sm:$0xf]
    %v7763 = vld [vmem:[%s3394 + $0x9c] sm:$0xf]
    %v7764 = vld [vmem:[%s3394 + $0xa0] sm:$0xf]
    %v7765 = vld [vmem:[%s3394 + $0xa4] sm:$0xf]
    %v7766 = vld [vmem:[%s3394 + $0xa8] sm:$0xf]
    %v7767 = vld [vmem:[%s3394 + $0xac] sm:$0xf]
    %v7768 = vld [vmem:[%s3394 + $0xb0] sm:$0xf]
    %v7769 = vld [vmem:[%s3394 + $0xb4] sm:$0xf]
    %v7770 = vld [vmem:[%s3394 + $0xb8] sm:$0xf]
    %v7771 = vld [vmem:[%s3394 + $0xbc] sm:$0xf]
    %v7772 = vld [vmem:[%s3394 + $0xc0] sm:$0xf]
    %v7773 = vld [vmem:[%s3394 + $0xc4] sm:$0xf]
    %v7774 = vld [vmem:[%s3394 + $0xc8] sm:$0xf]
    %v7775 = vld [vmem:[%s3394 + $0xcc] sm:$0xf]
    %v7777 = vshrl.u32 %v7428, 16
    %v7780 = vshrl.u32 %v7429, 16
    %v7783 = vshrl.u32 %v7430, 16
    %v7785 = vshrl.u32 %v7431, 16
    %v7842 = vunpack.c.l.b16 %v7724
    %v7843 = vunpack.c.l.b16 %v7725
    %v7844 = vunpack.c.l.b16 %v7726
    %v7845 = vunpack.c.l.b16 %v7727
    %v7846 = vunpack.c.l.b16 %v7728
    %v7847 = vunpack.c.l.b16 %v7729
    %v7848 = vunpack.c.l.b16 %v7730
    %v7849 = vunpack.c.l.b16 %v7731
    %v7850 = vunpack.c.l.b16 %v7732
    %v7851 = vunpack.c.l.b16 %v7733
    %v7852 = vunpack.c.l.b16 %v7734
    %v7853 = vunpack.c.l.b16 %v7735
    %v7854 = vunpack.c.l.b16 %v7736
    %v7855 = vunpack.c.l.b16 %v7737
    %v7856 = vunpack.c.l.b16 %v7738
    %v7857 = vunpack.c.l.b16 %v7739
    %v7858 = vunpack.c.l.b16 %v7740
    %v7859 = vunpack.c.l.b16 %v7741
    %v7860 = vunpack.c.l.b16 %v7742
    %v7861 = vunpack.c.l.b16 %v7743
    %v7862 = vunpack.c.l.b16 %v7744
    %v7863 = vunpack.c.l.b16 %v7745
    %v7864 = vunpack.c.l.b16 %v7746
    %v7865 = vunpack.c.l.b16 %v7747
    %v7866 = vunpack.c.l.b16 %v7748
    %v7867 = vunpack.c.l.b16 %v7749
    %v7868 = vunpack.c.l.b16 %v7750
    %v7869 = vunpack.c.l.b16 %v7751
    %v7870 = vunpack.c.l.b16 %v7752
    %v7871 = vunpack.c.l.b16 %v7753
    %v7872 = vunpack.c.l.b16 %v7754
    %v7873 = vunpack.c.l.b16 %v7755
    %v7874 = vunpack.c.l.b16 %v7756
    %v7875 = vunpack.c.l.b16 %v7757
    %v7876 = vunpack.c.l.b16 %v7758
    %v7877 = vunpack.c.l.b16 %v7759
    %v7878 = vunpack.c.l.b16 %v7760
    %v7879 = vunpack.c.l.b16 %v7761
    %v7880 = vunpack.c.l.b16 %v7762
    %v7881 = vunpack.c.l.b16 %v7763
    %v7882 = vunpack.c.l.b16 %v7764
    %v7883 = vunpack.c.l.b16 %v7765
    %v7884 = vunpack.c.l.b16 %v7766
    %v7885 = vunpack.c.l.b16 %v7767
    %v7886 = vunpack.c.l.b16 %v7768
    %v7887 = vunpack.c.l.b16 %v7769
    %v7888 = vunpack.c.l.b16 %v7770
    %v7889 = vunpack.c.l.b16 %v7771
    %v7890 = vunpack.c.l.b16 %v7772
    %v7891 = vunpack.c.l.b16 %v7773
    %v7892 = vunpack.c.l.b16 %v7774
    %v7893 = vunpack.c.l.b16 %v7775
    %v7894 = vpack.c.b16 %v7843, %v7842
    %v7895 = vpack.c.b16 %v7845, %v7844
    %v7896 = vpack.c.b16 %v7847, %v7846
    %v7897 = vpack.c.b16 %v7849, %v7848
    %v7898 = vpack.c.b16 %v7851, %v7850
    %v7899 = vpack.c.b16 %v7853, %v7852
    %v7900 = vpack.c.b16 %v7855, %v7854
    %v7901 = vpack.c.b16 %v7857, %v7856
    %v7902 = vpack.c.b16 %v7859, %v7858
    %v7903 = vpack.c.b16 %v7861, %v7860
    %v7904 = vpack.c.b16 %v7863, %v7862
    %v7905 = vpack.c.b16 %v7865, %v7864
    %v7906 = vpack.c.b16 %v7867, %v7866
    %v7907 = vpack.c.b16 %v7869, %v7868
    %v7908 = vpack.c.b16 %v7871, %v7870
    %v7909 = vpack.c.b16 %v7873, %v7872
    %v7910 = vpack.c.b16 %v7875, %v7874
    %v7911 = vpack.c.b16 %v7877, %v7876
    %v7912 = vpack.c.b16 %v7879, %v7878
    %v7913 = vpack.c.b16 %v7881, %v7880
    %v7914 = vpack.c.b16 %v7883, %v7882
    %v7915 = vpack.c.b16 %v7885, %v7884
    %v7916 = vpack.c.b16 %v7887, %v7886
    %v7917 = vpack.c.b16 %v7889, %v7888
    %v7918 = vpack.c.b16 %v7891, %v7890
    %v7919 = vpack.c.b16 %v7893, %v7892
    %v7947 = vsel %vm1022, %v7785, 0
    %7949 = vmatprep.subr.bf16.mxu0 0
    %7950 = vmatpush1.bf16.msra.mxu0 %v7894
    %7951 = vmatprep.subr.bf16.mxu0 0
    %7952 = vmatpush1.bf16.msra.mxu0 %v7895
    %7953 = vmatprep.subr.bf16.mxu0 0
    %7954 = vmatpush1.bf16.msra.mxu0 %v7896
    %7955 = vmatprep.subr.bf16.mxu0 0
    %7956 = vmatpush1.bf16.msra.mxu0 %v7897
    %7957 = vmatprep.subr.bf16.mxu0 0
    %7958 = vmatpush1.bf16.msra.mxu0 %v7898
    %7959 = vmatprep.subr.bf16.mxu0 0
    %7960 = vmatpush1.bf16.msra.mxu0 %v7899
    %7961 = vmatprep.subr.bf16.mxu0 0
    %7962 = vmatpush1.bf16.msra.mxu0 %v7900
    %7963 = vmatprep.subr.bf16.mxu0 0
    %7964 = vmatpush1.bf16.msra.mxu0 %v7901
    %7965 = vmatprep.subr.bf16.mxu0 0
    %7966 = vmatpush1.bf16.msra.mxu0 %v7902
    %7967 = vmatprep.subr.bf16.mxu0 0
    %7968 = vmatpush1.bf16.msra.mxu0 %v7903
    %7969 = vmatprep.subr.bf16.mxu0 0
    %7970 = vmatpush1.bf16.msra.mxu0 %v7904
    %7971 = vmatprep.subr.bf16.mxu0 0
    %7972 = vmatpush1.bf16.msra.mxu0 %v7905
    %7973 = vmatprep.subr.bf16.mxu0 0
    %7974 = vmatpush1.bf16.msra.mxu0 %v7906
    %7975 = vmatprep.subr.bf16.mxu0 0
    %7976 = vmatpush1.bf16.msra.mxu0 %v7907
    %7977 = vmatprep.subr.bf16.mxu0 0
    %7978 = vmatpush1.bf16.msra.mxu0 %v7908
    %7979 = vmatprep.subr.bf16.mxu0 0
    %7980 = vmatpush1.bf16.msra.mxu0 %v7909
    %7981 = vmatprep.mubr.bf16.mxu0 %v7780
    %7982 = vmatmul.mubr.bf16.gmra.mrb[0].mxu0 %v7777
    %v7983 = vpop.f32.mrb[0].mxu0
    %v7984 = vadd.f32 0.0, %v7983
    %v7985 = vpop.f32.mrb[0].mxu0
    %v7986 = vpop.f32.mrb[0].mxu0
    %v7987 = vpop.f32.mrb[0].mxu0
    %7988 = vdwg.mxu0
    %7989 = vmatprep.subr.bf16.mxu0 0
    %7990 = vmatpush1.bf16.msra.mxu0 %v7910
    %7991 = vmatprep.subr.bf16.mxu0 0
    %7992 = vmatpush1.bf16.msra.mxu0 %v7911
    %7993 = vmatprep.subr.bf16.mxu0 0
    %7994 = vmatpush1.bf16.msra.mxu0 %v7912
    %7995 = vmatprep.subr.bf16.mxu0 0
    %7996 = vmatpush1.bf16.msra.mxu0 %v7913
    %7997 = vmatprep.subr.bf16.mxu0 0
    %7998 = vmatpush1.bf16.msra.mxu0 %v7914
    %7999 = vmatprep.subr.bf16.mxu0 0
    %8000 = vmatpush1.bf16.msra.mxu0 %v7915
    %8001 = vmatprep.subr.bf16.mxu0 0
    %8002 = vmatpush1.bf16.msra.mxu0 %v7916
    %8003 = vmatprep.subr.bf16.mxu0 0
    %8004 = vmatpush1.bf16.msra.mxu0 %v7917
    %8005 = vmatprep.subr.bf16.mxu0 0
    %8006 = vmatpush1.bf16.msra.mxu0 %v7918
    %8007 = vmatprep.subr.bf16.mxu0 0
    %8008 = vmatpush1.bf16.msra.mxu0 %v7919
    %8009 = vmatprep.subr.bf16.mxu0 0
    %8010 = vmatpush1.bf16.msra.mxu0 0
    %8011 = vmatprep.subr.bf16.mxu0 0
    %8012 = vmatpush1.bf16.msra.mxu0 0
    %8013 = vmatprep.subr.bf16.mxu0 0
    %8014 = vmatpush1.bf16.msra.mxu0 0
    %8015 = vmatprep.subr.bf16.mxu0 0
    %8016 = vmatpush1.bf16.msra.mxu0 0
    %8017 = vmatprep.subr.bf16.mxu0 0
    %8018 = vmatpush1.bf16.msra.mxu0 0
    %8019 = vmatprep.subr.bf16.mxu0 0
    %8020 = vmatpush1.bf16.msra.mxu0 0
    %8021 = vmatprep.mubr.bf16.mxu0 %v7947
    %8022 = vmatmul.mubr.bf16.gmra.mrb[0].mxu0 %v7783
    %v8023 = vpop.f32.mrb[0].mxu0
    %v8024 = vadd.f32 %v7984, %v8023
    %v8025 = vpop.f32.mrb[0].mxu0
    %v8026 = vpop.f32.mrb[0].mxu0
    %v8027 = vpop.f32.mrb[0].mxu0
    %8028 = vdwg.mxu0
    %v8029 = vadd.f32 %v7427, %v8024
    %v8030 = vld [vmem:[%s3701] sm:$0xf]
    %v8031 = vld [vmem:[%s3701 + $0x4] sm:$0xf]
    %v8032 = vld [vmem:[%s3701 + $0x8] sm:$0xf]
    %v8033 = vld [vmem:[%s3701 + $0xc] sm:$0xf]
    %v8034 = vld [vmem:[%s3701 + $0x10] sm:$0xf]
    %v8035 = vld [vmem:[%s3701 + $0x14] sm:$0xf]
    %v8036 = vld [vmem:[%s3701 + $0x18] sm:$0xf]
    %v8037 = vld [vmem:[%s3701 + $0x1c] sm:$0xf]
    %v8038 = vld [vmem:[%s3701 + $0x20] sm:$0xf]
    %v8039 = vld [vmem:[%s3701 + $0x24] sm:$0xf]
    %v8040 = vld [vmem:[%s3701 + $0x28] sm:$0xf]
    %v8041 = vld [vmem:[%s3701 + $0x2c] sm:$0xf]
    %v8042 = vld [vmem:[%s3701 + $0x30] sm:$0xf]
    %v8043 = vld [vmem:[%s3701 + $0x34] sm:$0xf]
    %v8044 = vld [vmem:[%s3701 + $0x38] sm:$0xf]
    %v8045 = vld [vmem:[%s3701 + $0x3c] sm:$0xf]
    %v8046 = vld [vmem:[%s3701 + $0x40] sm:$0xf]
    %v8047 = vld [vmem:[%s3701 + $0x44] sm:$0xf]
    %v8048 = vld [vmem:[%s3701 + $0x48] sm:$0xf]
    %v8049 = vld [vmem:[%s3701 + $0x4c] sm:$0xf]
    %v8050 = vld [vmem:[%s3701 + $0x50] sm:$0xf]
    %v8051 = vld [vmem:[%s3701 + $0x54] sm:$0xf]
    %v8052 = vld [vmem:[%s3701 + $0x58] sm:$0xf]
    %v8053 = vld [vmem:[%s3701 + $0x5c] sm:$0xf]
    %v8054 = vld [vmem:[%s3701 + $0x60] sm:$0xf]
    %v8055 = vld [vmem:[%s3701 + $0x64] sm:$0xf]
    %v8056 = vld [vmem:[%s3701 + $0x68] sm:$0xf]
    %v8057 = vld [vmem:[%s3701 + $0x6c] sm:$0xf]
    %v8058 = vld [vmem:[%s3701 + $0x70] sm:$0xf]
    %v8059 = vld [vmem:[%s3701 + $0x74] sm:$0xf]
    %v8060 = vld [vmem:[%s3701 + $0x78] sm:$0xf]
    %v8061 = vld [vmem:[%s3701 + $0x7c] sm:$0xf]
    %v8062 = vld [vmem:[%s3701 + $0x80] sm:$0xf]
    %v8063 = vld [vmem:[%s3701 + $0x84] sm:$0xf]
    %v8064 = vld [vmem:[%s3701 + $0x88] sm:$0xf]
    %v8065 = vld [vmem:[%s3701 + $0x8c] sm:$0xf]
    %v8066 = vld [vmem:[%s3701 + $0x90] sm:$0xf]
    %v8067 = vld [vmem:[%s3701 + $0x94] sm:$0xf]
    %v8068 = vld [vmem:[%s3701 + $0x98] sm:$0xf]
    %v8069 = vld [vmem:[%s3701 + $0x9c] sm:$0xf]
    %v8070 = vld [vmem:[%s3701 + $0xa0] sm:$0xf]
    %v8071 = vld [vmem:[%s3701 + $0xa4] sm:$0xf]
    %v8072 = vld [vmem:[%s3701 + $0xa8] sm:$0xf]
    %v8073 = vld [vmem:[%s3701 + $0xac] sm:$0xf]
    %v8074 = vld [vmem:[%s3701 + $0xb0] sm:$0xf]
    %v8075 = vld [vmem:[%s3701 + $0xb4] sm:$0xf]
    %v8076 = vld [vmem:[%s3701 + $0xb8] sm:$0xf]
    %v8077 = vld [vmem:[%s3701 + $0xbc] sm:$0xf]
    %v8078 = vld [vmem:[%s3701 + $0xc0] sm:$0xf]
    %v8079 = vld [vmem:[%s3701 + $0xc4] sm:$0xf]
    %v8080 = vld [vmem:[%s3701 + $0xc8] sm:$0xf]
    %v8081 = vld [vmem:[%s3701 + $0xcc] sm:$0xf]
    %v8086 = vrot.slane %v7428, 1
    %v8087 = vrot.slane %v7429, 1
    %v8088 = vrot.slane %v7430, 1
    %v8089 = vrot.slane %v7431, 1
    %v8145 = vunpack.c.l.b16 %v8030
    %v8146 = vunpack.c.l.b16 %v8031
    %v8147 = vunpack.c.l.b16 %v8032
    %v8148 = vunpack.c.l.b16 %v8033
    %v8149 = vunpack.c.l.b16 %v8034
    %v8150 = vunpack.c.l.b16 %v8035
    %v8151 = vunpack.c.l.b16 %v8036
    %v8152 = vunpack.c.l.b16 %v8037
    %v8153 = vunpack.c.l.b16 %v8038
    %v8154 = vunpack.c.l.b16 %v8039
    %v8155 = vunpack.c.l.b16 %v8040
    %v8156 = vunpack.c.l.b16 %v8041
    %v8157 = vunpack.c.l.b16 %v8042
    %v8158 = vunpack.c.l.b16 %v8043
    %v8159 = vunpack.c.l.b16 %v8044
    %v8160 = vunpack.c.l.b16 %v8045
    %v8161 = vunpack.c.l.b16 %v8046
    %v8162 = vunpack.c.l.b16 %v8047
    %v8163 = vunpack.c.l.b16 %v8048
    %v8164 = vunpack.c.l.b16 %v8049
    %v8165 = vunpack.c.l.b16 %v8050
    %v8166 = vunpack.c.l.b16 %v8051
    %v8167 = vunpack.c.l.b16 %v8052
    %v8168 = vunpack.c.l.b16 %v8053
    %v8169 = vunpack.c.l.b16 %v8054
    %v8170 = vunpack.c.l.b16 %v8055
    %v8171 = vunpack.c.l.b16 %v8056
    %v8172 = vunpack.c.l.b16 %v8057
    %v8173 = vunpack.c.l.b16 %v8058
    %v8174 = vunpack.c.l.b16 %v8059
    %v8175 = vunpack.c.l.b16 %v8060
    %v8176 = vunpack.c.l.b16 %v8061
    %v8177 = vunpack.c.l.b16 %v8062
    %v8178 = vunpack.c.l.b16 %v8063
    %v8179 = vunpack.c.l.b16 %v8064
    %v8180 = vunpack.c.l.b16 %v8065
    %v8181 = vunpack.c.l.b16 %v8066
    %v8182 = vunpack.c.l.b16 %v8067
    %v8183 = vunpack.c.l.b16 %v8068
    %v8184 = vunpack.c.l.b16 %v8069
    %v8185 = vunpack.c.l.b16 %v8070
    %v8186 = vunpack.c.l.b16 %v8071
    %v8187 = vunpack.c.l.b16 %v8072
    %v8188 = vunpack.c.l.b16 %v8073
    %v8189 = vunpack.c.l.b16 %v8074
    %v8190 = vunpack.c.l.b16 %v8075
    %v8191 = vunpack.c.l.b16 %v8076
    %v8192 = vunpack.c.l.b16 %v8077
    %v8193 = vunpack.c.l.b16 %v8078
    %v8194 = vunpack.c.l.b16 %v8079
    %v8195 = vunpack.c.l.b16 %v8080
    %v8196 = vunpack.c.l.b16 %v8081
    %v8197 = vpack.c.b16 %v8146, %v8145
    %v8198 = vpack.c.b16 %v8148, %v8147
    %v8199 = vpack.c.b16 %v8150, %v8149
    %v8200 = vpack.c.b16 %v8152, %v8151
    %v8201 = vpack.c.b16 %v8154, %v8153
    %v8202 = vpack.c.b16 %v8156, %v8155
    %v8203 = vpack.c.b16 %v8158, %v8157
    %v8204 = vpack.c.b16 %v8160, %v8159
    %v8205 = vpack.c.b16 %v8162, %v8161
    %v8206 = vpack.c.b16 %v8164, %v8163
    %v8207 = vpack.c.b16 %v8166, %v8165
    %v8208 = vpack.c.b16 %v8168, %v8167
    %v8209 = vpack.c.b16 %v8170, %v8169
    %v8210 = vpack.c.b16 %v8172, %v8171
    %v8211 = vpack.c.b16 %v8174, %v8173
    %v8212 = vpack.c.b16 %v8176, %v8175
    %v8213 = vpack.c.b16 %v8178, %v8177
    %v8214 = vpack.c.b16 %v8180, %v8179
    %v8215 = vpack.c.b16 %v8182, %v8181
    %v8216 = vpack.c.b16 %v8184, %v8183
    %v8217 = vpack.c.b16 %v8186, %v8185
    %v8218 = vpack.c.b16 %v8188, %v8187
    %v8219 = vpack.c.b16 %v8190, %v8189
    %v8220 = vpack.c.b16 %v8192, %v8191
    %v8221 = vpack.c.b16 %v8194, %v8193
    %v8222 = vpack.c.b16 %v8196, %v8195
    %v8250 = vsel %vm1022, %v8089, 0
    %8252 = vmatprep.subr.bf16.mxu0 0
    %8253 = vmatpush1.bf16.msra.mxu0 %v8197
    %8254 = vmatprep.subr.bf16.mxu0 0
    %8255 = vmatpush1.bf16.msra.mxu0 %v8198
    %8256 = vmatprep.subr.bf16.mxu0 0
    %8257 = vmatpush1.bf16.msra.mxu0 %v8199
    %8258 = vmatprep.subr.bf16.mxu0 0
    %8259 = vmatpush1.bf16.msra.mxu0 %v8200
    %8260 = vmatprep.subr.bf16.mxu0 0
    %8261 = vmatpush1.bf16.msra.mxu0 %v8201
    %8262 = vmatprep.subr.bf16.mxu0 0
    %8263 = vmatpush1.bf16.msra.mxu0 %v8202
    %8264 = vmatprep.subr.bf16.mxu0 0
    %8265 = vmatpush1.bf16.msra.mxu0 %v8203
    %8266 = vmatprep.subr.bf16.mxu0 0
    %8267 = vmatpush1.bf16.msra.mxu0 %v8204
    %8268 = vmatprep.subr.bf16.mxu0 0
    %8269 = vmatpush1.bf16.msra.mxu0 %v8205
    %8270 = vmatprep.subr.bf16.mxu0 0
    %8271 = vmatpush1.bf16.msra.mxu0 %v8206
    %8272 = vmatprep.subr.bf16.mxu0 0
    %8273 = vmatpush1.bf16.msra.mxu0 %v8207
    %8274 = vmatprep.subr.bf16.mxu0 0
    %8275 = vmatpush1.bf16.msra.mxu0 %v8208
    %8276 = vmatprep.subr.bf16.mxu0 0
    %8277 = vmatpush1.bf16.msra.mxu0 %v8209
    %8278 = vmatprep.subr.bf16.mxu0 0
    %8279 = vmatpush1.bf16.msra.mxu0 %v8210
    %8280 = vmatprep.subr.bf16.mxu0 0
    %8281 = vmatpush1.bf16.msra.mxu0 %v8211
    %8282 = vmatprep.subr.bf16.mxu0 0
    %8283 = vmatpush1.bf16.msra.mxu0 %v8212
    %8284 = vmatprep.mubr.bf16.mxu0 %v8087
    %8285 = vmatmul.mubr.bf16.gmra.mrb[0].mxu0 %v8086
    %v8286 = vpop.f32.mrb[0].mxu0
    %v8287 = vadd.f32 0.0, %v8286
    %v8288 = vpop.f32.mrb[0].mxu0
    %v8289 = vpop.f32.mrb[0].mxu0
    %v8290 = vpop.f32.mrb[0].mxu0
    %8291 = vdwg.mxu0
    %8292 = vmatprep.subr.bf16.mxu0 0
    %8293 = vmatpush1.bf16.msra.mxu0 %v8213
    %8294 = vmatprep.subr.bf16.mxu0 0
    %8295 = vmatpush1.bf16.msra.mxu0 %v8214
    %8296 = vmatprep.subr.bf16.mxu0 0
    %8297 = vmatpush1.bf16.msra.mxu0 %v8215
    %8298 = vmatprep.subr.bf16.mxu0 0
    %8299 = vmatpush1.bf16.msra.mxu0 %v8216
    %8300 = vmatprep.subr.bf16.mxu0 0
    %8301 = vmatpush1.bf16.msra.mxu0 %v8217
    %8302 = vmatprep.subr.bf16.mxu0 0
    %8303 = vmatpush1.bf16.msra.mxu0 %v8218
    %8304 = vmatprep.subr.bf16.mxu0 0
    %8305 = vmatpush1.bf16.msra.mxu0 %v8219
    %8306 = vmatprep.subr.bf16.mxu0 0
    %8307 = vmatpush1.bf16.msra.mxu0 %v8220
    %8308 = vmatprep.subr.bf16.mxu0 0
    %8309 = vmatpush1.bf16.msra.mxu0 %v8221
    %8310 = vmatprep.subr.bf16.mxu0 0
    %8311 = vmatpush1.bf16.msra.mxu0 %v8222
    %8312 = vmatprep.subr.bf16.mxu0 0
    %8313 = vmatpush1.bf16.msra.mxu0 0
    %8314 = vmatprep.subr.bf16.mxu0 0
    %8315 = vmatpush1.bf16.msra.mxu0 0
    %8316 = vmatprep.subr.bf16.mxu0 0
    %8317 = vmatpush1.bf16.msra.mxu0 0
    %8318 = vmatprep.subr.bf16.mxu0 0
    %8319 = vmatpush1.bf16.msra.mxu0 0
    %8320 = vmatprep.subr.bf16.mxu0 0
    %8321 = vmatpush1.bf16.msra.mxu0 0
    %8322 = vmatprep.subr.bf16.mxu0 0
    %8323 = vmatpush1.bf16.msra.mxu0 0
    %8324 = vmatprep.mubr.bf16.mxu0 %v8250
    %8325 = vmatmul.mubr.bf16.gmra.mrb[0].mxu0 %v8088
    %v8326 = vpop.f32.mrb[0].mxu0
    %v8327 = vadd.f32 %v8287, %v8326
    %v8328 = vpop.f32.mrb[0].mxu0
    %v8329 = vpop.f32.mrb[0].mxu0
    %v8330 = vpop.f32.mrb[0].mxu0
    %8331 = vdwg.mxu0
    %v8332 = vadd.f32 %v7723, %v8327
    %v8333 = vld [vmem:[%s4005] sm:$0xf]
    %v8334 = vld [vmem:[%s4005 + $0x4] sm:$0xf]
    %v8335 = vld [vmem:[%s4005 + $0x8] sm:$0xf]
    %v8336 = vld [vmem:[%s4005 + $0xc] sm:$0xf]
    %v8337 = vld [vmem:[%s4005 + $0x10] sm:$0xf]
    %v8338 = vld [vmem:[%s4005 + $0x14] sm:$0xf]
    %v8339 = vld [vmem:[%s4005 + $0x18] sm:$0xf]
    %v8340 = vld [vmem:[%s4005 + $0x1c] sm:$0xf]
    %v8341 = vld [vmem:[%s4005 + $0x20] sm:$0xf]
    %v8342 = vld [vmem:[%s4005 + $0x24] sm:$0xf]
    %v8343 = vld [vmem:[%s4005 + $0x28] sm:$0xf]
    %v8344 = vld [vmem:[%s4005 + $0x2c] sm:$0xf]
    %v8345 = vld [vmem:[%s4005 + $0x30] sm:$0xf]
    %v8346 = vld [vmem:[%s4005 + $0x34] sm:$0xf]
    %v8347 = vld [vmem:[%s4005 + $0x38] sm:$0xf]
    %v8348 = vld [vmem:[%s4005 + $0x3c] sm:$0xf]
    %v8349 = vld [vmem:[%s4005 + $0x40] sm:$0xf]
    %v8350 = vld [vmem:[%s4005 + $0x44] sm:$0xf]
    %v8351 = vld [vmem:[%s4005 + $0x48] sm:$0xf]
    %v8352 = vld [vmem:[%s4005 + $0x4c] sm:$0xf]
    %v8353 = vld [vmem:[%s4005 + $0x50] sm:$0xf]
    %v8354 = vld [vmem:[%s4005 + $0x54] sm:$0xf]
    %v8355 = vld [vmem:[%s4005 + $0x58] sm:$0xf]
    %v8356 = vld [vmem:[%s4005 + $0x5c] sm:$0xf]
    %v8357 = vld [vmem:[%s4005 + $0x60] sm:$0xf]
    %v8358 = vld [vmem:[%s4005 + $0x64] sm:$0xf]
    %v8359 = vld [vmem:[%s4005 + $0x68] sm:$0xf]
    %v8360 = vld [vmem:[%s4005 + $0x6c] sm:$0xf]
    %v8361 = vld [vmem:[%s4005 + $0x70] sm:$0xf]
    %v8362 = vld [vmem:[%s4005 + $0x74] sm:$0xf]
    %v8363 = vld [vmem:[%s4005 + $0x78] sm:$0xf]
    %v8364 = vld [vmem:[%s4005 + $0x7c] sm:$0xf]
    %v8365 = vld [vmem:[%s4005 + $0x80] sm:$0xf]
    %v8366 = vld [vmem:[%s4005 + $0x84] sm:$0xf]
    %v8367 = vld [vmem:[%s4005 + $0x88] sm:$0xf]
    %v8368 = vld [vmem:[%s4005 + $0x8c] sm:$0xf]
    %v8369 = vld [vmem:[%s4005 + $0x90] sm:$0xf]
    %v8370 = vld [vmem:[%s4005 + $0x94] sm:$0xf]
    %v8371 = vld [vmem:[%s4005 + $0x98] sm:$0xf]
    %v8372 = vld [vmem:[%s4005 + $0x9c] sm:$0xf]
    %v8373 = vld [vmem:[%s4005 + $0xa0] sm:$0xf]
    %v8374 = vld [vmem:[%s4005 + $0xa4] sm:$0xf]
    %v8375 = vld [vmem:[%s4005 + $0xa8] sm:$0xf]
    %v8376 = vld [vmem:[%s4005 + $0xac] sm:$0xf]
    %v8377 = vld [vmem:[%s4005 + $0xb0] sm:$0xf]
    %v8378 = vld [vmem:[%s4005 + $0xb4] sm:$0xf]
    %v8379 = vld [vmem:[%s4005 + $0xb8] sm:$0xf]
    %v8380 = vld [vmem:[%s4005 + $0xbc] sm:$0xf]
    %v8381 = vld [vmem:[%s4005 + $0xc0] sm:$0xf]
    %v8382 = vld [vmem:[%s4005 + $0xc4] sm:$0xf]
    %v8383 = vld [vmem:[%s4005 + $0xc8] sm:$0xf]
    %v8384 = vld [vmem:[%s4005 + $0xcc] sm:$0xf]
    %v8385 = vrot.slane %v7777, 1
    %v8386 = vrot.slane %v7780, 1
    %v8387 = vrot.slane %v7783, 1
    %v8388 = vrot.slane %v7785, 1
    %v8444 = vunpack.c.l.b16 %v8333
    %v8445 = vunpack.c.l.b16 %v8334
    %v8446 = vunpack.c.l.b16 %v8335
    %v8447 = vunpack.c.l.b16 %v8336
    %v8448 = vunpack.c.l.b16 %v8337
    %v8449 = vunpack.c.l.b16 %v8338
    %v8450 = vunpack.c.l.b16 %v8339
    %v8451 = vunpack.c.l.b16 %v8340
    %v8452 = vunpack.c.l.b16 %v8341
    %v8453 = vunpack.c.l.b16 %v8342
    %v8454 = vunpack.c.l.b16 %v8343
    %v8455 = vunpack.c.l.b16 %v8344
    %v8456 = vunpack.c.l.b16 %v8345
    %v8457 = vunpack.c.l.b16 %v8346
    %v8458 = vunpack.c.l.b16 %v8347
    %v8459 = vunpack.c.l.b16 %v8348
    %v8460 = vunpack.c.l.b16 %v8349
    %v8461 = vunpack.c.l.b16 %v8350
    %v8462 = vunpack.c.l.b16 %v8351
    %v8463 = vunpack.c.l.b16 %v8352
    %v8464 = vunpack.c.l.b16 %v8353
    %v8465 = vunpack.c.l.b16 %v8354
    %v8466 = vunpack.c.l.b16 %v8355
    %v8467 = vunpack.c.l.b16 %v8356
    %v8468 = vunpack.c.l.b16 %v8357
    %v8469 = vunpack.c.l.b16 %v8358
    %v8470 = vunpack.c.l.b16 %v8359
    %v8471 = vunpack.c.l.b16 %v8360
    %v8472 = vunpack.c.l.b16 %v8361
    %v8473 = vunpack.c.l.b16 %v8362
    %v8474 = vunpack.c.l.b16 %v8363
    %v8475 = vunpack.c.l.b16 %v8364
    %v8476 = vunpack.c.l.b16 %v8365
    %v8477 = vunpack.c.l.b16 %v8366
    %v8478 = vunpack.c.l.b16 %v8367
    %v8479 = vunpack.c.l.b16 %v8368
    %v8480 = vunpack.c.l.b16 %v8369
    %v8481 = vunpack.c.l.b16 %v8370
    %v8482 = vunpack.c.l.b16 %v8371
    %v8483 = vunpack.c.l.b16 %v8372
    %v8484 = vunpack.c.l.b16 %v8373
    %v8485 = vunpack.c.l.b16 %v8374
    %v8486 = vunpack.c.l.b16 %v8375
    %v8487 = vunpack.c.l.b16 %v8376
    %v8488 = vunpack.c.l.b16 %v8377
    %v8489 = vunpack.c.l.b16 %v8378
    %v8490 = vunpack.c.l.b16 %v8379
    %v8491 = vunpack.c.l.b16 %v8380
    %v8492 = vunpack.c.l.b16 %v8381
    %v8493 = vunpack.c.l.b16 %v8382
    %v8494 = vunpack.c.l.b16 %v8383
    %v8495 = vunpack.c.l.b16 %v8384
    %v8496 = vpack.c.b16 %v8445, %v8444
    %v8497 = vpack.c.b16 %v8447, %v8446
    %v8498 = vpack.c.b16 %v8449, %v8448
    %v8499 = vpack.c.b16 %v8451, %v8450
    %v8500 = vpack.c.b16 %v8453, %v8452
    %v8501 = vpack.c.b16 %v8455, %v8454
    %v8502 = vpack.c.b16 %v8457, %v8456
    %v8503 = vpack.c.b16 %v8459, %v8458
    %v8504 = vpack.c.b16 %v8461, %v8460
    %v8505 = vpack.c.b16 %v8463, %v8462
    %v8506 = vpack.c.b16 %v8465, %v8464
    %v8507 = vpack.c.b16 %v8467, %v8466
    %v8508 = vpack.c.b16 %v8469, %v8468
    %v8509 = vpack.c.b16 %v8471, %v8470
    %v8510 = vpack.c.b16 %v8473, %v8472
    %v8511 = vpack.c.b16 %v8475, %v8474
    %v8512 = vpack.c.b16 %v8477, %v8476
    %v8513 = vpack.c.b16 %v8479, %v8478
    %v8514 = vpack.c.b16 %v8481, %v8480
    %v8515 = vpack.c.b16 %v8483, %v8482
    %v8516 = vpack.c.b16 %v8485, %v8484
    %v8517 = vpack.c.b16 %v8487, %v8486
    %v8518 = vpack.c.b16 %v8489, %v8488
    %v8519 = vpack.c.b16 %v8491, %v8490
    %v8520 = vpack.c.b16 %v8493, %v8492
    %v8521 = vpack.c.b16 %v8495, %v8494
    %v8549 = vsel %vm1022, %v8388, 0
    %8551 = vmatprep.subr.bf16.mxu0 0
    %8552 = vmatpush1.bf16.msra.mxu0 %v8496
    %8553 = vmatprep.subr.bf16.mxu0 0
    %8554 = vmatpush1.bf16.msra.mxu0 %v8497
    %8555 = vmatprep.subr.bf16.mxu0 0
    %8556 = vmatpush1.bf16.msra.mxu0 %v8498
    %8557 = vmatprep.subr.bf16.mxu0 0
    %8558 = vmatpush1.bf16.msra.mxu0 %v8499
    %8559 = vmatprep.subr.bf16.mxu0 0
    %8560 = vmatpush1.bf16.msra.mxu0 %v8500
    %8561 = vmatprep.subr.bf16.mxu0 0
    %8562 = vmatpush1.bf16.msra.mxu0 %v8501
    %8563 = vmatprep.subr.bf16.mxu0 0
    %8564 = vmatpush1.bf16.msra.mxu0 %v8502
    %8565 = vmatprep.subr.bf16.mxu0 0
    %8566 = vmatpush1.bf16.msra.mxu0 %v8503
    %8567 = vmatprep.subr.bf16.mxu0 0
    %8568 = vmatpush1.bf16.msra.mxu0 %v8504
    %8569 = vmatprep.subr.bf16.mxu0 0
    %8570 = vmatpush1.bf16.msra.mxu0 %v8505
    %8571 = vmatprep.subr.bf16.mxu0 0
    %8572 = vmatpush1.bf16.msra.mxu0 %v8506
    %8573 = vmatprep.subr.bf16.mxu0 0
    %8574 = vmatpush1.bf16.msra.mxu0 %v8507
    %8575 = vmatprep.subr.bf16.mxu0 0
    %8576 = vmatpush1.bf16.msra.mxu0 %v8508
    %8577 = vmatprep.subr.bf16.mxu0 0
    %8578 = vmatpush1.bf16.msra.mxu0 %v8509
    %8579 = vmatprep.subr.bf16.mxu0 0
    %8580 = vmatpush1.bf16.msra.mxu0 %v8510
    %8581 = vmatprep.subr.bf16.mxu0 0
    %8582 = vmatpush1.bf16.msra.mxu0 %v8511
    %8583 = vmatprep.mubr.bf16.mxu0 %v8386
    %8584 = vmatmul.mubr.bf16.gmra.mrb[0].mxu0 %v8385
    %v8585 = vpop.f32.mrb[0].mxu0
    %v8586 = vadd.f32 0.0, %v8585
    %v8587 = vpop.f32.mrb[0].mxu0
    %v8588 = vpop.f32.mrb[0].mxu0
    %v8589 = vpop.f32.mrb[0].mxu0
    %8590 = vdwg.mxu0
    %8591 = vmatprep.subr.bf16.mxu0 0
    %8592 = vmatpush1.bf16.msra.mxu0 %v8512
    %8593 = vmatprep.subr.bf16.mxu0 0
    %8594 = vmatpush1.bf16.msra.mxu0 %v8513
    %8595 = vmatprep.subr.bf16.mxu0 0
    %8596 = vmatpush1.bf16.msra.mxu0 %v8514
    %8597 = vmatprep.subr.bf16.mxu0 0
    %8598 = vmatpush1.bf16.msra.mxu0 %v8515
    %8599 = vmatprep.subr.bf16.mxu0 0
    %8600 = vmatpush1.bf16.msra.mxu0 %v8516
    %8601 = vmatprep.subr.bf16.mxu0 0
    %8602 = vmatpush1.bf16.msra.mxu0 %v8517
    %8603 = vmatprep.subr.bf16.mxu0 0
    %8604 = vmatpush1.bf16.msra.mxu0 %v8518
    %8605 = vmatprep.subr.bf16.mxu0 0
    %8606 = vmatpush1.bf16.msra.mxu0 %v8519
    %8607 = vmatprep.subr.bf16.mxu0 0
    %8608 = vmatpush1.bf16.msra.mxu0 %v8520
    %8609 = vmatprep.subr.bf16.mxu0 0
    %8610 = vmatpush1.bf16.msra.mxu0 %v8521
    %8611 = vmatprep.subr.bf16.mxu0 0
    %8612 = vmatpush1.bf16.msra.mxu0 0
    %8613 = vmatprep.subr.bf16.mxu0 0
    %8614 = vmatpush1.bf16.msra.mxu0 0
    %8615 = vmatprep.subr.bf16.mxu0 0
    %8616 = vmatpush1.bf16.msra.mxu0 0
    %8617 = vmatprep.subr.bf16.mxu0 0
    %8618 = vmatpush1.bf16.msra.mxu0 0
    %8619 = vmatprep.subr.bf16.mxu0 0
    %8620 = vmatpush1.bf16.msra.mxu0 0
    %8621 = vmatprep.subr.bf16.mxu0 0
    %8622 = vmatpush1.bf16.msra.mxu0 0
    %8623 = vmatprep.mubr.bf16.mxu0 %v8549
    %8624 = vmatmul.mubr.bf16.gmra.mrb[0].mxu0 %v8387
    %v8625 = vpop.f32.mrb[0].mxu0
    %v8626 = vadd.f32 %v8586, %v8625
    %v8627 = vpop.f32.mrb[0].mxu0
    %v8628 = vpop.f32.mrb[0].mxu0
    %v8629 = vpop.f32.mrb[0].mxu0
    %8630 = vdwg.mxu0
    %v8631 = vadd.f32 %v8029, %v8626
    %v8632 = vld [vmem:[%s4305] sm:$0xf]
    %v8633 = vld [vmem:[%s4305 + $0x4] sm:$0xf]
    %v8634 = vld [vmem:[%s4305 + $0x8] sm:$0xf]
    %v8635 = vld [vmem:[%s4305 + $0xc] sm:$0xf]
    %v8636 = vld [vmem:[%s4305 + $0x10] sm:$0xf]
    %v8637 = vld [vmem:[%s4305 + $0x14] sm:$0xf]
    %v8638 = vld [vmem:[%s4305 + $0x18] sm:$0xf]
    %v8639 = vld [vmem:[%s4305 + $0x1c] sm:$0xf]
    %v8640 = vld [vmem:[%s4305 + $0x20] sm:$0xf]
    %v8641 = vld [vmem:[%s4305 + $0x24] sm:$0xf]
    %v8642 = vld [vmem:[%s4305 + $0x28] sm:$0xf]
    %v8643 = vld [vmem:[%s4305 + $0x2c] sm:$0xf]
    %v8644 = vld [vmem:[%s4305 + $0x30] sm:$0xf]
    %v8645 = vld [vmem:[%s4305 + $0x34] sm:$0xf]
    %v8646 = vld [vmem:[%s4305 + $0x38] sm:$0xf]
    %v8647 = vld [vmem:[%s4305 + $0x3c] sm:$0xf]
    %v8648 = vld [vmem:[%s4305 + $0x40] sm:$0xf]
    %v8649 = vld [vmem:[%s4305 + $0x44] sm:$0xf]
    %v8650 = vld [vmem:[%s4305 + $0x48] sm:$0xf]
    %v8651 = vld [vmem:[%s4305 + $0x4c] sm:$0xf]
    %v8652 = vld [vmem:[%s4305 + $0x50] sm:$0xf]
    %v8653 = vld [vmem:[%s4305 + $0x54] sm:$0xf]
    %v8654 = vld [vmem:[%s4305 + $0x58] sm:$0xf]
    %v8655 = vld [vmem:[%s4305 + $0x5c] sm:$0xf]
    %v8656 = vld [vmem:[%s4305 + $0x60] sm:$0xf]
    %v8657 = vld [vmem:[%s4305 + $0x64] sm:$0xf]
    %v8658 = vld [vmem:[%s4305 + $0x68] sm:$0xf]
    %v8659 = vld [vmem:[%s4305 + $0x6c] sm:$0xf]
    %v8660 = vld [vmem:[%s4305 + $0x70] sm:$0xf]
    %v8661 = vld [vmem:[%s4305 + $0x74] sm:$0xf]
    %v8662 = vld [vmem:[%s4305 + $0x78] sm:$0xf]
    %v8663 = vld [vmem:[%s4305 + $0x7c] sm:$0xf]
    %v8664 = vld [vmem:[%s4305 + $0x80] sm:$0xf]
    %v8665 = vld [vmem:[%s4305 + $0x84] sm:$0xf]
    %v8666 = vld [vmem:[%s4305 + $0x88] sm:$0xf]
    %v8667 = vld [vmem:[%s4305 + $0x8c] sm:$0xf]
    %v8668 = vld [vmem:[%s4305 + $0x90] sm:$0xf]
    %v8669 = vld [vmem:[%s4305 + $0x94] sm:$0xf]
    %v8670 = vld [vmem:[%s4305 + $0x98] sm:$0xf]
    %v8671 = vld [vmem:[%s4305 + $0x9c] sm:$0xf]
    %v8672 = vld [vmem:[%s4305 + $0xa0] sm:$0xf]
    %v8673 = vld [vmem:[%s4305 + $0xa4] sm:$0xf]
    %v8674 = vld [vmem:[%s4305 + $0xa8] sm:$0xf]
    %v8675 = vld [vmem:[%s4305 + $0xac] sm:$0xf]
    %v8676 = vld [vmem:[%s4305 + $0xb0] sm:$0xf]
    %v8677 = vld [vmem:[%s4305 + $0xb4] sm:$0xf]
    %v8678 = vld [vmem:[%s4305 + $0xb8] sm:$0xf]
    %v8679 = vld [vmem:[%s4305 + $0xbc] sm:$0xf]
    %v8680 = vld [vmem:[%s4305 + $0xc0] sm:$0xf]
    %v8681 = vld [vmem:[%s4305 + $0xc4] sm:$0xf]
    %v8682 = vld [vmem:[%s4305 + $0xc8] sm:$0xf]
    %v8683 = vld [vmem:[%s4305 + $0xcc] sm:$0xf]
    %v8684 = vrot.slane %v7428, 2
    %v8685 = vrot.slane %v7429, 2
    %v8686 = vrot.slane %v7430, 2
    %v8687 = vrot.slane %v7431, 2
    %v8743 = vunpack.c.l.b16 %v8632
    %v8744 = vunpack.c.l.b16 %v8633
    %v8745 = vunpack.c.l.b16 %v8634
    %v8746 = vunpack.c.l.b16 %v8635
    %v8747 = vunpack.c.l.b16 %v8636
    %v8748 = vunpack.c.l.b16 %v8637
    %v8749 = vunpack.c.l.b16 %v8638
    %v8750 = vunpack.c.l.b16 %v8639
    %v8751 = vunpack.c.l.b16 %v8640
    %v8752 = vunpack.c.l.b16 %v8641
    %v8753 = vunpack.c.l.b16 %v8642
    %v8754 = vunpack.c.l.b16 %v8643
    %v8755 = vunpack.c.l.b16 %v8644
    %v8756 = vunpack.c.l.b16 %v8645
    %v8757 = vunpack.c.l.b16 %v8646
    %v8758 = vunpack.c.l.b16 %v8647
    %v8759 = vunpack.c.l.b16 %v8648
    %v8760 = vunpack.c.l.b16 %v8649
    %v8761 = vunpack.c.l.b16 %v8650
    %v8762 = vunpack.c.l.b16 %v8651
    %v8763 = vunpack.c.l.b16 %v8652
    %v8764 = vunpack.c.l.b16 %v8653
    %v8765 = vunpack.c.l.b16 %v8654
    %v8766 = vunpack.c.l.b16 %v8655
    %v8767 = vunpack.c.l.b16 %v8656
    %v8768 = vunpack.c.l.b16 %v8657
    %v8769 = vunpack.c.l.b16 %v8658
    %v8770 = vunpack.c.l.b16 %v8659
    %v8771 = vunpack.c.l.b16 %v8660
    %v8772 = vunpack.c.l.b16 %v8661
    %v8773 = vunpack.c.l.b16 %v8662
    %v8774 = vunpack.c.l.b16 %v8663
    %v8775 = vunpack.c.l.b16 %v8664
    %v8776 = vunpack.c.l.b16 %v8665
    %v8777 = vunpack.c.l.b16 %v8666
    %v8778 = vunpack.c.l.b16 %v8667
    %v8779 = vunpack.c.l.b16 %v8668
    %v8780 = vunpack.c.l.b16 %v8669
    %v8781 = vunpack.c.l.b16 %v8670
    %v8782 = vunpack.c.l.b16 %v8671
    %v8783 = vunpack.c.l.b16 %v8672
    %v8784 = vunpack.c.l.b16 %v8673
    %v8785 = vunpack.c.l.b16 %v8674
    %v8786 = vunpack.c.l.b16 %v8675
    %v8787 = vunpack.c.l.b16 %v8676
    %v8788 = vunpack.c.l.b16 %v8677
    %v8789 = vunpack.c.l.b16 %v8678
    %v8790 = vunpack.c.l.b16 %v8679
    %v8791 = vunpack.c.l.b16 %v8680
    %v8792 = vunpack.c.l.b16 %v8681
    %v8793 = vunpack.c.l.b16 %v8682
    %v8794 = vunpack.c.l.b16 %v8683
    %v8795 = vpack.c.b16 %v8744, %v8743
    %v8796 = vpack.c.b16 %v8746, %v8745
    %v8797 = vpack.c.b16 %v8748, %v8747
    %v8798 = vpack.c.b16 %v8750, %v8749
    %v8799 = vpack.c.b16 %v8752, %v8751
    %v8800 = vpack.c.b16 %v8754, %v8753
    %v8801 = vpack.c.b16 %v8756, %v8755
    %v8802 = vpack.c.b16 %v8758, %v8757
    %v8803 = vpack.c.b16 %v8760, %v8759
    %v8804 = vpack.c.b16 %v8762, %v8761
    %v8805 = vpack.c.b16 %v8764, %v8763
    %v8806 = vpack.c.b16 %v8766, %v8765
    %v8807 = vpack.c.b16 %v8768, %v8767
    %v8808 = vpack.c.b16 %v8770, %v8769
    %v8809 = vpack.c.b16 %v8772, %v8771
    %v8810 = vpack.c.b16 %v8774, %v8773
    %v8811 = vpack.c.b16 %v8776, %v8775
    %v8812 = vpack.c.b16 %v8778, %v8777
    %v8813 = vpack.c.b16 %v8780, %v8779
    %v8814 = vpack.c.b16 %v8782, %v8781
    %v8815 = vpack.c.b16 %v8784, %v8783
    %v8816 = vpack.c.b16 %v8786, %v8785
    %v8817 = vpack.c.b16 %v8788, %v8787
    %v8818 = vpack.c.b16 %v8790, %v8789
    %v8819 = vpack.c.b16 %v8792, %v8791
    %v8820 = vpack.c.b16 %v8794, %v8793
    %v8848 = vsel %vm1022, %v8687, 0
    %8850 = vmatprep.subr.bf16.mxu0 0
    %8851 = vmatpush1.bf16.msra.mxu0 %v8795
    %8852 = vmatprep.subr.bf16.mxu0 0
    %8853 = vmatpush1.bf16.msra.mxu0 %v8796
    %8854 = vmatprep.subr.bf16.mxu0 0
    %8855 = vmatpush1.bf16.msra.mxu0 %v8797
    %8856 = vmatprep.subr.bf16.mxu0 0
    %8857 = vmatpush1.bf16.msra.mxu0 %v8798
    %8858 = vmatprep.subr.bf16.mxu0 0
    %8859 = vmatpush1.bf16.msra.mxu0 %v8799
    %8860 = vmatprep.subr.bf16.mxu0 0
    %8861 = vmatpush1.bf16.msra.mxu0 %v8800
    %8862 = vmatprep.subr.bf16.mxu0 0
    %8863 = vmatpush1.bf16.msra.mxu0 %v8801
    %8864 = vmatprep.subr.bf16.mxu0 0
    %8865 = vmatpush1.bf16.msra.mxu0 %v8802
    %8866 = vmatprep.subr.bf16.mxu0 0
    %8867 = vmatpush1.bf16.msra.mxu0 %v8803
    %8868 = vmatprep.subr.bf16.mxu0 0
    %8869 = vmatpush1.bf16.msra.mxu0 %v8804
    %8870 = vmatprep.subr.bf16.mxu0 0
    %8871 = vmatpush1.bf16.msra.mxu0 %v8805
    %8872 = vmatprep.subr.bf16.mxu0 0
    %8873 = vmatpush1.bf16.msra.mxu0 %v8806
    %8874 = vmatprep.subr.bf16.mxu0 0
    %8875 = vmatpush1.bf16.msra.mxu0 %v8807
    %8876 = vmatprep.subr.bf16.mxu0 0
    %8877 = vmatpush1.bf16.msra.mxu0 %v8808
    %8878 = vmatprep.subr.bf16.mxu0 0
    %8879 = vmatpush1.bf16.msra.mxu0 %v8809
    %8880 = vmatprep.subr.bf16.mxu0 0
    %8881 = vmatpush1.bf16.msra.mxu0 %v8810
    %8882 = vmatprep.mubr.bf16.mxu0 %v8685
    %8883 = vmatmul.mubr.bf16.gmra.mrb[0].mxu0 %v8684
    %v8884 = vpop.f32.mrb[0].mxu0
    %v8885 = vadd.f32 0.0, %v8884
    %v8886 = vpop.f32.mrb[0].mxu0
    %v8887 = vpop.f32.mrb[0].mxu0
    %v8888 = vpop.f32.mrb[0].mxu0
    %8889 = vdwg.mxu0
    %8890 = vmatprep.subr.bf16.mxu0 0
    %8891 = vmatpush1.bf16.msra.mxu0 %v8811
    %8892 = vmatprep.subr.bf16.mxu0 0
    %8893 = vmatpush1.bf16.msra.mxu0 %v8812
    %8894 = vmatprep.subr.bf16.mxu0 0
    %8895 = vmatpush1.bf16.msra.mxu0 %v8813
    %8896 = vmatprep.subr.bf16.mxu0 0
    %8897 = vmatpush1.bf16.msra.mxu0 %v8814
    %8898 = vmatprep.subr.bf16.mxu0 0
    %8899 = vmatpush1.bf16.msra.mxu0 %v8815
    %8900 = vmatprep.subr.bf16.mxu0 0
    %8901 = vmatpush1.bf16.msra.mxu0 %v8816
    %8902 = vmatprep.subr.bf16.mxu0 0
    %8903 = vmatpush1.bf16.msra.mxu0 %v8817
    %8904 = vmatprep.subr.bf16.mxu0 0
    %8905 = vmatpush1.bf16.msra.mxu0 %v8818
    %8906 = vmatprep.subr.bf16.mxu0 0
    %8907 = vmatpush1.bf16.msra.mxu0 %v8819
    %8908 = vmatprep.subr.bf16.mxu0 0
    %8909 = vmatpush1.bf16.msra.mxu0 %v8820
    %8910 = vmatprep.subr.bf16.mxu0 0
    %8911 = vmatpush1.bf16.msra.mxu0 0
    %8912 = vmatprep.subr.bf16.mxu0 0
    %8913 = vmatpush1.bf16.msra.mxu0 0
    %8914 = vmatprep.subr.bf16.mxu0 0
    %8915 = vmatpush1.bf16.msra.mxu0 0
    %8916 = vmatprep.subr.bf16.mxu0 0
    %8917 = vmatpush1.bf16.msra.mxu0 0
    %8918 = vmatprep.subr.bf16.mxu0 0
    %8919 = vmatpush1.bf16.msra.mxu0 0
    %8920 = vmatprep.subr.bf16.mxu0 0
    %8921 = vmatpush1.bf16.msra.mxu0 0
    %8922 = vmatprep.mubr.bf16.mxu0 %v8848
    %8923 = vmatmul.mubr.bf16.gmra.mrb[0].mxu0 %v8686
    %v8924 = vpop.f32.mrb[0].mxu0
    %v8925 = vadd.f32 %v8885, %v8924
    %v8926 = vpop.f32.mrb[0].mxu0
    %v8927 = vpop.f32.mrb[0].mxu0
    %v8928 = vpop.f32.mrb[0].mxu0
    %8929 = vdwg.mxu0
    %v8930 = vadd.f32 %v8332, %v8925
    %v8931 = vadd.f32 %v8930, %v8631
    %v8932 = vadd.f32 %v8931, %v236
    %v8933 = vmax.f32 %v8932, 0.0
    %8934 = vst [vmem:[#allocation2 + $0x1] sm:$0x1] %v8933
    %v8935 = vld [vmem:[#allocation2] sm:$0x3]
    %v8936 = vpack.c.bf16 %v8935, %v8935
    %v8937 = vld [vmem:[%s8] sm:$0xf]
    %v8938 = vld [vmem:[%s8 + $0x4] sm:$0xf]
    %v8939 = vld [vmem:[%s8 + $0x8] sm:$0xf]
    %v8940 = vld [vmem:[%s8 + $0xc] sm:$0xf]
    %v8941 = vld [vmem:[%s8 + $0x10] sm:$0xf]
    %v8942 = vld [vmem:[%s8 + $0x14] sm:$0xf]
    %v8943 = vld [vmem:[%s8 + $0x18] sm:$0xf]
    %v8944 = vld [vmem:[%s8 + $0x1c] sm:$0xf]
    %v8945 = vld [vmem:[%s8 + $0x20] sm:$0xf]
    %v8946 = vld [vmem:[%s8 + $0x24] sm:$0xf]
    %v8947 = vld [vmem:[%s8 + $0x28] sm:$0xf]
    %v8948 = vld [vmem:[%s8 + $0x2c] sm:$0xf]
    %v8949 = vld [vmem:[%s8 + $0x30] sm:$0xf]
    %v8950 = vld [vmem:[%s8 + $0x34] sm:$0xf]
    %v8951 = vld [vmem:[%s8 + $0x38] sm:$0xf]
    %v8952 = vld [vmem:[%s8 + $0x3c] sm:$0xf]
    %v8953 = vld [vmem:[#allocation12] sm:$0x1]
    %v8955 = vlaneseq
    %v8956 = vshrl.u32 %v8955, 7
    %v8957 = vsub.s32 0, %v8956
    %v8958 = vrot.slane %v8953, %v8957
    %v8976 = vunpack.c.l.b16 %v8937
    %v8977 = vunpack.c.l.b16 %v8938
    %v8978 = vunpack.c.l.b16 %v8939
    %v8979 = vunpack.c.l.b16 %v8940
    %v8980 = vunpack.c.l.b16 %v8941
    %v8981 = vunpack.c.l.b16 %v8942
    %v8982 = vunpack.c.l.b16 %v8943
    %v8983 = vunpack.c.l.b16 %v8944
    %v8984 = vunpack.c.l.b16 %v8945
    %v8985 = vunpack.c.l.b16 %v8946
    %v8986 = vunpack.c.l.b16 %v8947
    %v8987 = vunpack.c.l.b16 %v8948
    %v8988 = vunpack.c.l.b16 %v8949
    %v8989 = vunpack.c.l.b16 %v8950
    %v8990 = vunpack.c.l.b16 %v8951
    %v8991 = vunpack.c.l.b16 %v8952
    %v8992 = vpack.c.b16 %v8977, %v8976
    %v8993 = vpack.c.b16 %v8979, %v8978
    %v8994 = vpack.c.b16 %v8981, %v8980
    %v8995 = vpack.c.b16 %v8983, %v8982
    %v8996 = vpack.c.b16 %v8985, %v8984
    %v8997 = vpack.c.b16 %v8987, %v8986
    %v8998 = vpack.c.b16 %v8989, %v8988
    %v8999 = vpack.c.b16 %v8991, %v8990
    %9008 = vmatprep.subr.bf16.mxu0 0
    %9009 = vmatpush1.bf16.msra.mxu0 %v8992
    %9010 = vmatprep.subr.bf16.mxu0 0
    %9011 = vmatpush1.bf16.msra.mxu0 %v8993
    %9012 = vmatprep.subr.bf16.mxu0 0
    %9013 = vmatpush1.bf16.msra.mxu0 %v8994
    %9014 = vmatprep.subr.bf16.mxu0 0
    %9015 = vmatpush1.bf16.msra.mxu0 %v8995
    %9016 = vmatprep.subr.bf16.mxu0 0
    %9017 = vmatpush1.bf16.msra.mxu0 %v8996
    %9018 = vmatprep.subr.bf16.mxu0 0
    %9019 = vmatpush1.bf16.msra.mxu0 %v8997
    %9020 = vmatprep.subr.bf16.mxu0 0
    %9021 = vmatpush1.bf16.msra.mxu0 %v8998
    %9022 = vmatprep.subr.bf16.mxu0 0
    %9023 = vmatpush1.bf16.msra.mxu0 %v8999
    %9024 = vmatprep.subr.bf16.mxu0 0
    %9025 = vmatpush1.bf16.msra.mxu0 0
    %9026 = vmatprep.subr.bf16.mxu0 0
    %9027 = vmatpush1.bf16.msra.mxu0 0
    %9028 = vmatprep.subr.bf16.mxu0 0
    %9029 = vmatpush1.bf16.msra.mxu0 0
    %9030 = vmatprep.subr.bf16.mxu0 0
    %9031 = vmatpush1.bf16.msra.mxu0 0
    %9032 = vmatprep.subr.bf16.mxu0 0
    %9033 = vmatpush1.bf16.msra.mxu0 0
    %9034 = vmatprep.subr.bf16.mxu0 0
    %9035 = vmatpush1.bf16.msra.mxu0 0
    %9036 = vmatprep.subr.bf16.mxu0 0
    %9037 = vmatpush1.bf16.msra.mxu0 0
    %9038 = vmatprep.subr.bf16.mxu0 0
    %9039 = vmatpush1.bf16.msra.mxu0 0
    %9040 = vmatprep.mubr.bf16.mxu0 0
    %9041 = vmatmul.mubr.bf16.gmra.mrb[0].mxu0 %v8936
    %v9042 = vpop.f32.mrb[0].mxu0
    %v9043 = vadd.f32 %v8958, %v9042
    %v9044 = vpop.f32.mrb[0].mxu0
    %v9045 = vpop.f32.mrb[0].mxu0
    %v9046 = vpop.f32.mrb[0].mxu0
    %9047 = vdwg.mxu0
    %v9048 = vmax.f32 %v9043, 0.0
    %vm9049 = vcmask 107520
    %v9050 = vsel %vm9049, %v9048, -inf
    %9051 = vmax.xlane.f32.xlu0 %v9050
    %v9052 = vpop.xlane.xlu0 %9051
    %v9053 = vsub.f32 %v9048, %v9052
    %v9054 = vmul.f32 %v9053, 1.442695
    %v9055 = vpow.pop %v9054
    %v9056 = vsel %vm9049, %v9055, 0.0
    %9057 = vadd.xlane.f32.xlu0 %v9056
    %v9058 = vpop.xlane.xlu0 %9057
    %v9059 = vlog2.pop %v9058
    %v9060 = vmul.f32 %v9059, 0.6931472
    %v9061 = vadd.f32 %v9052, %v9060
    %v9062 = vsub.f32 %v9048, %v9061
    %9063 = vst.msk [vmem:[#allocation14] sm:$0x3] %vm9049, %v9062
    // Predicated region
    $region66: #{cnn_net1_forward.1} parent=1 // pred_check
      _
    $region67: #{cnn_net1_forward.1} parent=1 // pred_check_branch
      %9065 = sbr.rel (0) target = $region69
    $region68: #{cnn_net1_forward.1} parent=1 // pred_region
      %s9067 = ssub.s32 32, 32
      %9068 = vsyncadd [#allocation5], %s9067
      %s9070 = sshll.u32 [#allocation14], 4
      %s9071 = int_to_ptr.vmem [resolvable:$true] %s9070
      %9073 = dma.vmem_to_hbm [thread:$0]  %s9071, 32, %s10, [#allocation5]
    $region69: #{cnn_net1_forward.1} parent=1 // pred_fallthru
      _
    // Predicated region
    $region70: #{cnn_net1_forward.1} parent=1 // pred_check
      _
    $region71: #{cnn_net1_forward.1} parent=1 // pred_check_branch
      %9075 = sbr.rel (0) target = $region73
    $region72: #{cnn_net1_forward.1} parent=1 // pred_region
      %9076 = dma.done [#allocation5], 32
    $region73: #{cnn_net1_forward.1} parent=1 // pred_fallthru
      _
    %9077 = vsyncpa [#allocation4], 1
    %9078 = vsyncpa [#allocation7], 1
    %9079 = vsyncpa [#allocation10], 1
    %9080 = vsyncpa [#allocation13], 1
    %9081 = vsyncpa [#allocation5], 1

</llo_original>
